<compile_context>
chip_gen: v6e
topology: v6e:2x2x1
jax: 0.10.0
libtpu: 0.0.40
codegen_flags: <defaults>
</compile_context>

<pallas_src>
import numpy as np
import jax
import jax.numpy as jnp
from jax import lax
from jax.experimental import pallas as pl
from jax.experimental.pallas import tpu as pltpu

# ----------------------------- problem sizes --------------------------------
NUM_CLASSES = 5
NCP = 8                          # classes padded to sublane granularity
HIN, WIN = 32, 32                # input spatial size
H1, W1 = HIN // 4, WIN // 4      # x[0]  (stride 4)  -> 8 x 8
H2, W2 = HIN // 8, WIN // 8      # x[1]  (stride 8)  -> 4 x 4
H3, W3 = HIN // 16, WIN // 16    # x[2]  (stride 16) -> 2 x 2
C1, C2, C3 = 48, 96, 192         # HRNet branch channels (48+96+192 = 336)
CIN = C1 + C2 + C3               # 336
CPAD = 384                       # channel-pad to 3*128 lanes
CMID = 512
KCOL = 9 * CPAD                  # 3456 im2col contraction length
S1 = H1 * W1                     # 64 stride-4 spatial positions
SOUT = HIN * WIN                 # 1024 output spatial positions
BN_EPS = 1e-5


# ----------------------- bilinear (align_corners) matrix ---------------------
def _align_corners_matrix(in_size, out_size):
    """A (out,in) s.t. A @ x == F.interpolate(x, mode='bilinear',
    align_corners=True) along one axis."""
    A = np.zeros((out_size, in_size), np.float32)
    if out_size == 1:
        A[0, 0] = 1.0
        return A
    src = np.arange(out_size, dtype=np.float64) * (in_size - 1) / (out_size - 1)
    i0 = np.clip(np.floor(src).astype(np.int64), 0, in_size - 1)
    i1 = np.minimum(i0 + 1, in_size - 1)
    w1 = (src - i0).astype(np.float32)
    w0 = 1.0 - w1
    rows = np.arange(out_size)
    np.add.at(A, (rows, i0), w0)
    np.add.at(A, (rows, i1), w1)
    return A


# ------------------------ B_BLK selection (per chip) --------------------------
def _tensorcores_per_chip():
    # v5e / v6e have a single TensorCore per chip; v4 / v5p / v7x have two.
    try:
        kind = jax.devices()[0].device_kind.lower()
    except Exception:
        return 2
    if any(s in kind for s in ("v5 lite", "v5e", "v6 lite", "v6e")):
        return 1
    return 2


def _choose_b_blk(n, n_tc):
    # Largest M on the dominant matmul (up to 4 images -> M=256) while keeping
    # >= n_tc grid steps so every TensorCore gets work under "parallel".
    for b in (4, 3, 2):
        if n % b == 0 and n // b >= n_tc:
            return b
    return 1


# ------------------------------ Pallas kernel --------------------------------
def make_head_kernel(b_blk, ncp):
    bs1 = b_blk * S1

    def _head_kernel(f1_ref, f2_ref, f3_ref, k2_ref, k3_ref, koutT_ref,
                     wcol_ref, b1_ref, w2_ref, out_ref,
                     pad_ref, col_ref):
        # Zero only the regions the per-step interior writes never cover:
        # the 1-pixel border and the channel-pad tail.  (Must run every step:
        # scratch is uninitialised and per-core under "parallel" semantics;
        # zero wcol rows do NOT protect against NaN garbage, NaN*0=NaN.)
        zr = jnp.zeros((b_blk, 1, W1 + 2, CPAD), jnp.bfloat16)
        zc = jnp.zeros((b_blk, H1 + 2, 1, CPAD), jnp.bfloat16)
        pad_ref[:, 0:1, :, :] = zr
        pad_ref[:, H1 + 1:H1 + 2, :, :] = zr
        pad_ref[:, :, 0:1, :] = zc
        pad_ref[:, :, W1 + 1:W1 + 2, :] = zc
        pad_ref[:, :, :, CIN:CPAD] = jnp.zeros(
            (b_blk, H1 + 2, W1 + 2, CPAD - CIN), jnp.bfloat16)

        # Branch upsampling (align_corners=True): one bf16 matmul per branch
        # for the whole B block (block-diagonal kron matrices built on host).
        f2 = f2_ref[...].reshape(b_blk * H2 * W2, C2)          # bf16
        f3 = f3_ref[...].reshape(b_blk * H3 * W3, C3)          # bf16
        up2 = jnp.dot(k2_ref[...], f2,
                      preferred_element_type=jnp.float32)      # (B*S1, C2) f32
        up3 = jnp.dot(k3_ref[...], f3,
                      preferred_element_type=jnp.float32)      # (B*S1, C3) f32

        # Channel "concat": three slab stores into the padded buffer (no
        # jnp.concatenate, no lane-shuffled temporary).
        pad_ref[:, 1:1 + H1, 1:1 + W1, 0:C1] = f1_ref[...]
        pad_ref[:, 1:1 + H1, 1:1 + W1, C1:C1 + C2] = (
            up2.astype(jnp.bfloat16).reshape(b_blk, H1, W1, C2))
        pad_ref[:, 1:1 + H1, 1:1 + W1, C1 + C2:CIN] = (
            up3.astype(jnp.bfloat16).reshape(b_blk, H1, W1, C3))

        # im2col: 9 shifted bf16 windows -> (B*S1, 3456) buffer (lane-aligned
        # 384-wide column slabs, no per-tap dtype cast).
        for dy in range(3):
            for dx in range(3):
                tap = dy * 3 + dx
                win = pad_ref[:, dy:dy + H1, dx:dx + W1, :]    # (B,8,8,384) bf16
                col_ref[:, tap * CPAD:(tap + 1) * CPAD] = win.reshape(bs1, CPAD)

        # Conv2d(336,512,k=3,p=1) + bias + BatchNorm (all folded) -> ONE matmul.
        # TODO(synk): on v7x, 9 accumulating per-tap matmuls (MRB in-place acc)
        # would skip materialising col_ref; kept single big-K for v5e/v6e.
        acc = jnp.dot(col_ref[...], wcol_ref[...],
                      preferred_element_type=jnp.float32)      # (B*S1, 512) f32
        y = jnp.maximum(acc + b1_ref[...], 0.0).astype(jnp.bfloat16)

        # Conv2d(512, nc, k=1, bias=False) (classes padded to 8).
        logits = jnp.dot(y, w2_ref[...],
                         preferred_element_type=jnp.float32)   # (B*S1, ncp) f32

        # Final bilinear upsample to (HIN, WIN), lane-dense, ONE matmul:
        # out[(b,c), t] = sum_s logits[b, s, c] * koutT[s, t].
        logitsT = jnp.swapaxes(logits.reshape(b_blk, S1, ncp), 1, 2)
        logitsT = logitsT.reshape(b_blk * ncp, S1).astype(jnp.bfloat16)
        out = jnp.dot(logitsT, koutT_ref[...],
                      preferred_element_type=jnp.float32)      # (B*ncp, SOUT)
        out_ref[...] = out.reshape(b_blk, ncp, SOUT)

    return _head_kernel


def aux_head_pallas(f1, f2_flat, f3_flat, k2, k3, koutT, wcol, b1, w2,
                    b_blk, ncp):
    n = f1.shape[0]
    assert n % b_blk == 0
    kernel = make_head_kernel(b_blk, ncp)
    return pl.pallas_call(
        kernel,
        out_shape=jax.ShapeDtypeStruct((n, ncp, SOUT), jnp.float32),
        grid_spec=pltpu.PrefetchScalarGridSpec(
            num_scalar_prefetch=0,
            grid=(n // b_blk,),
            in_specs=[
                pl.BlockSpec((b_blk, H1, W1, C1), lambda i: (i, 0, 0, 0)),
                pl.BlockSpec((b_blk, H2 * W2, C2), lambda i: (i, 0, 0)),
                pl.BlockSpec((b_blk, H3 * W3, C3), lambda i: (i, 0, 0)),
                pl.BlockSpec((b_blk * S1, b_blk * H2 * W2), lambda i: (0, 0)),
                pl.BlockSpec((b_blk * S1, b_blk * H3 * W3), lambda i: (0, 0)),
                pl.BlockSpec((S1, SOUT), lambda i: (0, 0)),
                pl.BlockSpec((KCOL, CMID), lambda i: (0, 0)),
                pl.BlockSpec((1, CMID), lambda i: (0, 0)),
                pl.BlockSpec((CMID, ncp), lambda i: (0, 0)),
            ],
            out_specs=pl.BlockSpec((b_blk, ncp, SOUT), lambda i: (i, 0, 0)),
            scratch_shapes=[
                pltpu.VMEM((b_blk, H1 + 2, W1 + 2, CPAD), jnp.bfloat16),
                pltpu.VMEM((b_blk * S1, KCOL), jnp.bfloat16),
            ],
        ),
        compiler_params=pltpu.CompilerParams(
            dimension_semantics=("parallel",),        # shard batch over TCs
            vmem_limit_bytes=32 * 1024 * 1024,        # fits v7x 64 MiB VMEM
        ),
    )(f1, f2_flat, f3_flat, k2, k3, koutT, wcol, b1, w2)


# ------------------------------- backbone stub -------------------------------
def _conv2d_nhwc(x, w, stride):
    return lax.conv_general_dilated(
        x, w, window_strides=(stride, stride), padding='SAME',
        dimension_numbers=('NHWC', 'HWIO', 'NHWC'))


def stub_backbone(x_nhwc, params):
    # TODO(synk): HRNetBackbone definition is not provided in the reference; this is a
    # deterministic stand-in producing HRNet-style outputs (stride 4/8/16, 48/96/192 ch).
    y = jax.nn.relu(_conv2d_nhwc(x_nhwc, params['w_stem1'], 2))
    f1 = jax.nn.relu(_conv2d_nhwc(y, params['w_stem2'], 2))
    f2 = jax.nn.relu(_conv2d_nhwc(f1, params['w_down2'], 2))
    f3 = jax.nn.relu(_conv2d_nhwc(f2, params['w_down3'], 2))
    return f1, f2, f3


# ------------------------------ parameter init -------------------------------
def init_params(keys):
    it = iter(keys)

    def nrm(shape, scale):
        return jax.random.normal(next(it), shape, jnp.float32) * scale

    p = {}
    p['w_stem1'] = nrm((3, 3, 3, 24), 0.2)
    p['w_stem2'] = nrm((3, 3, 24, C1), 0.1)
    p['w_down2'] = nrm((3, 3, C1, C2), 0.1)
    p['w_down3'] = nrm((3, 3, C2, C3), 0.1)
    p['w_aux1'] = nrm((3, 3, CIN, CMID), 0.05)            # HWIO
    p['b_aux1'] = nrm((CMID,), 0.1)
    p['bn_gamma'] = 1.0 + nrm((CMID,), 0.1)
    p['bn_beta'] = nrm((CMID,), 0.1)
    p['bn_mean'] = nrm((CMID,), 0.1)
    p['bn_var'] = jnp.abs(nrm((CMID,), 0.1)) + 1.0
    p['w_aux2'] = nrm((CMID, NUM_CLASSES), 0.05)          # 1x1 conv, no bias
    return p


# ------------------------------ full forward ---------------------------------
def hiresnet_forward(x_nchw, params):
    x_nhwc = jnp.transpose(x_nchw, (0, 2, 3, 1)).astype(jnp.float32)
    f1, f2, f3 = stub_backbone(x_nhwc, params)
    n = f1.shape[0]
    h1, w1 = f1.shape[1], f1.shape[2]
    h_in, w_in = x_nchw.shape[2], x_nchw.shape[3]

    b_blk = _choose_b_blk(n, _tensorcores_per_chip())

    # Separable bilinear matrices, kron'd into single-matmul form on the host;
    # branch matrices are made block-diagonal over the B_BLK tile so the whole
    # tile's upsampling is one matmul.  bf16 (weights sum to 1 -> tiny error).
    a2h = _align_corners_matrix(f2.shape[1], h1)
    a2w = _align_corners_matrix(f2.shape[2], w1)
    a3h = _align_corners_matrix(f3.shape[1], h1)
    a3w = _align_corners_matrix(f3.shape[2], w1)
    aoh = _align_corners_matrix(h1, h_in)
    aow = _align_corners_matrix(w1, w_in)
    eye_b = np.eye(b_blk, dtype=np.float32)
    k2 = jnp.asarray(np.kron(eye_b, np.kron(a2h, a2w)), jnp.bfloat16)   # (B*64, B*16)
    k3 = jnp.asarray(np.kron(eye_b, np.kron(a3h, a3w)), jnp.bfloat16)   # (B*64, B*4)
    koutT = jnp.asarray(np.kron(aoh, aow).T, jnp.bfloat16)              # (64, 1024)

    # Fold BatchNorm (eval) + conv bias into the 3x3 conv weights.
    bn_scale = params['bn_gamma'] / jnp.sqrt(params['bn_var'] + BN_EPS)
    bn_shift = params['bn_beta'] - params['bn_mean'] * bn_scale
    w1f = params['w_aux1'] * bn_scale[None, None, None, :]  # (3,3,336,512)
    b1f = (params['b_aux1'] * bn_scale + bn_shift).reshape(1, CMID)

    # Channel-pad to 384 (=3*128 lanes), flatten taps to im2col layout, bf16.
    w1p = jnp.pad(w1f, ((0, 0), (0, 0), (0, CPAD - CIN), (0, 0)))
    wcol = w1p.reshape(KCOL, CMID).astype(jnp.bfloat16)     # (3456, 512)

    # Pad the 1x1-conv output channels 5 -> 8 (sublane granularity), bf16.
    w2p = jnp.pad(params['w_aux2'],
                  ((0, 0), (0, NCP - NUM_CLASSES))).astype(jnp.bfloat16)

    out_flat = aux_head_pallas(
        f1.astype(jnp.bfloat16),
        f2.reshape(n, H2 * W2, C2).astype(jnp.bfloat16),
        f3.reshape(n, H3 * W3, C3).astype(jnp.bfloat16),
        k2, k3, koutT, wcol, b1f, w2p, b_blk, NCP)
    # Kernel output is already channel-major (NCHW-flat) and lane-dense;
    # just drop the padded classes and reshape.
    return out_flat[:, :NUM_CLASSES, :].reshape(n, NUM_CLASSES, h_in, w_in)


# --------------------------- pure-JAX reference -------------------------------
def reference_forward(x_nchw, params):
    x_nhwc = jnp.transpose(x_nchw, (0, 2, 3, 1)).astype(jnp.float32)
    f1, f2, f3 = stub_backbone(x_nhwc, params)
    h1, w1 = f1.shape[1], f1.shape[2]
    h_in, w_in = x_nchw.shape[2], x_nchw.shape[3]
    a2h = jnp.asarray(_align_corners_matrix(f2.shape[1], h1))
    a2w = jnp.asarray(_align_corners_matrix(f2.shape[2], w1))
    a3h = jnp.asarray(_align_corners_matrix(f3.shape[1], h1))
    a3w = jnp.asarray(_align_corners_matrix(f3.shape[2], w1))
    aoh = jnp.asarray(_align_corners_matrix(h1, h_in))
    aow = jnp.asarray(_align_corners_matrix(w1, w_in))

    def up(feat, ah, aw):
        t = jnp.einsum('hi,nijc->nhjc', ah, feat)
        return jnp.einsum('wj,nhjc->nhwc', aw, t)

    feats = jnp.concatenate([f1, up(f2, a2h, a2w), up(f3, a3h, a3w)], axis=-1)
    y = lax.conv_general_dilated(feats, params['w_aux1'], (1, 1),
                                 [(1, 1), (1, 1)],
                                 dimension_numbers=('NHWC', 'HWIO', 'NHWC'))
    y = y + params['b_aux1'][None, None, None, :]
    bn_scale = params['bn_gamma'] / jnp.sqrt(params['bn_var'] + BN_EPS)
    bn_shift = params['bn_beta'] - params['bn_mean'] * bn_scale
    y = jax.nn.relu(y * bn_scale + bn_shift)
    logits = jnp.einsum('nhwc,co->nhwo', y, params['w_aux2'])
    t = jnp.einsum('hi,niwc->nhwc', aoh, logits)
    out = jnp.einsum('wj,nhjc->nhwc', aow, t)
    return jnp.transpose(out, (0, 3, 1, 2))


# ----------------------------------- main -------------------------------------
if __name__ == "__main__":
    key = jax.random.PRNGKey(0)
    keys = jax.random.split(key, 12)
    x = jax.random.normal(keys[0], (2, 3, HIN, WIN), jnp.float32)   # NCHW input
    params = init_params(keys[1:])

    out = hiresnet_forward(x, params)
    out = jax.block_until_ready(out)
    assert out.shape == (2, NUM_CLASSES, HIN, WIN), out.shape

    ref = jax.block_until_ready(reference_forward(x, params))
    # Tolerance sized for bf16 weights/activations with f32 accumulation.
    np.testing.assert_allclose(np.asarray(out), np.asarray(ref),
                               rtol=5e-2, atol=5e-2)
    print("KERNEL_OK")
</pallas_src>

<mosaic_0001>
module attributes {stable_mosaic.version = 11 : i64} {
  func.func @_head_kernel(%arg0: i32, %arg1: memref<1x8x8x48xbf16, #tpu.memory_space<vmem>>, %arg2: memref<1x16x96xbf16, #tpu.memory_space<vmem>>, %arg3: memref<1x4x192xbf16, #tpu.memory_space<vmem>>, %arg4: memref<64x16xbf16, #tpu.memory_space<vmem>>, %arg5: memref<64x4xbf16, #tpu.memory_space<vmem>>, %arg6: memref<64x1024xbf16, #tpu.memory_space<vmem>>, %arg7: memref<3456x512xbf16, #tpu.memory_space<vmem>>, %arg8: memref<1x512xf32, #tpu.memory_space<vmem>>, %arg9: memref<512x8xbf16, #tpu.memory_space<vmem>>, %arg10: memref<1x8x1024xf32, #tpu.memory_space<vmem>>, %arg11: memref<1x10x10x384xbf16, #tpu.memory_space<vmem>>, %arg12: memref<64x3456xbf16, #tpu.memory_space<vmem>>) attributes {dimension_semantics = [#tpu.dimension_semantics<parallel>], iteration_bounds = array<i64: 2>, scalar_prefetch = 0 : i64, scratch_operands = 2 : i64, tpu.core_type = #tpu.core_type<tc>, window_params = [{transform_indices = @transform_0, window_bounds = array<i64: 1, 8, 8, 48>}, {transform_indices = @transform_1, window_bounds = array<i64: 1, 16, 96>}, {transform_indices = @transform_2, window_bounds = array<i64: 1, 4, 192>}, {pipeline_mode = #tpu.pipeline_mode<synchronous>, transform_indices = @transform_3, window_bounds = array<i64: 64, 16>}, {pipeline_mode = #tpu.pipeline_mode<synchronous>, transform_indices = @transform_4, window_bounds = array<i64: 64, 4>}, {pipeline_mode = #tpu.pipeline_mode<synchronous>, transform_indices = @transform_5, window_bounds = array<i64: 64, 1024>}, {pipeline_mode = #tpu.pipeline_mode<synchronous>, transform_indices = @transform_6, window_bounds = array<i64: 3456, 512>}, {pipeline_mode = #tpu.pipeline_mode<synchronous>, transform_indices = @transform_7, window_bounds = array<i64: 1, 512>}, {pipeline_mode = #tpu.pipeline_mode<synchronous>, transform_indices = @transform_8, window_bounds = array<i64: 512, 8>}, {transform_indices = @transform_9, window_bounds = array<i64: 1, 8, 1024>}]} {
    %cst = arith.constant 0.000000e+00 : bf16
    %0 = vector.broadcast %cst : bf16 to vector<1x1x10x384xbf16>
    %cst_0 = arith.constant 0.000000e+00 : bf16
    %1 = vector.broadcast %cst_0 : bf16 to vector<1x10x1x384xbf16>
    %c0 = arith.constant 0 : index
    %c0_1 = arith.constant 0 : index
    %c0_2 = arith.constant 0 : index
    %c0_3 = arith.constant 0 : index
    %2 = vector.load %arg11[%c0, %c0_1, %c0_2, %c0_3] : memref<1x10x10x384xbf16, #tpu.memory_space<vmem>>, vector<1x1x10x384xbf16>
    tpu.vector_store %arg11[%c0, %c0_1, %c0_2, %c0_3], %0 {strides = array<i32>} : memref<1x10x10x384xbf16, #tpu.memory_space<vmem>>, vector<1x1x10x384xbf16>,
    %c0_4 = arith.constant 0 : index
    %c9 = arith.constant 9 : index
    %c0_5 = arith.constant 0 : index
    %c0_6 = arith.constant 0 : index
    %3 = vector.load %arg11[%c0_4, %c9, %c0_5, %c0_6] : memref<1x10x10x384xbf16, #tpu.memory_space<vmem>>, vector<1x1x10x384xbf16>
    tpu.vector_store %arg11[%c0_4, %c9, %c0_5, %c0_6], %0 {strides = array<i32>} : memref<1x10x10x384xbf16, #tpu.memory_space<vmem>>, vector<1x1x10x384xbf16>,
    %c0_7 = arith.constant 0 : index
    %c0_8 = arith.constant 0 : index
    %c0_9 = arith.constant 0 : index
    %c0_10 = arith.constant 0 : index
    %4 = vector.load %arg11[%c0_7, %c0_8, %c0_9, %c0_10] : memref<1x10x10x384xbf16, #tpu.memory_space<vmem>>, vector<1x10x1x384xbf16>
    tpu.vector_store %arg11[%c0_7, %c0_8, %c0_9, %c0_10], %1 {strides = array<i32>} : memref<1x10x10x384xbf16, #tpu.memory_space<vmem>>, vector<1x10x1x384xbf16>,
    %c0_11 = arith.constant 0 : index
    %c0_12 = arith.constant 0 : index
    %c9_13 = arith.constant 9 : index
    %c0_14 = arith.constant 0 : index
    %5 = vector.load %arg11[%c0_11, %c0_12, %c9_13, %c0_14] : memref<1x10x10x384xbf16, #tpu.memory_space<vmem>>, vector<1x10x1x384xbf16>
    tpu.vector_store %arg11[%c0_11, %c0_12, %c9_13, %c0_14], %1 {strides = array<i32>} : memref<1x10x10x384xbf16, #tpu.memory_space<vmem>>, vector<1x10x1x384xbf16>,
    %cst_15 = arith.constant 0.000000e+00 : bf16
    %6 = vector.broadcast %cst_15 : bf16 to vector<1x10x10x48xbf16>
    %c0_16 = arith.constant 0 : index
    %c0_17 = arith.constant 0 : index
    %c0_18 = arith.constant 0 : index
    %c336 = arith.constant 336 : index
    %7 = vector.load %arg11[%c0_16, %c0_17, %c0_18, %c336] : memref<1x10x10x384xbf16, #tpu.memory_space<vmem>>, vector<1x10x10x48xbf16>
    tpu.vector_store %arg11[%c0_16, %c0_17, %c0_18, %c336], %6 {strides = array<i32>} : memref<1x10x10x384xbf16, #tpu.memory_space<vmem>>, vector<1x10x10x48xbf16>,
    %c0_19 = arith.constant 0 : index
    %c0_20 = arith.constant 0 : index
    %c0_21 = arith.constant 0 : index
    %8 = vector.load %arg2[%c0_19, %c0_20, %c0_21] : memref<1x16x96xbf16, #tpu.memory_space<vmem>>, vector<1x16x96xbf16>
    %9 = vector.shape_cast %8 : vector<1x16x96xbf16> to vector<16x96xbf16>
    %c0_22 = arith.constant 0 : index
    %c0_23 = arith.constant 0 : index
    %c0_24 = arith.constant 0 : index
    %10 = vector.load %arg3[%c0_22, %c0_23, %c0_24] : memref<1x4x192xbf16, #tpu.memory_space<vmem>>, vector<1x4x192xbf16>
    %11 = vector.shape_cast %10 : vector<1x4x192xbf16> to vector<4x192xbf16>
    %c0_25 = arith.constant 0 : index
    %c0_26 = arith.constant 0 : index
    %12 = vector.load %arg4[%c0_25, %c0_26] : memref<64x16xbf16, #tpu.memory_space<vmem>>, vector<64x16xbf16>
    %cst_27 = arith.constant dense<0.000000e+00> : vector<64x96xf32>
    %13 = tpu.matmul %12, %9, %cst_27 {dimension_numbers = #tpu.dot_dimension_numbers<[1], [0], [0], [1], [0, 0, 1, 1], [], []>} : vector<64x16xbf16>, vector<16x96xbf16>, vector<64x96xf32> -> vector<64x96xf32>
    %c0_28 = arith.constant 0 : index
    %c0_29 = arith.constant 0 : index
    %14 = vector.load %arg5[%c0_28, %c0_29] : memref<64x4xbf16, #tpu.memory_space<vmem>>, vector<64x4xbf16>
    %cst_30 = arith.constant dense<0.000000e+00> : vector<64x192xf32>
    %15 = tpu.matmul %14, %11, %cst_30 {dimension_numbers = #tpu.dot_dimension_numbers<[1], [0], [0], [1], [0, 0, 1, 1], [], []>} : vector<64x4xbf16>, vector<4x192xbf16>, vector<64x192xf32> -> vector<64x192xf32>
    %c0_31 = arith.constant 0 : index
    %c0_32 = arith.constant 0 : index
    %c0_33 = arith.constant 0 : index
    %c0_34 = arith.constant 0 : index
    %16 = vector.load %arg1[%c0_31, %c0_32, %c0_33, %c0_34] : memref<1x8x8x48xbf16, #tpu.memory_space<vmem>>, vector<1x8x8x48xbf16>
    %c0_35 = arith.constant 0 : index
    %c1 = arith.constant 1 : index
    %c1_36 = arith.constant 1 : index
    %c0_37 = arith.constant 0 : index
    %17 = vector.load %arg11[%c0_35, %c1, %c1_36, %c0_37] : memref<1x10x10x384xbf16, #tpu.memory_space<vmem>>, vector<1x8x8x48xbf16>
    tpu.vector_store %arg11[%c0_35, %c1, %c1_36, %c0_37], %16 {strides = array<i32>} : memref<1x10x10x384xbf16, #tpu.memory_space<vmem>>, vector<1x8x8x48xbf16>,
    %18 = arith.truncf %13 : vector<64x96xf32> to vector<64x96xbf16>
    %19 = vector.shape_cast %18 : vector<64x96xbf16> to vector<1x8x8x96xbf16>
    %c0_38 = arith.constant 0 : index
    %c1_39 = arith.constant 1 : index
    %c1_40 = arith.constant 1 : index
    %c48 = arith.constant 48 : index
    %20 = vector.load %arg11[%c0_38, %c1_39, %c1_40, %c48] : memref<1x10x10x384xbf16, #tpu.memory_space<vmem>>, vector<1x8x8x96xbf16>
    tpu.vector_store %arg11[%c0_38, %c1_39, %c1_40, %c48], %19 {strides = array<i32>} : memref<1x10x10x384xbf16, #tpu.memory_space<vmem>>, vector<1x8x8x96xbf16>,
    %21 = arith.truncf %15 : vector<64x192xf32> to vector<64x192xbf16>
    %22 = vector.shape_cast %21 : vector<64x192xbf16> to vector<1x8x8x192xbf16>
    %c0_41 = arith.constant 0 : index
    %c1_42 = arith.constant 1 : index
    %c1_43 = arith.constant 1 : index
    %c144 = arith.constant 144 : index
    %23 = vector.load %arg11[%c0_41, %c1_42, %c1_43, %c144] : memref<1x10x10x384xbf16, #tpu.memory_space<vmem>>, vector<1x8x8x192xbf16>
    tpu.vector_store %arg11[%c0_41, %c1_42, %c1_43, %c144], %22 {strides = array<i32>} : memref<1x10x10x384xbf16, #tpu.memory_space<vmem>>, vector<1x8x8x192xbf16>,
    %c0_44 = arith.constant 0 : index
    %c0_45 = arith.constant 0 : index
    %c0_46 = arith.constant 0 : index
    %c0_47 = arith.constant 0 : index
    %24 = vector.load %arg11[%c0_44, %c0_45, %c0_46, %c0_47] : memref<1x10x10x384xbf16, #tpu.memory_space<vmem>>, vector<1x8x8x384xbf16>
    %25 = vector.shape_cast %24 : vector<1x8x8x384xbf16> to vector<64x384xbf16>
    %c0_48 = arith.constant 0 : index
    %c0_49 = arith.constant 0 : index
    %26 = vector.load %arg12[%c0_48, %c0_49] : memref<64x3456xbf16, #tpu.memory_space<vmem>>, vector<64x384xbf16>
    tpu.vector_store %arg12[%c0_48, %c0_49], %25 {strides = array<i32>} : memref<64x3456xbf16, #tpu.memory_space<vmem>>, vector<64x384xbf16>,
    %c0_50 = arith.constant 0 : index
    %c0_51 = arith.constant 0 : index
    %c1_52 = arith.constant 1 : index
    %c0_53 = arith.constant 0 : index
    %27 = vector.load %arg11[%c0_50, %c0_51, %c1_52, %c0_53] : memref<1x10x10x384xbf16, #tpu.memory_space<vmem>>, vector<1x8x8x384xbf16>
    %28 = vector.shape_cast %27 : vector<1x8x8x384xbf16> to vector<64x384xbf16>
    %c0_54 = arith.constant 0 : index
    %c384 = arith.constant 384 : index
    %29 = vector.load %arg12[%c0_54, %c384] : memref<64x3456xbf16, #tpu.memory_space<vmem>>, vector<64x384xbf16>
    tpu.vector_store %arg12[%c0_54, %c384], %28 {strides = array<i32>} : memref<64x3456xbf16, #tpu.memory_space<vmem>>, vector<64x384xbf16>,
    %c0_55 = arith.constant 0 : index
    %c0_56 = arith.constant 0 : index
    %c2 = arith.constant 2 : index
    %c0_57 = arith.constant 0 : index
    %30 = vector.load %arg11[%c0_55, %c0_56, %c2, %c0_57] : memref<1x10x10x384xbf16, #tpu.memory_space<vmem>>, vector<1x8x8x384xbf16>
    %31 = vector.shape_cast %30 : vector<1x8x8x384xbf16> to vector<64x384xbf16>
    %c0_58 = arith.constant 0 : index
    %c768 = arith.constant 768 : index
    %32 = vector.load %arg12[%c0_58, %c768] : memref<64x3456xbf16, #tpu.memory_space<vmem>>, vector<64x384xbf16>
    tpu.vector_store %arg12[%c0_58, %c768], %31 {strides = array<i32>} : memref<64x3456xbf16, #tpu.memory_space<vmem>>, vector<64x384xbf16>,
    %c0_59 = arith.constant 0 : index
    %c1_60 = arith.constant 1 : index
    %c0_61 = arith.constant 0 : index
    %c0_62 = arith.constant 0 : index
    %33 = vector.load %arg11[%c0_59, %c1_60, %c0_61, %c0_62] : memref<1x10x10x384xbf16, #tpu.memory_space<vmem>>, vector<1x8x8x384xbf16>
    %34 = vector.shape_cast %33 : vector<1x8x8x384xbf16> to vector<64x384xbf16>
    %c0_63 = arith.constant 0 : index
    %c1152 = arith.constant 1152 : index
    %35 = vector.load %arg12[%c0_63, %c1152] : memref<64x3456xbf16, #tpu.memory_space<vmem>>, vector<64x384xbf16>
    tpu.vector_store %arg12[%c0_63, %c1152], %34 {strides = array<i32>} : memref<64x3456xbf16, #tpu.memory_space<vmem>>, vector<64x384xbf16>,
    %c0_64 = arith.constant 0 : index
    %c1_65 = arith.constant 1 : index
    %c1_66 = arith.constant 1 : index
    %c0_67 = arith.constant 0 : index
    %36 = vector.load %arg11[%c0_64, %c1_65, %c1_66, %c0_67] : memref<1x10x10x384xbf16, #tpu.memory_space<vmem>>, vector<1x8x8x384xbf16>
    %37 = vector.shape_cast %36 : vector<1x8x8x384xbf16> to vector<64x384xbf16>
    %c0_68 = arith.constant 0 : index
    %c1536 = arith.constant 1536 : index
    %38 = vector.load %arg12[%c0_68, %c1536] : memref<64x3456xbf16, #tpu.memory_space<vmem>>, vector<64x384xbf16>
    tpu.vector_store %arg12[%c0_68, %c1536], %37 {strides = array<i32>} : memref<64x3456xbf16, #tpu.memory_space<vmem>>, vector<64x384xbf16>,
    %c0_69 = arith.constant 0 : index
    %c1_70 = arith.constant 1 : index
    %c2_71 = arith.constant 2 : index
    %c0_72 = arith.constant 0 : index
    %39 = vector.load %arg11[%c0_69, %c1_70, %c2_71, %c0_72] : memref<1x10x10x384xbf16, #tpu.memory_space<vmem>>, vector<1x8x8x384xbf16>
    %40 = vector.shape_cast %39 : vector<1x8x8x384xbf16> to vector<64x384xbf16>
    %c0_73 = arith.constant 0 : index
    %c1920 = arith.constant 1920 : index
    %41 = vector.load %arg12[%c0_73, %c1920] : memref<64x3456xbf16, #tpu.memory_space<vmem>>, vector<64x384xbf16>
    tpu.vector_store %arg12[%c0_73, %c1920], %40 {strides = array<i32>} : memref<64x3456xbf16, #tpu.memory_space<vmem>>, vector<64x384xbf16>,
    %c0_74 = arith.constant 0 : index
    %c2_75 = arith.constant 2 : index
    %c0_76 = arith.constant 0 : index
    %c0_77 = arith.constant 0 : index
    %42 = vector.load %arg11[%c0_74, %c2_75, %c0_76, %c0_77] : memref<1x10x10x384xbf16, #tpu.memory_space<vmem>>, vector<1x8x8x384xbf16>
    %43 = vector.shape_cast %42 : vector<1x8x8x384xbf16> to vector<64x384xbf16>
    %c0_78 = arith.constant 0 : index
    %c2304 = arith.constant 2304 : index
    %44 = vector.load %arg12[%c0_78, %c2304] : memref<64x3456xbf16, #tpu.memory_space<vmem>>, vector<64x384xbf16>
    tpu.vector_store %arg12[%c0_78, %c2304], %43 {strides = array<i32>} : memref<64x3456xbf16, #tpu.memory_space<vmem>>, vector<64x384xbf16>,
    %c0_79 = arith.constant 0 : index
    %c2_80 = arith.constant 2 : index
    %c1_81 = arith.constant 1 : index
    %c0_82 = arith.constant 0 : index
    %45 = vector.load %arg11[%c0_79, %c2_80, %c1_81, %c0_82] : memref<1x10x10x384xbf16, #tpu.memory_space<vmem>>, vector<1x8x8x384xbf16>
    %46 = vector.shape_cast %45 : vector<1x8x8x384xbf16> to vector<64x384xbf16>
    %c0_83 = arith.constant 0 : index
    %c2688 = arith.constant 2688 : index
    %47 = vector.load %arg12[%c0_83, %c2688] : memref<64x3456xbf16, #tpu.memory_space<vmem>>, vector<64x384xbf16>
    tpu.vector_store %arg12[%c0_83, %c2688], %46 {strides = array<i32>} : memref<64x3456xbf16, #tpu.memory_space<vmem>>, vector<64x384xbf16>,
    %c0_84 = arith.constant 0 : index
    %c2_85 = arith.constant 2 : index
    %c2_86 = arith.constant 2 : index
    %c0_87 = arith.constant 0 : index
    %48 = vector.load %arg11[%c0_84, %c2_85, %c2_86, %c0_87] : memref<1x10x10x384xbf16, #tpu.memory_space<vmem>>, vector<1x8x8x384xbf16>
    %49 = vector.shape_cast %48 : vector<1x8x8x384xbf16> to vector<64x384xbf16>
    %c0_88 = arith.constant 0 : index
    %c3072 = arith.constant 3072 : index
    %50 = vector.load %arg12[%c0_88, %c3072] : memref<64x3456xbf16, #tpu.memory_space<vmem>>, vector<64x384xbf16>
    tpu.vector_store %arg12[%c0_88, %c3072], %49 {strides = array<i32>} : memref<64x3456xbf16, #tpu.memory_space<vmem>>, vector<64x384xbf16>,
    %c0_89 = arith.constant 0 : index
    %c0_90 = arith.constant 0 : index
    %51 = vector.load %arg12[%c0_89, %c0_90] : memref<64x3456xbf16, #tpu.memory_space<vmem>>, vector<64x3456xbf16>
    %c0_91 = arith.constant 0 : index
    %c0_92 = arith.constant 0 : index
    %52 = vector.load %arg7[%c0_91, %c0_92] : memref<3456x512xbf16, #tpu.memory_space<vmem>>, vector<3456x512xbf16>
    %cst_93 = arith.constant dense<0.000000e+00> : vector<64x512xf32>
    %53 = tpu.matmul %51, %52, %cst_93 {dimension_numbers = #tpu.dot_dimension_numbers<[1], [0], [0], [1], [0, 0, 1, 1], [], []>} : vector<64x3456xbf16>, vector<3456x512xbf16>, vector<64x512xf32> -> vector<64x512xf32>
    %c0_94 = arith.constant 0 : index
    %c0_95 = arith.constant 0 : index
    %54 = vector.load %arg8[%c0_94, %c0_95] : memref<1x512xf32, #tpu.memory_space<vmem>>, vector<1x512xf32>
    %55 = vector.broadcast %54 : vector<1x512xf32> to vector<64x512xf32>
    %56 = arith.addf %53, %55 : vector<64x512xf32>
    %cst_96 = arith.constant 0.000000e+00 : f32
    %57 = vector.broadcast %cst_96 : f32 to vector<64x512xf32>
    %58 = arith.maximumf %56, %57 : vector<64x512xf32>
    %59 = arith.truncf %58 : vector<64x512xf32> to vector<64x512xbf16>
    %c0_97 = arith.constant 0 : index
    %c0_98 = arith.constant 0 : index
    %60 = vector.load %arg9[%c0_97, %c0_98] : memref<512x8xbf16, #tpu.memory_space<vmem>>, vector<512x8xbf16>
    %cst_99 = arith.constant dense<0.000000e+00> : vector<64x8xf32>
    %61 = tpu.matmul %59, %60, %cst_99 {dimension_numbers = #tpu.dot_dimension_numbers<[1], [0], [0], [1], [0, 0, 1, 1], [], []>} : vector<64x512xbf16>, vector<512x8xbf16>, vector<64x8xf32> -> vector<64x8xf32>
    %62 = vector.shape_cast %61 : vector<64x8xf32> to vector<1x64x8xf32>
    %63 = tpu.transpose %62, [0, 2, 1] : vector<1x64x8xf32> -> vector<1x8x64xf32>
    %64 = vector.shape_cast %63 : vector<1x8x64xf32> to vector<8x64xf32>
    %65 = arith.truncf %64 : vector<8x64xf32> to vector<8x64xbf16>
    %c0_100 = arith.constant 0 : index
    %c0_101 = arith.constant 0 : index
    %66 = vector.load %arg6[%c0_100, %c0_101] : memref<64x1024xbf16, #tpu.memory_space<vmem>>, vector<64x1024xbf16>
    %cst_102 = arith.constant dense<0.000000e+00> : vector<8x1024xf32>
    %67 = tpu.matmul %65, %66, %cst_102 {dimension_numbers = #tpu.dot_dimension_numbers<[1], [0], [0], [1], [0, 0, 1, 1], [], []>} : vector<8x64xbf16>, vector<64x1024xbf16>, vector<8x1024xf32> -> vector<8x1024xf32>
    %68 = vector.shape_cast %67 : vector<8x1024xf32> to vector<1x8x1024xf32>
    %c0_103 = arith.constant 0 : index
    %c0_104 = arith.constant 0 : index
    %c0_105 = arith.constant 0 : index
    %69 = vector.load %arg10[%c0_103, %c0_104, %c0_105] : memref<1x8x1024xf32, #tpu.memory_space<vmem>>, vector<1x8x1024xf32>
    tpu.vector_store %arg10[%c0_103, %c0_104, %c0_105], %68 {strides = array<i32>} : memref<1x8x1024xf32, #tpu.memory_space<vmem>>, vector<1x8x1024xf32>,
    return
  }
  func.func @transform_0(%arg0: i32) -> (i32, i32, i32, i32) {
    %c0_i32 = arith.constant 0 : i32
    %c0_i32_0 = arith.constant 0 : i32
    %c0_i32_1 = arith.constant 0 : i32
    %c0_i32_2 = arith.constant 0 : i32
    return %arg0, %c0_i32, %c0_i32_0, %c0_i32_1 : i32, i32, i32, i32
  }
  func.func @transform_1(%arg0: i32) -> (i32, i32, i32) {
    %c0_i32 = arith.constant 0 : i32
    %c0_i32_0 = arith.constant 0 : i32
    %c0_i32_1 = arith.constant 0 : i32
    return %arg0, %c0_i32, %c0_i32_0 : i32, i32, i32
  }
  func.func @transform_2(%arg0: i32) -> (i32, i32, i32) {
    %c0_i32 = arith.constant 0 : i32
    %c0_i32_0 = arith.constant 0 : i32
    %c0_i32_1 = arith.constant 0 : i32
    return %arg0, %c0_i32, %c0_i32_0 : i32, i32, i32
  }
  func.func @transform_3(%arg0: i32) -> (i32, i32) {
    %c0_i32 = arith.constant 0 : i32
    %c0_i32_0 = arith.constant 0 : i32
    %c0_i32_1 = arith.constant 0 : i32
    return %c0_i32, %c0_i32_0 : i32, i32
  }
  func.func @transform_4(%arg0: i32) -> (i32, i32) {
    %c0_i32 = arith.constant 0 : i32
    %c0_i32_0 = arith.constant 0 : i32
    %c0_i32_1 = arith.constant 0 : i32
    return %c0_i32, %c0_i32_0 : i32, i32
  }
  func.func @transform_5(%arg0: i32) -> (i32, i32) {
    %c0_i32 = arith.constant 0 : i32
    %c0_i32_0 = arith.constant 0 : i32
    %c0_i32_1 = arith.constant 0 : i32
    return %c0_i32, %c0_i32_0 : i32, i32
  }
  func.func @transform_6(%arg0: i32) -> (i32, i32) {
    %c0_i32 = arith.constant 0 : i32
    %c0_i32_0 = arith.constant 0 : i32
    %c0_i32_1 = arith.constant 0 : i32
    return %c0_i32, %c0_i32_0 : i32, i32
  }
  func.func @transform_7(%arg0: i32) -> (i32, i32) {
    %c0_i32 = arith.constant 0 : i32
    %c0_i32_0 = arith.constant 0 : i32
    %c0_i32_1 = arith.constant 0 : i32
    return %c0_i32, %c0_i32_0 : i32, i32
  }
  func.func @transform_8(%arg0: i32) -> (i32, i32) {
    %c0_i32 = arith.constant 0 : i32
    %c0_i32_0 = arith.constant 0 : i32
    %c0_i32_1 = arith.constant 0 : i32
    return %c0_i32, %c0_i32_0 : i32, i32
  }
  func.func @transform_9(%arg0: i32) -> (i32, i32, i32) {
    %c0_i32 = arith.constant 0 : i32
    %c0_i32_0 = arith.constant 0 : i32
    %c0_i32_1 = arith.constant 0 : i32
    return %arg0, %c0_i32, %c0_i32_0 : i32, i32, i32
  }
}

</mosaic_0001>

<llo_original>
// kernel: tpu_custom_call.1
$region0: #{tpu_custom_call.1}
  #allocation0 [shape = 'u32[]', space=smem, size = 0x4, offset = 0x4, fixed_abs, tag = 'smem constant byte address 0x4 - core index']
  #allocation1 [shape = 'u32[144,128]{1,0:T(1,128)}', space=vmem, size = 0x12000, scoped, tag = 'internal scratch']
  #allocation2 [shape = 'bf16[1,10,10,384]{3,2,1,0:T(8,128)(2,1)}', space=vmem, size = 0x1e000, scoped, tag = 'scratch operand']
  #allocation3 [shape = 'bf16[64,3456]{1,0:T(8,128)(2,1)}', space=vmem, size = 0x6c000, scoped, tag = 'scratch operand']
  %s0 = inlined_call_operand.hbm [shape: bf16[2,8,8,48], index: 0, kind: input, shape index: {}]
  %s1 = inlined_call_operand.hbm [shape: bf16[2,16,96], index: 1, kind: input, shape index: {}]
  %s2 = inlined_call_operand.hbm [shape: bf16[2,4,192], index: 2, kind: input, shape index: {}]
  %s3 = inlined_call_operand.vmem [shape: bf16[64,16], index: 3, kind: input, shape index: {}]
  %s4 = inlined_call_operand.vmem [shape: bf16[64,4], index: 4, kind: input, shape index: {}]
  %s5 = inlined_call_operand.hbm [shape: bf16[64,1024], index: 5, kind: input, shape index: {}]
  %s6 = inlined_call_operand.hbm [shape: bf16[3456,512], index: 6, kind: input, shape index: {}]
  %s7 = inlined_call_operand.hbm [shape: f32[1,512], index: 7, kind: input, shape index: {}]
  %s8 = inlined_call_operand.vmem [shape: bf16[512,8], index: 8, kind: input, shape index: {}]
  %s9 = inlined_call_operand.hbm [shape: f32[2,8,1024], index: 9, kind: output, shape index: {}]
  %s10 = sld [smem:[#allocation0]]
  $region93: #{tpu_custom_call.1} parent=0
    _
  %s12 = ssub.s32 1, %s10
  %s13 = scalar_select 0, %s12, %s10
  $region1: #{tpu_custom_call.1} parent=0
    #allocation4 [shape = 'u8[32768]{0}', space=vmem, size = 0x8000, scoped, tag = 'input window, operand 0']
    #allocation5 [shape = 's32[2]{0}', space=sflag, size = 0x8, scoped, tag = 'scoped memory for tpu_custom_call.1']
    #allocation6 [shape = 's32[2]{0}', space=sflag, size = 0x8, scoped, tag = 'scoped memory for tpu_custom_call.1']
    #allocation7 [shape = 'u8[8192]{0}', space=vmem, size = 0x2000, scoped, tag = 'input window, operand 1']
    #allocation8 [shape = 's32[2]{0}', space=sflag, size = 0x8, scoped, tag = 'scoped memory for tpu_custom_call.1']
    #allocation9 [shape = 'u8[4096]{0}', space=vmem, size = 0x1000, scoped, tag = 'input window, operand 2']
    #allocation10 [shape = 'u8[131072]{0}', space=vmem, size = 0x20000, scoped, tag = 'input window, operand 5, single buffered']
    #allocation11 [shape = 's32[1]{0}', space=sflag, size = 0x4, scoped, tag = 'scoped memory for tpu_custom_call.1']
    #allocation12 [shape = 'u8[3538944]{0}', space=vmem, size = 0x360000, scoped, tag = 'input window, operand 6, single buffered']
    #allocation13 [shape = 'u8[2048]{0}', space=vmem, size = 0x800, scoped, tag = 'input window, operand 7, single buffered']
    #allocation14 [shape = 's32[1]{0}', space=sflag, size = 0x4, scoped, tag = 'scoped memory for tpu_custom_call.1']
    #allocation15 [shape = 'u8[65536]{0}', space=vmem, size = 0x10000, scoped, tag = 'output window, operand 0']
    %14 = vsyncpa [#allocation5], 0
    %s15 = scalar_lea.sflag [#allocation5], 1
    %16 = vsyncpa %s15, 0
    %17 = vsyncpa [#allocation8], 0
    %s18 = scalar_lea.sflag [#allocation8], 1
    %19 = vsyncpa %s18, 0
    %20 = vsyncpa [#allocation11], 0
    %21 = vsyncpa [#allocation14], 0
    %22 = vsyncpa [#allocation6], 0
    %s23 = scalar_lea.sflag [#allocation6], 1
    %24 = vsyncpa %s23, 0
    loop: start=0, step=1, limit=4
    $region2: #{tpu_custom_call.1} parent=1 // loop_pre_header
      _
    $region3: #{tpu_custom_call.1} parent=1 // loop_header
      %s26 = sphi 0, %s30
      %p27 = scmp.ge.s32.totalorder %s26, 4
      %s36 = sphi 0, %s38
      %s39 = sphi 0, %s36
      %s40 = sphi 0, %s39
      %s56 = sphi 0, %s40
      %s62 = sphi 0, %s64
      %s65 = sphi 0, %s62
      %s66 = sphi 0, %s65
      %s82 = sphi 0, %s66
      %s88 = sphi 0, %s90
      %s91 = sphi 0, %s88
      %s92 = sphi 0, %s91
      %s108 = sphi 0, %s92
      %s112 = sphi 0, %s112
      %s114 = sphi 0, %s112
      %s115 = sphi 0, %s114
      %s129 = sphi 0, %s115
      %s133 = sphi 0, %s133
      %s135 = sphi 0, %s133
      %s136 = sphi 0, %s135
      %s150 = sphi 0, %s136
      %s154 = sphi 0, %s154
      %s156 = sphi 0, %s154
      %s157 = sphi 0, %s156
      %s171 = sphi 0, %s157
      %s175 = sphi 0, %s175
      %s177 = sphi 0, %s175
      %s178 = sphi 0, %s177
      %s192 = sphi 0, %s178
      %s196 = sphi 0, %s196
      %s198 = sphi 0, %s196
      %s199 = sphi 0, %s198
      %s213 = sphi 0, %s199
      %s217 = sphi 0, %s217
      %s219 = sphi 0, %s217
      %s220 = sphi 0, %s219
      %s234 = sphi 0, %s220
      %s240 = sphi 0, %s242
      %s243 = sphi 0, %s240
      %s244 = sphi 0, %s243
      %s260 = sphi 0, %s244
    $region4: #{tpu_custom_call.1} parent=1 // loop_header_branch
      %29 = sbr.rel (%p27) target = $region8
    $region5: #{tpu_custom_call.1} parent=1 // loop_body
      %s31 = ssub.s32 %s26, 1
      %s32 = ssub.s32 %s26, 2
      %s33 = sadd.s32 %s26, 1
      %s34 = ssub.s32 %s26, %s33
      %p35 = scmp.eq.s32.totalorder %s34, 0
      %s37 = sadd.s32 %s36, 1
      %s38 = scalar_select %p35, %s36, %s37
      %p41 = pneg %p35
      %p42 = scmp.eq.s32.totalorder %s26, 1
      %p43 = por %p41, %p42
      %p44 = scmp.ne.s32.totalorder %s36, %s39
      %p45 = scmp.eq.s32.totalorder %s26, 0
      %p46 = por %p44, %p45
      %p47 = scmp.ne.s32.totalorder %s36, %s39
      %p48 = scmp.eq.s32.totalorder %s31, 1
      %p49 = por %p47, %p48
      %p50 = scmp.ne.s32.totalorder %s39, %s40
      %p51 = scmp.eq.s32.totalorder %s31, 0
      %p52 = por %p50, %p51
      %p53 = scmp.ne.s32.totalorder %s39, %s40
      %p54 = scmp.eq.s32.totalorder %s32, 1
      %p55 = por %p53, %p54
      %p57 = scmp.ne.s32.totalorder %s40, %s56
      %p58 = scmp.eq.s32.totalorder %s32, 0
      %p59 = por %p57, %p58
      %s60 = ssub.s32 %s26, %s33
      %p61 = scmp.eq.s32.totalorder %s60, 0
      %s63 = sadd.s32 %s62, 1
      %s64 = scalar_select %p61, %s62, %s63
      %p67 = pneg %p61
      %p68 = scmp.eq.s32.totalorder %s26, 1
      %p69 = por %p67, %p68
      %p70 = scmp.ne.s32.totalorder %s62, %s65
      %p71 = scmp.eq.s32.totalorder %s26, 0
      %p72 = por %p70, %p71
      %p73 = scmp.ne.s32.totalorder %s62, %s65
      %p74 = scmp.eq.s32.totalorder %s31, 1
      %p75 = por %p73, %p74
      %p76 = scmp.ne.s32.totalorder %s65, %s66
      %p77 = scmp.eq.s32.totalorder %s31, 0
      %p78 = por %p76, %p77
      %p79 = scmp.ne.s32.totalorder %s65, %s66
      %p80 = scmp.eq.s32.totalorder %s32, 1
      %p81 = por %p79, %p80
      %p83 = scmp.ne.s32.totalorder %s66, %s82
      %p84 = scmp.eq.s32.totalorder %s32, 0
      %p85 = por %p83, %p84
      %s86 = ssub.s32 %s26, %s33
      %p87 = scmp.eq.s32.totalorder %s86, 0
      %s89 = sadd.s32 %s88, 1
      %s90 = scalar_select %p87, %s88, %s89
      %p93 = pneg %p87
      %p94 = scmp.eq.s32.totalorder %s26, 1
      %p95 = por %p93, %p94
      %p96 = scmp.ne.s32.totalorder %s88, %s91
      %p97 = scmp.eq.s32.totalorder %s26, 0
      %p98 = por %p96, %p97
      %p99 = scmp.ne.s32.totalorder %s88, %s91
      %p100 = scmp.eq.s32.totalorder %s31, 1
      %p101 = por %p99, %p100
      %p102 = scmp.ne.s32.totalorder %s91, %s92
      %p103 = scmp.eq.s32.totalorder %s31, 0
      %p104 = por %p102, %p103
      %p105 = scmp.ne.s32.totalorder %s91, %s92
      %p106 = scmp.eq.s32.totalorder %s32, 1
      %p107 = por %p105, %p106
      %p109 = scmp.ne.s32.totalorder %s92, %s108
      %p110 = scmp.eq.s32.totalorder %s32, 0
      %p111 = por %p109, %p110
      %s113 = sadd.s32 %s112, 1
      %p116 = scmp.eq.s32.totalorder %s26, 1
      %p117 = scmp.ne.s32.totalorder %s112, %s114
      %p118 = scmp.eq.s32.totalorder %s26, 0
      %p119 = por %p117, %p118
      %p120 = scmp.ne.s32.totalorder %s112, %s114
      %p121 = scmp.eq.s32.totalorder %s31, 1
      %p122 = por %p120, %p121
      %p123 = scmp.ne.s32.totalorder %s114, %s115
      %p124 = scmp.eq.s32.totalorder %s31, 0
      %p125 = por %p123, %p124
      %p126 = scmp.ne.s32.totalorder %s114, %s115
      %p127 = scmp.eq.s32.totalorder %s32, 1
      %p128 = por %p126, %p127
      %p130 = scmp.ne.s32.totalorder %s115, %s129
      %p131 = scmp.eq.s32.totalorder %s32, 0
      %p132 = por %p130, %p131
      %s134 = sadd.s32 %s133, 1
      %p137 = scmp.eq.s32.totalorder %s26, 1
      %p138 = scmp.ne.s32.totalorder %s133, %s135
      %p139 = scmp.eq.s32.totalorder %s26, 0
      %p140 = por %p138, %p139
      %p141 = scmp.ne.s32.totalorder %s133, %s135
      %p142 = scmp.eq.s32.totalorder %s31, 1
      %p143 = por %p141, %p142
      %p144 = scmp.ne.s32.totalorder %s135, %s136
      %p145 = scmp.eq.s32.totalorder %s31, 0
      %p146 = por %p144, %p145
      %p147 = scmp.ne.s32.totalorder %s135, %s136
      %p148 = scmp.eq.s32.totalorder %s32, 1
      %p149 = por %p147, %p148
      %p151 = scmp.ne.s32.totalorder %s136, %s150
      %p152 = scmp.eq.s32.totalorder %s32, 0
      %p153 = por %p151, %p152
      %s155 = sadd.s32 %s154, 1
      %p158 = scmp.eq.s32.totalorder %s26, 1
      %p159 = scmp.ne.s32.totalorder %s154, %s156
      %p160 = scmp.eq.s32.totalorder %s26, 0
      %p161 = por %p159, %p160
      %p162 = scmp.ne.s32.totalorder %s154, %s156
      %p163 = scmp.eq.s32.totalorder %s31, 1
      %p164 = por %p162, %p163
      %p165 = scmp.ne.s32.totalorder %s156, %s157
      %p166 = scmp.eq.s32.totalorder %s31, 0
      %p167 = por %p165, %p166
      %p168 = scmp.ne.s32.totalorder %s156, %s157
      %p169 = scmp.eq.s32.totalorder %s32, 1
      %p170 = por %p168, %p169
      %p172 = scmp.ne.s32.totalorder %s157, %s171
      %p173 = scmp.eq.s32.totalorder %s32, 0
      %p174 = por %p172, %p173
      %s176 = sadd.s32 %s175, 1
      %p179 = scmp.eq.s32.totalorder %s26, 1
      %p180 = scmp.ne.s32.totalorder %s175, %s177
      %p181 = scmp.eq.s32.totalorder %s26, 0
      %p182 = por %p180, %p181
      %p183 = scmp.ne.s32.totalorder %s175, %s177
      %p184 = scmp.eq.s32.totalorder %s31, 1
      %p185 = por %p183, %p184
      %p186 = scmp.ne.s32.totalorder %s177, %s178
      %p187 = scmp.eq.s32.totalorder %s31, 0
      %p188 = por %p186, %p187
      %p189 = scmp.ne.s32.totalorder %s177, %s178
      %p190 = scmp.eq.s32.totalorder %s32, 1
      %p191 = por %p189, %p190
      %p193 = scmp.ne.s32.totalorder %s178, %s192
      %p194 = scmp.eq.s32.totalorder %s32, 0
      %p195 = por %p193, %p194
      %s197 = sadd.s32 %s196, 1
      %p200 = scmp.eq.s32.totalorder %s26, 1
      %p201 = scmp.ne.s32.totalorder %s196, %s198
      %p202 = scmp.eq.s32.totalorder %s26, 0
      %p203 = por %p201, %p202
      %p204 = scmp.ne.s32.totalorder %s196, %s198
      %p205 = scmp.eq.s32.totalorder %s31, 1
      %p206 = por %p204, %p205
      %p207 = scmp.ne.s32.totalorder %s198, %s199
      %p208 = scmp.eq.s32.totalorder %s31, 0
      %p209 = por %p207, %p208
      %p210 = scmp.ne.s32.totalorder %s198, %s199
      %p211 = scmp.eq.s32.totalorder %s32, 1
      %p212 = por %p210, %p211
      %p214 = scmp.ne.s32.totalorder %s199, %s213
      %p215 = scmp.eq.s32.totalorder %s32, 0
      %p216 = por %p214, %p215
      %s218 = sadd.s32 %s217, 1
      %p221 = scmp.eq.s32.totalorder %s26, 1
      %p222 = scmp.ne.s32.totalorder %s217, %s219
      %p223 = scmp.eq.s32.totalorder %s26, 0
      %p224 = por %p222, %p223
      %p225 = scmp.ne.s32.totalorder %s217, %s219
      %p226 = scmp.eq.s32.totalorder %s31, 1
      %p227 = por %p225, %p226
      %p228 = scmp.ne.s32.totalorder %s219, %s220
      %p229 = scmp.eq.s32.totalorder %s31, 0
      %p230 = por %p228, %p229
      %p231 = scmp.ne.s32.totalorder %s219, %s220
      %p232 = scmp.eq.s32.totalorder %s32, 1
      %p233 = por %p231, %p232
      %p235 = scmp.ne.s32.totalorder %s220, %s234
      %p236 = scmp.eq.s32.totalorder %s32, 0
      %p237 = por %p235, %p236
      %s238 = ssub.s32 %s26, %s33
      %p239 = scmp.eq.s32.totalorder %s238, 0
      %s241 = sadd.s32 %s240, 1
      %s242 = scalar_select %p239, %s240, %s241
      %p245 = pneg %p239
      %p246 = scmp.eq.s32.totalorder %s26, 1
      %p247 = por %p245, %p246
      %p248 = scmp.ne.s32.totalorder %s240, %s243
      %p249 = scmp.eq.s32.totalorder %s26, 0
      %p250 = por %p248, %p249
      %p251 = scmp.ne.s32.totalorder %s240, %s243
      %p252 = scmp.eq.s32.totalorder %s31, 1
      %p253 = por %p251, %p252
      %p254 = scmp.ne.s32.totalorder %s243, %s244
      %p255 = scmp.eq.s32.totalorder %s31, 0
      %p256 = por %p254, %p255
      %p257 = scmp.ne.s32.totalorder %s243, %s244
      %p258 = scmp.eq.s32.totalorder %s32, 1
      %p259 = por %p257, %p258
      %p261 = scmp.ne.s32.totalorder %s244, %s260
      %p262 = scmp.eq.s32.totalorder %s32, 0
      %p263 = por %p261, %p262
      %p264 = scmp.le.s32.totalorder 1, %s26
      %p265 = scmp.lt.s32.totalorder %s26, 3
      %p266 = pnand %p264, %p265
      %p267 = pneg %p266
      // Predicated region
      $region9: #{tpu_custom_call.1} parent=5 // pred_check
        _
      $region10: #{tpu_custom_call.1} parent=5 // pred_check_branch
        %269 = sbr.rel (%p266) target = $region12
      $region11: #{tpu_custom_call.1} parent=5 // pred_region
        %s270 = ssub.s32 %s26, 1
        // Predicated region
        $region13: #{tpu_custom_call.1} parent=11 // pred_check
          %p271 = pneg %p125
        $region14: #{tpu_custom_call.1} parent=11 // pred_check_branch
          %273 = sbr.rel (%p271) target = $region16
        $region15: #{tpu_custom_call.1} parent=11 // pred_region
          _
        $region16: #{tpu_custom_call.1} parent=11 // pred_fallthru
          _
        // Predicated region
        $region17: #{tpu_custom_call.1} parent=11 // pred_check
          %p274 = pneg %p146
        $region18: #{tpu_custom_call.1} parent=11 // pred_check_branch
          %276 = sbr.rel (%p274) target = $region20
        $region19: #{tpu_custom_call.1} parent=11 // pred_region
          _
        $region20: #{tpu_custom_call.1} parent=11 // pred_fallthru
          _
        // Predicated region
        $region21: #{tpu_custom_call.1} parent=11 // pred_check
          %p277 = pneg %p167
        $region22: #{tpu_custom_call.1} parent=11 // pred_check_branch
          %279 = sbr.rel (%p277) target = $region24
        $region23: #{tpu_custom_call.1} parent=11 // pred_region
          %s281 = ssub.s32 4096, 4096
          %282 = vsyncadd [#allocation11], %s281
          %s283 = sshll.u32 [#allocation10], 4
          %s284 = int_to_ptr.vmem [resolvable:$true] %s283
          %289 = dma.hbm_to_vmem [thread:$0]  %s5, 4096, %s284, [#allocation11], 512, 512, 32
        $region24: #{tpu_custom_call.1} parent=11 // pred_fallthru
          _
        // Predicated region
        $region25: #{tpu_custom_call.1} parent=11 // pred_check
          %p290 = pneg %p188
        $region26: #{tpu_custom_call.1} parent=11 // pred_check_branch
          %292 = sbr.rel (%p290) target = $region28
        $region27: #{tpu_custom_call.1} parent=11 // pred_region
          %s294 = ssub.s32 110592, 110592
          %295 = vsyncadd [#allocation11], %s294
          %s296 = sshll.u32 [#allocation12], 4
          %s297 = int_to_ptr.vmem [resolvable:$true] %s296
          %302 = dma.hbm_to_vmem [thread:$0]  %s6, 110592, %s297, [#allocation11], 256, 256, 16
        $region28: #{tpu_custom_call.1} parent=11 // pred_fallthru
          _
        // Predicated region
        $region29: #{tpu_custom_call.1} parent=11 // pred_check
          %p303 = pneg %p209
        $region30: #{tpu_custom_call.1} parent=11 // pred_check_branch
          %305 = sbr.rel (%p303) target = $region32
        $region31: #{tpu_custom_call.1} parent=11 // pred_region
          %s307 = ssub.s32 64, 64
          %308 = vsyncadd [#allocation14], %s307
          %s310 = sshll.u32 [#allocation13], 4
          %s311 = int_to_ptr.vmem [resolvable:$true] %s310
          %313 = dma.hbm_to_vmem [thread:$0]  %s7, 64, %s311, [#allocation14]
        $region32: #{tpu_custom_call.1} parent=11 // pred_fallthru
          _
        // Predicated region
        $region33: #{tpu_custom_call.1} parent=11 // pred_check
          %p314 = pneg %p230
        $region34: #{tpu_custom_call.1} parent=11 // pred_check_branch
          %316 = sbr.rel (%p314) target = $region36
        $region35: #{tpu_custom_call.1} parent=11 // pred_region
          _
        $region36: #{tpu_custom_call.1} parent=11 // pred_fallthru
          _
      $region12: #{tpu_custom_call.1} parent=5 // pred_fallthru
        _
      %p317 = scmp.lt.s32.totalorder %s26, 2
      // Predicated region
      $region37: #{tpu_custom_call.1} parent=5 // pred_check
        %p318 = pneg %p317
      $region38: #{tpu_custom_call.1} parent=5 // pred_check_branch
        %320 = sbr.rel (%p318) target = $region40
      $region39: #{tpu_custom_call.1} parent=5 // pred_region
        // Predicated region
        $region41: #{tpu_custom_call.1} parent=39 // pred_check
          %p321 = pneg %p46
        $region42: #{tpu_custom_call.1} parent=39 // pred_check_branch
          %323 = sbr.rel (%p321) target = $region44
        $region43: #{tpu_custom_call.1} parent=39 // pred_region
          %s324 = sand.u32 %s36, 1
          %s325 = scalar_lea.sflag [#allocation5], %s324
          %s326 = sand.u32 %s36, 1
          %s327 = smul.addr %s326, 32
          %s328 = scalar_lea.vmem [#allocation4], %s327
          %s330 = ssub.s32 512, 512
          %331 = vsyncadd %s325, %s330
          %s332 = smul.addr %s26, 8
          %s333 = smul.addr %s332, 64
          %s334 = scalar_lea.hbm %s0, %s333
          %s335 = sshll.u32 %s328, 4
          %s336 = int_to_ptr.vmem [resolvable:$true] %s335
          %341 = dma.hbm_to_vmem [thread:$0]  %s334, 512, %s336, %s325, 64, 64, 4
        $region44: #{tpu_custom_call.1} parent=39 // pred_fallthru
          _
        // Predicated region
        $region45: #{tpu_custom_call.1} parent=39 // pred_check
          %p342 = pneg %p72
        $region46: #{tpu_custom_call.1} parent=39 // pred_check_branch
          %344 = sbr.rel (%p342) target = $region48
        $region47: #{tpu_custom_call.1} parent=39 // pred_region
          %s345 = sand.u32 %s26, 1
          %s346 = scalar_lea.sflag [#allocation8], %s345
          %s347 = sand.u32 %s62, 1
          %s348 = smul.addr %s347, 8
          %s349 = scalar_lea.vmem [#allocation7], %s348
          %s351 = ssub.s32 128, 128
          %352 = vsyncadd %s346, %s351
          %s353 = smul.addr %s26, 2
          %s354 = smul.addr %s353, 64
          %s355 = scalar_lea.hbm %s1, %s354
          %s356 = sshll.u32 %s349, 4
          %s357 = int_to_ptr.vmem [resolvable:$true] %s356
          %362 = dma.hbm_to_vmem [thread:$0]  %s355, 128, %s357, %s346, 64, 64, 4
        $region48: #{tpu_custom_call.1} parent=39 // pred_fallthru
          _
        // Predicated region
        $region49: #{tpu_custom_call.1} parent=39 // pred_check
          %p363 = pneg %p98
        $region50: #{tpu_custom_call.1} parent=39 // pred_check_branch
          %365 = sbr.rel (%p363) target = $region52
        $region51: #{tpu_custom_call.1} parent=39 // pred_region
          %s366 = sand.u32 %s26, 1
          %s367 = scalar_lea.sflag [#allocation8], %s366
          %s368 = sand.u32 %s88, 1
          %s369 = smul.addr %s368, 4
          %s370 = scalar_lea.vmem [#allocation9], %s369
          %s372 = ssub.s32 64, 64
          %373 = vsyncadd %s367, %s372
          %s374 = smul.addr %s26, 2
          %s375 = smul.addr %s374, 32
          %s376 = scalar_lea.hbm %s2, %s375
          %s378 = sshll.u32 %s370, 4
          %s379 = int_to_ptr.vmem [resolvable:$true] %s378
          %381 = dma.hbm_to_vmem [thread:$0]  %s376, 64, %s379, %s367
        $region52: #{tpu_custom_call.1} parent=39 // pred_fallthru
          _
      $region40: #{tpu_custom_call.1} parent=5 // pred_fallthru
        _
      %p382 = scmp.le.s32.totalorder 1, %s26
      %p383 = scmp.lt.s32.totalorder %s26, 3
      %p384 = pnand %p382, %p383
      %p385 = pneg %p384
      // Predicated region
      $region53: #{tpu_custom_call.1} parent=5 // pred_check
        _
      $region54: #{tpu_custom_call.1} parent=5 // pred_check_branch
        %387 = sbr.rel (%p384) target = $region56
      $region55: #{tpu_custom_call.1} parent=5 // pred_region
        %s388 = ssub.s32 %s26, 1
        %s389 = sand.u32 %s39, 1
        %s390 = scalar_lea.sflag [#allocation5], %s389
        %s391 = sand.u32 %s39, 1
        %s392 = smul.addr %s391, 32
        %s393 = scalar_lea.vmem [#allocation4], %s392
        // Predicated region
        $region57: #{tpu_custom_call.1} parent=55 // pred_check
          %p394 = pneg %p52
        $region58: #{tpu_custom_call.1} parent=55 // pred_check_branch
          %396 = sbr.rel (%p394) target = $region60
        $region59: #{tpu_custom_call.1} parent=55 // pred_region
          %397 = dma.done %s390, 512
        $region60: #{tpu_custom_call.1} parent=55 // pred_fallthru
          _
        %s398 = sand.u32 %s31, 1
        %s399 = scalar_lea.sflag [#allocation8], %s398
        %s400 = sand.u32 %s65, 1
        %s401 = smul.addr %s400, 8
        %s402 = scalar_lea.vmem [#allocation7], %s401
        // Predicated region
        $region61: #{tpu_custom_call.1} parent=55 // pred_check
          %p403 = pneg %p78
        $region62: #{tpu_custom_call.1} parent=55 // pred_check_branch
          %405 = sbr.rel (%p403) target = $region64
        $region63: #{tpu_custom_call.1} parent=55 // pred_region
          %406 = dma.done %s399, 128
        $region64: #{tpu_custom_call.1} parent=55 // pred_fallthru
          _
        %s407 = sand.u32 %s31, 1
        %s408 = scalar_lea.sflag [#allocation8], %s407
        %s409 = sand.u32 %s91, 1
        %s410 = smul.addr %s409, 4
        %s411 = scalar_lea.vmem [#allocation9], %s410
        // Predicated region
        $region65: #{tpu_custom_call.1} parent=55 // pred_check
          %p412 = pneg %p104
        $region66: #{tpu_custom_call.1} parent=55 // pred_check_branch
          %414 = sbr.rel (%p412) target = $region68
        $region67: #{tpu_custom_call.1} parent=55 // pred_region
          %415 = dma.done %s408, 64
        $region68: #{tpu_custom_call.1} parent=55 // pred_fallthru
          _
        // Predicated region
        $region69: #{tpu_custom_call.1} parent=55 // pred_check
          %p416 = pneg %p167
        $region70: #{tpu_custom_call.1} parent=55 // pred_check_branch
          %418 = sbr.rel (%p416) target = $region72
        $region71: #{tpu_custom_call.1} parent=55 // pred_region
          %419 = dma.done [#allocation11], 4096
        $region72: #{tpu_custom_call.1} parent=55 // pred_fallthru
          _
        // Predicated region
        $region73: #{tpu_custom_call.1} parent=55 // pred_check
          %p420 = pneg %p188
        $region74: #{tpu_custom_call.1} parent=55 // pred_check_branch
          %422 = sbr.rel (%p420) target = $region76
        $region75: #{tpu_custom_call.1} parent=55 // pred_region
          %423 = dma.done [#allocation11], 110592
        $region76: #{tpu_custom_call.1} parent=55 // pred_fallthru
          _
        // Predicated region
        $region77: #{tpu_custom_call.1} parent=55 // pred_check
          %p424 = pneg %p209
        $region78: #{tpu_custom_call.1} parent=55 // pred_check_branch
          %426 = sbr.rel (%p424) target = $region80
        $region79: #{tpu_custom_call.1} parent=55 // pred_region
          %427 = dma.done [#allocation14], 64
        $region80: #{tpu_custom_call.1} parent=55 // pred_fallthru
          _
        %s428 = sand.u32 %s39, 1
        %s429 = scalar_lea.sflag [#allocation5], %s428
        %s430 = sand.u32 %s39, 1
        %s431 = smul.addr %s430, 32
        %s432 = scalar_lea.vmem [#allocation4], %s431
        %p433 = pneg %p52
        %p434 = pneg %p49
        %s435 = sand.u32 %s31, 1
        %s436 = scalar_lea.sflag [#allocation8], %s435
        %s437 = sand.u32 %s65, 1
        %s438 = smul.addr %s437, 8
        %s439 = scalar_lea.vmem [#allocation7], %s438
        %p440 = pneg %p78
        %p441 = pneg %p75
        %s442 = sand.u32 %s31, 1
        %s443 = scalar_lea.sflag [#allocation8], %s442
        %s444 = sand.u32 %s91, 1
        %s445 = smul.addr %s444, 4
        %s446 = scalar_lea.vmem [#allocation9], %s445
        %p447 = pneg %p104
        %p448 = pneg %p101
        %p449 = pneg %p125
        %p450 = pneg %p122
        %p451 = pneg %p146
        %p452 = pneg %p143
        %p453 = pneg %p167
        %p454 = pneg %p164
        %p455 = pneg %p188
        %p456 = pneg %p185
        %p457 = pneg %p209
        %p458 = pneg %p206
        %p459 = pneg %p230
        %p460 = pneg %p227
        %p461 = pneg %p256
        %p462 = pneg %p253
        %s463 = sand.u32 %s243, 1
        %s464 = scalar_lea.sflag [#allocation6], %s463
        %s465 = sand.u32 %s243, 1
        %s466 = smul.addr %s465, 64
        %s467 = scalar_lea.vmem [#allocation15], %s466
        %469 = vst [vmem:[#allocation2] sm:$0xff] 0
        %470 = vst [vmem:[#allocation2 + $0x8] sm:$0xf] 0
        %471 = vst [vmem:[#allocation2 + $0xc] sm:$0x11] 0
        %472 = vst [vmem:[#allocation2 + $0x14] sm:$0x1] 0
        %s473 = scalar_lea.vmem [#allocation2], 216
        %474 = vst [vmem:[%s473] sm:$0xff] 0
        %475 = vst [vmem:[%s473 + $0x8] sm:$0xf] 0
        %476 = vst [vmem:[%s473 + $0xc] sm:$0x11] 0
        %477 = vst [vmem:[%s473 + $0x14] sm:$0x1] 0
        %vm478 = vcmask 1040384
        %vm479 = vsmask.f32 256
        %vm480 = vmand %vm478, %vm479
        %vm481 = vcmask 1044484
        %vm482 = vsmask.f32 4352
        %vm483 = vmand %vm481, %vm482
        %vm484 = vmor %vm483, %vm480
        %v485 = vld [vmem:[#allocation2] sm:$0x11]
        %v486 = vsel %vm484, 0, %v485
        %487 = vst [vmem:[#allocation2] sm:$0x11] %v486
        %v488 = vld [vmem:[#allocation2 + $0x8] sm:$0x1]
        %v489 = vsel %vm480, 0, %v488
        %490 = vst [vmem:[#allocation2 + $0x8] sm:$0x1] %v489
        %v491 = vld [vmem:[#allocation2 + $0x18] sm:$0x11]
        %v492 = vsel %vm484, 0, %v491
        %493 = vst [vmem:[#allocation2 + $0x18] sm:$0x11] %v492
        %v494 = vld [vmem:[#allocation2 + $0x20] sm:$0x1]
        %v495 = vsel %vm480, 0, %v494
        %496 = vst [vmem:[#allocation2 + $0x20] sm:$0x1] %v495
        %v497 = vld [vmem:[#allocation2 + $0x30] sm:$0x11]
        %v498 = vsel %vm484, 0, %v497
        %499 = vst [vmem:[#allocation2 + $0x30] sm:$0x11] %v498
        %v500 = vld [vmem:[#allocation2 + $0x38] sm:$0x1]
        %v501 = vsel %vm480, 0, %v500
        %502 = vst [vmem:[#allocation2 + $0x38] sm:$0x1] %v501
        %v503 = vld [vmem:[#allocation2 + $0x48] sm:$0x11]
        %v504 = vsel %vm484, 0, %v503
        %505 = vst [vmem:[#allocation2 + $0x48] sm:$0x11] %v504
        %v506 = vld [vmem:[#allocation2 + $0x50] sm:$0x1]
        %v507 = vsel %vm480, 0, %v506
        %508 = vst [vmem:[#allocation2 + $0x50] sm:$0x1] %v507
        %v509 = vld [vmem:[#allocation2 + $0x60] sm:$0x11]
        %v510 = vsel %vm484, 0, %v509
        %511 = vst [vmem:[#allocation2 + $0x60] sm:$0x11] %v510
        %v512 = vld [vmem:[#allocation2 + $0x68] sm:$0x1]
        %v513 = vsel %vm480, 0, %v512
        %514 = vst [vmem:[#allocation2 + $0x68] sm:$0x1] %v513
        %v515 = vld [vmem:[#allocation2 + $0x78] sm:$0x11]
        %v516 = vsel %vm484, 0, %v515
        %517 = vst [vmem:[#allocation2 + $0x78] sm:$0x11] %v516
        %v518 = vld [vmem:[#allocation2 + $0x80] sm:$0x1]
        %v519 = vsel %vm480, 0, %v518
        %520 = vst [vmem:[#allocation2 + $0x80] sm:$0x1] %v519
        %v521 = vld [vmem:[#allocation2 + $0x90] sm:$0x11]
        %v522 = vsel %vm484, 0, %v521
        %523 = vst [vmem:[#allocation2 + $0x90] sm:$0x11] %v522
        %v524 = vld [vmem:[#allocation2 + $0x98] sm:$0x1]
        %v525 = vsel %vm480, 0, %v524
        %526 = vst [vmem:[#allocation2 + $0x98] sm:$0x1] %v525
        %v527 = vld [vmem:[#allocation2 + $0xa8] sm:$0x11]
        %v528 = vsel %vm484, 0, %v527
        %529 = vst [vmem:[#allocation2 + $0xa8] sm:$0x11] %v528
        %v530 = vld [vmem:[#allocation2 + $0xb0] sm:$0x1]
        %v531 = vsel %vm480, 0, %v530
        %532 = vst [vmem:[#allocation2 + $0xb0] sm:$0x1] %v531
        %v533 = vld [vmem:[#allocation2 + $0xc0] sm:$0x11]
        %v534 = vsel %vm484, 0, %v533
        %535 = vst [vmem:[#allocation2 + $0xc0] sm:$0x11] %v534
        %v536 = vld [vmem:[#allocation2 + $0xc8] sm:$0x1]
        %v537 = vsel %vm480, 0, %v536
        %538 = vst [vmem:[#allocation2 + $0xc8] sm:$0x1] %v537
        %v539 = vld [vmem:[#allocation2 + $0xd8] sm:$0x11]
        %v540 = vsel %vm484, 0, %v539
        %541 = vst [vmem:[#allocation2 + $0xd8] sm:$0x11] %v540
        %v542 = vld [vmem:[#allocation2 + $0xe0] sm:$0x1]
        %v543 = vsel %vm480, 0, %v542
        %544 = vst [vmem:[#allocation2 + $0xe0] sm:$0x1] %v543
        %vm545 = vsmask.f32 7938
        %vm546 = vmand %vm478, %vm545
        %vm547 = vsmask.f32 7954
        %vm548 = vmand %vm481, %vm547
        %vm549 = vmor %vm548, %vm546
        %v550 = vld [vmem:[#allocation2 + $0xc] sm:$0x11]
        %v551 = vsel %vm549, 0, %v550
        %552 = vst [vmem:[#allocation2 + $0xc] sm:$0x11] %v551
        %v553 = vld [vmem:[#allocation2 + $0x14] sm:$0x1]
        %v554 = vsel %vm546, 0, %v553
        %555 = vst [vmem:[#allocation2 + $0x14] sm:$0x1] %v554
        %v556 = vld [vmem:[#allocation2 + $0x24] sm:$0x11]
        %v557 = vsel %vm549, 0, %v556
        %558 = vst [vmem:[#allocation2 + $0x24] sm:$0x11] %v557
        %v559 = vld [vmem:[#allocation2 + $0x2c] sm:$0x1]
        %v560 = vsel %vm546, 0, %v559
        %561 = vst [vmem:[#allocation2 + $0x2c] sm:$0x1] %v560
        %v562 = vld [vmem:[#allocation2 + $0x3c] sm:$0x11]
        %v563 = vsel %vm549, 0, %v562
        %564 = vst [vmem:[#allocation2 + $0x3c] sm:$0x11] %v563
        %v565 = vld [vmem:[#allocation2 + $0x44] sm:$0x1]
        %v566 = vsel %vm546, 0, %v565
        %567 = vst [vmem:[#allocation2 + $0x44] sm:$0x1] %v566
        %v568 = vld [vmem:[#allocation2 + $0x54] sm:$0x11]
        %v569 = vsel %vm549, 0, %v568
        %570 = vst [vmem:[#allocation2 + $0x54] sm:$0x11] %v569
        %v571 = vld [vmem:[#allocation2 + $0x5c] sm:$0x1]
        %v572 = vsel %vm546, 0, %v571
        %573 = vst [vmem:[#allocation2 + $0x5c] sm:$0x1] %v572
        %v574 = vld [vmem:[#allocation2 + $0x6c] sm:$0x11]
        %v575 = vsel %vm549, 0, %v574
        %576 = vst [vmem:[#allocation2 + $0x6c] sm:$0x11] %v575
        %v577 = vld [vmem:[#allocation2 + $0x74] sm:$0x1]
        %v578 = vsel %vm546, 0, %v577
        %579 = vst [vmem:[#allocation2 + $0x74] sm:$0x1] %v578
        %v580 = vld [vmem:[#allocation2 + $0x84] sm:$0x11]
        %v581 = vsel %vm549, 0, %v580
        %582 = vst [vmem:[#allocation2 + $0x84] sm:$0x11] %v581
        %v583 = vld [vmem:[#allocation2 + $0x8c] sm:$0x1]
        %v584 = vsel %vm546, 0, %v583
        %585 = vst [vmem:[#allocation2 + $0x8c] sm:$0x1] %v584
        %v586 = vld [vmem:[#allocation2 + $0x9c] sm:$0x11]
        %v587 = vsel %vm549, 0, %v586
        %588 = vst [vmem:[#allocation2 + $0x9c] sm:$0x11] %v587
        %v589 = vld [vmem:[#allocation2 + $0xa4] sm:$0x1]
        %v590 = vsel %vm546, 0, %v589
        %591 = vst [vmem:[#allocation2 + $0xa4] sm:$0x1] %v590
        %v592 = vld [vmem:[#allocation2 + $0xb4] sm:$0x11]
        %v593 = vsel %vm549, 0, %v592
        %594 = vst [vmem:[#allocation2 + $0xb4] sm:$0x11] %v593
        %v595 = vld [vmem:[#allocation2 + $0xbc] sm:$0x1]
        %v596 = vsel %vm546, 0, %v595
        %597 = vst [vmem:[#allocation2 + $0xbc] sm:$0x1] %v596
        %v598 = vld [vmem:[#allocation2 + $0xcc] sm:$0x11]
        %v599 = vsel %vm549, 0, %v598
        %600 = vst [vmem:[#allocation2 + $0xcc] sm:$0x11] %v599
        %v601 = vld [vmem:[#allocation2 + $0xd4] sm:$0x1]
        %v602 = vsel %vm546, 0, %v601
        %603 = vst [vmem:[#allocation2 + $0xd4] sm:$0x1] %v602
        %v604 = vld [vmem:[#allocation2 + $0xe4] sm:$0x11]
        %v605 = vsel %vm549, 0, %v604
        %606 = vst [vmem:[#allocation2 + $0xe4] sm:$0x11] %v605
        %v607 = vld [vmem:[#allocation2 + $0xec] sm:$0x1]
        %v608 = vsel %vm546, 0, %v607
        %609 = vst [vmem:[#allocation2 + $0xec] sm:$0x1] %v608
        %vm610 = vcmask 1044096
        %611 = vst.msk [vmem:[#allocation2 + $0x8] sm:$0xf] %vm610, 0
        %vm612 = vcmask 1041024
        %613 = vst.msk [vmem:[#allocation2 + $0x14] sm:$0x1] %vm612, 0
        %614 = vst.msk [vmem:[#allocation2 + $0x20] sm:$0xf] %vm610, 0
        %615 = vst.msk [vmem:[#allocation2 + $0x2c] sm:$0x1] %vm612, 0
        %616 = vst.msk [vmem:[#allocation2 + $0x38] sm:$0xf] %vm610, 0
        %617 = vst.msk [vmem:[#allocation2 + $0x44] sm:$0x1] %vm612, 0
        %618 = vst.msk [vmem:[#allocation2 + $0x50] sm:$0xf] %vm610, 0
        %619 = vst.msk [vmem:[#allocation2 + $0x5c] sm:$0x1] %vm612, 0
        %620 = vst.msk [vmem:[#allocation2 + $0x68] sm:$0xf] %vm610, 0
        %621 = vst.msk [vmem:[#allocation2 + $0x74] sm:$0x1] %vm612, 0
        %622 = vst.msk [vmem:[#allocation2 + $0x80] sm:$0xf] %vm610, 0
        %623 = vst.msk [vmem:[#allocation2 + $0x8c] sm:$0x1] %vm612, 0
        %624 = vst.msk [vmem:[#allocation2 + $0x98] sm:$0xf] %vm610, 0
        %625 = vst.msk [vmem:[#allocation2 + $0xa4] sm:$0x1] %vm612, 0
        %626 = vst.msk [vmem:[#allocation2 + $0xb0] sm:$0xf] %vm610, 0
        %627 = vst.msk [vmem:[#allocation2 + $0xbc] sm:$0x1] %vm612, 0
        %628 = vst.msk [vmem:[#allocation2 + $0xc8] sm:$0xf] %vm610, 0
        %629 = vst.msk [vmem:[#allocation2 + $0xd4] sm:$0x1] %vm612, 0
        %630 = vst.msk [vmem:[#allocation2 + $0xe0] sm:$0xf] %vm610, 0
        %631 = vst.msk [vmem:[#allocation2 + $0xec] sm:$0x1] %vm612, 0
        %v632 = vld [vmem:[%s402] sm:$0xf]
        %v633 = vld [vmem:[%s402 + $0x4] sm:$0xf]
        %v634 = vld [vmem:[%s411] sm:$0xf]
        %v635 = vld [vmem:[%s3] sm:$0xf]
        %v636 = vld [vmem:[%s3 + $0x4] sm:$0xf]
        %v637 = vld [vmem:[%s3 + $0x8] sm:$0xf]
        %v638 = vld [vmem:[%s3 + $0xc] sm:$0xf]
        %v639 = vld [vmem:[%s3 + $0x10] sm:$0xf]
        %v640 = vld [vmem:[%s3 + $0x14] sm:$0xf]
        %v641 = vld [vmem:[%s3 + $0x18] sm:$0xf]
        %v642 = vld [vmem:[%s3 + $0x1c] sm:$0xf]
        %v651 = vunpack.c.l.b16 %v635
        %v652 = vunpack.c.l.b16 %v636
        %v653 = vunpack.c.l.b16 %v637
        %v654 = vunpack.c.l.b16 %v638
        %v655 = vunpack.c.l.b16 %v639
        %v656 = vunpack.c.l.b16 %v640
        %v657 = vunpack.c.l.b16 %v641
        %v658 = vunpack.c.l.b16 %v642
        %v659 = vpack.c.b16 %v652, %v651
        %v660 = vpack.c.b16 %v654, %v653
        %v661 = vpack.c.b16 %v656, %v655
        %v662 = vpack.c.b16 %v658, %v657
        %v665 = vunpack.c.l.b16 %v632
        %v666 = vunpack.c.l.b16 %v633
        %v667 = vpack.c.b16 %v666, %v665
        %vm669 = vcmask 130048
        %v671 = vsel %vm669, %v659, 0
        %v674 = vsel %vm669, %v660, 0
        %v677 = vsel %vm669, %v661, 0
        %v680 = vsel %vm669, %v662, 0
        %682 = vmatprep.subr.bf16.mxu0 0
        %683 = vmatpush1.bf16.msra.mxu0 0
        %684 = vmatprep.subr.bf16.mxu0 0
        %685 = vmatpush1.bf16.msra.mxu0 0
        %686 = vmatprep.subr.bf16.mxu0 0
        %687 = vmatpush1.bf16.msra.mxu0 0
        %688 = vmatprep.subr.bf16.mxu0 0
        %689 = vmatpush1.bf16.msra.mxu0 0
        %690 = vmatprep.subr.bf16.mxu0 0
        %691 = vmatpush1.bf16.msra.mxu0 0
        %692 = vmatprep.subr.bf16.mxu0 0
        %693 = vmatpush1.bf16.msra.mxu0 0
        %694 = vmatprep.subr.bf16.mxu0 0
        %695 = vmatpush1.bf16.msra.mxu0 0
        %696 = vmatprep.subr.bf16.mxu0 0
        %697 = vmatpush1.bf16.msra.mxu0 %v667
        %698 = vmatprep.subr.bf16.mxu0 0
        %699 = vmatpush2.bf16.msra.mxu0 0
        %700 = vmatprep.subr.bf16.mxu0 0
        %701 = vmatpush2.bf16.msra.mxu0 0
        %702 = vmatprep.subr.bf16.mxu0 0
        %703 = vmatpush2.bf16.msra.mxu0 0
        %704 = vmatprep.subr.bf16.mxu0 0
        %705 = vmatpush2.bf16.msra.mxu0 0
        %706 = vmatprep.subr.bf16.mxu0 0
        %707 = vmatpush2.bf16.msra.mxu0 0
        %708 = vmatprep.subr.bf16.mxu0 0
        %709 = vmatpush2.bf16.msra.mxu0 0
        %710 = vmatprep.subr.bf16.mxu0 0
        %711 = vmatpush2.bf16.msra.mxu0 0
        %712 = vmatprep.subr.bf16.mxu0 0
        %713 = vmatpush2.bf16.msra.mxu0 0
        %714 = vmatprep.mubr.bf16.mxu0 0
        %715 = vmatmul.mubr.bf16.gmra.mxu0 %v671
        %v716 = vpop.f32.mrf.mxu0
        %v717 = vadd.f32 0.0, %v716
        %v718 = vpop.f32.mrf.mxu0
        %v719 = vpop.f32.mrf.mxu0
        %v720 = vadd.f32 0.0, %v719
        %v721 = vpop.f32.mrf.mxu0
        %722 = vmatprep.mubr.bf16.mxu0 0
        %723 = vmatmul.mubr.bf16.gmra.mxu0 %v674
        %v724 = vpop.f32.mrf.mxu0
        %v725 = vadd.f32 0.0, %v724
        %v726 = vpop.f32.mrf.mxu0
        %v727 = vpop.f32.mrf.mxu0
        %v728 = vadd.f32 0.0, %v727
        %v729 = vpop.f32.mrf.mxu0
        %730 = vmatprep.mubr.bf16.mxu0 0
        %731 = vmatmul.mubr.bf16.gmra.mxu0 %v677
        %v732 = vpop.f32.mrf.mxu0
        %v733 = vadd.f32 0.0, %v732
        %v734 = vpop.f32.mrf.mxu0
        %v735 = vpop.f32.mrf.mxu0
        %v736 = vadd.f32 0.0, %v735
        %v737 = vpop.f32.mrf.mxu0
        %738 = vmatprep.mubr.bf16.mxu0 0
        %739 = vmatmul.mubr.bf16.gmra.mxu0 %v680
        %v740 = vpop.f32.mrf.mxu0
        %v741 = vadd.f32 0.0, %v740
        %v742 = vpop.f32.mrf.mxu0
        %v743 = vpop.f32.mrf.mxu0
        %v744 = vadd.f32 0.0, %v743
        %v745 = vpop.f32.mrf.mxu0
        %746 = vdwg.mxu0
        %v747 = vld [vmem:[%s4] sm:$0xf]
        %v748 = vld [vmem:[%s4 + $0x4] sm:$0xf]
        %v749 = vld [vmem:[%s4 + $0x8] sm:$0xf]
        %v750 = vld [vmem:[%s4 + $0xc] sm:$0xf]
        %v751 = vld [vmem:[%s4 + $0x10] sm:$0xf]
        %v752 = vld [vmem:[%s4 + $0x14] sm:$0xf]
        %v753 = vld [vmem:[%s4 + $0x18] sm:$0xf]
        %v754 = vld [vmem:[%s4 + $0x1c] sm:$0xf]
        %v763 = vunpack.c.l.b16 %v747
        %v764 = vunpack.c.l.b16 %v748
        %v765 = vunpack.c.l.b16 %v749
        %v766 = vunpack.c.l.b16 %v750
        %v767 = vunpack.c.l.b16 %v751
        %v768 = vunpack.c.l.b16 %v752
        %v769 = vunpack.c.l.b16 %v753
        %v770 = vunpack.c.l.b16 %v754
        %v771 = vpack.c.b16 %v764, %v763
        %v772 = vpack.c.b16 %v766, %v765
        %v773 = vpack.c.b16 %v768, %v767
        %v774 = vpack.c.b16 %v770, %v769
        %v777 = vunpack.c.l.s4 1983009808
        %v778 = vunpack.c.0.s8 %v777
        %v779 = vlaneseq
        %v780 = vshrl.u32 %v779, 7
        %v781 = vsub.s32 %v778, %v780
        %v782 = vrot.slane %v634, %v781
        %v783 = vcombine.high %v782, %v782
        %vm784 = vcmask 31744
        %v786 = vsel %vm784, %v771, 0
        %v789 = vsel %vm784, %v772, 0
        %v792 = vsel %vm784, %v773, 0
        %v795 = vsel %vm784, %v774, 0
        %vm797 = vcmask 1041408
        %v799 = vsel %vm797, %v782, 0
        %v802 = vsel %vm797, %v783, 0
        %804 = vmatprep.subr.bf16.mxu0 0
        %805 = vmatpush1.bf16.msra.mxu0 0
        %806 = vmatprep.subr.bf16.mxu0 0
        %807 = vmatpush1.bf16.msra.mxu0 0
        %808 = vmatprep.subr.bf16.mxu0 0
        %809 = vmatpush1.bf16.msra.mxu0 0
        %810 = vmatprep.subr.bf16.mxu0 0
        %811 = vmatpush1.bf16.msra.mxu0 0
        %812 = vmatprep.subr.bf16.mxu0 0
        %813 = vmatpush1.bf16.msra.mxu0 0
        %814 = vmatprep.subr.bf16.mxu0 0
        %815 = vmatpush1.bf16.msra.mxu0 0
        %816 = vmatprep.subr.bf16.mxu0 0
        %817 = vmatpush1.bf16.msra.mxu0 0
        %818 = vmatprep.subr.bf16.mxu0 %v802
        %819 = vmatpush1.bf16.msra.mxu0 %v799
        %820 = vmatprep.subr.bf16.mxu0 0
        %821 = vmatpush2.bf16.msra.mxu0 0
        %822 = vmatprep.subr.bf16.mxu0 0
        %823 = vmatpush2.bf16.msra.mxu0 0
        %824 = vmatprep.subr.bf16.mxu0 0
        %825 = vmatpush2.bf16.msra.mxu0 0
        %826 = vmatprep.subr.bf16.mxu0 0
        %827 = vmatpush2.bf16.msra.mxu0 0
        %828 = vmatprep.subr.bf16.mxu0 0
        %829 = vmatpush2.bf16.msra.mxu0 0
        %830 = vmatprep.subr.bf16.mxu0 0
        %831 = vmatpush2.bf16.msra.mxu0 0
        %832 = vmatprep.subr.bf16.mxu0 0
        %833 = vmatpush2.bf16.msra.mxu0 0
        %834 = vmatprep.subr.bf16.mxu0 0
        %835 = vmatpush2.bf16.msra.mxu0 0
        %836 = vmatprep.mubr.bf16.mxu0 0
        %837 = vmatmul.mubr.bf16.gmra.mxu0 %v786
        %v838 = vpop.f32.mrf.mxu0
        %v839 = vadd.f32 0.0, %v838
        %v840 = vpop.f32.mrf.mxu0
        %v841 = vadd.f32 0.0, %v840
        %v842 = vpop.f32.mrf.mxu0
        %v843 = vadd.f32 0.0, %v842
        %v844 = vpop.f32.mrf.mxu0
        %v845 = vadd.f32 0.0, %v844
        %846 = vmatprep.mubr.bf16.mxu0 0
        %847 = vmatmul.mubr.bf16.gmra.mxu0 %v789
        %v848 = vpop.f32.mrf.mxu0
        %v849 = vadd.f32 0.0, %v848
        %v850 = vpop.f32.mrf.mxu0
        %v851 = vadd.f32 0.0, %v850
        %v852 = vpop.f32.mrf.mxu0
        %v853 = vadd.f32 0.0, %v852
        %v854 = vpop.f32.mrf.mxu0
        %v855 = vadd.f32 0.0, %v854
        %856 = vmatprep.mubr.bf16.mxu0 0
        %857 = vmatmul.mubr.bf16.gmra.mxu0 %v792
        %v858 = vpop.f32.mrf.mxu0
        %v859 = vadd.f32 0.0, %v858
        %v860 = vpop.f32.mrf.mxu0
        %v861 = vadd.f32 0.0, %v860
        %v862 = vpop.f32.mrf.mxu0
        %v863 = vadd.f32 0.0, %v862
        %v864 = vpop.f32.mrf.mxu0
        %v865 = vadd.f32 0.0, %v864
        %866 = vmatprep.mubr.bf16.mxu0 0
        %867 = vmatmul.mubr.bf16.gmra.mxu0 %v795
        %v868 = vpop.f32.mrf.mxu0
        %v869 = vadd.f32 0.0, %v868
        %v870 = vpop.f32.mrf.mxu0
        %v871 = vadd.f32 0.0, %v870
        %v872 = vpop.f32.mrf.mxu0
        %v873 = vadd.f32 0.0, %v872
        %v874 = vpop.f32.mrf.mxu0
        %v875 = vadd.f32 0.0, %v874
        %876 = vdwg.mxu0
        %v877 = vld [vmem:[%s393] sm:$0xf]
        %v878 = vld [vmem:[%s393 + $0x4] sm:$0xf]
        %v879 = vld [vmem:[%s393 + $0x8] sm:$0xf]
        %v880 = vld [vmem:[%s393 + $0xc] sm:$0xf]
        %v881 = vld [vmem:[%s393 + $0x10] sm:$0xf]
        %v882 = vld [vmem:[%s393 + $0x14] sm:$0xf]
        %v883 = vld [vmem:[%s393 + $0x18] sm:$0xf]
        %v884 = vld [vmem:[%s393 + $0x1c] sm:$0xf]
        %v886 = vshrl.u32 %v877, 16
        %v888 = vrot.slane %v886, 7
        %v889 = vshll.u32 %v877, 16
        %v891 = vor.u32 %v888, %v889
        %v892 = vrot.slane %v888, 4
        %v894 = vshrl.u32 %v878, 16
        %v896 = vrot.slane %v894, 7
        %v897 = vshll.u32 %v878, 16
        %v899 = vor.u32 %v896, %v897
        %v900 = vrot.slane %v896, 4
        %v902 = vshrl.u32 %v879, 16
        %v904 = vrot.slane %v902, 7
        %v905 = vshll.u32 %v879, 16
        %v907 = vor.u32 %v904, %v905
        %v908 = vrot.slane %v904, 4
        %v910 = vshrl.u32 %v880, 16
        %v912 = vrot.slane %v910, 7
        %v913 = vshll.u32 %v880, 16
        %v915 = vor.u32 %v912, %v913
        %v916 = vrot.slane %v912, 4
        %v918 = vshrl.u32 %v881, 16
        %v920 = vrot.slane %v918, 7
        %v921 = vshll.u32 %v881, 16
        %v923 = vor.u32 %v920, %v921
        %v924 = vrot.slane %v920, 4
        %v926 = vshrl.u32 %v882, 16
        %v928 = vrot.slane %v926, 7
        %v929 = vshll.u32 %v882, 16
        %v931 = vor.u32 %v928, %v929
        %v932 = vrot.slane %v928, 4
        %v934 = vshrl.u32 %v883, 16
        %v936 = vrot.slane %v934, 7
        %v937 = vshll.u32 %v883, 16
        %v939 = vor.u32 %v936, %v937
        %v940 = vrot.slane %v936, 4
        %v942 = vshrl.u32 %v884, 16
        %v944 = vrot.slane %v942, 7
        %v945 = vshll.u32 %v884, 16
        %v947 = vor.u32 %v944, %v945
        %v948 = vrot.slane %v944, 4
        %s965 = scalar_lea.vmem [#allocation2], 24
        %vm966 = vcmask 388096
        %vm967 = vmand %vm966, %vm545
        %v968 = vld [vmem:[%s965] sm:$0xf]
        %v969 = vsel %vm967, %v891, %v968
        %970 = vst [vmem:[%s965] sm:$0xf] %v969
        %vm971 = vcmask 385024
        %vm972 = vmand %vm971, %vm479
        %v973 = vld [vmem:[%s965 + $0xc] sm:$0x1]
        %v974 = vsel %vm972, %v892, %v973
        %975 = vst [vmem:[%s965 + $0xc] sm:$0x1] %v974
        %v976 = vld [vmem:[%s965 + $0x18] sm:$0xf]
        %v977 = vsel %vm967, %v899, %v976
        %978 = vst [vmem:[%s965 + $0x18] sm:$0xf] %v977
        %v979 = vld [vmem:[%s965 + $0x24] sm:$0x1]
        %v980 = vsel %vm972, %v900, %v979
        %981 = vst [vmem:[%s965 + $0x24] sm:$0x1] %v980
        %v982 = vld [vmem:[%s965 + $0x30] sm:$0xf]
        %v983 = vsel %vm967, %v907, %v982
        %984 = vst [vmem:[%s965 + $0x30] sm:$0xf] %v983
        %v985 = vld [vmem:[%s965 + $0x3c] sm:$0x1]
        %v986 = vsel %vm972, %v908, %v985
        %987 = vst [vmem:[%s965 + $0x3c] sm:$0x1] %v986
        %v988 = vld [vmem:[%s965 + $0x48] sm:$0xf]
        %v989 = vsel %vm967, %v915, %v988
        %990 = vst [vmem:[%s965 + $0x48] sm:$0xf] %v989
        %v991 = vld [vmem:[%s965 + $0x54] sm:$0x1]
        %v992 = vsel %vm972, %v916, %v991
        %993 = vst [vmem:[%s965 + $0x54] sm:$0x1] %v992
        %v994 = vld [vmem:[%s965 + $0x60] sm:$0xf]
        %v995 = vsel %vm967, %v923, %v994
        %996 = vst [vmem:[%s965 + $0x60] sm:$0xf] %v995
        %v997 = vld [vmem:[%s965 + $0x6c] sm:$0x1]
        %v998 = vsel %vm972, %v924, %v997
        %999 = vst [vmem:[%s965 + $0x6c] sm:$0x1] %v998
        %v1000 = vld [vmem:[%s965 + $0x78] sm:$0xf]
        %v1001 = vsel %vm967, %v931, %v1000
        %1002 = vst [vmem:[%s965 + $0x78] sm:$0xf] %v1001
        %v1003 = vld [vmem:[%s965 + $0x84] sm:$0x1]
        %v1004 = vsel %vm972, %v932, %v1003
        %1005 = vst [vmem:[%s965 + $0x84] sm:$0x1] %v1004
        %v1006 = vld [vmem:[%s965 + $0x90] sm:$0xf]
        %v1007 = vsel %vm967, %v939, %v1006
        %1008 = vst [vmem:[%s965 + $0x90] sm:$0xf] %v1007
        %v1009 = vld [vmem:[%s965 + $0x9c] sm:$0x1]
        %v1010 = vsel %vm972, %v940, %v1009
        %1011 = vst [vmem:[%s965 + $0x9c] sm:$0x1] %v1010
        %v1012 = vld [vmem:[%s965 + $0xa8] sm:$0xf]
        %v1013 = vsel %vm967, %v947, %v1012
        %1014 = vst [vmem:[%s965 + $0xa8] sm:$0xf] %v1013
        %v1015 = vld [vmem:[%s965 + $0xb4] sm:$0x1]
        %v1016 = vsel %vm972, %v948, %v1015
        %1017 = vst [vmem:[%s965 + $0xb4] sm:$0x1] %v1016
        %v1018 = vpack.c.bf16 %v720, %v717
        %v1019 = vpack.c.bf16 %v728, %v725
        %v1020 = vpack.c.bf16 %v736, %v733
        %v1021 = vpack.c.bf16 %v744, %v741
        %v1026 = vunpack.c.l.b16 %v1018
        %v1027 = vunpack.c.h.b16 %v1018
        %v1028 = vunpack.c.l.b16 %v1019
        %v1029 = vunpack.c.h.b16 %v1019
        %v1030 = vunpack.c.l.b16 %v1020
        %v1031 = vunpack.c.h.b16 %v1020
        %v1032 = vunpack.c.l.b16 %v1021
        %v1033 = vunpack.c.h.b16 %v1021
        %v1034 = vpack.c.b16 %v1026, %v1026
        %v1035 = vpack.c.b16 %v1027, %v1027
        %v1036 = vpack.c.b16 %v1028, %v1028
        %v1037 = vpack.c.b16 %v1029, %v1029
        %v1038 = vpack.c.b16 %v1030, %v1030
        %v1039 = vpack.c.b16 %v1031, %v1031
        %v1040 = vpack.c.b16 %v1032, %v1032
        %v1041 = vpack.c.b16 %v1033, %v1033
        %v1043 = vshrl.u32 %v1034, 16
        %v1045 = vrot.slane %v1043, 7
        %v1046 = vshll.u32 %v1034, 16
        %v1048 = vor.u32 %v1045, %v1046
        %v1049 = vrot.slane %v1045, 4
        %v1051 = vshrl.u32 %v1035, 16
        %v1053 = vrot.slane %v1051, 7
        %v1054 = vshll.u32 %v1035, 16
        %v1056 = vor.u32 %v1053, %v1054
        %v1057 = vrot.slane %v1053, 4
        %v1059 = vshrl.u32 %v1036, 16
        %v1061 = vrot.slane %v1059, 7
        %v1062 = vshll.u32 %v1036, 16
        %v1064 = vor.u32 %v1061, %v1062
        %v1065 = vrot.slane %v1061, 4
        %v1067 = vshrl.u32 %v1037, 16
        %v1069 = vrot.slane %v1067, 7
        %v1070 = vshll.u32 %v1037, 16
        %v1072 = vor.u32 %v1069, %v1070
        %v1073 = vrot.slane %v1069, 4
        %v1075 = vshrl.u32 %v1038, 16
        %v1077 = vrot.slane %v1075, 7
        %v1078 = vshll.u32 %v1038, 16
        %v1080 = vor.u32 %v1077, %v1078
        %v1081 = vrot.slane %v1077, 4
        %v1083 = vshrl.u32 %v1039, 16
        %v1085 = vrot.slane %v1083, 7
        %v1086 = vshll.u32 %v1039, 16
        %v1088 = vor.u32 %v1085, %v1086
        %v1089 = vrot.slane %v1085, 4
        %v1091 = vshrl.u32 %v1040, 16
        %v1093 = vrot.slane %v1091, 7
        %v1094 = vshll.u32 %v1040, 16
        %v1096 = vor.u32 %v1093, %v1094
        %v1097 = vrot.slane %v1093, 4
        %v1099 = vshrl.u32 %v1041, 16
        %v1101 = vrot.slane %v1099, 7
        %v1102 = vshll.u32 %v1041, 16
        %v1104 = vor.u32 %v1101, %v1102
        %v1105 = vrot.slane %v1101, 4
        %1106 = vrot.lane.b32.xlu0 %v1048, 48
        %v1107 = vpop.permute.xlu0 %1106
        %1108 = vrot.lane.b32.xlu0 %v1049, 48
        %v1109 = vpop.permute.xlu0 %1108
        %1110 = vrot.lane.b32.xlu0 %v1056, 48
        %v1111 = vpop.permute.xlu0 %1110
        %1112 = vrot.lane.b32.xlu0 %v1057, 48
        %v1113 = vpop.permute.xlu0 %1112
        %1114 = vrot.lane.b32.xlu0 %v1064, 48
        %v1115 = vpop.permute.xlu0 %1114
        %1116 = vrot.lane.b32.xlu0 %v1065, 48
        %v1117 = vpop.permute.xlu0 %1116
        %1118 = vrot.lane.b32.xlu0 %v1072, 48
        %v1119 = vpop.permute.xlu0 %1118
        %1120 = vrot.lane.b32.xlu0 %v1073, 48
        %v1121 = vpop.permute.xlu0 %1120
        %1122 = vrot.lane.b32.xlu0 %v1080, 48
        %v1123 = vpop.permute.xlu0 %1122
        %1124 = vrot.lane.b32.xlu0 %v1081, 48
        %v1125 = vpop.permute.xlu0 %1124
        %1126 = vrot.lane.b32.xlu0 %v1088, 48
        %v1127 = vpop.permute.xlu0 %1126
        %1128 = vrot.lane.b32.xlu0 %v1089, 48
        %v1129 = vpop.permute.xlu0 %1128
        %1130 = vrot.lane.b32.xlu0 %v1096, 48
        %v1131 = vpop.permute.xlu0 %1130
        %1132 = vrot.lane.b32.xlu0 %v1097, 48
        %v1133 = vpop.permute.xlu0 %1132
        %1134 = vrot.lane.b32.xlu0 %v1104, 48
        %v1135 = vpop.permute.xlu0 %1134
        %1136 = vrot.lane.b32.xlu0 %v1105, 48
        %v1137 = vpop.permute.xlu0 %1136
        %v1138 = vrot.slane %v1107, 4
        %v1139 = vrot.slane %v1109, 4
        %v1140 = vrot.slane %v1111, 4
        %v1141 = vrot.slane %v1113, 4
        %v1142 = vrot.slane %v1115, 4
        %v1143 = vrot.slane %v1117, 4
        %v1144 = vrot.slane %v1119, 4
        %v1145 = vrot.slane %v1121, 4
        %v1146 = vrot.slane %v1123, 4
        %v1147 = vrot.slane %v1125, 4
        %v1148 = vrot.slane %v1127, 4
        %v1149 = vrot.slane %v1129, 4
        %v1150 = vrot.slane %v1131, 4
        %v1151 = vrot.slane %v1133, 4
        %v1152 = vrot.slane %v1135, 4
        %v1153 = vrot.slane %v1137, 4
        %vm1154 = vcmask 392192
        %v1155 = vsel %vm1154, %v1138, %v1107
        %v1156 = vsel %vm1154, %v1139, %v1109
        %v1157 = vsel %vm1154, %v1140, %v1111
        %v1158 = vsel %vm1154, %v1141, %v1113
        %v1159 = vsel %vm1154, %v1142, %v1115
        %v1160 = vsel %vm1154, %v1143, %v1117
        %v1161 = vsel %vm1154, %v1144, %v1119
        %v1162 = vsel %vm1154, %v1145, %v1121
        %v1163 = vsel %vm1154, %v1146, %v1123
        %v1164 = vsel %vm1154, %v1147, %v1125
        %v1165 = vsel %vm1154, %v1148, %v1127
        %v1166 = vsel %vm1154, %v1149, %v1129
        %v1167 = vsel %vm1154, %v1150, %v1131
        %v1168 = vsel %vm1154, %v1151, %v1133
        %v1169 = vsel %vm1154, %v1152, %v1135
        %v1170 = vsel %vm1154, %v1153, %v1137
        %vm1187 = vcmask 1043840
        %vm1188 = vmand %vm1187, %vm545
        %vm1189 = vcmask 130052
        %vm1190 = vmand %vm1189, %vm547
        %vm1191 = vmor %vm1190, %vm1188
        %v1192 = vld [vmem:[%s965] sm:$0xff]
        %v1193 = vsel %vm1191, %v1155, %v1192
        %1194 = vst [vmem:[%s965] sm:$0xff] %v1193
        %vm1195 = vcmask 1040768
        %vm1196 = vmand %vm1195, %vm479
        %vm1197 = vcmask 126980
        %vm1198 = vmand %vm1197, %vm482
        %vm1199 = vmor %vm1198, %vm1196
        %v1200 = vld [vmem:[%s965 + $0xc] sm:$0x11]
        %v1201 = vsel %vm1199, %v1156, %v1200
        %1202 = vst [vmem:[%s965 + $0xc] sm:$0x11] %v1201
        %v1203 = vld [vmem:[%s965 + $0x18] sm:$0xff]
        %v1204 = vsel %vm1191, %v1157, %v1203
        %1205 = vst [vmem:[%s965 + $0x18] sm:$0xff] %v1204
        %v1206 = vld [vmem:[%s965 + $0x24] sm:$0x11]
        %v1207 = vsel %vm1199, %v1158, %v1206
        %1208 = vst [vmem:[%s965 + $0x24] sm:$0x11] %v1207
        %v1209 = vld [vmem:[%s965 + $0x30] sm:$0xff]
        %v1210 = vsel %vm1191, %v1159, %v1209
        %1211 = vst [vmem:[%s965 + $0x30] sm:$0xff] %v1210
        %v1212 = vld [vmem:[%s965 + $0x3c] sm:$0x11]
        %v1213 = vsel %vm1199, %v1160, %v1212
        %1214 = vst [vmem:[%s965 + $0x3c] sm:$0x11] %v1213
        %v1215 = vld [vmem:[%s965 + $0x48] sm:$0xff]
        %v1216 = vsel %vm1191, %v1161, %v1215
        %1217 = vst [vmem:[%s965 + $0x48] sm:$0xff] %v1216
        %v1218 = vld [vmem:[%s965 + $0x54] sm:$0x11]
        %v1219 = vsel %vm1199, %v1162, %v1218
        %1220 = vst [vmem:[%s965 + $0x54] sm:$0x11] %v1219
        %v1221 = vld [vmem:[%s965 + $0x60] sm:$0xff]
        %v1222 = vsel %vm1191, %v1163, %v1221
        %1223 = vst [vmem:[%s965 + $0x60] sm:$0xff] %v1222
        %v1224 = vld [vmem:[%s965 + $0x6c] sm:$0x11]
        %v1225 = vsel %vm1199, %v1164, %v1224
        %1226 = vst [vmem:[%s965 + $0x6c] sm:$0x11] %v1225
        %v1227 = vld [vmem:[%s965 + $0x78] sm:$0xff]
        %v1228 = vsel %vm1191, %v1165, %v1227
        %1229 = vst [vmem:[%s965 + $0x78] sm:$0xff] %v1228
        %v1230 = vld [vmem:[%s965 + $0x84] sm:$0x11]
        %v1231 = vsel %vm1199, %v1166, %v1230
        %1232 = vst [vmem:[%s965 + $0x84] sm:$0x11] %v1231
        %v1233 = vld [vmem:[%s965 + $0x90] sm:$0xff]
        %v1234 = vsel %vm1191, %v1167, %v1233
        %1235 = vst [vmem:[%s965 + $0x90] sm:$0xff] %v1234
        %v1236 = vld [vmem:[%s965 + $0x9c] sm:$0x11]
        %v1237 = vsel %vm1199, %v1168, %v1236
        %1238 = vst [vmem:[%s965 + $0x9c] sm:$0x11] %v1237
        %v1239 = vld [vmem:[%s965 + $0xa8] sm:$0xff]
        %v1240 = vsel %vm1191, %v1169, %v1239
        %1241 = vst [vmem:[%s965 + $0xa8] sm:$0xff] %v1240
        %v1242 = vld [vmem:[%s965 + $0xb4] sm:$0x11]
        %v1243 = vsel %vm1199, %v1170, %v1242
        %1244 = vst [vmem:[%s965 + $0xb4] sm:$0x11] %v1243
        %v1245 = vpack.c.bf16 %v843, %v839
        %v1246 = vpack.c.bf16 %v845, %v841
        %v1247 = vpack.c.bf16 %v853, %v849
        %v1248 = vpack.c.bf16 %v855, %v851
        %v1249 = vpack.c.bf16 %v863, %v859
        %v1250 = vpack.c.bf16 %v865, %v861
        %v1251 = vpack.c.bf16 %v873, %v869
        %v1252 = vpack.c.bf16 %v875, %v871
        %v1261 = vunpack.c.l.b16 %v1245
        %v1262 = vunpack.c.l.b16 %v1246
        %v1263 = vunpack.c.h.b16 %v1245
        %v1264 = vunpack.c.h.b16 %v1246
        %v1265 = vunpack.c.l.b16 %v1247
        %v1266 = vunpack.c.l.b16 %v1248
        %v1267 = vunpack.c.h.b16 %v1247
        %v1268 = vunpack.c.h.b16 %v1248
        %v1269 = vunpack.c.l.b16 %v1249
        %v1270 = vunpack.c.l.b16 %v1250
        %v1271 = vunpack.c.h.b16 %v1249
        %v1272 = vunpack.c.h.b16 %v1250
        %v1273 = vunpack.c.l.b16 %v1251
        %v1274 = vunpack.c.l.b16 %v1252
        %v1275 = vunpack.c.h.b16 %v1251
        %v1276 = vunpack.c.h.b16 %v1252
        %v1277 = vpack.c.b16 %v1262, %v1261
        %v1278 = vpack.c.b16 %v1264, %v1263
        %v1279 = vpack.c.b16 %v1266, %v1265
        %v1280 = vpack.c.b16 %v1268, %v1267
        %v1281 = vpack.c.b16 %v1270, %v1269
        %v1282 = vpack.c.b16 %v1272, %v1271
        %v1283 = vpack.c.b16 %v1274, %v1273
        %v1284 = vpack.c.b16 %v1276, %v1275
        %v1286 = vshrl.u32 %v1277, 16
        %v1288 = vrot.slane %v1286, 7
        %v1289 = vshll.u32 %v1277, 16
        %v1291 = vor.u32 %v1288, %v1289
        %v1292 = vrot.slane %v1288, 4
        %v1294 = vshrl.u32 %v1278, 16
        %v1296 = vrot.slane %v1294, 7
        %v1297 = vshll.u32 %v1278, 16
        %v1299 = vor.u32 %v1296, %v1297
        %v1300 = vrot.slane %v1296, 4
        %v1302 = vshrl.u32 %v1279, 16
        %v1304 = vrot.slane %v1302, 7
        %v1305 = vshll.u32 %v1279, 16
        %v1307 = vor.u32 %v1304, %v1305
        %v1308 = vrot.slane %v1304, 4
        %v1310 = vshrl.u32 %v1280, 16
        %v1312 = vrot.slane %v1310, 7
        %v1313 = vshll.u32 %v1280, 16
        %v1315 = vor.u32 %v1312, %v1313
        %v1316 = vrot.slane %v1312, 4
        %v1318 = vshrl.u32 %v1281, 16
        %v1320 = vrot.slane %v1318, 7
        %v1321 = vshll.u32 %v1281, 16
        %v1323 = vor.u32 %v1320, %v1321
        %v1324 = vrot.slane %v1320, 4
        %v1326 = vshrl.u32 %v1282, 16
        %v1328 = vrot.slane %v1326, 7
        %v1329 = vshll.u32 %v1282, 16
        %v1331 = vor.u32 %v1328, %v1329
        %v1332 = vrot.slane %v1328, 4
        %v1334 = vshrl.u32 %v1283, 16
        %v1336 = vrot.slane %v1334, 7
        %v1337 = vshll.u32 %v1283, 16
        %v1339 = vor.u32 %v1336, %v1337
        %v1340 = vrot.slane %v1336, 4
        %v1342 = vshrl.u32 %v1284, 16
        %v1344 = vrot.slane %v1342, 7
        %v1345 = vshll.u32 %v1284, 16
        %v1347 = vor.u32 %v1344, %v1345
        %v1348 = vrot.slane %v1344, 4
        %1349 = vrot.lane.b32.xlu0 %v1291, 16
        %v1350 = vpop.permute.xlu0 %1349
        %1351 = vrot.lane.b32.xlu0 %v1292, 16
        %v1352 = vpop.permute.xlu0 %1351
        %1353 = vrot.lane.b32.xlu0 %v1299, 16
        %v1354 = vpop.permute.xlu0 %1353
        %1355 = vrot.lane.b32.xlu0 %v1300, 16
        %v1356 = vpop.permute.xlu0 %1355
        %1357 = vrot.lane.b32.xlu0 %v1307, 16
        %v1358 = vpop.permute.xlu0 %1357
        %1359 = vrot.lane.b32.xlu0 %v1308, 16
        %v1360 = vpop.permute.xlu0 %1359
        %1361 = vrot.lane.b32.xlu0 %v1315, 16
        %v1362 = vpop.permute.xlu0 %1361
        %1363 = vrot.lane.b32.xlu0 %v1316, 16
        %v1364 = vpop.permute.xlu0 %1363
        %1365 = vrot.lane.b32.xlu0 %v1323, 16
        %v1366 = vpop.permute.xlu0 %1365
        %1367 = vrot.lane.b32.xlu0 %v1324, 16
        %v1368 = vpop.permute.xlu0 %1367
        %1369 = vrot.lane.b32.xlu0 %v1331, 16
        %v1370 = vpop.permute.xlu0 %1369
        %1371 = vrot.lane.b32.xlu0 %v1332, 16
        %v1372 = vpop.permute.xlu0 %1371
        %1373 = vrot.lane.b32.xlu0 %v1339, 16
        %v1374 = vpop.permute.xlu0 %1373
        %1375 = vrot.lane.b32.xlu0 %v1340, 16
        %v1376 = vpop.permute.xlu0 %1375
        %1377 = vrot.lane.b32.xlu0 %v1347, 16
        %v1378 = vpop.permute.xlu0 %1377
        %1379 = vrot.lane.b32.xlu0 %v1348, 16
        %v1380 = vpop.permute.xlu0 %1379
        %v1381 = vrot.slane %v1350, 4
        %v1382 = vrot.slane %v1352, 4
        %v1383 = vrot.slane %v1354, 4
        %v1384 = vrot.slane %v1356, 4
        %v1385 = vrot.slane %v1358, 4
        %v1386 = vrot.slane %v1360, 4
        %v1387 = vrot.slane %v1362, 4
        %v1388 = vrot.slane %v1364, 4
        %v1389 = vrot.slane %v1366, 4
        %v1390 = vrot.slane %v1368, 4
        %v1391 = vrot.slane %v1370, 4
        %v1392 = vrot.slane %v1372, 4
        %v1393 = vrot.slane %v1374, 4
        %v1394 = vrot.slane %v1376, 4
        %v1395 = vrot.slane %v1378, 4
        %v1396 = vrot.slane %v1380, 4
        %vm1397 = vcmask 130048
        %v1398 = vsel %vm1397, %v1381, %v1350
        %v1399 = vsel %vm1397, %v1382, %v1352
        %v1400 = vsel %vm1397, %v1383, %v1354
        %v1401 = vsel %vm1397, %v1384, %v1356
        %v1402 = vsel %vm1397, %v1385, %v1358
        %v1403 = vsel %vm1397, %v1386, %v1360
        %v1404 = vsel %vm1397, %v1387, %v1362
        %v1405 = vsel %vm1397, %v1388, %v1364
        %v1406 = vsel %vm1397, %v1389, %v1366
        %v1407 = vsel %vm1397, %v1390, %v1368
        %v1408 = vsel %vm1397, %v1391, %v1370
        %v1409 = vsel %vm1397, %v1392, %v1372
        %v1410 = vsel %vm1397, %v1393, %v1374
        %v1411 = vsel %vm1397, %v1394, %v1376
        %v1412 = vsel %vm1397, %v1395, %v1378
        %v1413 = vsel %vm1397, %v1396, %v1380
        %vm1430 = vcmask 1043584
        %vm1431 = vmand %vm1430, %vm545
        %vm1432 = vcmask 654340
        %vm1433 = vmand %vm1432, %vm547
        %vm1434 = vmor %vm1433, %vm1431
        %v1435 = vld [vmem:[%s965 + $0x4] sm:$0xff]
        %v1436 = vsel %vm1434, %v1398, %v1435
        %1437 = vst [vmem:[%s965 + $0x4] sm:$0xff] %v1436
        %vm1438 = vcmask 1040512
        %vm1439 = vmand %vm1438, %vm479
        %vm1440 = vcmask 651268
        %vm1441 = vmand %vm1440, %vm482
        %vm1442 = vmor %vm1441, %vm1439
        %v1443 = vld [vmem:[%s965 + $0x10] sm:$0x11]
        %v1444 = vsel %vm1442, %v1399, %v1443
        %1445 = vst [vmem:[%s965 + $0x10] sm:$0x11] %v1444
        %v1446 = vld [vmem:[%s965 + $0x1c] sm:$0xff]
        %v1447 = vsel %vm1434, %v1400, %v1446
        %1448 = vst [vmem:[%s965 + $0x1c] sm:$0xff] %v1447
        %v1449 = vld [vmem:[%s965 + $0x28] sm:$0x11]
        %v1450 = vsel %vm1442, %v1401, %v1449
        %1451 = vst [vmem:[%s965 + $0x28] sm:$0x11] %v1450
        %v1452 = vld [vmem:[%s965 + $0x34] sm:$0xff]
        %v1453 = vsel %vm1434, %v1402, %v1452
        %1454 = vst [vmem:[%s965 + $0x34] sm:$0xff] %v1453
        %v1455 = vld [vmem:[%s965 + $0x40] sm:$0x11]
        %v1456 = vsel %vm1442, %v1403, %v1455
        %1457 = vst [vmem:[%s965 + $0x40] sm:$0x11] %v1456
        %v1458 = vld [vmem:[%s965 + $0x4c] sm:$0xff]
        %v1459 = vsel %vm1434, %v1404, %v1458
        %1460 = vst [vmem:[%s965 + $0x4c] sm:$0xff] %v1459
        %v1461 = vld [vmem:[%s965 + $0x58] sm:$0x11]
        %v1462 = vsel %vm1442, %v1405, %v1461
        %1463 = vst [vmem:[%s965 + $0x58] sm:$0x11] %v1462
        %v1464 = vld [vmem:[%s965 + $0x64] sm:$0xff]
        %v1465 = vsel %vm1434, %v1406, %v1464
        %1466 = vst [vmem:[%s965 + $0x64] sm:$0xff] %v1465
        %v1467 = vld [vmem:[%s965 + $0x70] sm:$0x11]
        %v1468 = vsel %vm1442, %v1407, %v1467
        %1469 = vst [vmem:[%s965 + $0x70] sm:$0x11] %v1468
        %v1470 = vld [vmem:[%s965 + $0x7c] sm:$0xff]
        %v1471 = vsel %vm1434, %v1408, %v1470
        %1472 = vst [vmem:[%s965 + $0x7c] sm:$0xff] %v1471
        %v1473 = vld [vmem:[%s965 + $0x88] sm:$0x11]
        %v1474 = vsel %vm1442, %v1409, %v1473
        %1475 = vst [vmem:[%s965 + $0x88] sm:$0x11] %v1474
        %v1476 = vld [vmem:[%s965 + $0x94] sm:$0xff]
        %v1477 = vsel %vm1434, %v1410, %v1476
        %1478 = vst [vmem:[%s965 + $0x94] sm:$0xff] %v1477
        %v1479 = vld [vmem:[%s965 + $0xa0] sm:$0x11]
        %v1480 = vsel %vm1442, %v1411, %v1479
        %1481 = vst [vmem:[%s965 + $0xa0] sm:$0x11] %v1480
        %v1482 = vld [vmem:[%s965 + $0xac] sm:$0xff]
        %v1483 = vsel %vm1434, %v1412, %v1482
        %1484 = vst [vmem:[%s965 + $0xac] sm:$0xff] %v1483
        %v1485 = vld [vmem:[%s965 + $0xb8] sm:$0x11]
        %v1486 = vsel %vm1442, %v1413, %v1485
        %1487 = vst [vmem:[%s965 + $0xb8] sm:$0x11] %v1486
        %v1488 = vld [vmem:[#allocation2] sm:$0xff]
        %v1489 = vld [vmem:[#allocation2 + $0x8] sm:$0xf]
        %v1490 = vld [vmem:[#allocation2 + $0x18] sm:$0xff]
        %v1491 = vld [vmem:[#allocation2 + $0x20] sm:$0xf]
        %v1492 = vld [vmem:[#allocation2 + $0x30] sm:$0xff]
        %v1493 = vld [vmem:[#allocation2 + $0x38] sm:$0xf]
        %v1494 = vld [vmem:[#allocation2 + $0x48] sm:$0xff]
        %v1495 = vld [vmem:[#allocation2 + $0x50] sm:$0xf]
        %v1496 = vld [vmem:[#allocation2 + $0x60] sm:$0xff]
        %v1497 = vld [vmem:[#allocation2 + $0x68] sm:$0xf]
        %v1498 = vld [vmem:[#allocation2 + $0x78] sm:$0xff]
        %v1499 = vld [vmem:[#allocation2 + $0x80] sm:$0xf]
        %v1500 = vld [vmem:[#allocation2 + $0x90] sm:$0xff]
        %v1501 = vld [vmem:[#allocation2 + $0x98] sm:$0xf]
        %v1502 = vld [vmem:[#allocation2 + $0xa8] sm:$0xff]
        %v1503 = vld [vmem:[#allocation2 + $0xb0] sm:$0xf]
        %1504 = vst [vmem:[#allocation3] sm:$0xff] %v1488
        %1505 = vst [vmem:[#allocation3 + $0x8] sm:$0xf] %v1489
        %1506 = vst [vmem:[#allocation3 + $0x6c] sm:$0xff] %v1490
        %1507 = vst [vmem:[#allocation3 + $0x74] sm:$0xf] %v1491
        %1508 = vst [vmem:[#allocation3 + $0xd8] sm:$0xff] %v1492
        %1509 = vst [vmem:[#allocation3 + $0xe0] sm:$0xf] %v1493
        %1510 = vst [vmem:[#allocation3 + $0x144] sm:$0xff] %v1494
        %1511 = vst [vmem:[#allocation3 + $0x14c] sm:$0xf] %v1495
        %1512 = vst [vmem:[#allocation3 + $0x1b0] sm:$0xff] %v1496
        %1513 = vst [vmem:[#allocation3 + $0x1b8] sm:$0xf] %v1497
        %1514 = vst [vmem:[#allocation3 + $0x21c] sm:$0xff] %v1498
        %1515 = vst [vmem:[#allocation3 + $0x224] sm:$0xf] %v1499
        %1516 = vst [vmem:[#allocation3 + $0x288] sm:$0xff] %v1500
        %1517 = vst [vmem:[#allocation3 + $0x290] sm:$0xf] %v1501
        %1518 = vst [vmem:[#allocation3 + $0x2f4] sm:$0xff] %v1502
        %1519 = vst [vmem:[#allocation3 + $0x2fc] sm:$0xf] %v1503
        %v1520 = vld [vmem:[#allocation2] sm:$0xff]
        %v1521 = vld [vmem:[#allocation2 + $0x8] sm:$0xf]
        %v1522 = vld [vmem:[#allocation2 + $0xc] sm:$0x11]
        %v1523 = vld [vmem:[#allocation2 + $0x14] sm:$0x1]
        %v1524 = vld [vmem:[#allocation2 + $0x18] sm:$0xff]
        %v1525 = vld [vmem:[#allocation2 + $0x20] sm:$0xf]
        %v1526 = vld [vmem:[#allocation2 + $0x24] sm:$0x11]
        %v1527 = vld [vmem:[#allocation2 + $0x2c] sm:$0x1]
        %v1528 = vld [vmem:[#allocation2 + $0x30] sm:$0xff]
        %v1529 = vld [vmem:[#allocation2 + $0x38] sm:$0xf]
        %v1530 = vld [vmem:[#allocation2 + $0x3c] sm:$0x11]
        %v1531 = vld [vmem:[#allocation2 + $0x44] sm:$0x1]
        %v1532 = vld [vmem:[#allocation2 + $0x48] sm:$0xff]
        %v1533 = vld [vmem:[#allocation2 + $0x50] sm:$0xf]
        %v1534 = vld [vmem:[#allocation2 + $0x54] sm:$0x11]
        %v1535 = vld [vmem:[#allocation2 + $0x5c] sm:$0x1]
        %v1536 = vld [vmem:[#allocation2 + $0x60] sm:$0xff]
        %v1537 = vld [vmem:[#allocation2 + $0x68] sm:$0xf]
        %v1538 = vld [vmem:[#allocation2 + $0x6c] sm:$0x11]
        %v1539 = vld [vmem:[#allocation2 + $0x74] sm:$0x1]
        %v1540 = vld [vmem:[#allocation2 + $0x78] sm:$0xff]
        %v1541 = vld [vmem:[#allocation2 + $0x80] sm:$0xf]
        %v1542 = vld [vmem:[#allocation2 + $0x84] sm:$0x11]
        %v1543 = vld [vmem:[#allocation2 + $0x8c] sm:$0x1]
        %v1544 = vld [vmem:[#allocation2 + $0x90] sm:$0xff]
        %v1545 = vld [vmem:[#allocation2 + $0x98] sm:$0xf]
        %v1546 = vld [vmem:[#allocation2 + $0x9c] sm:$0x11]
        %v1547 = vld [vmem:[#allocation2 + $0xa4] sm:$0x1]
        %v1548 = vld [vmem:[#allocation2 + $0xa8] sm:$0xff]
        %v1549 = vld [vmem:[#allocation2 + $0xb0] sm:$0xf]
        %v1550 = vld [vmem:[#allocation2 + $0xb4] sm:$0x11]
        %v1551 = vld [vmem:[#allocation2 + $0xbc] sm:$0x1]
        %vm1552 = vsmask.f32 3328
        %vm1553 = vsmask.f32 7440
        %vm1554 = vmor %vm1552, %vm1553
        %v1556 = vshrl.u32 %v1520, 16
        %v1558 = vrot.slane %v1556, 4
        %v1559 = vshll.u32 %v1520, 16
        %v1561 = vrot.slane %v1559, 5
        %v1562 = vor.u32 %v1558, %v1561
        %v1563 = vrot.slane %v1562, 4
        %v1565 = vshll.u32 %v1522, 16
        %v1567 = vrot.slane %v1565, 5
        %v1568 = vsel %vm1554, %v1563, %v1567
        %v1570 = vshrl.u32 %v1521, 16
        %v1572 = vrot.slane %v1570, 4
        %v1573 = vshll.u32 %v1521, 16
        %v1575 = vrot.slane %v1573, 5
        %v1576 = vor.u32 %v1572, %v1575
        %v1577 = vrot.slane %v1576, 4
        %v1579 = vshll.u32 %v1523, 16
        %v1581 = vrot.slane %v1579, 5
        %v1582 = vsel %vm1554, %v1577, %v1581
        %v1584 = vshrl.u32 %v1524, 16
        %v1586 = vrot.slane %v1584, 4
        %v1587 = vshll.u32 %v1524, 16
        %v1589 = vrot.slane %v1587, 5
        %v1590 = vor.u32 %v1586, %v1589
        %v1591 = vrot.slane %v1590, 4
        %v1593 = vshll.u32 %v1526, 16
        %v1595 = vrot.slane %v1593, 5
        %v1596 = vsel %vm1554, %v1591, %v1595
        %v1598 = vshrl.u32 %v1525, 16
        %v1600 = vrot.slane %v1598, 4
        %v1601 = vshll.u32 %v1525, 16
        %v1603 = vrot.slane %v1601, 5
        %v1604 = vor.u32 %v1600, %v1603
        %v1605 = vrot.slane %v1604, 4
        %v1607 = vshll.u32 %v1527, 16
        %v1609 = vrot.slane %v1607, 5
        %v1610 = vsel %vm1554, %v1605, %v1609
        %v1612 = vshrl.u32 %v1528, 16
        %v1614 = vrot.slane %v1612, 4
        %v1615 = vshll.u32 %v1528, 16
        %v1617 = vrot.slane %v1615, 5
        %v1618 = vor.u32 %v1614, %v1617
        %v1619 = vrot.slane %v1618, 4
        %v1621 = vshll.u32 %v1530, 16
        %v1623 = vrot.slane %v1621, 5
        %v1624 = vsel %vm1554, %v1619, %v1623
        %v1626 = vshrl.u32 %v1529, 16
        %v1628 = vrot.slane %v1626, 4
        %v1629 = vshll.u32 %v1529, 16
        %v1631 = vrot.slane %v1629, 5
        %v1632 = vor.u32 %v1628, %v1631
        %v1633 = vrot.slane %v1632, 4
        %v1635 = vshll.u32 %v1531, 16
        %v1637 = vrot.slane %v1635, 5
        %v1638 = vsel %vm1554, %v1633, %v1637
        %v1640 = vshrl.u32 %v1532, 16
        %v1642 = vrot.slane %v1640, 4
        %v1643 = vshll.u32 %v1532, 16
        %v1645 = vrot.slane %v1643, 5
        %v1646 = vor.u32 %v1642, %v1645
        %v1647 = vrot.slane %v1646, 4
        %v1649 = vshll.u32 %v1534, 16
        %v1651 = vrot.slane %v1649, 5
        %v1652 = vsel %vm1554, %v1647, %v1651
        %v1654 = vshrl.u32 %v1533, 16
        %v1656 = vrot.slane %v1654, 4
        %v1657 = vshll.u32 %v1533, 16
        %v1659 = vrot.slane %v1657, 5
        %v1660 = vor.u32 %v1656, %v1659
        %v1661 = vrot.slane %v1660, 4
        %v1663 = vshll.u32 %v1535, 16
        %v1665 = vrot.slane %v1663, 5
        %v1666 = vsel %vm1554, %v1661, %v1665
        %v1668 = vshrl.u32 %v1536, 16
        %v1670 = vrot.slane %v1668, 4
        %v1671 = vshll.u32 %v1536, 16
        %v1673 = vrot.slane %v1671, 5
        %v1674 = vor.u32 %v1670, %v1673
        %v1675 = vrot.slane %v1674, 4
        %v1677 = vshll.u32 %v1538, 16
        %v1679 = vrot.slane %v1677, 5
        %v1680 = vsel %vm1554, %v1675, %v1679
        %v1682 = vshrl.u32 %v1537, 16
        %v1684 = vrot.slane %v1682, 4
        %v1685 = vshll.u32 %v1537, 16
        %v1687 = vrot.slane %v1685, 5
        %v1688 = vor.u32 %v1684, %v1687
        %v1689 = vrot.slane %v1688, 4
        %v1691 = vshll.u32 %v1539, 16
        %v1693 = vrot.slane %v1691, 5
        %v1694 = vsel %vm1554, %v1689, %v1693
        %v1696 = vshrl.u32 %v1540, 16
        %v1698 = vrot.slane %v1696, 4
        %v1699 = vshll.u32 %v1540, 16
        %v1701 = vrot.slane %v1699, 5
        %v1702 = vor.u32 %v1698, %v1701
        %v1703 = vrot.slane %v1702, 4
        %v1705 = vshll.u32 %v1542, 16
        %v1707 = vrot.slane %v1705, 5
        %v1708 = vsel %vm1554, %v1703, %v1707
        %v1710 = vshrl.u32 %v1541, 16
        %v1712 = vrot.slane %v1710, 4
        %v1713 = vshll.u32 %v1541, 16
        %v1715 = vrot.slane %v1713, 5
        %v1716 = vor.u32 %v1712, %v1715
        %v1717 = vrot.slane %v1716, 4
        %v1719 = vshll.u32 %v1543, 16
        %v1721 = vrot.slane %v1719, 5
        %v1722 = vsel %vm1554, %v1717, %v1721
        %v1724 = vshrl.u32 %v1544, 16
        %v1726 = vrot.slane %v1724, 4
        %v1727 = vshll.u32 %v1544, 16
        %v1729 = vrot.slane %v1727, 5
        %v1730 = vor.u32 %v1726, %v1729
        %v1731 = vrot.slane %v1730, 4
        %v1733 = vshll.u32 %v1546, 16
        %v1735 = vrot.slane %v1733, 5
        %v1736 = vsel %vm1554, %v1731, %v1735
        %v1738 = vshrl.u32 %v1545, 16
        %v1740 = vrot.slane %v1738, 4
        %v1741 = vshll.u32 %v1545, 16
        %v1743 = vrot.slane %v1741, 5
        %v1744 = vor.u32 %v1740, %v1743
        %v1745 = vrot.slane %v1744, 4
        %v1747 = vshll.u32 %v1547, 16
        %v1749 = vrot.slane %v1747, 5
        %v1750 = vsel %vm1554, %v1745, %v1749
        %v1752 = vshrl.u32 %v1548, 16
        %v1754 = vrot.slane %v1752, 4
        %v1755 = vshll.u32 %v1548, 16
        %v1757 = vrot.slane %v1755, 5
        %v1758 = vor.u32 %v1754, %v1757
        %v1759 = vrot.slane %v1758, 4
        %v1761 = vshll.u32 %v1550, 16
        %v1763 = vrot.slane %v1761, 5
        %v1764 = vsel %vm1554, %v1759, %v1763
        %v1766 = vshrl.u32 %v1549, 16
        %v1768 = vrot.slane %v1766, 4
        %v1769 = vshll.u32 %v1549, 16
        %v1771 = vrot.slane %v1769, 5
        %v1772 = vor.u32 %v1768, %v1771
        %v1773 = vrot.slane %v1772, 4
        %v1775 = vshll.u32 %v1551, 16
        %v1777 = vrot.slane %v1775, 5
        %v1778 = vsel %vm1554, %v1773, %v1777
        %1795 = vst [vmem:[#allocation3 + $0xc] sm:$0xff] %v1568
        %1796 = vst [vmem:[#allocation3 + $0x14] sm:$0xf] %v1582
        %1797 = vst [vmem:[#allocation3 + $0x78] sm:$0xff] %v1596
        %1798 = vst [vmem:[#allocation3 + $0x80] sm:$0xf] %v1610
        %1799 = vst [vmem:[#allocation3 + $0xe4] sm:$0xff] %v1624
        %1800 = vst [vmem:[#allocation3 + $0xec] sm:$0xf] %v1638
        %1801 = vst [vmem:[#allocation3 + $0x150] sm:$0xff] %v1652
        %1802 = vst [vmem:[#allocation3 + $0x158] sm:$0xf] %v1666
        %1803 = vst [vmem:[#allocation3 + $0x1bc] sm:$0xff] %v1680
        %1804 = vst [vmem:[#allocation3 + $0x1c4] sm:$0xf] %v1694
        %1805 = vst [vmem:[#allocation3 + $0x228] sm:$0xff] %v1708
        %1806 = vst [vmem:[#allocation3 + $0x230] sm:$0xf] %v1722
        %1807 = vst [vmem:[#allocation3 + $0x294] sm:$0xff] %v1736
        %1808 = vst [vmem:[#allocation3 + $0x29c] sm:$0xf] %v1750
        %1809 = vst [vmem:[#allocation3 + $0x300] sm:$0xff] %v1764
        %1810 = vst [vmem:[#allocation3 + $0x308] sm:$0xf] %v1778
        %v1811 = vld [vmem:[#allocation2] sm:$0xee]
        %v1812 = vld [vmem:[#allocation2 + $0x8] sm:$0xe]
        %v1813 = vld [vmem:[#allocation2 + $0xc] sm:$0x11]
        %v1814 = vld [vmem:[#allocation2 + $0x14] sm:$0x1]
        %v1815 = vld [vmem:[#allocation2 + $0x18] sm:$0xee]
        %v1816 = vld [vmem:[#allocation2 + $0x20] sm:$0xe]
        %v1817 = vld [vmem:[#allocation2 + $0x24] sm:$0x11]
        %v1818 = vld [vmem:[#allocation2 + $0x2c] sm:$0x1]
        %v1819 = vld [vmem:[#allocation2 + $0x30] sm:$0xee]
        %v1820 = vld [vmem:[#allocation2 + $0x38] sm:$0xe]
        %v1821 = vld [vmem:[#allocation2 + $0x3c] sm:$0x11]
        %v1822 = vld [vmem:[#allocation2 + $0x44] sm:$0x1]
        %v1823 = vld [vmem:[#allocation2 + $0x48] sm:$0xee]
        %v1824 = vld [vmem:[#allocation2 + $0x50] sm:$0xe]
        %v1825 = vld [vmem:[#allocation2 + $0x54] sm:$0x11]
        %v1826 = vld [vmem:[#allocation2 + $0x5c] sm:$0x1]
        %v1827 = vld [vmem:[#allocation2 + $0x60] sm:$0xee]
        %v1828 = vld [vmem:[#allocation2 + $0x68] sm:$0xe]
        %v1829 = vld [vmem:[#allocation2 + $0x6c] sm:$0x11]
        %v1830 = vld [vmem:[#allocation2 + $0x74] sm:$0x1]
        %v1831 = vld [vmem:[#allocation2 + $0x78] sm:$0xee]
        %v1832 = vld [vmem:[#allocation2 + $0x80] sm:$0xe]
        %v1833 = vld [vmem:[#allocation2 + $0x84] sm:$0x11]
        %v1834 = vld [vmem:[#allocation2 + $0x8c] sm:$0x1]
        %v1835 = vld [vmem:[#allocation2 + $0x90] sm:$0xee]
        %v1836 = vld [vmem:[#allocation2 + $0x98] sm:$0xe]
        %v1837 = vld [vmem:[#allocation2 + $0x9c] sm:$0x11]
        %v1838 = vld [vmem:[#allocation2 + $0xa4] sm:$0x1]
        %v1839 = vld [vmem:[#allocation2 + $0xa8] sm:$0xee]
        %v1840 = vld [vmem:[#allocation2 + $0xb0] sm:$0xe]
        %v1841 = vld [vmem:[#allocation2 + $0xb4] sm:$0x11]
        %v1842 = vld [vmem:[#allocation2 + $0xbc] sm:$0x1]
        %vm1875 = vcmask 1042432
        %vm1876 = vcmask 1046532
        %vm1877 = vmor %vm1875, %vm1876
        %v1878 = vrot.slane %v1811, 5
        %v1879 = vrot.slane %v1878, 4
        %v1880 = vrot.slane %v1813, 5
        %v1881 = vsel %vm1877, %v1879, %v1880
        %v1882 = vrot.slane %v1812, 5
        %v1883 = vrot.slane %v1882, 4
        %v1884 = vrot.slane %v1814, 5
        %v1885 = vsel %vm1877, %v1883, %v1884
        %v1886 = vrot.slane %v1815, 5
        %v1887 = vrot.slane %v1886, 4
        %v1888 = vrot.slane %v1817, 5
        %v1889 = vsel %vm1877, %v1887, %v1888
        %v1890 = vrot.slane %v1816, 5
        %v1891 = vrot.slane %v1890, 4
        %v1892 = vrot.slane %v1818, 5
        %v1893 = vsel %vm1877, %v1891, %v1892
        %v1894 = vrot.slane %v1819, 5
        %v1895 = vrot.slane %v1894, 4
        %v1896 = vrot.slane %v1821, 5
        %v1897 = vsel %vm1877, %v1895, %v1896
        %v1898 = vrot.slane %v1820, 5
        %v1899 = vrot.slane %v1898, 4
        %v1900 = vrot.slane %v1822, 5
        %v1901 = vsel %vm1877, %v1899, %v1900
        %v1902 = vrot.slane %v1823, 5
        %v1903 = vrot.slane %v1902, 4
        %v1904 = vrot.slane %v1825, 5
        %v1905 = vsel %vm1877, %v1903, %v1904
        %v1906 = vrot.slane %v1824, 5
        %v1907 = vrot.slane %v1906, 4
        %v1908 = vrot.slane %v1826, 5
        %v1909 = vsel %vm1877, %v1907, %v1908
        %v1910 = vrot.slane %v1827, 5
        %v1911 = vrot.slane %v1910, 4
        %v1912 = vrot.slane %v1829, 5
        %v1913 = vsel %vm1877, %v1911, %v1912
        %v1914 = vrot.slane %v1828, 5
        %v1915 = vrot.slane %v1914, 4
        %v1916 = vrot.slane %v1830, 5
        %v1917 = vsel %vm1877, %v1915, %v1916
        %v1918 = vrot.slane %v1831, 5
        %v1919 = vrot.slane %v1918, 4
        %v1920 = vrot.slane %v1833, 5
        %v1921 = vsel %vm1877, %v1919, %v1920
        %v1922 = vrot.slane %v1832, 5
        %v1923 = vrot.slane %v1922, 4
        %v1924 = vrot.slane %v1834, 5
        %v1925 = vsel %vm1877, %v1923, %v1924
        %v1926 = vrot.slane %v1835, 5
        %v1927 = vrot.slane %v1926, 4
        %v1928 = vrot.slane %v1837, 5
        %v1929 = vsel %vm1877, %v1927, %v1928
        %v1930 = vrot.slane %v1836, 5
        %v1931 = vrot.slane %v1930, 4
        %v1932 = vrot.slane %v1838, 5
        %v1933 = vsel %vm1877, %v1931, %v1932
        %v1934 = vrot.slane %v1839, 5
        %v1935 = vrot.slane %v1934, 4
        %v1936 = vrot.slane %v1841, 5
        %v1937 = vsel %vm1877, %v1935, %v1936
        %v1938 = vrot.slane %v1840, 5
        %v1939 = vrot.slane %v1938, 4
        %v1940 = vrot.slane %v1842, 5
        %v1941 = vsel %vm1877, %v1939, %v1940
        %1958 = vst [vmem:[#allocation3 + $0x18] sm:$0xff] %v1881
        %1959 = vst [vmem:[#allocation3 + $0x20] sm:$0xf] %v1885
        %1960 = vst [vmem:[#allocation3 + $0x84] sm:$0xff] %v1889
        %1961 = vst [vmem:[#allocation3 + $0x8c] sm:$0xf] %v1893
        %1962 = vst [vmem:[#allocation3 + $0xf0] sm:$0xff] %v1897
        %1963 = vst [vmem:[#allocation3 + $0xf8] sm:$0xf] %v1901
        %1964 = vst [vmem:[#allocation3 + $0x15c] sm:$0xff] %v1905
        %1965 = vst [vmem:[#allocation3 + $0x164] sm:$0xf] %v1909
        %1966 = vst [vmem:[#allocation3 + $0x1c8] sm:$0xff] %v1913
        %1967 = vst [vmem:[#allocation3 + $0x1d0] sm:$0xf] %v1917
        %1968 = vst [vmem:[#allocation3 + $0x234] sm:$0xff] %v1921
        %1969 = vst [vmem:[#allocation3 + $0x23c] sm:$0xf] %v1925
        %1970 = vst [vmem:[#allocation3 + $0x2a0] sm:$0xff] %v1929
        %1971 = vst [vmem:[#allocation3 + $0x2a8] sm:$0xf] %v1933
        %1972 = vst [vmem:[#allocation3 + $0x30c] sm:$0xff] %v1937
        %1973 = vst [vmem:[#allocation3 + $0x314] sm:$0xf] %v1941
        %v1974 = vld [vmem:[%s965] sm:$0xff]
        %v1975 = vld [vmem:[%s965 + $0x8] sm:$0xf]
        %v1976 = vld [vmem:[%s965 + $0x18] sm:$0xff]
        %v1977 = vld [vmem:[%s965 + $0x20] sm:$0xf]
        %v1978 = vld [vmem:[%s965 + $0x30] sm:$0xff]
        %v1979 = vld [vmem:[%s965 + $0x38] sm:$0xf]
        %v1980 = vld [vmem:[%s965 + $0x48] sm:$0xff]
        %v1981 = vld [vmem:[%s965 + $0x50] sm:$0xf]
        %v1982 = vld [vmem:[%s965 + $0x60] sm:$0xff]
        %v1983 = vld [vmem:[%s965 + $0x68] sm:$0xf]
        %v1984 = vld [vmem:[%s965 + $0x78] sm:$0xff]
        %v1985 = vld [vmem:[%s965 + $0x80] sm:$0xf]
        %v1986 = vld [vmem:[%s965 + $0x90] sm:$0xff]
        %v1987 = vld [vmem:[%s965 + $0x98] sm:$0xf]
        %v1988 = vld [vmem:[%s965 + $0xa8] sm:$0xff]
        %v1989 = vld [vmem:[%s965 + $0xb0] sm:$0xf]
        %1990 = vst [vmem:[#allocation3 + $0x24] sm:$0xff] %v1974
        %1991 = vst [vmem:[#allocation3 + $0x2c] sm:$0xf] %v1975
        %1992 = vst [vmem:[#allocation3 + $0x90] sm:$0xff] %v1976
        %1993 = vst [vmem:[#allocation3 + $0x98] sm:$0xf] %v1977
        %1994 = vst [vmem:[#allocation3 + $0xfc] sm:$0xff] %v1978
        %1995 = vst [vmem:[#allocation3 + $0x104] sm:$0xf] %v1979
        %1996 = vst [vmem:[#allocation3 + $0x168] sm:$0xff] %v1980
        %1997 = vst [vmem:[#allocation3 + $0x170] sm:$0xf] %v1981
        %1998 = vst [vmem:[#allocation3 + $0x1d4] sm:$0xff] %v1982
        %1999 = vst [vmem:[#allocation3 + $0x1dc] sm:$0xf] %v1983
        %2000 = vst [vmem:[#allocation3 + $0x240] sm:$0xff] %v1984
        %2001 = vst [vmem:[#allocation3 + $0x248] sm:$0xf] %v1985
        %2002 = vst [vmem:[#allocation3 + $0x2ac] sm:$0xff] %v1986
        %2003 = vst [vmem:[#allocation3 + $0x2b4] sm:$0xf] %v1987
        %2004 = vst [vmem:[#allocation3 + $0x318] sm:$0xff] %v1988
        %2005 = vst [vmem:[#allocation3 + $0x320] sm:$0xf] %v1989
        %v2006 = vld [vmem:[%s965] sm:$0xff]
        %v2007 = vld [vmem:[%s965 + $0x8] sm:$0xf]
        %v2008 = vld [vmem:[%s965 + $0xc] sm:$0x11]
        %v2009 = vld [vmem:[%s965 + $0x14] sm:$0x1]
        %v2010 = vld [vmem:[%s965 + $0x18] sm:$0xff]
        %v2011 = vld [vmem:[%s965 + $0x20] sm:$0xf]
        %v2012 = vld [vmem:[%s965 + $0x24] sm:$0x11]
        %v2013 = vld [vmem:[%s965 + $0x2c] sm:$0x1]
        %v2014 = vld [vmem:[%s965 + $0x30] sm:$0xff]
        %v2015 = vld [vmem:[%s965 + $0x38] sm:$0xf]
        %v2016 = vld [vmem:[%s965 + $0x3c] sm:$0x11]
        %v2017 = vld [vmem:[%s965 + $0x44] sm:$0x1]
        %v2018 = vld [vmem:[%s965 + $0x48] sm:$0xff]
        %v2019 = vld [vmem:[%s965 + $0x50] sm:$0xf]
        %v2020 = vld [vmem:[%s965 + $0x54] sm:$0x11]
        %v2021 = vld [vmem:[%s965 + $0x5c] sm:$0x1]
        %v2022 = vld [vmem:[%s965 + $0x60] sm:$0xff]
        %v2023 = vld [vmem:[%s965 + $0x68] sm:$0xf]
        %v2024 = vld [vmem:[%s965 + $0x6c] sm:$0x11]
        %v2025 = vld [vmem:[%s965 + $0x74] sm:$0x1]
        %v2026 = vld [vmem:[%s965 + $0x78] sm:$0xff]
        %v2027 = vld [vmem:[%s965 + $0x80] sm:$0xf]
        %v2028 = vld [vmem:[%s965 + $0x84] sm:$0x11]
        %v2029 = vld [vmem:[%s965 + $0x8c] sm:$0x1]
        %v2030 = vld [vmem:[%s965 + $0x90] sm:$0xff]
        %v2031 = vld [vmem:[%s965 + $0x98] sm:$0xf]
        %v2032 = vld [vmem:[%s965 + $0x9c] sm:$0x11]
        %v2033 = vld [vmem:[%s965 + $0xa4] sm:$0x1]
        %v2034 = vld [vmem:[%s965 + $0xa8] sm:$0xff]
        %v2035 = vld [vmem:[%s965 + $0xb0] sm:$0xf]
        %v2036 = vld [vmem:[%s965 + $0xb4] sm:$0x11]
        %v2037 = vld [vmem:[%s965 + $0xbc] sm:$0x1]
        %v2039 = vshrl.u32 %v2006, 16
        %v2041 = vrot.slane %v2039, 4
        %v2042 = vshll.u32 %v2006, 16
        %v2044 = vrot.slane %v2042, 5
        %v2045 = vor.u32 %v2041, %v2044
        %v2046 = vrot.slane %v2045, 4
        %v2048 = vshll.u32 %v2008, 16
        %v2050 = vrot.slane %v2048, 5
        %v2051 = vsel %vm1554, %v2046, %v2050
        %v2053 = vshrl.u32 %v2007, 16
        %v2055 = vrot.slane %v2053, 4
        %v2056 = vshll.u32 %v2007, 16
        %v2058 = vrot.slane %v2056, 5
        %v2059 = vor.u32 %v2055, %v2058
        %v2060 = vrot.slane %v2059, 4
        %v2062 = vshll.u32 %v2009, 16
        %v2064 = vrot.slane %v2062, 5
        %v2065 = vsel %vm1554, %v2060, %v2064
        %v2067 = vshrl.u32 %v2010, 16
        %v2069 = vrot.slane %v2067, 4
        %v2070 = vshll.u32 %v2010, 16
        %v2072 = vrot.slane %v2070, 5
        %v2073 = vor.u32 %v2069, %v2072
        %v2074 = vrot.slane %v2073, 4
        %v2076 = vshll.u32 %v2012, 16
        %v2078 = vrot.slane %v2076, 5
        %v2079 = vsel %vm1554, %v2074, %v2078
        %v2081 = vshrl.u32 %v2011, 16
        %v2083 = vrot.slane %v2081, 4
        %v2084 = vshll.u32 %v2011, 16
        %v2086 = vrot.slane %v2084, 5
        %v2087 = vor.u32 %v2083, %v2086
        %v2088 = vrot.slane %v2087, 4
        %v2090 = vshll.u32 %v2013, 16
        %v2092 = vrot.slane %v2090, 5
        %v2093 = vsel %vm1554, %v2088, %v2092
        %v2095 = vshrl.u32 %v2014, 16
        %v2097 = vrot.slane %v2095, 4
        %v2098 = vshll.u32 %v2014, 16
        %v2100 = vrot.slane %v2098, 5
        %v2101 = vor.u32 %v2097, %v2100
        %v2102 = vrot.slane %v2101, 4
        %v2104 = vshll.u32 %v2016, 16
        %v2106 = vrot.slane %v2104, 5
        %v2107 = vsel %vm1554, %v2102, %v2106
        %v2109 = vshrl.u32 %v2015, 16
        %v2111 = vrot.slane %v2109, 4
        %v2112 = vshll.u32 %v2015, 16
        %v2114 = vrot.slane %v2112, 5
        %v2115 = vor.u32 %v2111, %v2114
        %v2116 = vrot.slane %v2115, 4
        %v2118 = vshll.u32 %v2017, 16
        %v2120 = vrot.slane %v2118, 5
        %v2121 = vsel %vm1554, %v2116, %v2120
        %v2123 = vshrl.u32 %v2018, 16
        %v2125 = vrot.slane %v2123, 4
        %v2126 = vshll.u32 %v2018, 16
        %v2128 = vrot.slane %v2126, 5
        %v2129 = vor.u32 %v2125, %v2128
        %v2130 = vrot.slane %v2129, 4
        %v2132 = vshll.u32 %v2020, 16
        %v2134 = vrot.slane %v2132, 5
        %v2135 = vsel %vm1554, %v2130, %v2134
        %v2137 = vshrl.u32 %v2019, 16
        %v2139 = vrot.slane %v2137, 4
        %v2140 = vshll.u32 %v2019, 16
        %v2142 = vrot.slane %v2140, 5
        %v2143 = vor.u32 %v2139, %v2142
        %v2144 = vrot.slane %v2143, 4
        %v2146 = vshll.u32 %v2021, 16
        %v2148 = vrot.slane %v2146, 5
        %v2149 = vsel %vm1554, %v2144, %v2148
        %v2151 = vshrl.u32 %v2022, 16
        %v2153 = vrot.slane %v2151, 4
        %v2154 = vshll.u32 %v2022, 16
        %v2156 = vrot.slane %v2154, 5
        %v2157 = vor.u32 %v2153, %v2156
        %v2158 = vrot.slane %v2157, 4
        %v2160 = vshll.u32 %v2024, 16
        %v2162 = vrot.slane %v2160, 5
        %v2163 = vsel %vm1554, %v2158, %v2162
        %v2165 = vshrl.u32 %v2023, 16
        %v2167 = vrot.slane %v2165, 4
        %v2168 = vshll.u32 %v2023, 16
        %v2170 = vrot.slane %v2168, 5
        %v2171 = vor.u32 %v2167, %v2170
        %v2172 = vrot.slane %v2171, 4
        %v2174 = vshll.u32 %v2025, 16
        %v2176 = vrot.slane %v2174, 5
        %v2177 = vsel %vm1554, %v2172, %v2176
        %v2179 = vshrl.u32 %v2026, 16
        %v2181 = vrot.slane %v2179, 4
        %v2182 = vshll.u32 %v2026, 16
        %v2184 = vrot.slane %v2182, 5
        %v2185 = vor.u32 %v2181, %v2184
        %v2186 = vrot.slane %v2185, 4
        %v2188 = vshll.u32 %v2028, 16
        %v2190 = vrot.slane %v2188, 5
        %v2191 = vsel %vm1554, %v2186, %v2190
        %v2193 = vshrl.u32 %v2027, 16
        %v2195 = vrot.slane %v2193, 4
        %v2196 = vshll.u32 %v2027, 16
        %v2198 = vrot.slane %v2196, 5
        %v2199 = vor.u32 %v2195, %v2198
        %v2200 = vrot.slane %v2199, 4
        %v2202 = vshll.u32 %v2029, 16
        %v2204 = vrot.slane %v2202, 5
        %v2205 = vsel %vm1554, %v2200, %v2204
        %v2207 = vshrl.u32 %v2030, 16
        %v2209 = vrot.slane %v2207, 4
        %v2210 = vshll.u32 %v2030, 16
        %v2212 = vrot.slane %v2210, 5
        %v2213 = vor.u32 %v2209, %v2212
        %v2214 = vrot.slane %v2213, 4
        %v2216 = vshll.u32 %v2032, 16
        %v2218 = vrot.slane %v2216, 5
        %v2219 = vsel %vm1554, %v2214, %v2218
        %v2221 = vshrl.u32 %v2031, 16
        %v2223 = vrot.slane %v2221, 4
        %v2224 = vshll.u32 %v2031, 16
        %v2226 = vrot.slane %v2224, 5
        %v2227 = vor.u32 %v2223, %v2226
        %v2228 = vrot.slane %v2227, 4
        %v2230 = vshll.u32 %v2033, 16
        %v2232 = vrot.slane %v2230, 5
        %v2233 = vsel %vm1554, %v2228, %v2232
        %v2235 = vshrl.u32 %v2034, 16
        %v2237 = vrot.slane %v2235, 4
        %v2238 = vshll.u32 %v2034, 16
        %v2240 = vrot.slane %v2238, 5
        %v2241 = vor.u32 %v2237, %v2240
        %v2242 = vrot.slane %v2241, 4
        %v2244 = vshll.u32 %v2036, 16
        %v2246 = vrot.slane %v2244, 5
        %v2247 = vsel %vm1554, %v2242, %v2246
        %v2249 = vshrl.u32 %v2035, 16
        %v2251 = vrot.slane %v2249, 4
        %v2252 = vshll.u32 %v2035, 16
        %v2254 = vrot.slane %v2252, 5
        %v2255 = vor.u32 %v2251, %v2254
        %v2256 = vrot.slane %v2255, 4
        %v2258 = vshll.u32 %v2037, 16
        %v2260 = vrot.slane %v2258, 5
        %v2261 = vsel %vm1554, %v2256, %v2260
        %2278 = vst [vmem:[#allocation3 + $0x30] sm:$0xff] %v2051
        %2279 = vst [vmem:[#allocation3 + $0x38] sm:$0xf] %v2065
        %2280 = vst [vmem:[#allocation3 + $0x9c] sm:$0xff] %v2079
        %2281 = vst [vmem:[#allocation3 + $0xa4] sm:$0xf] %v2093
        %2282 = vst [vmem:[#allocation3 + $0x108] sm:$0xff] %v2107
        %2283 = vst [vmem:[#allocation3 + $0x110] sm:$0xf] %v2121
        %2284 = vst [vmem:[#allocation3 + $0x174] sm:$0xff] %v2135
        %2285 = vst [vmem:[#allocation3 + $0x17c] sm:$0xf] %v2149
        %2286 = vst [vmem:[#allocation3 + $0x1e0] sm:$0xff] %v2163
        %2287 = vst [vmem:[#allocation3 + $0x1e8] sm:$0xf] %v2177
        %2288 = vst [vmem:[#allocation3 + $0x24c] sm:$0xff] %v2191
        %2289 = vst [vmem:[#allocation3 + $0x254] sm:$0xf] %v2205
        %2290 = vst [vmem:[#allocation3 + $0x2b8] sm:$0xff] %v2219
        %2291 = vst [vmem:[#allocation3 + $0x2c0] sm:$0xf] %v2233
        %2292 = vst [vmem:[#allocation3 + $0x324] sm:$0xff] %v2247
        %2293 = vst [vmem:[#allocation3 + $0x32c] sm:$0xf] %v2261
        %v2294 = vld [vmem:[%s965] sm:$0xee]
        %v2295 = vld [vmem:[%s965 + $0x8] sm:$0xe]
        %v2296 = vld [vmem:[%s965 + $0xc] sm:$0x11]
        %v2297 = vld [vmem:[%s965 + $0x14] sm:$0x1]
        %v2298 = vld [vmem:[%s965 + $0x18] sm:$0xee]
        %v2299 = vld [vmem:[%s965 + $0x20] sm:$0xe]
        %v2300 = vld [vmem:[%s965 + $0x24] sm:$0x11]
        %v2301 = vld [vmem:[%s965 + $0x2c] sm:$0x1]
        %v2302 = vld [vmem:[%s965 + $0x30] sm:$0xee]
        %v2303 = vld [vmem:[%s965 + $0x38] sm:$0xe]
        %v2304 = vld [vmem:[%s965 + $0x3c] sm:$0x11]
        %v2305 = vld [vmem:[%s965 + $0x44] sm:$0x1]
        %v2306 = vld [vmem:[%s965 + $0x48] sm:$0xee]
        %v2307 = vld [vmem:[%s965 + $0x50] sm:$0xe]
        %v2308 = vld [vmem:[%s965 + $0x54] sm:$0x11]
        %v2309 = vld [vmem:[%s965 + $0x5c] sm:$0x1]
        %v2310 = vld [vmem:[%s965 + $0x60] sm:$0xee]
        %v2311 = vld [vmem:[%s965 + $0x68] sm:$0xe]
        %v2312 = vld [vmem:[%s965 + $0x6c] sm:$0x11]
        %v2313 = vld [vmem:[%s965 + $0x74] sm:$0x1]
        %v2314 = vld [vmem:[%s965 + $0x78] sm:$0xee]
        %v2315 = vld [vmem:[%s965 + $0x80] sm:$0xe]
        %v2316 = vld [vmem:[%s965 + $0x84] sm:$0x11]
        %v2317 = vld [vmem:[%s965 + $0x8c] sm:$0x1]
        %v2318 = vld [vmem:[%s965 + $0x90] sm:$0xee]
        %v2319 = vld [vmem:[%s965 + $0x98] sm:$0xe]
        %v2320 = vld [vmem:[%s965 + $0x9c] sm:$0x11]
        %v2321 = vld [vmem:[%s965 + $0xa4] sm:$0x1]
        %v2322 = vld [vmem:[%s965 + $0xa8] sm:$0xee]
        %v2323 = vld [vmem:[%s965 + $0xb0] sm:$0xe]
        %v2324 = vld [vmem:[%s965 + $0xb4] sm:$0x11]
        %v2325 = vld [vmem:[%s965 + $0xbc] sm:$0x1]
        %v2358 = vrot.slane %v2294, 5
        %v2359 = vrot.slane %v2358, 4
        %v2360 = vrot.slane %v2296, 5
        %v2361 = vsel %vm1877, %v2359, %v2360
        %v2362 = vrot.slane %v2295, 5
        %v2363 = vrot.slane %v2362, 4
        %v2364 = vrot.slane %v2297, 5
        %v2365 = vsel %vm1877, %v2363, %v2364
        %v2366 = vrot.slane %v2298, 5
        %v2367 = vrot.slane %v2366, 4
        %v2368 = vrot.slane %v2300, 5
        %v2369 = vsel %vm1877, %v2367, %v2368
        %v2370 = vrot.slane %v2299, 5
        %v2371 = vrot.slane %v2370, 4
        %v2372 = vrot.slane %v2301, 5
        %v2373 = vsel %vm1877, %v2371, %v2372
        %v2374 = vrot.slane %v2302, 5
        %v2375 = vrot.slane %v2374, 4
        %v2376 = vrot.slane %v2304, 5
        %v2377 = vsel %vm1877, %v2375, %v2376
        %v2378 = vrot.slane %v2303, 5
        %v2379 = vrot.slane %v2378, 4
        %v2380 = vrot.slane %v2305, 5
        %v2381 = vsel %vm1877, %v2379, %v2380
        %v2382 = vrot.slane %v2306, 5
        %v2383 = vrot.slane %v2382, 4
        %v2384 = vrot.slane %v2308, 5
        %v2385 = vsel %vm1877, %v2383, %v2384
        %v2386 = vrot.slane %v2307, 5
        %v2387 = vrot.slane %v2386, 4
        %v2388 = vrot.slane %v2309, 5
        %v2389 = vsel %vm1877, %v2387, %v2388
        %v2390 = vrot.slane %v2310, 5
        %v2391 = vrot.slane %v2390, 4
        %v2392 = vrot.slane %v2312, 5
        %v2393 = vsel %vm1877, %v2391, %v2392
        %v2394 = vrot.slane %v2311, 5
        %v2395 = vrot.slane %v2394, 4
        %v2396 = vrot.slane %v2313, 5
        %v2397 = vsel %vm1877, %v2395, %v2396
        %v2398 = vrot.slane %v2314, 5
        %v2399 = vrot.slane %v2398, 4
        %v2400 = vrot.slane %v2316, 5
        %v2401 = vsel %vm1877, %v2399, %v2400
        %v2402 = vrot.slane %v2315, 5
        %v2403 = vrot.slane %v2402, 4
        %v2404 = vrot.slane %v2317, 5
        %v2405 = vsel %vm1877, %v2403, %v2404
        %v2406 = vrot.slane %v2318, 5
        %v2407 = vrot.slane %v2406, 4
        %v2408 = vrot.slane %v2320, 5
        %v2409 = vsel %vm1877, %v2407, %v2408
        %v2410 = vrot.slane %v2319, 5
        %v2411 = vrot.slane %v2410, 4
        %v2412 = vrot.slane %v2321, 5
        %v2413 = vsel %vm1877, %v2411, %v2412
        %v2414 = vrot.slane %v2322, 5
        %v2415 = vrot.slane %v2414, 4
        %v2416 = vrot.slane %v2324, 5
        %v2417 = vsel %vm1877, %v2415, %v2416
        %v2418 = vrot.slane %v2323, 5
        %v2419 = vrot.slane %v2418, 4
        %v2420 = vrot.slane %v2325, 5
        %v2421 = vsel %vm1877, %v2419, %v2420
        %2438 = vst [vmem:[#allocation3 + $0x3c] sm:$0xff] %v2361
        %2439 = vst [vmem:[#allocation3 + $0x44] sm:$0xf] %v2365
        %2440 = vst [vmem:[#allocation3 + $0xa8] sm:$0xff] %v2369
        %2441 = vst [vmem:[#allocation3 + $0xb0] sm:$0xf] %v2373
        %2442 = vst [vmem:[#allocation3 + $0x114] sm:$0xff] %v2377
        %2443 = vst [vmem:[#allocation3 + $0x11c] sm:$0xf] %v2381
        %2444 = vst [vmem:[#allocation3 + $0x180] sm:$0xff] %v2385
        %2445 = vst [vmem:[#allocation3 + $0x188] sm:$0xf] %v2389
        %2446 = vst [vmem:[#allocation3 + $0x1ec] sm:$0xff] %v2393
        %2447 = vst [vmem:[#allocation3 + $0x1f4] sm:$0xf] %v2397
        %2448 = vst [vmem:[#allocation3 + $0x258] sm:$0xff] %v2401
        %2449 = vst [vmem:[#allocation3 + $0x260] sm:$0xf] %v2405
        %2450 = vst [vmem:[#allocation3 + $0x2c4] sm:$0xff] %v2409
        %2451 = vst [vmem:[#allocation3 + $0x2cc] sm:$0xf] %v2413
        %2452 = vst [vmem:[#allocation3 + $0x330] sm:$0xff] %v2417
        %2453 = vst [vmem:[#allocation3 + $0x338] sm:$0xf] %v2421
        %s2454 = scalar_lea.vmem [#allocation2], 48
        %v2455 = vld [vmem:[%s2454] sm:$0xff]
        %v2456 = vld [vmem:[%s2454 + $0x8] sm:$0xf]
        %v2457 = vld [vmem:[%s2454 + $0x18] sm:$0xff]
        %v2458 = vld [vmem:[%s2454 + $0x20] sm:$0xf]
        %v2459 = vld [vmem:[%s2454 + $0x30] sm:$0xff]
        %v2460 = vld [vmem:[%s2454 + $0x38] sm:$0xf]
        %v2461 = vld [vmem:[%s2454 + $0x48] sm:$0xff]
        %v2462 = vld [vmem:[%s2454 + $0x50] sm:$0xf]
        %v2463 = vld [vmem:[%s2454 + $0x60] sm:$0xff]
        %v2464 = vld [vmem:[%s2454 + $0x68] sm:$0xf]
        %v2465 = vld [vmem:[%s2454 + $0x78] sm:$0xff]
        %v2466 = vld [vmem:[%s2454 + $0x80] sm:$0xf]
        %v2467 = vld [vmem:[%s2454 + $0x90] sm:$0xff]
        %v2468 = vld [vmem:[%s2454 + $0x98] sm:$0xf]
        %v2469 = vld [vmem:[%s2454 + $0xa8] sm:$0xff]
        %v2470 = vld [vmem:[%s2454 + $0xb0] sm:$0xf]
        %2471 = vst [vmem:[#allocation3 + $0x48] sm:$0xff] %v2455
        %2472 = vst [vmem:[#allocation3 + $0x50] sm:$0xf] %v2456
        %2473 = vst [vmem:[#allocation3 + $0xb4] sm:$0xff] %v2457
        %2474 = vst [vmem:[#allocation3 + $0xbc] sm:$0xf] %v2458
        %2475 = vst [vmem:[#allocation3 + $0x120] sm:$0xff] %v2459
        %2476 = vst [vmem:[#allocation3 + $0x128] sm:$0xf] %v2460
        %2477 = vst [vmem:[#allocation3 + $0x18c] sm:$0xff] %v2461
        %2478 = vst [vmem:[#allocation3 + $0x194] sm:$0xf] %v2462
        %2479 = vst [vmem:[#allocation3 + $0x1f8] sm:$0xff] %v2463
        %2480 = vst [vmem:[#allocation3 + $0x200] sm:$0xf] %v2464
        %2481 = vst [vmem:[#allocation3 + $0x264] sm:$0xff] %v2465
        %2482 = vst [vmem:[#allocation3 + $0x26c] sm:$0xf] %v2466
        %2483 = vst [vmem:[#allocation3 + $0x2d0] sm:$0xff] %v2467
        %2484 = vst [vmem:[#allocation3 + $0x2d8] sm:$0xf] %v2468
        %2485 = vst [vmem:[#allocation3 + $0x33c] sm:$0xff] %v2469
        %2486 = vst [vmem:[#allocation3 + $0x344] sm:$0xf] %v2470
        %v2487 = vld [vmem:[%s2454] sm:$0xff]
        %v2488 = vld [vmem:[%s2454 + $0x8] sm:$0xf]
        %v2489 = vld [vmem:[%s2454 + $0xc] sm:$0x11]
        %v2490 = vld [vmem:[%s2454 + $0x14] sm:$0x1]
        %v2491 = vld [vmem:[%s2454 + $0x18] sm:$0xff]
        %v2492 = vld [vmem:[%s2454 + $0x20] sm:$0xf]
        %v2493 = vld [vmem:[%s2454 + $0x24] sm:$0x11]
        %v2494 = vld [vmem:[%s2454 + $0x2c] sm:$0x1]
        %v2495 = vld [vmem:[%s2454 + $0x30] sm:$0xff]
        %v2496 = vld [vmem:[%s2454 + $0x38] sm:$0xf]
        %v2497 = vld [vmem:[%s2454 + $0x3c] sm:$0x11]
        %v2498 = vld [vmem:[%s2454 + $0x44] sm:$0x1]
        %v2499 = vld [vmem:[%s2454 + $0x48] sm:$0xff]
        %v2500 = vld [vmem:[%s2454 + $0x50] sm:$0xf]
        %v2501 = vld [vmem:[%s2454 + $0x54] sm:$0x11]
        %v2502 = vld [vmem:[%s2454 + $0x5c] sm:$0x1]
        %v2503 = vld [vmem:[%s2454 + $0x60] sm:$0xff]
        %v2504 = vld [vmem:[%s2454 + $0x68] sm:$0xf]
        %v2505 = vld [vmem:[%s2454 + $0x6c] sm:$0x11]
        %v2506 = vld [vmem:[%s2454 + $0x74] sm:$0x1]
        %v2507 = vld [vmem:[%s2454 + $0x78] sm:$0xff]
        %v2508 = vld [vmem:[%s2454 + $0x80] sm:$0xf]
        %v2509 = vld [vmem:[%s2454 + $0x84] sm:$0x11]
        %v2510 = vld [vmem:[%s2454 + $0x8c] sm:$0x1]
        %v2511 = vld [vmem:[%s2454 + $0x90] sm:$0xff]
        %v2512 = vld [vmem:[%s2454 + $0x98] sm:$0xf]
        %v2513 = vld [vmem:[%s2454 + $0x9c] sm:$0x11]
        %v2514 = vld [vmem:[%s2454 + $0xa4] sm:$0x1]
        %v2515 = vld [vmem:[%s2454 + $0xa8] sm:$0xff]
        %v2516 = vld [vmem:[%s2454 + $0xb0] sm:$0xf]
        %v2517 = vld [vmem:[%s2454 + $0xb4] sm:$0x11]
        %v2518 = vld [vmem:[%s2454 + $0xbc] sm:$0x1]
        %v2520 = vshrl.u32 %v2487, 16
        %v2522 = vrot.slane %v2520, 4
        %v2523 = vshll.u32 %v2487, 16
        %v2525 = vrot.slane %v2523, 5
        %v2526 = vor.u32 %v2522, %v2525
        %v2527 = vrot.slane %v2526, 4
        %v2529 = vshll.u32 %v2489, 16
        %v2531 = vrot.slane %v2529, 5
        %v2532 = vsel %vm1554, %v2527, %v2531
        %v2534 = vshrl.u32 %v2488, 16
        %v2536 = vrot.slane %v2534, 4
        %v2537 = vshll.u32 %v2488, 16
        %v2539 = vrot.slane %v2537, 5
        %v2540 = vor.u32 %v2536, %v2539
        %v2541 = vrot.slane %v2540, 4
        %v2543 = vshll.u32 %v2490, 16
        %v2545 = vrot.slane %v2543, 5
        %v2546 = vsel %vm1554, %v2541, %v2545
        %v2548 = vshrl.u32 %v2491, 16
        %v2550 = vrot.slane %v2548, 4
        %v2551 = vshll.u32 %v2491, 16
        %v2553 = vrot.slane %v2551, 5
        %v2554 = vor.u32 %v2550, %v2553
        %v2555 = vrot.slane %v2554, 4
        %v2557 = vshll.u32 %v2493, 16
        %v2559 = vrot.slane %v2557, 5
        %v2560 = vsel %vm1554, %v2555, %v2559
        %v2562 = vshrl.u32 %v2492, 16
        %v2564 = vrot.slane %v2562, 4
        %v2565 = vshll.u32 %v2492, 16
        %v2567 = vrot.slane %v2565, 5
        %v2568 = vor.u32 %v2564, %v2567
        %v2569 = vrot.slane %v2568, 4
        %v2571 = vshll.u32 %v2494, 16
        %v2573 = vrot.slane %v2571, 5
        %v2574 = vsel %vm1554, %v2569, %v2573
        %v2576 = vshrl.u32 %v2495, 16
        %v2578 = vrot.slane %v2576, 4
        %v2579 = vshll.u32 %v2495, 16
        %v2581 = vrot.slane %v2579, 5
        %v2582 = vor.u32 %v2578, %v2581
        %v2583 = vrot.slane %v2582, 4
        %v2585 = vshll.u32 %v2497, 16
        %v2587 = vrot.slane %v2585, 5
        %v2588 = vsel %vm1554, %v2583, %v2587
        %v2590 = vshrl.u32 %v2496, 16
        %v2592 = vrot.slane %v2590, 4
        %v2593 = vshll.u32 %v2496, 16
        %v2595 = vrot.slane %v2593, 5
        %v2596 = vor.u32 %v2592, %v2595
        %v2597 = vrot.slane %v2596, 4
        %v2599 = vshll.u32 %v2498, 16
        %v2601 = vrot.slane %v2599, 5
        %v2602 = vsel %vm1554, %v2597, %v2601
        %v2604 = vshrl.u32 %v2499, 16
        %v2606 = vrot.slane %v2604, 4
        %v2607 = vshll.u32 %v2499, 16
        %v2609 = vrot.slane %v2607, 5
        %v2610 = vor.u32 %v2606, %v2609
        %v2611 = vrot.slane %v2610, 4
        %v2613 = vshll.u32 %v2501, 16
        %v2615 = vrot.slane %v2613, 5
        %v2616 = vsel %vm1554, %v2611, %v2615
        %v2618 = vshrl.u32 %v2500, 16
        %v2620 = vrot.slane %v2618, 4
        %v2621 = vshll.u32 %v2500, 16
        %v2623 = vrot.slane %v2621, 5
        %v2624 = vor.u32 %v2620, %v2623
        %v2625 = vrot.slane %v2624, 4
        %v2627 = vshll.u32 %v2502, 16
        %v2629 = vrot.slane %v2627, 5
        %v2630 = vsel %vm1554, %v2625, %v2629
        %v2632 = vshrl.u32 %v2503, 16
        %v2634 = vrot.slane %v2632, 4
        %v2635 = vshll.u32 %v2503, 16
        %v2637 = vrot.slane %v2635, 5
        %v2638 = vor.u32 %v2634, %v2637
        %v2639 = vrot.slane %v2638, 4
        %v2641 = vshll.u32 %v2505, 16
        %v2643 = vrot.slane %v2641, 5
        %v2644 = vsel %vm1554, %v2639, %v2643
        %v2646 = vshrl.u32 %v2504, 16
        %v2648 = vrot.slane %v2646, 4
        %v2649 = vshll.u32 %v2504, 16
        %v2651 = vrot.slane %v2649, 5
        %v2652 = vor.u32 %v2648, %v2651
        %v2653 = vrot.slane %v2652, 4
        %v2655 = vshll.u32 %v2506, 16
        %v2657 = vrot.slane %v2655, 5
        %v2658 = vsel %vm1554, %v2653, %v2657
        %v2660 = vshrl.u32 %v2507, 16
        %v2662 = vrot.slane %v2660, 4
        %v2663 = vshll.u32 %v2507, 16
        %v2665 = vrot.slane %v2663, 5
        %v2666 = vor.u32 %v2662, %v2665
        %v2667 = vrot.slane %v2666, 4
        %v2669 = vshll.u32 %v2509, 16
        %v2671 = vrot.slane %v2669, 5
        %v2672 = vsel %vm1554, %v2667, %v2671
        %v2674 = vshrl.u32 %v2508, 16
        %v2676 = vrot.slane %v2674, 4
        %v2677 = vshll.u32 %v2508, 16
        %v2679 = vrot.slane %v2677, 5
        %v2680 = vor.u32 %v2676, %v2679
        %v2681 = vrot.slane %v2680, 4
        %v2683 = vshll.u32 %v2510, 16
        %v2685 = vrot.slane %v2683, 5
        %v2686 = vsel %vm1554, %v2681, %v2685
        %v2688 = vshrl.u32 %v2511, 16
        %v2690 = vrot.slane %v2688, 4
        %v2691 = vshll.u32 %v2511, 16
        %v2693 = vrot.slane %v2691, 5
        %v2694 = vor.u32 %v2690, %v2693
        %v2695 = vrot.slane %v2694, 4
        %v2697 = vshll.u32 %v2513, 16
        %v2699 = vrot.slane %v2697, 5
        %v2700 = vsel %vm1554, %v2695, %v2699
        %v2702 = vshrl.u32 %v2512, 16
        %v2704 = vrot.slane %v2702, 4
        %v2705 = vshll.u32 %v2512, 16
        %v2707 = vrot.slane %v2705, 5
        %v2708 = vor.u32 %v2704, %v2707
        %v2709 = vrot.slane %v2708, 4
        %v2711 = vshll.u32 %v2514, 16
        %v2713 = vrot.slane %v2711, 5
        %v2714 = vsel %vm1554, %v2709, %v2713
        %v2716 = vshrl.u32 %v2515, 16
        %v2718 = vrot.slane %v2716, 4
        %v2719 = vshll.u32 %v2515, 16
        %v2721 = vrot.slane %v2719, 5
        %v2722 = vor.u32 %v2718, %v2721
        %v2723 = vrot.slane %v2722, 4
        %v2725 = vshll.u32 %v2517, 16
        %v2727 = vrot.slane %v2725, 5
        %v2728 = vsel %vm1554, %v2723, %v2727
        %v2730 = vshrl.u32 %v2516, 16
        %v2732 = vrot.slane %v2730, 4
        %v2733 = vshll.u32 %v2516, 16
        %v2735 = vrot.slane %v2733, 5
        %v2736 = vor.u32 %v2732, %v2735
        %v2737 = vrot.slane %v2736, 4
        %v2739 = vshll.u32 %v2518, 16
        %v2741 = vrot.slane %v2739, 5
        %v2742 = vsel %vm1554, %v2737, %v2741
        %2759 = vst [vmem:[#allocation3 + $0x54] sm:$0xff] %v2532
        %2760 = vst [vmem:[#allocation3 + $0x5c] sm:$0xf] %v2546
        %2761 = vst [vmem:[#allocation3 + $0xc0] sm:$0xff] %v2560
        %2762 = vst [vmem:[#allocation3 + $0xc8] sm:$0xf] %v2574
        %2763 = vst [vmem:[#allocation3 + $0x12c] sm:$0xff] %v2588
        %2764 = vst [vmem:[#allocation3 + $0x134] sm:$0xf] %v2602
        %2765 = vst [vmem:[#allocation3 + $0x198] sm:$0xff] %v2616
        %2766 = vst [vmem:[#allocation3 + $0x1a0] sm:$0xf] %v2630
        %2767 = vst [vmem:[#allocation3 + $0x204] sm:$0xff] %v2644
        %2768 = vst [vmem:[#allocation3 + $0x20c] sm:$0xf] %v2658
        %2769 = vst [vmem:[#allocation3 + $0x270] sm:$0xff] %v2672
        %2770 = vst [vmem:[#allocation3 + $0x278] sm:$0xf] %v2686
        %2771 = vst [vmem:[#allocation3 + $0x2dc] sm:$0xff] %v2700
        %2772 = vst [vmem:[#allocation3 + $0x2e4] sm:$0xf] %v2714
        %2773 = vst [vmem:[#allocation3 + $0x348] sm:$0xff] %v2728
        %2774 = vst [vmem:[#allocation3 + $0x350] sm:$0xf] %v2742
        %v2775 = vld [vmem:[%s2454] sm:$0xee]
        %v2776 = vld [vmem:[%s2454 + $0x8] sm:$0xe]
        %v2777 = vld [vmem:[%s2454 + $0xc] sm:$0x11]
        %v2778 = vld [vmem:[%s2454 + $0x14] sm:$0x1]
        %v2779 = vld [vmem:[%s2454 + $0x18] sm:$0xee]
        %v2780 = vld [vmem:[%s2454 + $0x20] sm:$0xe]
        %v2781 = vld [vmem:[%s2454 + $0x24] sm:$0x11]
        %v2782 = vld [vmem:[%s2454 + $0x2c] sm:$0x1]
        %v2783 = vld [vmem:[%s2454 + $0x30] sm:$0xee]
        %v2784 = vld [vmem:[%s2454 + $0x38] sm:$0xe]
        %v2785 = vld [vmem:[%s2454 + $0x3c] sm:$0x11]
        %v2786 = vld [vmem:[%s2454 + $0x44] sm:$0x1]
        %v2787 = vld [vmem:[%s2454 + $0x48] sm:$0xee]
        %v2788 = vld [vmem:[%s2454 + $0x50] sm:$0xe]
        %v2789 = vld [vmem:[%s2454 + $0x54] sm:$0x11]
        %v2790 = vld [vmem:[%s2454 + $0x5c] sm:$0x1]
        %v2791 = vld [vmem:[%s2454 + $0x60] sm:$0xee]
        %v2792 = vld [vmem:[%s2454 + $0x68] sm:$0xe]
        %v2793 = vld [vmem:[%s2454 + $0x6c] sm:$0x11]
        %v2794 = vld [vmem:[%s2454 + $0x74] sm:$0x1]
        %v2795 = vld [vmem:[%s2454 + $0x78] sm:$0xee]
        %v2796 = vld [vmem:[%s2454 + $0x80] sm:$0xe]
        %v2797 = vld [vmem:[%s2454 + $0x84] sm:$0x11]
        %v2798 = vld [vmem:[%s2454 + $0x8c] sm:$0x1]
        %v2799 = vld [vmem:[%s2454 + $0x90] sm:$0xee]
        %v2800 = vld [vmem:[%s2454 + $0x98] sm:$0xe]
        %v2801 = vld [vmem:[%s2454 + $0x9c] sm:$0x11]
        %v2802 = vld [vmem:[%s2454 + $0xa4] sm:$0x1]
        %v2803 = vld [vmem:[%s2454 + $0xa8] sm:$0xee]
        %v2804 = vld [vmem:[%s2454 + $0xb0] sm:$0xe]
        %v2805 = vld [vmem:[%s2454 + $0xb4] sm:$0x11]
        %v2806 = vld [vmem:[%s2454 + $0xbc] sm:$0x1]
        %v2839 = vrot.slane %v2775, 5
        %v2840 = vrot.slane %v2839, 4
        %v2841 = vrot.slane %v2777, 5
        %v2842 = vsel %vm1877, %v2840, %v2841
        %v2843 = vrot.slane %v2776, 5
        %v2844 = vrot.slane %v2843, 4
        %v2845 = vrot.slane %v2778, 5
        %v2846 = vsel %vm1877, %v2844, %v2845
        %v2847 = vrot.slane %v2779, 5
        %v2848 = vrot.slane %v2847, 4
        %v2849 = vrot.slane %v2781, 5
        %v2850 = vsel %vm1877, %v2848, %v2849
        %v2851 = vrot.slane %v2780, 5
        %v2852 = vrot.slane %v2851, 4
        %v2853 = vrot.slane %v2782, 5
        %v2854 = vsel %vm1877, %v2852, %v2853
        %v2855 = vrot.slane %v2783, 5
        %v2856 = vrot.slane %v2855, 4
        %v2857 = vrot.slane %v2785, 5
        %v2858 = vsel %vm1877, %v2856, %v2857
        %v2859 = vrot.slane %v2784, 5
        %v2860 = vrot.slane %v2859, 4
        %v2861 = vrot.slane %v2786, 5
        %v2862 = vsel %vm1877, %v2860, %v2861
        %v2863 = vrot.slane %v2787, 5
        %v2864 = vrot.slane %v2863, 4
        %v2865 = vrot.slane %v2789, 5
        %v2866 = vsel %vm1877, %v2864, %v2865
        %v2867 = vrot.slane %v2788, 5
        %v2868 = vrot.slane %v2867, 4
        %v2869 = vrot.slane %v2790, 5
        %v2870 = vsel %vm1877, %v2868, %v2869
        %v2871 = vrot.slane %v2791, 5
        %v2872 = vrot.slane %v2871, 4
        %v2873 = vrot.slane %v2793, 5
        %v2874 = vsel %vm1877, %v2872, %v2873
        %v2875 = vrot.slane %v2792, 5
        %v2876 = vrot.slane %v2875, 4
        %v2877 = vrot.slane %v2794, 5
        %v2878 = vsel %vm1877, %v2876, %v2877
        %v2879 = vrot.slane %v2795, 5
        %v2880 = vrot.slane %v2879, 4
        %v2881 = vrot.slane %v2797, 5
        %v2882 = vsel %vm1877, %v2880, %v2881
        %v2883 = vrot.slane %v2796, 5
        %v2884 = vrot.slane %v2883, 4
        %v2885 = vrot.slane %v2798, 5
        %v2886 = vsel %vm1877, %v2884, %v2885
        %v2887 = vrot.slane %v2799, 5
        %v2888 = vrot.slane %v2887, 4
        %v2889 = vrot.slane %v2801, 5
        %v2890 = vsel %vm1877, %v2888, %v2889
        %v2891 = vrot.slane %v2800, 5
        %v2892 = vrot.slane %v2891, 4
        %v2893 = vrot.slane %v2802, 5
        %v2894 = vsel %vm1877, %v2892, %v2893
        %v2895 = vrot.slane %v2803, 5
        %v2896 = vrot.slane %v2895, 4
        %v2897 = vrot.slane %v2805, 5
        %v2898 = vsel %vm1877, %v2896, %v2897
        %v2899 = vrot.slane %v2804, 5
        %v2900 = vrot.slane %v2899, 4
        %v2901 = vrot.slane %v2806, 5
        %v2902 = vsel %vm1877, %v2900, %v2901
        %2919 = vst [vmem:[#allocation3 + $0x60] sm:$0xff] %v2842
        %2920 = vst [vmem:[#allocation3 + $0x68] sm:$0xf] %v2846
        %2921 = vst [vmem:[#allocation3 + $0xcc] sm:$0xff] %v2850
        %2922 = vst [vmem:[#allocation3 + $0xd4] sm:$0xf] %v2854
        %2923 = vst [vmem:[#allocation3 + $0x138] sm:$0xff] %v2858
        %2924 = vst [vmem:[#allocation3 + $0x140] sm:$0xf] %v2862
        %2925 = vst [vmem:[#allocation3 + $0x1a4] sm:$0xff] %v2866
        %2926 = vst [vmem:[#allocation3 + $0x1ac] sm:$0xf] %v2870
        %2927 = vst [vmem:[#allocation3 + $0x210] sm:$0xff] %v2874
        %2928 = vst [vmem:[#allocation3 + $0x218] sm:$0xf] %v2878
        %2929 = vst [vmem:[#allocation3 + $0x27c] sm:$0xff] %v2882
        %2930 = vst [vmem:[#allocation3 + $0x284] sm:$0xf] %v2886
        %2931 = vst [vmem:[#allocation3 + $0x2e8] sm:$0xff] %v2890
        %2932 = vst [vmem:[#allocation3 + $0x2f0] sm:$0xf] %v2894
        %2933 = vst [vmem:[#allocation3 + $0x354] sm:$0xff] %v2898
        %2934 = vst [vmem:[#allocation3 + $0x35c] sm:$0xf] %v2902
        %v2935 = vld [vmem:[#allocation3] sm:$0xff]
        %v2936 = vld [vmem:[#allocation3 + $0x8] sm:$0xff]
        %v2937 = vld [vmem:[#allocation3 + $0x10] sm:$0xff]
        %v2938 = vld [vmem:[#allocation3 + $0x18] sm:$0xff]
        %v2939 = vld [vmem:[#allocation3 + $0x20] sm:$0xff]
        %v2940 = vld [vmem:[#allocation3 + $0x28] sm:$0xff]
        %v2941 = vld [vmem:[#allocation3 + $0x30] sm:$0xff]
        %v2942 = vld [vmem:[#allocation3 + $0x38] sm:$0xff]
        %v2943 = vld [vmem:[#allocation3 + $0x40] sm:$0xff]
        %v2944 = vld [vmem:[#allocation3 + $0x48] sm:$0xff]
        %v2945 = vld [vmem:[#allocation3 + $0x50] sm:$0xff]
        %v2946 = vld [vmem:[#allocation3 + $0x58] sm:$0xff]
        %v2947 = vld [vmem:[#allocation3 + $0x60] sm:$0xff]
        %v2948 = vld [vmem:[#allocation3 + $0x68] sm:$0xf]
        %v2949 = vld [vmem:[#allocation3 + $0x6c] sm:$0xff]
        %v2950 = vld [vmem:[#allocation3 + $0x74] sm:$0xff]
        %v2951 = vld [vmem:[#allocation3 + $0x7c] sm:$0xff]
        %v2952 = vld [vmem:[#allocation3 + $0x84] sm:$0xff]
        %v2953 = vld [vmem:[#allocation3 + $0x8c] sm:$0xff]
        %v2954 = vld [vmem:[#allocation3 + $0x94] sm:$0xff]
        %v2955 = vld [vmem:[#allocation3 + $0x9c] sm:$0xff]
        %v2956 = vld [vmem:[#allocation3 + $0xa4] sm:$0xff]
        %v2957 = vld [vmem:[#allocation3 + $0xac] sm:$0xff]
        %v2958 = vld [vmem:[#allocation3 + $0xb4] sm:$0xff]
        %v2959 = vld [vmem:[#allocation3 + $0xbc] sm:$0xff]
        %v2960 = vld [vmem:[#allocation3 + $0xc4] sm:$0xff]
        %v2961 = vld [vmem:[#allocation3 + $0xcc] sm:$0xff]
        %v2962 = vld [vmem:[#allocation3 + $0xd4] sm:$0xf]
        %v2963 = vld [vmem:[#allocation3 + $0xd8] sm:$0xff]
        %v2964 = vld [vmem:[#allocation3 + $0xe0] sm:$0xff]
        %v2965 = vld [vmem:[#allocation3 + $0xe8] sm:$0xff]
        %v2966 = vld [vmem:[#allocation3 + $0xf0] sm:$0xff]
        %v2967 = vld [vmem:[#allocation3 + $0xf8] sm:$0xff]
        %v2968 = vld [vmem:[#allocation3 + $0x100] sm:$0xff]
        %v2969 = vld [vmem:[#allocation3 + $0x108] sm:$0xff]
        %v2970 = vld [vmem:[#allocation3 + $0x110] sm:$0xff]
        %v2971 = vld [vmem:[#allocation3 + $0x118] sm:$0xff]
        %v2972 = vld [vmem:[#allocation3 + $0x120] sm:$0xff]
        %v2973 = vld [vmem:[#allocation3 + $0x128] sm:$0xff]
        %v2974 = vld [vmem:[#allocation3 + $0x130] sm:$0xff]
        %v2975 = vld [vmem:[#allocation3 + $0x138] sm:$0xff]
        %v2976 = vld [vmem:[#allocation3 + $0x140] sm:$0xf]
        %v2977 = vld [vmem:[#allocation3 + $0x144] sm:$0xff]
        %v2978 = vld [vmem:[#allocation3 + $0x14c] sm:$0xff]
        %v2979 = vld [vmem:[#allocation3 + $0x154] sm:$0xff]
        %v2980 = vld [vmem:[#allocation3 + $0x15c] sm:$0xff]
        %v2981 = vld [vmem:[#allocation3 + $0x164] sm:$0xff]
        %v2982 = vld [vmem:[#allocation3 + $0x16c] sm:$0xff]
        %v2983 = vld [vmem:[#allocation3 + $0x174] sm:$0xff]
        %v2984 = vld [vmem:[#allocation3 + $0x17c] sm:$0xff]
        %v2985 = vld [vmem:[#allocation3 + $0x184] sm:$0xff]
        %v2986 = vld [vmem:[#allocation3 + $0x18c] sm:$0xff]
        %v2987 = vld [vmem:[#allocation3 + $0x194] sm:$0xff]
        %v2988 = vld [vmem:[#allocation3 + $0x19c] sm:$0xff]
        %v2989 = vld [vmem:[#allocation3 + $0x1a4] sm:$0xff]
        %v2990 = vld [vmem:[#allocation3 + $0x1ac] sm:$0xf]
        %v2991 = vld [vmem:[#allocation3 + $0x1b0] sm:$0xff]
        %v2992 = vld [vmem:[#allocation3 + $0x1b8] sm:$0xff]
        %v2993 = vld [vmem:[#allocation3 + $0x1c0] sm:$0xff]
        %v2994 = vld [vmem:[#allocation3 + $0x1c8] sm:$0xff]
        %v2995 = vld [vmem:[#allocation3 + $0x1d0] sm:$0xff]
        %v2996 = vld [vmem:[#allocation3 + $0x1d8] sm:$0xff]
        %v2997 = vld [vmem:[#allocation3 + $0x1e0] sm:$0xff]
        %v2998 = vld [vmem:[#allocation3 + $0x1e8] sm:$0xff]
        %v2999 = vld [vmem:[#allocation3 + $0x1f0] sm:$0xff]
        %v3000 = vld [vmem:[#allocation3 + $0x1f8] sm:$0xff]
        %v3001 = vld [vmem:[#allocation3 + $0x200] sm:$0xff]
        %v3002 = vld [vmem:[#allocation3 + $0x208] sm:$0xff]
        %v3003 = vld [vmem:[#allocation3 + $0x210] sm:$0xff]
        %v3004 = vld [vmem:[#allocation3 + $0x218] sm:$0xf]
        %v3005 = vld [vmem:[#allocation3 + $0x21c] sm:$0xff]
        %v3006 = vld [vmem:[#allocation3 + $0x224] sm:$0xff]
        %v3007 = vld [vmem:[#allocation3 + $0x22c] sm:$0xff]
        %v3008 = vld [vmem:[#allocation3 + $0x234] sm:$0xff]
        %v3009 = vld [vmem:[#allocation3 + $0x23c] sm:$0xff]
        %v3010 = vld [vmem:[#allocation3 + $0x244] sm:$0xff]
        %v3011 = vld [vmem:[#allocation3 + $0x24c] sm:$0xff]
        %v3012 = vld [vmem:[#allocation3 + $0x254] sm:$0xff]
        %v3013 = vld [vmem:[#allocation3 + $0x25c] sm:$0xff]
        %v3014 = vld [vmem:[#allocation3 + $0x264] sm:$0xff]
        %v3015 = vld [vmem:[#allocation3 + $0x26c] sm:$0xff]
        %v3016 = vld [vmem:[#allocation3 + $0x274] sm:$0xff]
        %v3017 = vld [vmem:[#allocation3 + $0x27c] sm:$0xff]
        %v3018 = vld [vmem:[#allocation3 + $0x284] sm:$0xf]
        %v3019 = vld [vmem:[#allocation3 + $0x288] sm:$0xff]
        %v3020 = vld [vmem:[#allocation3 + $0x290] sm:$0xff]
        %v3021 = vld [vmem:[#allocation3 + $0x298] sm:$0xff]
        %v3022 = vld [vmem:[#allocation3 + $0x2a0] sm:$0xff]
        %v3023 = vld [vmem:[#allocation3 + $0x2a8] sm:$0xff]
        %v3024 = vld [vmem:[#allocation3 + $0x2b0] sm:$0xff]
        %v3025 = vld [vmem:[#allocation3 + $0x2b8] sm:$0xff]
        %v3026 = vld [vmem:[#allocation3 + $0x2c0] sm:$0xff]
        %v3027 = vld [vmem:[#allocation3 + $0x2c8] sm:$0xff]
        %v3028 = vld [vmem:[#allocation3 + $0x2d0] sm:$0xff]
        %v3029 = vld [vmem:[#allocation3 + $0x2d8] sm:$0xff]
        %v3030 = vld [vmem:[#allocation3 + $0x2e0] sm:$0xff]
        %v3031 = vld [vmem:[#allocation3 + $0x2e8] sm:$0xff]
        %v3032 = vld [vmem:[#allocation3 + $0x2f0] sm:$0xf]
        %v3033 = vld [vmem:[#allocation3 + $0x2f4] sm:$0xff]
        %v3034 = vld [vmem:[#allocation3 + $0x2fc] sm:$0xff]
        %v3035 = vld [vmem:[#allocation3 + $0x304] sm:$0xff]
        %v3036 = vld [vmem:[#allocation3 + $0x30c] sm:$0xff]
        %v3037 = vld [vmem:[#allocation3 + $0x314] sm:$0xff]
        %v3038 = vld [vmem:[#allocation3 + $0x31c] sm:$0xff]
        %v3039 = vld [vmem:[#allocation3 + $0x324] sm:$0xff]
        %v3040 = vld [vmem:[#allocation3 + $0x32c] sm:$0xff]
        %v3041 = vld [vmem:[#allocation3 + $0x334] sm:$0xff]
        %v3042 = vld [vmem:[#allocation3 + $0x33c] sm:$0xff]
        %v3043 = vld [vmem:[#allocation3 + $0x344] sm:$0xff]
        %v3044 = vld [vmem:[#allocation3 + $0x34c] sm:$0xff]
        %v3045 = vld [vmem:[#allocation3 + $0x354] sm:$0xff]
        %v3046 = vld [vmem:[#allocation3 + $0x35c] sm:$0xf]
        %v3047 = vld [vmem:[#allocation12] sm:$0xff]
        %v3048 = vld [vmem:[#allocation12 + $0x8] sm:$0xff]
        %v3049 = vld [vmem:[#allocation12 + $0x10] sm:$0xff]
        %v3050 = vld [vmem:[#allocation12 + $0x18] sm:$0xff]
        %v3051 = vld [vmem:[#allocation12 + $0x20] sm:$0xff]
        %v3052 = vld [vmem:[#allocation12 + $0x28] sm:$0xff]
        %v3053 = vld [vmem:[#allocation12 + $0x30] sm:$0xff]
        %v3054 = vld [vmem:[#allocation12 + $0x38] sm:$0xff]
        %v3055 = vld [vmem:[#allocation12 + $0x40] sm:$0xff]
        %v3056 = vld [vmem:[#allocation12 + $0x48] sm:$0xff]
        %v3057 = vld [vmem:[#allocation12 + $0x50] sm:$0xff]
        %v3058 = vld [vmem:[#allocation12 + $0x58] sm:$0xff]
        %v3059 = vld [vmem:[#allocation12 + $0x60] sm:$0xff]
        %v3060 = vld [vmem:[#allocation12 + $0x68] sm:$0xff]
        %v3061 = vld [vmem:[#allocation12 + $0x70] sm:$0xff]
        %v3062 = vld [vmem:[#allocation12 + $0x78] sm:$0xff]
        %v3063 = vld [vmem:[#allocation12 + $0x80] sm:$0xff]
        %v3064 = vld [vmem:[#allocation12 + $0x88] sm:$0xff]
        %v3065 = vld [vmem:[#allocation12 + $0x90] sm:$0xff]
        %v3066 = vld [vmem:[#allocation12 + $0x98] sm:$0xff]
        %v3067 = vld [vmem:[#allocation12 + $0xa0] sm:$0xff]
        %v3068 = vld [vmem:[#allocation12 + $0xa8] sm:$0xff]
        %v3069 = vld [vmem:[#allocation12 + $0xb0] sm:$0xff]
        %v3070 = vld [vmem:[#allocation12 + $0xb8] sm:$0xff]
        %v3071 = vld [vmem:[#allocation12 + $0xc0] sm:$0xff]
        %v3072 = vld [vmem:[#allocation12 + $0xc8] sm:$0xff]
        %v3073 = vld [vmem:[#allocation12 + $0xd0] sm:$0xff]
        %v3074 = vld [vmem:[#allocation12 + $0xd8] sm:$0xff]
        %v3075 = vld [vmem:[#allocation12 + $0xe0] sm:$0xff]
        %v3076 = vld [vmem:[#allocation12 + $0xe8] sm:$0xff]
        %v3077 = vld [vmem:[#allocation12 + $0xf0] sm:$0xff]
        %v3078 = vld [vmem:[#allocation12 + $0xf8] sm:$0xff]
        %v3079 = vld [vmem:[#allocation12 + $0x100] sm:$0xff]
        %v3080 = vld [vmem:[#allocation12 + $0x108] sm:$0xff]
        %v3081 = vld [vmem:[#allocation12 + $0x110] sm:$0xff]
        %v3082 = vld [vmem:[#allocation12 + $0x118] sm:$0xff]
        %v3083 = vld [vmem:[#allocation12 + $0x120] sm:$0xff]
        %v3084 = vld [vmem:[#allocation12 + $0x128] sm:$0xff]
        %v3085 = vld [vmem:[#allocation12 + $0x130] sm:$0xff]
        %v3086 = vld [vmem:[#allocation12 + $0x138] sm:$0xff]
        %v3087 = vld [vmem:[#allocation12 + $0x140] sm:$0xff]
        %v3088 = vld [vmem:[#allocation12 + $0x148] sm:$0xff]
        %v3089 = vld [vmem:[#allocation12 + $0x150] sm:$0xff]
        %v3090 = vld [vmem:[#allocation12 + $0x158] sm:$0xff]
        %v3091 = vld [vmem:[#allocation12 + $0x160] sm:$0xff]
        %v3092 = vld [vmem:[#allocation12 + $0x168] sm:$0xff]
        %v3093 = vld [vmem:[#allocation12 + $0x170] sm:$0xff]
        %v3094 = vld [vmem:[#allocation12 + $0x178] sm:$0xff]
        %v3095 = vld [vmem:[#allocation12 + $0x180] sm:$0xff]
        %v3096 = vld [vmem:[#allocation12 + $0x188] sm:$0xff]
        %v3097 = vld [vmem:[#allocation12 + $0x190] sm:$0xff]
        %v3098 = vld [vmem:[#allocation12 + $0x198] sm:$0xff]
        %v3099 = vld [vmem:[#allocation12 + $0x1a0] sm:$0xff]
        %v3100 = vld [vmem:[#allocation12 + $0x1a8] sm:$0xff]
        %v3101 = vld [vmem:[#allocation12 + $0x1b0] sm:$0xff]
        %v3102 = vld [vmem:[#allocation12 + $0x1b8] sm:$0xff]
        %v3103 = vld [vmem:[#allocation12 + $0x1c0] sm:$0xff]
        %v3104 = vld [vmem:[#allocation12 + $0x1c8] sm:$0xff]
        %v3105 = vld [vmem:[#allocation12 + $0x1d0] sm:$0xff]
        %v3106 = vld [vmem:[#allocation12 + $0x1d8] sm:$0xff]
        %v3107 = vld [vmem:[#allocation12 + $0x1e0] sm:$0xff]
        %v3108 = vld [vmem:[#allocation12 + $0x1e8] sm:$0xff]
        %v3109 = vld [vmem:[#allocation12 + $0x1f0] sm:$0xff]
        %v3110 = vld [vmem:[#allocation12 + $0x1f8] sm:$0xff]
        %v3111 = vld [vmem:[#allocation12 + $0x200] sm:$0xff]
        %v3112 = vld [vmem:[#allocation12 + $0x208] sm:$0xff]
        %v3113 = vld [vmem:[#allocation12 + $0x210] sm:$0xff]
        %v3114 = vld [vmem:[#allocation12 + $0x218] sm:$0xff]
        %v3115 = vld [vmem:[#allocation12 + $0x220] sm:$0xff]
        %v3116 = vld [vmem:[#allocation12 + $0x228] sm:$0xff]
        %v3117 = vld [vmem:[#allocation12 + $0x230] sm:$0xff]
        %v3118 = vld [vmem:[#allocation12 + $0x238] sm:$0xff]
        %v3119 = vld [vmem:[#allocation12 + $0x240] sm:$0xff]
        %v3120 = vld [vmem:[#allocation12 + $0x248] sm:$0xff]
        %v3121 = vld [vmem:[#allocation12 + $0x250] sm:$0xff]
        %v3122 = vld [vmem:[#allocation12 + $0x258] sm:$0xff]
        %v3123 = vld [vmem:[#allocation12 + $0x260] sm:$0xff]
        %v3124 = vld [vmem:[#allocation12 + $0x268] sm:$0xff]
        %v3125 = vld [vmem:[#allocation12 + $0x270] sm:$0xff]
        %v3126 = vld [vmem:[#allocation12 + $0x278] sm:$0xff]
        %v3127 = vld [vmem:[#allocation12 + $0x280] sm:$0xff]
        %v3128 = vld [vmem:[#allocation12 + $0x288] sm:$0xff]
        %v3129 = vld [vmem:[#allocation12 + $0x290] sm:$0xff]
        %v3130 = vld [vmem:[#allocation12 + $0x298] sm:$0xff]
        %v3131 = vld [vmem:[#allocation12 + $0x2a0] sm:$0xff]
        %v3132 = vld [vmem:[#allocation12 + $0x2a8] sm:$0xff]
        %v3133 = vld [vmem:[#allocation12 + $0x2b0] sm:$0xff]
        %v3134 = vld [vmem:[#allocation12 + $0x2b8] sm:$0xff]
        %v3135 = vld [vmem:[#allocation12 + $0x2c0] sm:$0xff]
        %v3136 = vld [vmem:[#allocation12 + $0x2c8] sm:$0xff]
        %v3137 = vld [vmem:[#allocation12 + $0x2d0] sm:$0xff]
        %v3138 = vld [vmem:[#allocation12 + $0x2d8] sm:$0xff]
        %v3139 = vld [vmem:[#allocation12 + $0x2e0] sm:$0xff]
        %v3140 = vld [vmem:[#allocation12 + $0x2e8] sm:$0xff]
        %v3141 = vld [vmem:[#allocation12 + $0x2f0] sm:$0xff]
        %v3142 = vld [vmem:[#allocation12 + $0x2f8] sm:$0xff]
        %v3143 = vld [vmem:[#allocation12 + $0x300] sm:$0xff]
        %v3144 = vld [vmem:[#allocation12 + $0x308] sm:$0xff]
        %v3145 = vld [vmem:[#allocation12 + $0x310] sm:$0xff]
        %v3146 = vld [vmem:[#allocation12 + $0x318] sm:$0xff]
        %v3147 = vld [vmem:[#allocation12 + $0x320] sm:$0xff]
        %v3148 = vld [vmem:[#allocation12 + $0x328] sm:$0xff]
        %v3149 = vld [vmem:[#allocation12 + $0x330] sm:$0xff]
        %v3150 = vld [vmem:[#allocation12 + $0x338] sm:$0xff]
        %v3151 = vld [vmem:[#allocation12 + $0x340] sm:$0xff]
        %v3152 = vld [vmem:[#allocation12 + $0x348] sm:$0xff]
        %v3153 = vld [vmem:[#allocation12 + $0x350] sm:$0xff]
        %v3154 = vld [vmem:[#allocation12 + $0x358] sm:$0xff]
        %v3155 = vld [vmem:[#allocation12 + $0x360] sm:$0xff]
        %v3156 = vld [vmem:[#allocation12 + $0x368] sm:$0xff]
        %v3157 = vld [vmem:[#allocation12 + $0x370] sm:$0xff]
        %v3158 = vld [vmem:[#allocation12 + $0x378] sm:$0xff]
        %v3159 = vld [vmem:[#allocation12 + $0x380] sm:$0xff]
        %v3160 = vld [vmem:[#allocation12 + $0x388] sm:$0xff]
        %v3161 = vld [vmem:[#allocation12 + $0x390] sm:$0xff]
        %v3162 = vld [vmem:[#allocation12 + $0x398] sm:$0xff]
        %v3163 = vld [vmem:[#allocation12 + $0x3a0] sm:$0xff]
        %v3164 = vld [vmem:[#allocation12 + $0x3a8] sm:$0xff]
        %v3165 = vld [vmem:[#allocation12 + $0x3b0] sm:$0xff]
        %v3166 = vld [vmem:[#allocation12 + $0x3b8] sm:$0xff]
        %v3167 = vld [vmem:[#allocation12 + $0x3c0] sm:$0xff]
        %v3168 = vld [vmem:[#allocation12 + $0x3c8] sm:$0xff]
        %v3169 = vld [vmem:[#allocation12 + $0x3d0] sm:$0xff]
        %v3170 = vld [vmem:[#allocation12 + $0x3d8] sm:$0xff]
        %v3171 = vld [vmem:[#allocation12 + $0x3e0] sm:$0xff]
        %v3172 = vld [vmem:[#allocation12 + $0x3e8] sm:$0xff]
        %v3173 = vld [vmem:[#allocation12 + $0x3f0] sm:$0xff]
        %v3174 = vld [vmem:[#allocation12 + $0x3f8] sm:$0xff]
        %v3175 = vld [vmem:[#allocation12 + $0x400] sm:$0xff]
        %v3176 = vld [vmem:[#allocation12 + $0x408] sm:$0xff]
        %v3177 = vld [vmem:[#allocation12 + $0x410] sm:$0xff]
        %v3178 = vld [vmem:[#allocation12 + $0x418] sm:$0xff]
        %v3179 = vld [vmem:[#allocation12 + $0x420] sm:$0xff]
        %v3180 = vld [vmem:[#allocation12 + $0x428] sm:$0xff]
        %v3181 = vld [vmem:[#allocation12 + $0x430] sm:$0xff]
        %v3182 = vld [vmem:[#allocation12 + $0x438] sm:$0xff]
        %v3183 = vld [vmem:[#allocation12 + $0x440] sm:$0xff]
        %v3184 = vld [vmem:[#allocation12 + $0x448] sm:$0xff]
        %v3185 = vld [vmem:[#allocation12 + $0x450] sm:$0xff]
        %v3186 = vld [vmem:[#allocation12 + $0x458] sm:$0xff]
        %v3187 = vld [vmem:[#allocation12 + $0x460] sm:$0xff]
        %v3188 = vld [vmem:[#allocation12 + $0x468] sm:$0xff]
        %v3189 = vld [vmem:[#allocation12 + $0x470] sm:$0xff]
        %v3190 = vld [vmem:[#allocation12 + $0x478] sm:$0xff]
        %v3191 = vld [vmem:[#allocation12 + $0x480] sm:$0xff]
        %v3192 = vld [vmem:[#allocation12 + $0x488] sm:$0xff]
        %v3193 = vld [vmem:[#allocation12 + $0x490] sm:$0xff]
        %v3194 = vld [vmem:[#allocation12 + $0x498] sm:$0xff]
        %v3195 = vld [vmem:[#allocation12 + $0x4a0] sm:$0xff]
        %v3196 = vld [vmem:[#allocation12 + $0x4a8] sm:$0xff]
        %v3197 = vld [vmem:[#allocation12 + $0x4b0] sm:$0xff]
        %v3198 = vld [vmem:[#allocation12 + $0x4b8] sm:$0xff]
        %v3199 = vld [vmem:[#allocation12 + $0x4c0] sm:$0xff]
        %v3200 = vld [vmem:[#allocation12 + $0x4c8] sm:$0xff]
        %v3201 = vld [vmem:[#allocation12 + $0x4d0] sm:$0xff]
        %v3202 = vld [vmem:[#allocation12 + $0x4d8] sm:$0xff]
        %v3203 = vld [vmem:[#allocation12 + $0x4e0] sm:$0xff]
        %v3204 = vld [vmem:[#allocation12 + $0x4e8] sm:$0xff]
        %v3205 = vld [vmem:[#allocation12 + $0x4f0] sm:$0xff]
        %v3206 = vld [vmem:[#allocation12 + $0x4f8] sm:$0xff]
        %v3207 = vld [vmem:[#allocation12 + $0x500] sm:$0xff]
        %v3208 = vld [vmem:[#allocation12 + $0x508] sm:$0xff]
        %v3209 = vld [vmem:[#allocation12 + $0x510] sm:$0xff]
        %v3210 = vld [vmem:[#allocation12 + $0x518] sm:$0xff]
        %v3211 = vld [vmem:[#allocation12 + $0x520] sm:$0xff]
        %v3212 = vld [vmem:[#allocation12 + $0x528] sm:$0xff]
        %v3213 = vld [vmem:[#allocation12 + $0x530] sm:$0xff]
        %v3214 = vld [vmem:[#allocation12 + $0x538] sm:$0xff]
        %v3215 = vld [vmem:[#allocation12 + $0x540] sm:$0xff]
        %v3216 = vld [vmem:[#allocation12 + $0x548] sm:$0xff]
        %v3217 = vld [vmem:[#allocation12 + $0x550] sm:$0xff]
        %v3218 = vld [vmem:[#allocation12 + $0x558] sm:$0xff]
        %v3219 = vld [vmem:[#allocation12 + $0x560] sm:$0xff]
        %v3220 = vld [vmem:[#allocation12 + $0x568] sm:$0xff]
        %v3221 = vld [vmem:[#allocation12 + $0x570] sm:$0xff]
        %v3222 = vld [vmem:[#allocation12 + $0x578] sm:$0xff]
        %v3223 = vld [vmem:[#allocation12 + $0x580] sm:$0xff]
        %v3224 = vld [vmem:[#allocation12 + $0x588] sm:$0xff]
        %v3225 = vld [vmem:[#allocation12 + $0x590] sm:$0xff]
        %v3226 = vld [vmem:[#allocation12 + $0x598] sm:$0xff]
        %v3227 = vld [vmem:[#allocation12 + $0x5a0] sm:$0xff]
        %v3228 = vld [vmem:[#allocation12 + $0x5a8] sm:$0xff]
        %v3229 = vld [vmem:[#allocation12 + $0x5b0] sm:$0xff]
        %v3230 = vld [vmem:[#allocation12 + $0x5b8] sm:$0xff]
        %v3231 = vld [vmem:[#allocation12 + $0x5c0] sm:$0xff]
        %v3232 = vld [vmem:[#allocation12 + $0x5c8] sm:$0xff]
        %v3233 = vld [vmem:[#allocation12 + $0x5d0] sm:$0xff]
        %v3234 = vld [vmem:[#allocation12 + $0x5d8] sm:$0xff]
        %v3235 = vld [vmem:[#allocation12 + $0x5e0] sm:$0xff]
        %v3236 = vld [vmem:[#allocation12 + $0x5e8] sm:$0xff]
        %v3237 = vld [vmem:[#allocation12 + $0x5f0] sm:$0xff]
        %v3238 = vld [vmem:[#allocation12 + $0x5f8] sm:$0xff]
        %v3239 = vld [vmem:[#allocation12 + $0x600] sm:$0xff]
        %v3240 = vld [vmem:[#allocation12 + $0x608] sm:$0xff]
        %v3241 = vld [vmem:[#allocation12 + $0x610] sm:$0xff]
        %v3242 = vld [vmem:[#allocation12 + $0x618] sm:$0xff]
        %v3243 = vld [vmem:[#allocation12 + $0x620] sm:$0xff]
        %v3244 = vld [vmem:[#allocation12 + $0x628] sm:$0xff]
        %v3245 = vld [vmem:[#allocation12 + $0x630] sm:$0xff]
        %v3246 = vld [vmem:[#allocation12 + $0x638] sm:$0xff]
        %v3247 = vld [vmem:[#allocation12 + $0x640] sm:$0xff]
        %v3248 = vld [vmem:[#allocation12 + $0x648] sm:$0xff]
        %v3249 = vld [vmem:[#allocation12 + $0x650] sm:$0xff]
        %v3250 = vld [vmem:[#allocation12 + $0x658] sm:$0xff]
        %v3251 = vld [vmem:[#allocation12 + $0x660] sm:$0xff]
        %v3252 = vld [vmem:[#allocation12 + $0x668] sm:$0xff]
        %v3253 = vld [vmem:[#allocation12 + $0x670] sm:$0xff]
        %v3254 = vld [vmem:[#allocation12 + $0x678] sm:$0xff]
        %v3255 = vld [vmem:[#allocation12 + $0x680] sm:$0xff]
        %v3256 = vld [vmem:[#allocation12 + $0x688] sm:$0xff]
        %v3257 = vld [vmem:[#allocation12 + $0x690] sm:$0xff]
        %v3258 = vld [vmem:[#allocation12 + $0x698] sm:$0xff]
        %v3259 = vld [vmem:[#allocation12 + $0x6a0] sm:$0xff]
        %v3260 = vld [vmem:[#allocation12 + $0x6a8] sm:$0xff]
        %v3261 = vld [vmem:[#allocation12 + $0x6b0] sm:$0xff]
        %v3262 = vld [vmem:[#allocation12 + $0x6b8] sm:$0xff]
        %v3263 = vld [vmem:[#allocation12 + $0x6c0] sm:$0xff]
        %v3264 = vld [vmem:[#allocation12 + $0x6c8] sm:$0xff]
        %v3265 = vld [vmem:[#allocation12 + $0x6d0] sm:$0xff]
        %v3266 = vld [vmem:[#allocation12 + $0x6d8] sm:$0xff]
        %v3267 = vld [vmem:[#allocation12 + $0x6e0] sm:$0xff]
        %v3268 = vld [vmem:[#allocation12 + $0x6e8] sm:$0xff]
        %v3269 = vld [vmem:[#allocation12 + $0x6f0] sm:$0xff]
        %v3270 = vld [vmem:[#allocation12 + $0x6f8] sm:$0xff]
        %v3271 = vld [vmem:[#allocation12 + $0x700] sm:$0xff]
        %v3272 = vld [vmem:[#allocation12 + $0x708] sm:$0xff]
        %v3273 = vld [vmem:[#allocation12 + $0x710] sm:$0xff]
        %v3274 = vld [vmem:[#allocation12 + $0x718] sm:$0xff]
        %v3275 = vld [vmem:[#allocation12 + $0x720] sm:$0xff]
        %v3276 = vld [vmem:[#allocation12 + $0x728] sm:$0xff]
        %v3277 = vld [vmem:[#allocation12 + $0x730] sm:$0xff]
        %v3278 = vld [vmem:[#allocation12 + $0x738] sm:$0xff]
        %v3279 = vld [vmem:[#allocation12 + $0x740] sm:$0xff]
        %v3280 = vld [vmem:[#allocation12 + $0x748] sm:$0xff]
        %v3281 = vld [vmem:[#allocation12 + $0x750] sm:$0xff]
        %v3282 = vld [vmem:[#allocation12 + $0x758] sm:$0xff]
        %v3283 = vld [vmem:[#allocation12 + $0x760] sm:$0xff]
        %v3284 = vld [vmem:[#allocation12 + $0x768] sm:$0xff]
        %v3285 = vld [vmem:[#allocation12 + $0x770] sm:$0xff]
        %v3286 = vld [vmem:[#allocation12 + $0x778] sm:$0xff]
        %v3287 = vld [vmem:[#allocation12 + $0x780] sm:$0xff]
        %v3288 = vld [vmem:[#allocation12 + $0x788] sm:$0xff]
        %v3289 = vld [vmem:[#allocation12 + $0x790] sm:$0xff]
        %v3290 = vld [vmem:[#allocation12 + $0x798] sm:$0xff]
        %v3291 = vld [vmem:[#allocation12 + $0x7a0] sm:$0xff]
        %v3292 = vld [vmem:[#allocation12 + $0x7a8] sm:$0xff]
        %v3293 = vld [vmem:[#allocation12 + $0x7b0] sm:$0xff]
        %v3294 = vld [vmem:[#allocation12 + $0x7b8] sm:$0xff]
        %v3295 = vld [vmem:[#allocation12 + $0x7c0] sm:$0xff]
        %v3296 = vld [vmem:[#allocation12 + $0x7c8] sm:$0xff]
        %v3297 = vld [vmem:[#allocation12 + $0x7d0] sm:$0xff]
        %v3298 = vld [vmem:[#allocation12 + $0x7d8] sm:$0xff]
        %v3299 = vld [vmem:[#allocation12 + $0x7e0] sm:$0xff]
        %v3300 = vld [vmem:[#allocation12 + $0x7e8] sm:$0xff]
        %v3301 = vld [vmem:[#allocation12 + $0x7f0] sm:$0xff]
        %v3302 = vld [vmem:[#allocation12 + $0x7f8] sm:$0xff]
        %v3303 = vld [vmem:[#allocation12 + $0x800] sm:$0xff]
        %v3304 = vld [vmem:[#allocation12 + $0x808] sm:$0xff]
        %v3305 = vld [vmem:[#allocation12 + $0x810] sm:$0xff]
        %v3306 = vld [vmem:[#allocation12 + $0x818] sm:$0xff]
        %v3307 = vld [vmem:[#allocation12 + $0x820] sm:$0xff]
        %v3308 = vld [vmem:[#allocation12 + $0x828] sm:$0xff]
        %v3309 = vld [vmem:[#allocation12 + $0x830] sm:$0xff]
        %v3310 = vld [vmem:[#allocation12 + $0x838] sm:$0xff]
        %v3311 = vld [vmem:[#allocation12 + $0x840] sm:$0xff]
        %v3312 = vld [vmem:[#allocation12 + $0x848] sm:$0xff]
        %v3313 = vld [vmem:[#allocation12 + $0x850] sm:$0xff]
        %v3314 = vld [vmem:[#allocation12 + $0x858] sm:$0xff]
        %v3315 = vld [vmem:[#allocation12 + $0x860] sm:$0xff]
        %v3316 = vld [vmem:[#allocation12 + $0x868] sm:$0xff]
        %v3317 = vld [vmem:[#allocation12 + $0x870] sm:$0xff]
        %v3318 = vld [vmem:[#allocation12 + $0x878] sm:$0xff]
        %v3319 = vld [vmem:[#allocation12 + $0x880] sm:$0xff]
        %v3320 = vld [vmem:[#allocation12 + $0x888] sm:$0xff]
        %v3321 = vld [vmem:[#allocation12 + $0x890] sm:$0xff]
        %v3322 = vld [vmem:[#allocation12 + $0x898] sm:$0xff]
        %v3323 = vld [vmem:[#allocation12 + $0x8a0] sm:$0xff]
        %v3324 = vld [vmem:[#allocation12 + $0x8a8] sm:$0xff]
        %v3325 = vld [vmem:[#allocation12 + $0x8b0] sm:$0xff]
        %v3326 = vld [vmem:[#allocation12 + $0x8b8] sm:$0xff]
        %v3327 = vld [vmem:[#allocation12 + $0x8c0] sm:$0xff]
        %v3328 = vld [vmem:[#allocation12 + $0x8c8] sm:$0xff]
        %v3329 = vld [vmem:[#allocation12 + $0x8d0] sm:$0xff]
        %v3330 = vld [vmem:[#allocation12 + $0x8d8] sm:$0xff]
        %v3331 = vld [vmem:[#allocation12 + $0x8e0] sm:$0xff]
        %v3332 = vld [vmem:[#allocation12 + $0x8e8] sm:$0xff]
        %v3333 = vld [vmem:[#allocation12 + $0x8f0] sm:$0xff]
        %v3334 = vld [vmem:[#allocation12 + $0x8f8] sm:$0xff]
        %v3335 = vld [vmem:[#allocation12 + $0x900] sm:$0xff]
        %v3336 = vld [vmem:[#allocation12 + $0x908] sm:$0xff]
        %v3337 = vld [vmem:[#allocation12 + $0x910] sm:$0xff]
        %v3338 = vld [vmem:[#allocation12 + $0x918] sm:$0xff]
        %v3339 = vld [vmem:[#allocation12 + $0x920] sm:$0xff]
        %v3340 = vld [vmem:[#allocation12 + $0x928] sm:$0xff]
        %v3341 = vld [vmem:[#allocation12 + $0x930] sm:$0xff]
        %v3342 = vld [vmem:[#allocation12 + $0x938] sm:$0xff]
        %v3343 = vld [vmem:[#allocation12 + $0x940] sm:$0xff]
        %v3344 = vld [vmem:[#allocation12 + $0x948] sm:$0xff]
        %v3345 = vld [vmem:[#allocation12 + $0x950] sm:$0xff]
        %v3346 = vld [vmem:[#allocation12 + $0x958] sm:$0xff]
        %v3347 = vld [vmem:[#allocation12 + $0x960] sm:$0xff]
        %v3348 = vld [vmem:[#allocation12 + $0x968] sm:$0xff]
        %v3349 = vld [vmem:[#allocation12 + $0x970] sm:$0xff]
        %v3350 = vld [vmem:[#allocation12 + $0x978] sm:$0xff]
        %v3351 = vld [vmem:[#allocation12 + $0x980] sm:$0xff]
        %v3352 = vld [vmem:[#allocation12 + $0x988] sm:$0xff]
        %v3353 = vld [vmem:[#allocation12 + $0x990] sm:$0xff]
        %v3354 = vld [vmem:[#allocation12 + $0x998] sm:$0xff]
        %v3355 = vld [vmem:[#allocation12 + $0x9a0] sm:$0xff]
        %v3356 = vld [vmem:[#allocation12 + $0x9a8] sm:$0xff]
        %v3357 = vld [vmem:[#allocation12 + $0x9b0] sm:$0xff]
        %v3358 = vld [vmem:[#allocation12 + $0x9b8] sm:$0xff]
        %v3359 = vld [vmem:[#allocation12 + $0x9c0] sm:$0xff]
        %v3360 = vld [vmem:[#allocation12 + $0x9c8] sm:$0xff]
        %v3361 = vld [vmem:[#allocation12 + $0x9d0] sm:$0xff]
        %v3362 = vld [vmem:[#allocation12 + $0x9d8] sm:$0xff]
        %v3363 = vld [vmem:[#allocation12 + $0x9e0] sm:$0xff]
        %v3364 = vld [vmem:[#allocation12 + $0x9e8] sm:$0xff]
        %v3365 = vld [vmem:[#allocation12 + $0x9f0] sm:$0xff]
        %v3366 = vld [vmem:[#allocation12 + $0x9f8] sm:$0xff]
        %v3367 = vld [vmem:[#allocation12 + $0xa00] sm:$0xff]
        %v3368 = vld [vmem:[#allocation12 + $0xa08] sm:$0xff]
        %v3369 = vld [vmem:[#allocation12 + $0xa10] sm:$0xff]
        %v3370 = vld [vmem:[#allocation12 + $0xa18] sm:$0xff]
        %v3371 = vld [vmem:[#allocation12 + $0xa20] sm:$0xff]
        %v3372 = vld [vmem:[#allocation12 + $0xa28] sm:$0xff]
        %v3373 = vld [vmem:[#allocation12 + $0xa30] sm:$0xff]
        %v3374 = vld [vmem:[#allocation12 + $0xa38] sm:$0xff]
        %v3375 = vld [vmem:[#allocation12 + $0xa40] sm:$0xff]
        %v3376 = vld [vmem:[#allocation12 + $0xa48] sm:$0xff]
        %v3377 = vld [vmem:[#allocation12 + $0xa50] sm:$0xff]
        %v3378 = vld [vmem:[#allocation12 + $0xa58] sm:$0xff]
        %v3379 = vld [vmem:[#allocation12 + $0xa60] sm:$0xff]
        %v3380 = vld [vmem:[#allocation12 + $0xa68] sm:$0xff]
        %v3381 = vld [vmem:[#allocation12 + $0xa70] sm:$0xff]
        %v3382 = vld [vmem:[#allocation12 + $0xa78] sm:$0xff]
        %v3383 = vld [vmem:[#allocation12 + $0xa80] sm:$0xff]
        %v3384 = vld [vmem:[#allocation12 + $0xa88] sm:$0xff]
        %v3385 = vld [vmem:[#allocation12 + $0xa90] sm:$0xff]
        %v3386 = vld [vmem:[#allocation12 + $0xa98] sm:$0xff]
        %v3387 = vld [vmem:[#allocation12 + $0xaa0] sm:$0xff]
        %v3388 = vld [vmem:[#allocation12 + $0xaa8] sm:$0xff]
        %v3389 = vld [vmem:[#allocation12 + $0xab0] sm:$0xff]
        %v3390 = vld [vmem:[#allocation12 + $0xab8] sm:$0xff]
        %v3391 = vld [vmem:[#allocation12 + $0xac0] sm:$0xff]
        %v3392 = vld [vmem:[#allocation12 + $0xac8] sm:$0xff]
        %v3393 = vld [vmem:[#allocation12 + $0xad0] sm:$0xff]
        %v3394 = vld [vmem:[#allocation12 + $0xad8] sm:$0xff]
        %v3395 = vld [vmem:[#allocation12 + $0xae0] sm:$0xff]
        %v3396 = vld [vmem:[#allocation12 + $0xae8] sm:$0xff]
        %v3397 = vld [vmem:[#allocation12 + $0xaf0] sm:$0xff]
        %v3398 = vld [vmem:[#allocation12 + $0xaf8] sm:$0xff]
        %v3399 = vld [vmem:[#allocation12 + $0xb00] sm:$0xff]
        %v3400 = vld [vmem:[#allocation12 + $0xb08] sm:$0xff]
        %v3401 = vld [vmem:[#allocation12 + $0xb10] sm:$0xff]
        %v3402 = vld [vmem:[#allocation12 + $0xb18] sm:$0xff]
        %v3403 = vld [vmem:[#allocation12 + $0xb20] sm:$0xff]
        %v3404 = vld [vmem:[#allocation12 + $0xb28] sm:$0xff]
        %v3405 = vld [vmem:[#allocation12 + $0xb30] sm:$0xff]
        %v3406 = vld [vmem:[#allocation12 + $0xb38] sm:$0xff]
        %v3407 = vld [vmem:[#allocation12 + $0xb40] sm:$0xff]
        %v3408 = vld [vmem:[#allocation12 + $0xb48] sm:$0xff]
        %v3409 = vld [vmem:[#allocation12 + $0xb50] sm:$0xff]
        %v3410 = vld [vmem:[#allocation12 + $0xb58] sm:$0xff]
        %v3411 = vld [vmem:[#allocation12 + $0xb60] sm:$0xff]
        %v3412 = vld [vmem:[#allocation12 + $0xb68] sm:$0xff]
        %v3413 = vld [vmem:[#allocation12 + $0xb70] sm:$0xff]
        %v3414 = vld [vmem:[#allocation12 + $0xb78] sm:$0xff]
        %v3415 = vld [vmem:[#allocation12 + $0xb80] sm:$0xff]
        %v3416 = vld [vmem:[#allocation12 + $0xb88] sm:$0xff]
        %v3417 = vld [vmem:[#allocation12 + $0xb90] sm:$0xff]
        %v3418 = vld [vmem:[#allocation12 + $0xb98] sm:$0xff]
        %v3419 = vld [vmem:[#allocation12 + $0xba0] sm:$0xff]
        %v3420 = vld [vmem:[#allocation12 + $0xba8] sm:$0xff]
        %v3421 = vld [vmem:[#allocation12 + $0xbb0] sm:$0xff]
        %v3422 = vld [vmem:[#allocation12 + $0xbb8] sm:$0xff]
        %v3423 = vld [vmem:[#allocation12 + $0xbc0] sm:$0xff]
        %v3424 = vld [vmem:[#allocation12 + $0xbc8] sm:$0xff]
        %v3425 = vld [vmem:[#allocation12 + $0xbd0] sm:$0xff]
        %v3426 = vld [vmem:[#allocation12 + $0xbd8] sm:$0xff]
        %v3427 = vld [vmem:[#allocation12 + $0xbe0] sm:$0xff]
        %v3428 = vld [vmem:[#allocation12 + $0xbe8] sm:$0xff]
        %v3429 = vld [vmem:[#allocation12 + $0xbf0] sm:$0xff]
        %v3430 = vld [vmem:[#allocation12 + $0xbf8] sm:$0xff]
        %v3431 = vld [vmem:[#allocation12 + $0xc00] sm:$0xff]
        %v3432 = vld [vmem:[#allocation12 + $0xc08] sm:$0xff]
        %v3433 = vld [vmem:[#allocation12 + $0xc10] sm:$0xff]
        %v3434 = vld [vmem:[#allocation12 + $0xc18] sm:$0xff]
        %v3435 = vld [vmem:[#allocation12 + $0xc20] sm:$0xff]
        %v3436 = vld [vmem:[#allocation12 + $0xc28] sm:$0xff]
        %v3437 = vld [vmem:[#allocation12 + $0xc30] sm:$0xff]
        %v3438 = vld [vmem:[#allocation12 + $0xc38] sm:$0xff]
        %v3439 = vld [vmem:[#allocation12 + $0xc40] sm:$0xff]
        %v3440 = vld [vmem:[#allocation12 + $0xc48] sm:$0xff]
        %v3441 = vld [vmem:[#allocation12 + $0xc50] sm:$0xff]
        %v3442 = vld [vmem:[#allocation12 + $0xc58] sm:$0xff]
        %v3443 = vld [vmem:[#allocation12 + $0xc60] sm:$0xff]
        %v3444 = vld [vmem:[#allocation12 + $0xc68] sm:$0xff]
        %v3445 = vld [vmem:[#allocation12 + $0xc70] sm:$0xff]
        %v3446 = vld [vmem:[#allocation12 + $0xc78] sm:$0xff]
        %v3447 = vld [vmem:[#allocation12 + $0xc80] sm:$0xff]
        %v3448 = vld [vmem:[#allocation12 + $0xc88] sm:$0xff]
        %v3449 = vld [vmem:[#allocation12 + $0xc90] sm:$0xff]
        %v3450 = vld [vmem:[#allocation12 + $0xc98] sm:$0xff]
        %v3451 = vld [vmem:[#allocation12 + $0xca0] sm:$0xff]
        %v3452 = vld [vmem:[#allocation12 + $0xca8] sm:$0xff]
        %v3453 = vld [vmem:[#allocation12 + $0xcb0] sm:$0xff]
        %v3454 = vld [vmem:[#allocation12 + $0xcb8] sm:$0xff]
        %v3455 = vld [vmem:[#allocation12 + $0xcc0] sm:$0xff]
        %v3456 = vld [vmem:[#allocation12 + $0xcc8] sm:$0xff]
        %v3457 = vld [vmem:[#allocation12 + $0xcd0] sm:$0xff]
        %v3458 = vld [vmem:[#allocation12 + $0xcd8] sm:$0xff]
        %v3459 = vld [vmem:[#allocation12 + $0xce0] sm:$0xff]
        %v3460 = vld [vmem:[#allocation12 + $0xce8] sm:$0xff]
        %v3461 = vld [vmem:[#allocation12 + $0xcf0] sm:$0xff]
        %v3462 = vld [vmem:[#allocation12 + $0xcf8] sm:$0xff]
        %v3463 = vld [vmem:[#allocation12 + $0xd00] sm:$0xff]
        %v3464 = vld [vmem:[#allocation12 + $0xd08] sm:$0xff]
        %v3465 = vld [vmem:[#allocation12 + $0xd10] sm:$0xff]
        %v3466 = vld [vmem:[#allocation12 + $0xd18] sm:$0xff]
        %v3467 = vld [vmem:[#allocation12 + $0xd20] sm:$0xff]
        %v3468 = vld [vmem:[#allocation12 + $0xd28] sm:$0xff]
        %v3469 = vld [vmem:[#allocation12 + $0xd30] sm:$0xff]
        %v3470 = vld [vmem:[#allocation12 + $0xd38] sm:$0xff]
        %v3471 = vld [vmem:[#allocation12 + $0xd40] sm:$0xff]
        %v3472 = vld [vmem:[#allocation12 + $0xd48] sm:$0xff]
        %v3473 = vld [vmem:[#allocation12 + $0xd50] sm:$0xff]
        %v3474 = vld [vmem:[#allocation12 + $0xd58] sm:$0xff]
        %v3475 = vld [vmem:[#allocation12 + $0xd60] sm:$0xff]
        %v3476 = vld [vmem:[#allocation12 + $0xd68] sm:$0xff]
        %v3477 = vld [vmem:[#allocation12 + $0xd70] sm:$0xff]
        %v3478 = vld [vmem:[#allocation12 + $0xd78] sm:$0xff]
        %v3479 = vld [vmem:[#allocation12 + $0xd80] sm:$0xff]
        %v3480 = vld [vmem:[#allocation12 + $0xd88] sm:$0xff]
        %v3481 = vld [vmem:[#allocation12 + $0xd90] sm:$0xff]
        %v3482 = vld [vmem:[#allocation12 + $0xd98] sm:$0xff]
        %v3483 = vld [vmem:[#allocation12 + $0xda0] sm:$0xff]
        %v3484 = vld [vmem:[#allocation12 + $0xda8] sm:$0xff]
        %v3485 = vld [vmem:[#allocation12 + $0xdb0] sm:$0xff]
        %v3486 = vld [vmem:[#allocation12 + $0xdb8] sm:$0xff]
        %v3487 = vld [vmem:[#allocation12 + $0xdc0] sm:$0xff]
        %v3488 = vld [vmem:[#allocation12 + $0xdc8] sm:$0xff]
        %v3489 = vld [vmem:[#allocation12 + $0xdd0] sm:$0xff]
        %v3490 = vld [vmem:[#allocation12 + $0xdd8] sm:$0xff]
        %v3491 = vld [vmem:[#allocation12 + $0xde0] sm:$0xff]
        %v3492 = vld [vmem:[#allocation12 + $0xde8] sm:$0xff]
        %v3493 = vld [vmem:[#allocation12 + $0xdf0] sm:$0xff]
        %v3494 = vld [vmem:[#allocation12 + $0xdf8] sm:$0xff]
        %v3495 = vld [vmem:[#allocation12 + $0xe00] sm:$0xff]
        %v3496 = vld [vmem:[#allocation12 + $0xe08] sm:$0xff]
        %v3497 = vld [vmem:[#allocation12 + $0xe10] sm:$0xff]
        %v3498 = vld [vmem:[#allocation12 + $0xe18] sm:$0xff]
        %v3499 = vld [vmem:[#allocation12 + $0xe20] sm:$0xff]
        %v3500 = vld [vmem:[#allocation12 + $0xe28] sm:$0xff]
        %v3501 = vld [vmem:[#allocation12 + $0xe30] sm:$0xff]
        %v3502 = vld [vmem:[#allocation12 + $0xe38] sm:$0xff]
        %v3503 = vld [vmem:[#allocation12 + $0xe40] sm:$0xff]
        %v3504 = vld [vmem:[#allocation12 + $0xe48] sm:$0xff]
        %v3505 = vld [vmem:[#allocation12 + $0xe50] sm:$0xff]
        %v3506 = vld [vmem:[#allocation12 + $0xe58] sm:$0xff]
        %v3507 = vld [vmem:[#allocation12 + $0xe60] sm:$0xff]
        %v3508 = vld [vmem:[#allocation12 + $0xe68] sm:$0xff]
        %v3509 = vld [vmem:[#allocation12 + $0xe70] sm:$0xff]
        %v3510 = vld [vmem:[#allocation12 + $0xe78] sm:$0xff]
        %v3511 = vld [vmem:[#allocation12 + $0xe80] sm:$0xff]
        %v3512 = vld [vmem:[#allocation12 + $0xe88] sm:$0xff]
        %v3513 = vld [vmem:[#allocation12 + $0xe90] sm:$0xff]
        %v3514 = vld [vmem:[#allocation12 + $0xe98] sm:$0xff]
        %v3515 = vld [vmem:[#allocation12 + $0xea0] sm:$0xff]
        %v3516 = vld [vmem:[#allocation12 + $0xea8] sm:$0xff]
        %v3517 = vld [vmem:[#allocation12 + $0xeb0] sm:$0xff]
        %v3518 = vld [vmem:[#allocation12 + $0xeb8] sm:$0xff]
        %v3519 = vld [vmem:[#allocation12 + $0xec0] sm:$0xff]
        %v3520 = vld [vmem:[#allocation12 + $0xec8] sm:$0xff]
        %v3521 = vld [vmem:[#allocation12 + $0xed0] sm:$0xff]
        %v3522 = vld [vmem:[#allocation12 + $0xed8] sm:$0xff]
        %v3523 = vld [vmem:[#allocation12 + $0xee0] sm:$0xff]
        %v3524 = vld [vmem:[#allocation12 + $0xee8] sm:$0xff]
        %v3525 = vld [vmem:[#allocation12 + $0xef0] sm:$0xff]
        %v3526 = vld [vmem:[#allocation12 + $0xef8] sm:$0xff]
        %v3527 = vld [vmem:[#allocation12 + $0xf00] sm:$0xff]
        %v3528 = vld [vmem:[#allocation12 + $0xf08] sm:$0xff]
        %v3529 = vld [vmem:[#allocation12 + $0xf10] sm:$0xff]
        %v3530 = vld [vmem:[#allocation12 + $0xf18] sm:$0xff]
        %v3531 = vld [vmem:[#allocation12 + $0xf20] sm:$0xff]
        %v3532 = vld [vmem:[#allocation12 + $0xf28] sm:$0xff]
        %v3533 = vld [vmem:[#allocation12 + $0xf30] sm:$0xff]
        %v3534 = vld [vmem:[#allocation12 + $0xf38] sm:$0xff]
        %v3535 = vld [vmem:[#allocation12 + $0xf40] sm:$0xff]
        %v3536 = vld [vmem:[#allocation12 + $0xf48] sm:$0xff]
        %v3537 = vld [vmem:[#allocation12 + $0xf50] sm:$0xff]
        %v3538 = vld [vmem:[#allocation12 + $0xf58] sm:$0xff]
        %v3539 = vld [vmem:[#allocation12 + $0xf60] sm:$0xff]
        %v3540 = vld [vmem:[#allocation12 + $0xf68] sm:$0xff]
        %v3541 = vld [vmem:[#allocation12 + $0xf70] sm:$0xff]
        %v3542 = vld [vmem:[#allocation12 + $0xf78] sm:$0xff]
        %v3543 = vld [vmem:[#allocation12 + $0xf80] sm:$0xff]
        %v3544 = vld [vmem:[#allocation12 + $0xf88] sm:$0xff]
        %v3545 = vld [vmem:[#allocation12 + $0xf90] sm:$0xff]
        %v3546 = vld [vmem:[#allocation12 + $0xf98] sm:$0xff]
        %v3547 = vld [vmem:[#allocation12 + $0xfa0] sm:$0xff]
        %v3548 = vld [vmem:[#allocation12 + $0xfa8] sm:$0xff]
        %v3549 = vld [vmem:[#allocation12 + $0xfb0] sm:$0xff]
        %v3550 = vld [vmem:[#allocation12 + $0xfb8] sm:$0xff]
        %v3551 = vld [vmem:[#allocation12 + $0xfc0] sm:$0xff]
        %v3552 = vld [vmem:[#allocation12 + $0xfc8] sm:$0xff]
        %v3553 = vld [vmem:[#allocation12 + $0xfd0] sm:$0xff]
        %v3554 = vld [vmem:[#allocation12 + $0xfd8] sm:$0xff]
        %v3555 = vld [vmem:[#allocation12 + $0xfe0] sm:$0xff]
        %v3556 = vld [vmem:[#allocation12 + $0xfe8] sm:$0xff]
        %v3557 = vld [vmem:[#allocation12 + $0xff0] sm:$0xff]
        %v3558 = vld [vmem:[#allocation12 + $0xff8] sm:$0xff]
        %v3559 = vld [vmem:[#allocation12 + $0x1000] sm:$0xff]
        %v3560 = vld [vmem:[#allocation12 + $0x1008] sm:$0xff]
        %v3561 = vld [vmem:[#allocation12 + $0x1010] sm:$0xff]
        %v3562 = vld [vmem:[#allocation12 + $0x1018] sm:$0xff]
        %v3563 = vld [vmem:[#allocation12 + $0x1020] sm:$0xff]
        %v3564 = vld [vmem:[#allocation12 + $0x1028] sm:$0xff]
        %v3565 = vld [vmem:[#allocation12 + $0x1030] sm:$0xff]
        %v3566 = vld [vmem:[#allocation12 + $0x1038] sm:$0xff]
        %v3567 = vld [vmem:[#allocation12 + $0x1040] sm:$0xff]
        %v3568 = vld [vmem:[#allocation12 + $0x1048] sm:$0xff]
        %v3569 = vld [vmem:[#allocation12 + $0x1050] sm:$0xff]
        %v3570 = vld [vmem:[#allocation12 + $0x1058] sm:$0xff]
        %v3571 = vld [vmem:[#allocation12 + $0x1060] sm:$0xff]
        %v3572 = vld [vmem:[#allocation12 + $0x1068] sm:$0xff]
        %v3573 = vld [vmem:[#allocation12 + $0x1070] sm:$0xff]
        %v3574 = vld [vmem:[#allocation12 + $0x1078] sm:$0xff]
        %v3575 = vld [vmem:[#allocation12 + $0x1080] sm:$0xff]
        %v3576 = vld [vmem:[#allocation12 + $0x1088] sm:$0xff]
        %v3577 = vld [vmem:[#allocation12 + $0x1090] sm:$0xff]
        %v3578 = vld [vmem:[#allocation12 + $0x1098] sm:$0xff]
        %v3579 = vld [vmem:[#allocation12 + $0x10a0] sm:$0xff]
        %v3580 = vld [vmem:[#allocation12 + $0x10a8] sm:$0xff]
        %v3581 = vld [vmem:[#allocation12 + $0x10b0] sm:$0xff]
        %v3582 = vld [vmem:[#allocation12 + $0x10b8] sm:$0xff]
        %v3583 = vld [vmem:[#allocation12 + $0x10c0] sm:$0xff]
        %v3584 = vld [vmem:[#allocation12 + $0x10c8] sm:$0xff]
        %v3585 = vld [vmem:[#allocation12 + $0x10d0] sm:$0xff]
        %v3586 = vld [vmem:[#allocation12 + $0x10d8] sm:$0xff]
        %v3587 = vld [vmem:[#allocation12 + $0x10e0] sm:$0xff]
        %v3588 = vld [vmem:[#allocation12 + $0x10e8] sm:$0xff]
        %v3589 = vld [vmem:[#allocation12 + $0x10f0] sm:$0xff]
        %v3590 = vld [vmem:[#allocation12 + $0x10f8] sm:$0xff]
        %v3591 = vld [vmem:[#allocation12 + $0x1100] sm:$0xff]
        %v3592 = vld [vmem:[#allocation12 + $0x1108] sm:$0xff]
        %v3593 = vld [vmem:[#allocation12 + $0x1110] sm:$0xff]
        %v3594 = vld [vmem:[#allocation12 + $0x1118] sm:$0xff]
        %v3595 = vld [vmem:[#allocation12 + $0x1120] sm:$0xff]
        %v3596 = vld [vmem:[#allocation12 + $0x1128] sm:$0xff]
        %v3597 = vld [vmem:[#allocation12 + $0x1130] sm:$0xff]
        %v3598 = vld [vmem:[#allocation12 + $0x1138] sm:$0xff]
        %v3599 = vld [vmem:[#allocation12 + $0x1140] sm:$0xff]
        %v3600 = vld [vmem:[#allocation12 + $0x1148] sm:$0xff]
        %v3601 = vld [vmem:[#allocation12 + $0x1150] sm:$0xff]
        %v3602 = vld [vmem:[#allocation12 + $0x1158] sm:$0xff]
        %v3603 = vld [vmem:[#allocation12 + $0x1160] sm:$0xff]
        %v3604 = vld [vmem:[#allocation12 + $0x1168] sm:$0xff]
        %v3605 = vld [vmem:[#allocation12 + $0x1170] sm:$0xff]
        %v3606 = vld [vmem:[#allocation12 + $0x1178] sm:$0xff]
        %v3607 = vld [vmem:[#allocation12 + $0x1180] sm:$0xff]
        %v3608 = vld [vmem:[#allocation12 + $0x1188] sm:$0xff]
        %v3609 = vld [vmem:[#allocation12 + $0x1190] sm:$0xff]
        %v3610 = vld [vmem:[#allocation12 + $0x1198] sm:$0xff]
        %v3611 = vld [vmem:[#allocation12 + $0x11a0] sm:$0xff]
        %v3612 = vld [vmem:[#allocation12 + $0x11a8] sm:$0xff]
        %v3613 = vld [vmem:[#allocation12 + $0x11b0] sm:$0xff]
        %v3614 = vld [vmem:[#allocation12 + $0x11b8] sm:$0xff]
        %v3615 = vld [vmem:[#allocation12 + $0x11c0] sm:$0xff]
        %v3616 = vld [vmem:[#allocation12 + $0x11c8] sm:$0xff]
        %v3617 = vld [vmem:[#allocation12 + $0x11d0] sm:$0xff]
        %v3618 = vld [vmem:[#allocation12 + $0x11d8] sm:$0xff]
        %v3619 = vld [vmem:[#allocation12 + $0x11e0] sm:$0xff]
        %v3620 = vld [vmem:[#allocation12 + $0x11e8] sm:$0xff]
        %v3621 = vld [vmem:[#allocation12 + $0x11f0] sm:$0xff]
        %v3622 = vld [vmem:[#allocation12 + $0x11f8] sm:$0xff]
        %v3623 = vld [vmem:[#allocation12 + $0x1200] sm:$0xff]
        %v3624 = vld [vmem:[#allocation12 + $0x1208] sm:$0xff]
        %v3625 = vld [vmem:[#allocation12 + $0x1210] sm:$0xff]
        %v3626 = vld [vmem:[#allocation12 + $0x1218] sm:$0xff]
        %v3627 = vld [vmem:[#allocation12 + $0x1220] sm:$0xff]
        %v3628 = vld [vmem:[#allocation12 + $0x1228] sm:$0xff]
        %v3629 = vld [vmem:[#allocation12 + $0x1230] sm:$0xff]
        %v3630 = vld [vmem:[#allocation12 + $0x1238] sm:$0xff]
        %v3631 = vld [vmem:[#allocation12 + $0x1240] sm:$0xff]
        %v3632 = vld [vmem:[#allocation12 + $0x1248] sm:$0xff]
        %v3633 = vld [vmem:[#allocation12 + $0x1250] sm:$0xff]
        %v3634 = vld [vmem:[#allocation12 + $0x1258] sm:$0xff]
        %v3635 = vld [vmem:[#allocation12 + $0x1260] sm:$0xff]
        %v3636 = vld [vmem:[#allocation12 + $0x1268] sm:$0xff]
        %v3637 = vld [vmem:[#allocation12 + $0x1270] sm:$0xff]
        %v3638 = vld [vmem:[#allocation12 + $0x1278] sm:$0xff]
        %v3639 = vld [vmem:[#allocation12 + $0x1280] sm:$0xff]
        %v3640 = vld [vmem:[#allocation12 + $0x1288] sm:$0xff]
        %v3641 = vld [vmem:[#allocation12 + $0x1290] sm:$0xff]
        %v3642 = vld [vmem:[#allocation12 + $0x1298] sm:$0xff]
        %v3643 = vld [vmem:[#allocation12 + $0x12a0] sm:$0xff]
        %v3644 = vld [vmem:[#allocation12 + $0x12a8] sm:$0xff]
        %v3645 = vld [vmem:[#allocation12 + $0x12b0] sm:$0xff]
        %v3646 = vld [vmem:[#allocation12 + $0x12b8] sm:$0xff]
        %v3647 = vld [vmem:[#allocation12 + $0x12c0] sm:$0xff]
        %v3648 = vld [vmem:[#allocation12 + $0x12c8] sm:$0xff]
        %v3649 = vld [vmem:[#allocation12 + $0x12d0] sm:$0xff]
        %v3650 = vld [vmem:[#allocation12 + $0x12d8] sm:$0xff]
        %v3651 = vld [vmem:[#allocation12 + $0x12e0] sm:$0xff]
        %v3652 = vld [vmem:[#allocation12 + $0x12e8] sm:$0xff]
        %v3653 = vld [vmem:[#allocation12 + $0x12f0] sm:$0xff]
        %v3654 = vld [vmem:[#allocation12 + $0x12f8] sm:$0xff]
        %v3655 = vld [vmem:[#allocation12 + $0x1300] sm:$0xff]
        %v3656 = vld [vmem:[#allocation12 + $0x1308] sm:$0xff]
        %v3657 = vld [vmem:[#allocation12 + $0x1310] sm:$0xff]
        %v3658 = vld [vmem:[#allocation12 + $0x1318] sm:$0xff]
        %v3659 = vld [vmem:[#allocation12 + $0x1320] sm:$0xff]
        %v3660 = vld [vmem:[#allocation12 + $0x1328] sm:$0xff]
        %v3661 = vld [vmem:[#allocation12 + $0x1330] sm:$0xff]
        %v3662 = vld [vmem:[#allocation12 + $0x1338] sm:$0xff]
        %v3663 = vld [vmem:[#allocation12 + $0x1340] sm:$0xff]
        %v3664 = vld [vmem:[#allocation12 + $0x1348] sm:$0xff]
        %v3665 = vld [vmem:[#allocation12 + $0x1350] sm:$0xff]
        %v3666 = vld [vmem:[#allocation12 + $0x1358] sm:$0xff]
        %v3667 = vld [vmem:[#allocation12 + $0x1360] sm:$0xff]
        %v3668 = vld [vmem:[#allocation12 + $0x1368] sm:$0xff]
        %v3669 = vld [vmem:[#allocation12 + $0x1370] sm:$0xff]
        %v3670 = vld [vmem:[#allocation12 + $0x1378] sm:$0xff]
        %v3671 = vld [vmem:[#allocation12 + $0x1380] sm:$0xff]
        %v3672 = vld [vmem:[#allocation12 + $0x1388] sm:$0xff]
        %v3673 = vld [vmem:[#allocation12 + $0x1390] sm:$0xff]
        %v3674 = vld [vmem:[#allocation12 + $0x1398] sm:$0xff]
        %v3675 = vld [vmem:[#allocation12 + $0x13a0] sm:$0xff]
        %v3676 = vld [vmem:[#allocation12 + $0x13a8] sm:$0xff]
        %v3677 = vld [vmem:[#allocation12 + $0x13b0] sm:$0xff]
        %v3678 = vld [vmem:[#allocation12 + $0x13b8] sm:$0xff]
        %v3679 = vld [vmem:[#allocation12 + $0x13c0] sm:$0xff]
        %v3680 = vld [vmem:[#allocation12 + $0x13c8] sm:$0xff]
        %v3681 = vld [vmem:[#allocation12 + $0x13d0] sm:$0xff]
        %v3682 = vld [vmem:[#allocation12 + $0x13d8] sm:$0xff]
        %v3683 = vld [vmem:[#allocation12 + $0x13e0] sm:$0xff]
        %v3684 = vld [vmem:[#allocation12 + $0x13e8] sm:$0xff]
        %v3685 = vld [vmem:[#allocation12 + $0x13f0] sm:$0xff]
        %v3686 = vld [vmem:[#allocation12 + $0x13f8] sm:$0xff]
        %v3687 = vld [vmem:[#allocation12 + $0x1400] sm:$0xff]
        %v3688 = vld [vmem:[#allocation12 + $0x1408] sm:$0xff]
        %v3689 = vld [vmem:[#allocation12 + $0x1410] sm:$0xff]
        %v3690 = vld [vmem:[#allocation12 + $0x1418] sm:$0xff]
        %v3691 = vld [vmem:[#allocation12 + $0x1420] sm:$0xff]
        %v3692 = vld [vmem:[#allocation12 + $0x1428] sm:$0xff]
        %v3693 = vld [vmem:[#allocation12 + $0x1430] sm:$0xff]
        %v3694 = vld [vmem:[#allocation12 + $0x1438] sm:$0xff]
        %v3695 = vld [vmem:[#allocation12 + $0x1440] sm:$0xff]
        %v3696 = vld [vmem:[#allocation12 + $0x1448] sm:$0xff]
        %v3697 = vld [vmem:[#allocation12 + $0x1450] sm:$0xff]
        %v3698 = vld [vmem:[#allocation12 + $0x1458] sm:$0xff]
        %v3699 = vld [vmem:[#allocation12 + $0x1460] sm:$0xff]
        %v3700 = vld [vmem:[#allocation12 + $0x1468] sm:$0xff]
        %v3701 = vld [vmem:[#allocation12 + $0x1470] sm:$0xff]
        %v3702 = vld [vmem:[#allocation12 + $0x1478] sm:$0xff]
        %v3703 = vld [vmem:[#allocation12 + $0x1480] sm:$0xff]
        %v3704 = vld [vmem:[#allocation12 + $0x1488] sm:$0xff]
        %v3705 = vld [vmem:[#allocation12 + $0x1490] sm:$0xff]
        %v3706 = vld [vmem:[#allocation12 + $0x1498] sm:$0xff]
        %v3707 = vld [vmem:[#allocation12 + $0x14a0] sm:$0xff]
        %v3708 = vld [vmem:[#allocation12 + $0x14a8] sm:$0xff]
        %v3709 = vld [vmem:[#allocation12 + $0x14b0] sm:$0xff]
        %v3710 = vld [vmem:[#allocation12 + $0x14b8] sm:$0xff]
        %v3711 = vld [vmem:[#allocation12 + $0x14c0] sm:$0xff]
        %v3712 = vld [vmem:[#allocation12 + $0x14c8] sm:$0xff]
        %v3713 = vld [vmem:[#allocation12 + $0x14d0] sm:$0xff]
        %v3714 = vld [vmem:[#allocation12 + $0x14d8] sm:$0xff]
        %v3715 = vld [vmem:[#allocation12 + $0x14e0] sm:$0xff]
        %v3716 = vld [vmem:[#allocation12 + $0x14e8] sm:$0xff]
        %v3717 = vld [vmem:[#allocation12 + $0x14f0] sm:$0xff]
        %v3718 = vld [vmem:[#allocation12 + $0x14f8] sm:$0xff]
        %v3719 = vld [vmem:[#allocation12 + $0x1500] sm:$0xff]
        %v3720 = vld [vmem:[#allocation12 + $0x1508] sm:$0xff]
        %v3721 = vld [vmem:[#allocation12 + $0x1510] sm:$0xff]
        %v3722 = vld [vmem:[#allocation12 + $0x1518] sm:$0xff]
        %v3723 = vld [vmem:[#allocation12 + $0x1520] sm:$0xff]
        %v3724 = vld [vmem:[#allocation12 + $0x1528] sm:$0xff]
        %v3725 = vld [vmem:[#allocation12 + $0x1530] sm:$0xff]
        %v3726 = vld [vmem:[#allocation12 + $0x1538] sm:$0xff]
        %v3727 = vld [vmem:[#allocation12 + $0x1540] sm:$0xff]
        %v3728 = vld [vmem:[#allocation12 + $0x1548] sm:$0xff]
        %v3729 = vld [vmem:[#allocation12 + $0x1550] sm:$0xff]
        %v3730 = vld [vmem:[#allocation12 + $0x1558] sm:$0xff]
        %v3731 = vld [vmem:[#allocation12 + $0x1560] sm:$0xff]
        %v3732 = vld [vmem:[#allocation12 + $0x1568] sm:$0xff]
        %v3733 = vld [vmem:[#allocation12 + $0x1570] sm:$0xff]
        %v3734 = vld [vmem:[#allocation12 + $0x1578] sm:$0xff]
        %v3735 = vld [vmem:[#allocation12 + $0x1580] sm:$0xff]
        %v3736 = vld [vmem:[#allocation12 + $0x1588] sm:$0xff]
        %v3737 = vld [vmem:[#allocation12 + $0x1590] sm:$0xff]
        %v3738 = vld [vmem:[#allocation12 + $0x1598] sm:$0xff]
        %v3739 = vld [vmem:[#allocation12 + $0x15a0] sm:$0xff]
        %v3740 = vld [vmem:[#allocation12 + $0x15a8] sm:$0xff]
        %v3741 = vld [vmem:[#allocation12 + $0x15b0] sm:$0xff]
        %v3742 = vld [vmem:[#allocation12 + $0x15b8] sm:$0xff]
        %v3743 = vld [vmem:[#allocation12 + $0x15c0] sm:$0xff]
        %v3744 = vld [vmem:[#allocation12 + $0x15c8] sm:$0xff]
        %v3745 = vld [vmem:[#allocation12 + $0x15d0] sm:$0xff]
        %v3746 = vld [vmem:[#allocation12 + $0x15d8] sm:$0xff]
        %v3747 = vld [vmem:[#allocation12 + $0x15e0] sm:$0xff]
        %v3748 = vld [vmem:[#allocation12 + $0x15e8] sm:$0xff]
        %v3749 = vld [vmem:[#allocation12 + $0x15f0] sm:$0xff]
        %v3750 = vld [vmem:[#allocation12 + $0x15f8] sm:$0xff]
        %v3751 = vld [vmem:[#allocation12 + $0x1600] sm:$0xff]
        %v3752 = vld [vmem:[#allocation12 + $0x1608] sm:$0xff]
        %v3753 = vld [vmem:[#allocation12 + $0x1610] sm:$0xff]
        %v3754 = vld [vmem:[#allocation12 + $0x1618] sm:$0xff]
        %v3755 = vld [vmem:[#allocation12 + $0x1620] sm:$0xff]
        %v3756 = vld [vmem:[#allocation12 + $0x1628] sm:$0xff]
        %v3757 = vld [vmem:[#allocation12 + $0x1630] sm:$0xff]
        %v3758 = vld [vmem:[#allocation12 + $0x1638] sm:$0xff]
        %v3759 = vld [vmem:[#allocation12 + $0x1640] sm:$0xff]
        %v3760 = vld [vmem:[#allocation12 + $0x1648] sm:$0xff]
        %v3761 = vld [vmem:[#allocation12 + $0x1650] sm:$0xff]
        %v3762 = vld [vmem:[#allocation12 + $0x1658] sm:$0xff]
        %v3763 = vld [vmem:[#allocation12 + $0x1660] sm:$0xff]
        %v3764 = vld [vmem:[#allocation12 + $0x1668] sm:$0xff]
        %v3765 = vld [vmem:[#allocation12 + $0x1670] sm:$0xff]
        %v3766 = vld [vmem:[#allocation12 + $0x1678] sm:$0xff]
        %v3767 = vld [vmem:[#allocation12 + $0x1680] sm:$0xff]
        %v3768 = vld [vmem:[#allocation12 + $0x1688] sm:$0xff]
        %v3769 = vld [vmem:[#allocation12 + $0x1690] sm:$0xff]
        %v3770 = vld [vmem:[#allocation12 + $0x1698] sm:$0xff]
        %v3771 = vld [vmem:[#allocation12 + $0x16a0] sm:$0xff]
        %v3772 = vld [vmem:[#allocation12 + $0x16a8] sm:$0xff]
        %v3773 = vld [vmem:[#allocation12 + $0x16b0] sm:$0xff]
        %v3774 = vld [vmem:[#allocation12 + $0x16b8] sm:$0xff]
        %v3775 = vld [vmem:[#allocation12 + $0x16c0] sm:$0xff]
        %v3776 = vld [vmem:[#allocation12 + $0x16c8] sm:$0xff]
        %v3777 = vld [vmem:[#allocation12 + $0x16d0] sm:$0xff]
        %v3778 = vld [vmem:[#allocation12 + $0x16d8] sm:$0xff]
        %v3779 = vld [vmem:[#allocation12 + $0x16e0] sm:$0xff]
        %v3780 = vld [vmem:[#allocation12 + $0x16e8] sm:$0xff]
        %v3781 = vld [vmem:[#allocation12 + $0x16f0] sm:$0xff]
        %v3782 = vld [vmem:[#allocation12 + $0x16f8] sm:$0xff]
        %v3783 = vld [vmem:[#allocation12 + $0x1700] sm:$0xff]
        %v3784 = vld [vmem:[#allocation12 + $0x1708] sm:$0xff]
        %v3785 = vld [vmem:[#allocation12 + $0x1710] sm:$0xff]
        %v3786 = vld [vmem:[#allocation12 + $0x1718] sm:$0xff]
        %v3787 = vld [vmem:[#allocation12 + $0x1720] sm:$0xff]
        %v3788 = vld [vmem:[#allocation12 + $0x1728] sm:$0xff]
        %v3789 = vld [vmem:[#allocation12 + $0x1730] sm:$0xff]
        %v3790 = vld [vmem:[#allocation12 + $0x1738] sm:$0xff]
        %v3791 = vld [vmem:[#allocation12 + $0x1740] sm:$0xff]
        %v3792 = vld [vmem:[#allocation12 + $0x1748] sm:$0xff]
        %v3793 = vld [vmem:[#allocation12 + $0x1750] sm:$0xff]
        %v3794 = vld [vmem:[#allocation12 + $0x1758] sm:$0xff]
        %v3795 = vld [vmem:[#allocation12 + $0x1760] sm:$0xff]
        %v3796 = vld [vmem:[#allocation12 + $0x1768] sm:$0xff]
        %v3797 = vld [vmem:[#allocation12 + $0x1770] sm:$0xff]
        %v3798 = vld [vmem:[#allocation12 + $0x1778] sm:$0xff]
        %v3799 = vld [vmem:[#allocation12 + $0x1780] sm:$0xff]
        %v3800 = vld [vmem:[#allocation12 + $0x1788] sm:$0xff]
        %v3801 = vld [vmem:[#allocation12 + $0x1790] sm:$0xff]
        %v3802 = vld [vmem:[#allocation12 + $0x1798] sm:$0xff]
        %v3803 = vld [vmem:[#allocation12 + $0x17a0] sm:$0xff]
        %v3804 = vld [vmem:[#allocation12 + $0x17a8] sm:$0xff]
        %v3805 = vld [vmem:[#allocation12 + $0x17b0] sm:$0xff]
        %v3806 = vld [vmem:[#allocation12 + $0x17b8] sm:$0xff]
        %v3807 = vld [vmem:[#allocation12 + $0x17c0] sm:$0xff]
        %v3808 = vld [vmem:[#allocation12 + $0x17c8] sm:$0xff]
        %v3809 = vld [vmem:[#allocation12 + $0x17d0] sm:$0xff]
        %v3810 = vld [vmem:[#allocation12 + $0x17d8] sm:$0xff]
        %v3811 = vld [vmem:[#allocation12 + $0x17e0] sm:$0xff]
        %v3812 = vld [vmem:[#allocation12 + $0x17e8] sm:$0xff]
        %v3813 = vld [vmem:[#allocation12 + $0x17f0] sm:$0xff]
        %v3814 = vld [vmem:[#allocation12 + $0x17f8] sm:$0xff]
        %v3815 = vld [vmem:[#allocation12 + $0x1800] sm:$0xff]
        %v3816 = vld [vmem:[#allocation12 + $0x1808] sm:$0xff]
        %v3817 = vld [vmem:[#allocation12 + $0x1810] sm:$0xff]
        %v3818 = vld [vmem:[#allocation12 + $0x1818] sm:$0xff]
        %v3819 = vld [vmem:[#allocation12 + $0x1820] sm:$0xff]
        %v3820 = vld [vmem:[#allocation12 + $0x1828] sm:$0xff]
        %v3821 = vld [vmem:[#allocation12 + $0x1830] sm:$0xff]
        %v3822 = vld [vmem:[#allocation12 + $0x1838] sm:$0xff]
        %v3823 = vld [vmem:[#allocation12 + $0x1840] sm:$0xff]
        %v3824 = vld [vmem:[#allocation12 + $0x1848] sm:$0xff]
        %v3825 = vld [vmem:[#allocation12 + $0x1850] sm:$0xff]
        %v3826 = vld [vmem:[#allocation12 + $0x1858] sm:$0xff]
        %v3827 = vld [vmem:[#allocation12 + $0x1860] sm:$0xff]
        %v3828 = vld [vmem:[#allocation12 + $0x1868] sm:$0xff]
        %v3829 = vld [vmem:[#allocation12 + $0x1870] sm:$0xff]
        %v3830 = vld [vmem:[#allocation12 + $0x1878] sm:$0xff]
        %v3831 = vld [vmem:[#allocation12 + $0x1880] sm:$0xff]
        %v3832 = vld [vmem:[#allocation12 + $0x1888] sm:$0xff]
        %v3833 = vld [vmem:[#allocation12 + $0x1890] sm:$0xff]
        %v3834 = vld [vmem:[#allocation12 + $0x1898] sm:$0xff]
        %v3835 = vld [vmem:[#allocation12 + $0x18a0] sm:$0xff]
        %v3836 = vld [vmem:[#allocation12 + $0x18a8] sm:$0xff]
        %v3837 = vld [vmem:[#allocation12 + $0x18b0] sm:$0xff]
        %v3838 = vld [vmem:[#allocation12 + $0x18b8] sm:$0xff]
        %v3839 = vld [vmem:[#allocation12 + $0x18c0] sm:$0xff]
        %v3840 = vld [vmem:[#allocation12 + $0x18c8] sm:$0xff]
        %v3841 = vld [vmem:[#allocation12 + $0x18d0] sm:$0xff]
        %v3842 = vld [vmem:[#allocation12 + $0x18d8] sm:$0xff]
        %v3843 = vld [vmem:[#allocation12 + $0x18e0] sm:$0xff]
        %v3844 = vld [vmem:[#allocation12 + $0x18e8] sm:$0xff]
        %v3845 = vld [vmem:[#allocation12 + $0x18f0] sm:$0xff]
        %v3846 = vld [vmem:[#allocation12 + $0x18f8] sm:$0xff]
        %v3847 = vld [vmem:[#allocation12 + $0x1900] sm:$0xff]
        %v3848 = vld [vmem:[#allocation12 + $0x1908] sm:$0xff]
        %v3849 = vld [vmem:[#allocation12 + $0x1910] sm:$0xff]
        %v3850 = vld [vmem:[#allocation12 + $0x1918] sm:$0xff]
        %v3851 = vld [vmem:[#allocation12 + $0x1920] sm:$0xff]
        %v3852 = vld [vmem:[#allocation12 + $0x1928] sm:$0xff]
        %v3853 = vld [vmem:[#allocation12 + $0x1930] sm:$0xff]
        %v3854 = vld [vmem:[#allocation12 + $0x1938] sm:$0xff]
        %v3855 = vld [vmem:[#allocation12 + $0x1940] sm:$0xff]
        %v3856 = vld [vmem:[#allocation12 + $0x1948] sm:$0xff]
        %v3857 = vld [vmem:[#allocation12 + $0x1950] sm:$0xff]
        %v3858 = vld [vmem:[#allocation12 + $0x1958] sm:$0xff]
        %v3859 = vld [vmem:[#allocation12 + $0x1960] sm:$0xff]
        %v3860 = vld [vmem:[#allocation12 + $0x1968] sm:$0xff]
        %v3861 = vld [vmem:[#allocation12 + $0x1970] sm:$0xff]
        %v3862 = vld [vmem:[#allocation12 + $0x1978] sm:$0xff]
        %v3863 = vld [vmem:[#allocation12 + $0x1980] sm:$0xff]
        %v3864 = vld [vmem:[#allocation12 + $0x1988] sm:$0xff]
        %v3865 = vld [vmem:[#allocation12 + $0x1990] sm:$0xff]
        %v3866 = vld [vmem:[#allocation12 + $0x1998] sm:$0xff]
        %v3867 = vld [vmem:[#allocation12 + $0x19a0] sm:$0xff]
        %v3868 = vld [vmem:[#allocation12 + $0x19a8] sm:$0xff]
        %v3869 = vld [vmem:[#allocation12 + $0x19b0] sm:$0xff]
        %v3870 = vld [vmem:[#allocation12 + $0x19b8] sm:$0xff]
        %v3871 = vld [vmem:[#allocation12 + $0x19c0] sm:$0xff]
        %v3872 = vld [vmem:[#allocation12 + $0x19c8] sm:$0xff]
        %v3873 = vld [vmem:[#allocation12 + $0x19d0] sm:$0xff]
        %v3874 = vld [vmem:[#allocation12 + $0x19d8] sm:$0xff]
        %v3875 = vld [vmem:[#allocation12 + $0x19e0] sm:$0xff]
        %v3876 = vld [vmem:[#allocation12 + $0x19e8] sm:$0xff]
        %v3877 = vld [vmem:[#allocation12 + $0x19f0] sm:$0xff]
        %v3878 = vld [vmem:[#allocation12 + $0x19f8] sm:$0xff]
        %v3879 = vld [vmem:[#allocation12 + $0x1a00] sm:$0xff]
        %v3880 = vld [vmem:[#allocation12 + $0x1a08] sm:$0xff]
        %v3881 = vld [vmem:[#allocation12 + $0x1a10] sm:$0xff]
        %v3882 = vld [vmem:[#allocation12 + $0x1a18] sm:$0xff]
        %v3883 = vld [vmem:[#allocation12 + $0x1a20] sm:$0xff]
        %v3884 = vld [vmem:[#allocation12 + $0x1a28] sm:$0xff]
        %v3885 = vld [vmem:[#allocation12 + $0x1a30] sm:$0xff]
        %v3886 = vld [vmem:[#allocation12 + $0x1a38] sm:$0xff]
        %v3887 = vld [vmem:[#allocation12 + $0x1a40] sm:$0xff]
        %v3888 = vld [vmem:[#allocation12 + $0x1a48] sm:$0xff]
        %v3889 = vld [vmem:[#allocation12 + $0x1a50] sm:$0xff]
        %v3890 = vld [vmem:[#allocation12 + $0x1a58] sm:$0xff]
        %v3891 = vld [vmem:[#allocation12 + $0x1a60] sm:$0xff]
        %v3892 = vld [vmem:[#allocation12 + $0x1a68] sm:$0xff]
        %v3893 = vld [vmem:[#allocation12 + $0x1a70] sm:$0xff]
        %v3894 = vld [vmem:[#allocation12 + $0x1a78] sm:$0xff]
        %v3895 = vld [vmem:[#allocation12 + $0x1a80] sm:$0xff]
        %v3896 = vld [vmem:[#allocation12 + $0x1a88] sm:$0xff]
        %v3897 = vld [vmem:[#allocation12 + $0x1a90] sm:$0xff]
        %v3898 = vld [vmem:[#allocation12 + $0x1a98] sm:$0xff]
        %v3899 = vld [vmem:[#allocation12 + $0x1aa0] sm:$0xff]
        %v3900 = vld [vmem:[#allocation12 + $0x1aa8] sm:$0xff]
        %v3901 = vld [vmem:[#allocation12 + $0x1ab0] sm:$0xff]
        %v3902 = vld [vmem:[#allocation12 + $0x1ab8] sm:$0xff]
        %v3903 = vld [vmem:[#allocation12 + $0x1ac0] sm:$0xff]
        %v3904 = vld [vmem:[#allocation12 + $0x1ac8] sm:$0xff]
        %v3905 = vld [vmem:[#allocation12 + $0x1ad0] sm:$0xff]
        %v3906 = vld [vmem:[#allocation12 + $0x1ad8] sm:$0xff]
        %v3907 = vld [vmem:[#allocation12 + $0x1ae0] sm:$0xff]
        %v3908 = vld [vmem:[#allocation12 + $0x1ae8] sm:$0xff]
        %v3909 = vld [vmem:[#allocation12 + $0x1af0] sm:$0xff]
        %v3910 = vld [vmem:[#allocation12 + $0x1af8] sm:$0xff]
        %v3911 = vld [vmem:[#allocation13] sm:$0xf]
        %v3913 = vlaneseq
        %v3914 = vshrl.u32 %v3913, 7
        %v3915 = vsub.s32 0, %v3914
        %v3916 = vrot.slane %v3911, %v3915
        %v3917 = vlaneseq
        %v3918 = vshrl.u32 %v3917, 7
        %v3919 = vsub.s32 1, %v3918
        %v3920 = vrot.slane %v3911, %v3919
        %v3921 = vlaneseq
        %v3922 = vshrl.u32 %v3921, 7
        %v3923 = vsub.s32 2, %v3922
        %v3924 = vrot.slane %v3911, %v3923
        %v3925 = vlaneseq
        %v3926 = vshrl.u32 %v3925, 7
        %v3927 = vsub.s32 3, %v3926
        %v3928 = vrot.slane %v3911, %v3927
        %v4045 = vunpack.c.l.b16 %v2935
        %v4046 = vunpack.c.h.b16 %v2935
        %v4047 = vunpack.c.l.b16 %v2936
        %v4048 = vunpack.c.h.b16 %v2936
        %v4049 = vunpack.c.l.b16 %v2937
        %v4050 = vunpack.c.h.b16 %v2937
        %v4051 = vunpack.c.l.b16 %v2938
        %v4052 = vunpack.c.h.b16 %v2938
        %v4053 = vunpack.c.l.b16 %v2939
        %v4054 = vunpack.c.h.b16 %v2939
        %v4055 = vunpack.c.l.b16 %v2940
        %v4056 = vunpack.c.h.b16 %v2940
        %v4057 = vunpack.c.l.b16 %v2941
        %v4058 = vunpack.c.h.b16 %v2941
        %v4059 = vunpack.c.l.b16 %v2942
        %v4060 = vunpack.c.h.b16 %v2942
        %v4061 = vunpack.c.l.b16 %v2943
        %v4062 = vunpack.c.h.b16 %v2943
        %v4063 = vunpack.c.l.b16 %v2944
        %v4064 = vunpack.c.h.b16 %v2944
        %v4065 = vunpack.c.l.b16 %v2945
        %v4066 = vunpack.c.h.b16 %v2945
        %v4067 = vunpack.c.l.b16 %v2946
        %v4068 = vunpack.c.h.b16 %v2946
        %v4069 = vunpack.c.l.b16 %v2947
        %v4070 = vunpack.c.h.b16 %v2947
        %v4071 = vunpack.c.l.b16 %v2948
        %v4072 = vunpack.c.l.b16 %v2949
        %v4073 = vunpack.c.h.b16 %v2949
        %v4074 = vunpack.c.l.b16 %v2950
        %v4075 = vunpack.c.h.b16 %v2950
        %v4076 = vunpack.c.l.b16 %v2951
        %v4077 = vunpack.c.h.b16 %v2951
        %v4078 = vunpack.c.l.b16 %v2952
        %v4079 = vunpack.c.h.b16 %v2952
        %v4080 = vunpack.c.l.b16 %v2953
        %v4081 = vunpack.c.h.b16 %v2953
        %v4082 = vunpack.c.l.b16 %v2954
        %v4083 = vunpack.c.h.b16 %v2954
        %v4084 = vunpack.c.l.b16 %v2955
        %v4085 = vunpack.c.h.b16 %v2955
        %v4086 = vunpack.c.l.b16 %v2956
        %v4087 = vunpack.c.h.b16 %v2956
        %v4088 = vunpack.c.l.b16 %v2957
        %v4089 = vunpack.c.h.b16 %v2957
        %v4090 = vunpack.c.l.b16 %v2958
        %v4091 = vunpack.c.h.b16 %v2958
        %v4092 = vunpack.c.l.b16 %v2959
        %v4093 = vunpack.c.h.b16 %v2959
        %v4094 = vunpack.c.l.b16 %v2960
        %v4095 = vunpack.c.h.b16 %v2960
        %v4096 = vunpack.c.l.b16 %v2961
        %v4097 = vunpack.c.h.b16 %v2961
        %v4098 = vunpack.c.l.b16 %v2962
        %v4099 = vunpack.c.l.b16 %v2963
        %v4100 = vunpack.c.h.b16 %v2963
        %v4101 = vunpack.c.l.b16 %v2964
        %v4102 = vunpack.c.h.b16 %v2964
        %v4103 = vunpack.c.l.b16 %v2965
        %v4104 = vunpack.c.h.b16 %v2965
        %v4105 = vunpack.c.l.b16 %v2966
        %v4106 = vunpack.c.h.b16 %v2966
        %v4107 = vunpack.c.l.b16 %v2967
        %v4108 = vunpack.c.h.b16 %v2967
        %v4109 = vunpack.c.l.b16 %v2968
        %v4110 = vunpack.c.h.b16 %v2968
        %v4111 = vunpack.c.l.b16 %v2969
        %v4112 = vunpack.c.h.b16 %v2969
        %v4113 = vunpack.c.l.b16 %v2970
        %v4114 = vunpack.c.h.b16 %v2970
        %v4115 = vunpack.c.l.b16 %v2971
        %v4116 = vunpack.c.h.b16 %v2971
        %v4117 = vunpack.c.l.b16 %v2972
        %v4118 = vunpack.c.h.b16 %v2972
        %v4119 = vunpack.c.l.b16 %v2973
        %v4120 = vunpack.c.h.b16 %v2973
        %v4121 = vunpack.c.l.b16 %v2974
        %v4122 = vunpack.c.h.b16 %v2974
        %v4123 = vunpack.c.l.b16 %v2975
        %v4124 = vunpack.c.h.b16 %v2975
        %v4125 = vunpack.c.l.b16 %v2976
        %v4126 = vunpack.c.l.b16 %v2977
        %v4127 = vunpack.c.h.b16 %v2977
        %v4128 = vunpack.c.l.b16 %v2978
        %v4129 = vunpack.c.h.b16 %v2978
        %v4130 = vunpack.c.l.b16 %v2979
        %v4131 = vunpack.c.h.b16 %v2979
        %v4132 = vunpack.c.l.b16 %v2980
        %v4133 = vunpack.c.h.b16 %v2980
        %v4134 = vunpack.c.l.b16 %v2981
        %v4135 = vunpack.c.h.b16 %v2981
        %v4136 = vunpack.c.l.b16 %v2982
        %v4137 = vunpack.c.h.b16 %v2982
        %v4138 = vunpack.c.l.b16 %v2983
        %v4139 = vunpack.c.h.b16 %v2983
        %v4140 = vunpack.c.l.b16 %v2984
        %v4141 = vunpack.c.h.b16 %v2984
        %v4142 = vunpack.c.l.b16 %v2985
        %v4143 = vunpack.c.h.b16 %v2985
        %v4144 = vunpack.c.l.b16 %v2986
        %v4145 = vunpack.c.h.b16 %v2986
        %v4146 = vunpack.c.l.b16 %v2987
        %v4147 = vunpack.c.h.b16 %v2987
        %v4148 = vunpack.c.l.b16 %v2988
        %v4149 = vunpack.c.h.b16 %v2988
        %v4150 = vunpack.c.l.b16 %v2989
        %v4151 = vunpack.c.h.b16 %v2989
        %v4152 = vunpack.c.l.b16 %v2990
        %v4153 = vunpack.c.l.b16 %v2991
        %v4154 = vunpack.c.h.b16 %v2991
        %v4155 = vunpack.c.l.b16 %v2992
        %v4156 = vunpack.c.h.b16 %v2992
        %v4157 = vunpack.c.l.b16 %v2993
        %v4158 = vunpack.c.h.b16 %v2993
        %v4159 = vunpack.c.l.b16 %v2994
        %v4160 = vunpack.c.h.b16 %v2994
        %v4161 = vunpack.c.l.b16 %v2995
        %v4162 = vunpack.c.h.b16 %v2995
        %v4163 = vunpack.c.l.b16 %v2996
        %v4164 = vunpack.c.h.b16 %v2996
        %v4165 = vunpack.c.l.b16 %v2997
        %v4166 = vunpack.c.h.b16 %v2997
        %v4167 = vunpack.c.l.b16 %v2998
        %v4168 = vunpack.c.h.b16 %v2998
        %v4169 = vunpack.c.l.b16 %v2999
        %v4170 = vunpack.c.h.b16 %v2999
        %v4171 = vunpack.c.l.b16 %v3000
        %v4172 = vunpack.c.h.b16 %v3000
        %v4173 = vunpack.c.l.b16 %v3001
        %v4174 = vunpack.c.h.b16 %v3001
        %v4175 = vunpack.c.l.b16 %v3002
        %v4176 = vunpack.c.h.b16 %v3002
        %v4177 = vunpack.c.l.b16 %v3003
        %v4178 = vunpack.c.h.b16 %v3003
        %v4179 = vunpack.c.l.b16 %v3004
        %v4180 = vunpack.c.l.b16 %v3005
        %v4181 = vunpack.c.h.b16 %v3005
        %v4182 = vunpack.c.l.b16 %v3006
        %v4183 = vunpack.c.h.b16 %v3006
        %v4184 = vunpack.c.l.b16 %v3007
        %v4185 = vunpack.c.h.b16 %v3007
        %v4186 = vunpack.c.l.b16 %v3008
        %v4187 = vunpack.c.h.b16 %v3008
        %v4188 = vunpack.c.l.b16 %v3009
        %v4189 = vunpack.c.h.b16 %v3009
        %v4190 = vunpack.c.l.b16 %v3010
        %v4191 = vunpack.c.h.b16 %v3010
        %v4192 = vunpack.c.l.b16 %v3011
        %v4193 = vunpack.c.h.b16 %v3011
        %v4194 = vunpack.c.l.b16 %v3012
        %v4195 = vunpack.c.h.b16 %v3012
        %v4196 = vunpack.c.l.b16 %v3013
        %v4197 = vunpack.c.h.b16 %v3013
        %v4198 = vunpack.c.l.b16 %v3014
        %v4199 = vunpack.c.h.b16 %v3014
        %v4200 = vunpack.c.l.b16 %v3015
        %v4201 = vunpack.c.h.b16 %v3015
        %v4202 = vunpack.c.l.b16 %v3016
        %v4203 = vunpack.c.h.b16 %v3016
        %v4204 = vunpack.c.l.b16 %v3017
        %v4205 = vunpack.c.h.b16 %v3017
        %v4206 = vunpack.c.l.b16 %v3018
        %v4207 = vunpack.c.l.b16 %v3019
        %v4208 = vunpack.c.h.b16 %v3019
        %v4209 = vunpack.c.l.b16 %v3020
        %v4210 = vunpack.c.h.b16 %v3020
        %v4211 = vunpack.c.l.b16 %v3021
        %v4212 = vunpack.c.h.b16 %v3021
        %v4213 = vunpack.c.l.b16 %v3022
        %v4214 = vunpack.c.h.b16 %v3022
        %v4215 = vunpack.c.l.b16 %v3023
        %v4216 = vunpack.c.h.b16 %v3023
        %v4217 = vunpack.c.l.b16 %v3024
        %v4218 = vunpack.c.h.b16 %v3024
        %v4219 = vunpack.c.l.b16 %v3025
        %v4220 = vunpack.c.h.b16 %v3025
        %v4221 = vunpack.c.l.b16 %v3026
        %v4222 = vunpack.c.h.b16 %v3026
        %v4223 = vunpack.c.l.b16 %v3027
        %v4224 = vunpack.c.h.b16 %v3027
        %v4225 = vunpack.c.l.b16 %v3028
        %v4226 = vunpack.c.h.b16 %v3028
        %v4227 = vunpack.c.l.b16 %v3029
        %v4228 = vunpack.c.h.b16 %v3029
        %v4229 = vunpack.c.l.b16 %v3030
        %v4230 = vunpack.c.h.b16 %v3030
        %v4231 = vunpack.c.l.b16 %v3031
        %v4232 = vunpack.c.h.b16 %v3031
        %v4233 = vunpack.c.l.b16 %v3032
        %v4234 = vunpack.c.l.b16 %v3033
        %v4235 = vunpack.c.h.b16 %v3033
        %v4236 = vunpack.c.l.b16 %v3034
        %v4237 = vunpack.c.h.b16 %v3034
        %v4238 = vunpack.c.l.b16 %v3035
        %v4239 = vunpack.c.h.b16 %v3035
        %v4240 = vunpack.c.l.b16 %v3036
        %v4241 = vunpack.c.h.b16 %v3036
        %v4242 = vunpack.c.l.b16 %v3037
        %v4243 = vunpack.c.h.b16 %v3037
        %v4244 = vunpack.c.l.b16 %v3038
        %v4245 = vunpack.c.h.b16 %v3038
        %v4246 = vunpack.c.l.b16 %v3039
        %v4247 = vunpack.c.h.b16 %v3039
        %v4248 = vunpack.c.l.b16 %v3040
        %v4249 = vunpack.c.h.b16 %v3040
        %v4250 = vunpack.c.l.b16 %v3041
        %v4251 = vunpack.c.h.b16 %v3041
        %v4252 = vunpack.c.l.b16 %v3042
        %v4253 = vunpack.c.h.b16 %v3042
        %v4254 = vunpack.c.l.b16 %v3043
        %v4255 = vunpack.c.h.b16 %v3043
        %v4256 = vunpack.c.l.b16 %v3044
        %v4257 = vunpack.c.h.b16 %v3044
        %v4258 = vunpack.c.l.b16 %v3045
        %v4259 = vunpack.c.h.b16 %v3045
        %v4260 = vunpack.c.l.b16 %v3046
        %v4261 = vpack.c.b16 %v4072, %v4045
        %v4262 = vpack.c.b16 %v4073, %v4046
        %v4263 = vpack.c.b16 %v4074, %v4047
        %v4264 = vpack.c.b16 %v4075, %v4048
        %v4265 = vpack.c.b16 %v4076, %v4049
        %v4266 = vpack.c.b16 %v4077, %v4050
        %v4267 = vpack.c.b16 %v4078, %v4051
        %v4268 = vpack.c.b16 %v4079, %v4052
        %v4269 = vpack.c.b16 %v4080, %v4053
        %v4270 = vpack.c.b16 %v4081, %v4054
        %v4271 = vpack.c.b16 %v4082, %v4055
        %v4272 = vpack.c.b16 %v4083, %v4056
        %v4273 = vpack.c.b16 %v4084, %v4057
        %v4274 = vpack.c.b16 %v4085, %v4058
        %v4275 = vpack.c.b16 %v4086, %v4059
        %v4276 = vpack.c.b16 %v4087, %v4060
        %v4277 = vpack.c.b16 %v4088, %v4061
        %v4278 = vpack.c.b16 %v4089, %v4062
        %v4279 = vpack.c.b16 %v4090, %v4063
        %v4280 = vpack.c.b16 %v4091, %v4064
        %v4281 = vpack.c.b16 %v4092, %v4065
        %v4282 = vpack.c.b16 %v4093, %v4066
        %v4283 = vpack.c.b16 %v4094, %v4067
        %v4284 = vpack.c.b16 %v4095, %v4068
        %v4285 = vpack.c.b16 %v4096, %v4069
        %v4286 = vpack.c.b16 %v4097, %v4070
        %v4287 = vpack.c.b16 %v4098, %v4071
        %v4288 = vpack.c.b16 %v4126, %v4099
        %v4289 = vpack.c.b16 %v4127, %v4100
        %v4290 = vpack.c.b16 %v4128, %v4101
        %v4291 = vpack.c.b16 %v4129, %v4102
        %v4292 = vpack.c.b16 %v4130, %v4103
        %v4293 = vpack.c.b16 %v4131, %v4104
        %v4294 = vpack.c.b16 %v4132, %v4105
        %v4295 = vpack.c.b16 %v4133, %v4106
        %v4296 = vpack.c.b16 %v4134, %v4107
        %v4297 = vpack.c.b16 %v4135, %v4108
        %v4298 = vpack.c.b16 %v4136, %v4109
        %v4299 = vpack.c.b16 %v4137, %v4110
        %v4300 = vpack.c.b16 %v4138, %v4111
        %v4301 = vpack.c.b16 %v4139, %v4112
        %v4302 = vpack.c.b16 %v4140, %v4113
        %v4303 = vpack.c.b16 %v4141, %v4114
        %v4304 = vpack.c.b16 %v4142, %v4115
        %v4305 = vpack.c.b16 %v4143, %v4116
        %v4306 = vpack.c.b16 %v4144, %v4117
        %v4307 = vpack.c.b16 %v4145, %v4118
        %v4308 = vpack.c.b16 %v4146, %v4119
        %v4309 = vpack.c.b16 %v4147, %v4120
        %v4310 = vpack.c.b16 %v4148, %v4121
        %v4311 = vpack.c.b16 %v4149, %v4122
        %v4312 = vpack.c.b16 %v4150, %v4123
        %v4313 = vpack.c.b16 %v4151, %v4124
        %v4314 = vpack.c.b16 %v4152, %v4125
        %v4315 = vpack.c.b16 %v4180, %v4153
        %v4316 = vpack.c.b16 %v4181, %v4154
        %v4317 = vpack.c.b16 %v4182, %v4155
        %v4318 = vpack.c.b16 %v4183, %v4156
        %v4319 = vpack.c.b16 %v4184, %v4157
        %v4320 = vpack.c.b16 %v4185, %v4158
        %v4321 = vpack.c.b16 %v4186, %v4159
        %v4322 = vpack.c.b16 %v4187, %v4160
        %v4323 = vpack.c.b16 %v4188, %v4161
        %v4324 = vpack.c.b16 %v4189, %v4162
        %v4325 = vpack.c.b16 %v4190, %v4163
        %v4326 = vpack.c.b16 %v4191, %v4164
        %v4327 = vpack.c.b16 %v4192, %v4165
        %v4328 = vpack.c.b16 %v4193, %v4166
        %v4329 = vpack.c.b16 %v4194, %v4167
        %v4330 = vpack.c.b16 %v4195, %v4168
        %v4331 = vpack.c.b16 %v4196, %v4169
        %v4332 = vpack.c.b16 %v4197, %v4170
        %v4333 = vpack.c.b16 %v4198, %v4171
        %v4334 = vpack.c.b16 %v4199, %v4172
        %v4335 = vpack.c.b16 %v4200, %v4173
        %v4336 = vpack.c.b16 %v4201, %v4174
        %v4337 = vpack.c.b16 %v4202, %v4175
        %v4338 = vpack.c.b16 %v4203, %v4176
        %v4339 = vpack.c.b16 %v4204, %v4177
        %v4340 = vpack.c.b16 %v4205, %v4178
        %v4341 = vpack.c.b16 %v4206, %v4179
        %v4342 = vpack.c.b16 %v4234, %v4207
        %v4343 = vpack.c.b16 %v4235, %v4208
        %v4344 = vpack.c.b16 %v4236, %v4209
        %v4345 = vpack.c.b16 %v4237, %v4210
        %v4346 = vpack.c.b16 %v4238, %v4211
        %v4347 = vpack.c.b16 %v4239, %v4212
        %v4348 = vpack.c.b16 %v4240, %v4213
        %v4349 = vpack.c.b16 %v4241, %v4214
        %v4350 = vpack.c.b16 %v4242, %v4215
        %v4351 = vpack.c.b16 %v4243, %v4216
        %v4352 = vpack.c.b16 %v4244, %v4217
        %v4353 = vpack.c.b16 %v4245, %v4218
        %v4354 = vpack.c.b16 %v4246, %v4219
        %v4355 = vpack.c.b16 %v4247, %v4220
        %v4356 = vpack.c.b16 %v4248, %v4221
        %v4357 = vpack.c.b16 %v4249, %v4222
        %v4358 = vpack.c.b16 %v4250, %v4223
        %v4359 = vpack.c.b16 %v4251, %v4224
        %v4360 = vpack.c.b16 %v4252, %v4225
        %v4361 = vpack.c.b16 %v4253, %v4226
        %v4362 = vpack.c.b16 %v4254, %v4227
        %v4363 = vpack.c.b16 %v4255, %v4228
        %v4364 = vpack.c.b16 %v4256, %v4229
        %v4365 = vpack.c.b16 %v4257, %v4230
        %v4366 = vpack.c.b16 %v4258, %v4231
        %v4367 = vpack.c.b16 %v4259, %v4232
        %v4368 = vpack.c.b16 %v4260, %v4233
        %v5341 = vunpack.c.l.b16 %v3047
        %v5342 = vunpack.c.h.b16 %v3047
        %v5343 = vunpack.c.l.b16 %v3048
        %v5344 = vunpack.c.h.b16 %v3048
        %v5345 = vunpack.c.l.b16 %v3049
        %v5346 = vunpack.c.h.b16 %v3049
        %v5347 = vunpack.c.l.b16 %v3050
        %v5348 = vunpack.c.h.b16 %v3050
        %v5349 = vunpack.c.l.b16 %v3051
        %v5350 = vunpack.c.h.b16 %v3051
        %v5351 = vunpack.c.l.b16 %v3052
        %v5352 = vunpack.c.h.b16 %v3052
        %v5353 = vunpack.c.l.b16 %v3053
        %v5354 = vunpack.c.h.b16 %v3053
        %v5355 = vunpack.c.l.b16 %v3054
        %v5356 = vunpack.c.h.b16 %v3054
        %v5357 = vunpack.c.l.b16 %v3055
        %v5358 = vunpack.c.h.b16 %v3055
        %v5359 = vunpack.c.l.b16 %v3056
        %v5360 = vunpack.c.h.b16 %v3056
        %v5361 = vunpack.c.l.b16 %v3057
        %v5362 = vunpack.c.h.b16 %v3057
        %v5363 = vunpack.c.l.b16 %v3058
        %v5364 = vunpack.c.h.b16 %v3058
        %v5365 = vunpack.c.l.b16 %v3059
        %v5366 = vunpack.c.h.b16 %v3059
        %v5367 = vunpack.c.l.b16 %v3060
        %v5368 = vunpack.c.h.b16 %v3060
        %v5369 = vunpack.c.l.b16 %v3061
        %v5370 = vunpack.c.h.b16 %v3061
        %v5371 = vunpack.c.l.b16 %v3062
        %v5372 = vunpack.c.h.b16 %v3062
        %v5373 = vunpack.c.l.b16 %v3063
        %v5374 = vunpack.c.h.b16 %v3063
        %v5375 = vunpack.c.l.b16 %v3064
        %v5376 = vunpack.c.h.b16 %v3064
        %v5377 = vunpack.c.l.b16 %v3065
        %v5378 = vunpack.c.h.b16 %v3065
        %v5379 = vunpack.c.l.b16 %v3066
        %v5380 = vunpack.c.h.b16 %v3066
        %v5381 = vunpack.c.l.b16 %v3067
        %v5382 = vunpack.c.h.b16 %v3067
        %v5383 = vunpack.c.l.b16 %v3068
        %v5384 = vunpack.c.h.b16 %v3068
        %v5385 = vunpack.c.l.b16 %v3069
        %v5386 = vunpack.c.h.b16 %v3069
        %v5387 = vunpack.c.l.b16 %v3070
        %v5388 = vunpack.c.h.b16 %v3070
        %v5389 = vunpack.c.l.b16 %v3071
        %v5390 = vunpack.c.h.b16 %v3071
        %v5391 = vunpack.c.l.b16 %v3072
        %v5392 = vunpack.c.h.b16 %v3072
        %v5393 = vunpack.c.l.b16 %v3073
        %v5394 = vunpack.c.h.b16 %v3073
        %v5395 = vunpack.c.l.b16 %v3074
        %v5396 = vunpack.c.h.b16 %v3074
        %v5397 = vunpack.c.l.b16 %v3075
        %v5398 = vunpack.c.h.b16 %v3075
        %v5399 = vunpack.c.l.b16 %v3076
        %v5400 = vunpack.c.h.b16 %v3076
        %v5401 = vunpack.c.l.b16 %v3077
        %v5402 = vunpack.c.h.b16 %v3077
        %v5403 = vunpack.c.l.b16 %v3078
        %v5404 = vunpack.c.h.b16 %v3078
        %v5405 = vunpack.c.l.b16 %v3079
        %v5406 = vunpack.c.h.b16 %v3079
        %v5407 = vunpack.c.l.b16 %v3080
        %v5408 = vunpack.c.h.b16 %v3080
        %v5409 = vunpack.c.l.b16 %v3081
        %v5410 = vunpack.c.h.b16 %v3081
        %v5411 = vunpack.c.l.b16 %v3082
        %v5412 = vunpack.c.h.b16 %v3082
        %v5413 = vunpack.c.l.b16 %v3083
        %v5414 = vunpack.c.h.b16 %v3083
        %v5415 = vunpack.c.l.b16 %v3084
        %v5416 = vunpack.c.h.b16 %v3084
        %v5417 = vunpack.c.l.b16 %v3085
        %v5418 = vunpack.c.h.b16 %v3085
        %v5419 = vunpack.c.l.b16 %v3086
        %v5420 = vunpack.c.h.b16 %v3086
        %v5421 = vunpack.c.l.b16 %v3087
        %v5422 = vunpack.c.h.b16 %v3087
        %v5423 = vunpack.c.l.b16 %v3088
        %v5424 = vunpack.c.h.b16 %v3088
        %v5425 = vunpack.c.l.b16 %v3089
        %v5426 = vunpack.c.h.b16 %v3089
        %v5427 = vunpack.c.l.b16 %v3090
        %v5428 = vunpack.c.h.b16 %v3090
        %v5429 = vunpack.c.l.b16 %v3091
        %v5430 = vunpack.c.h.b16 %v3091
        %v5431 = vunpack.c.l.b16 %v3092
        %v5432 = vunpack.c.h.b16 %v3092
        %v5433 = vunpack.c.l.b16 %v3093
        %v5434 = vunpack.c.h.b16 %v3093
        %v5435 = vunpack.c.l.b16 %v3094
        %v5436 = vunpack.c.h.b16 %v3094
        %v5437 = vunpack.c.l.b16 %v3095
        %v5438 = vunpack.c.h.b16 %v3095
        %v5439 = vunpack.c.l.b16 %v3096
        %v5440 = vunpack.c.h.b16 %v3096
        %v5441 = vunpack.c.l.b16 %v3097
        %v5442 = vunpack.c.h.b16 %v3097
        %v5443 = vunpack.c.l.b16 %v3098
        %v5444 = vunpack.c.h.b16 %v3098
        %v5445 = vunpack.c.l.b16 %v3099
        %v5446 = vunpack.c.h.b16 %v3099
        %v5447 = vunpack.c.l.b16 %v3100
        %v5448 = vunpack.c.h.b16 %v3100
        %v5449 = vunpack.c.l.b16 %v3101
        %v5450 = vunpack.c.h.b16 %v3101
        %v5451 = vunpack.c.l.b16 %v3102
        %v5452 = vunpack.c.h.b16 %v3102
        %v5453 = vunpack.c.l.b16 %v3103
        %v5454 = vunpack.c.h.b16 %v3103
        %v5455 = vunpack.c.l.b16 %v3104
        %v5456 = vunpack.c.h.b16 %v3104
        %v5457 = vunpack.c.l.b16 %v3105
        %v5458 = vunpack.c.h.b16 %v3105
        %v5459 = vunpack.c.l.b16 %v3106
        %v5460 = vunpack.c.h.b16 %v3106
        %v5461 = vunpack.c.l.b16 %v3107
        %v5462 = vunpack.c.h.b16 %v3107
        %v5463 = vunpack.c.l.b16 %v3108
        %v5464 = vunpack.c.h.b16 %v3108
        %v5465 = vunpack.c.l.b16 %v3109
        %v5466 = vunpack.c.h.b16 %v3109
        %v5467 = vunpack.c.l.b16 %v3110
        %v5468 = vunpack.c.h.b16 %v3110
        %v5469 = vunpack.c.l.b16 %v3111
        %v5470 = vunpack.c.h.b16 %v3111
        %v5471 = vunpack.c.l.b16 %v3112
        %v5472 = vunpack.c.h.b16 %v3112
        %v5473 = vunpack.c.l.b16 %v3113
        %v5474 = vunpack.c.h.b16 %v3113
        %v5475 = vunpack.c.l.b16 %v3114
        %v5476 = vunpack.c.h.b16 %v3114
        %v5477 = vunpack.c.l.b16 %v3115
        %v5478 = vunpack.c.h.b16 %v3115
        %v5479 = vunpack.c.l.b16 %v3116
        %v5480 = vunpack.c.h.b16 %v3116
        %v5481 = vunpack.c.l.b16 %v3117
        %v5482 = vunpack.c.h.b16 %v3117
        %v5483 = vunpack.c.l.b16 %v3118
        %v5484 = vunpack.c.h.b16 %v3118
        %v5485 = vunpack.c.l.b16 %v3119
        %v5486 = vunpack.c.h.b16 %v3119
        %v5487 = vunpack.c.l.b16 %v3120
        %v5488 = vunpack.c.h.b16 %v3120
        %v5489 = vunpack.c.l.b16 %v3121
        %v5490 = vunpack.c.h.b16 %v3121
        %v5491 = vunpack.c.l.b16 %v3122
        %v5492 = vunpack.c.h.b16 %v3122
        %v5493 = vunpack.c.l.b16 %v3123
        %v5494 = vunpack.c.h.b16 %v3123
        %v5495 = vunpack.c.l.b16 %v3124
        %v5496 = vunpack.c.h.b16 %v3124
        %v5497 = vunpack.c.l.b16 %v3125
        %v5498 = vunpack.c.h.b16 %v3125
        %v5499 = vunpack.c.l.b16 %v3126
        %v5500 = vunpack.c.h.b16 %v3126
        %v5501 = vunpack.c.l.b16 %v3127
        %v5502 = vunpack.c.h.b16 %v3127
        %v5503 = vunpack.c.l.b16 %v3128
        %v5504 = vunpack.c.h.b16 %v3128
        %v5505 = vunpack.c.l.b16 %v3129
        %v5506 = vunpack.c.h.b16 %v3129
        %v5507 = vunpack.c.l.b16 %v3130
        %v5508 = vunpack.c.h.b16 %v3130
        %v5509 = vunpack.c.l.b16 %v3131
        %v5510 = vunpack.c.h.b16 %v3131
        %v5511 = vunpack.c.l.b16 %v3132
        %v5512 = vunpack.c.h.b16 %v3132
        %v5513 = vunpack.c.l.b16 %v3133
        %v5514 = vunpack.c.h.b16 %v3133
        %v5515 = vunpack.c.l.b16 %v3134
        %v5516 = vunpack.c.h.b16 %v3134
        %v5517 = vunpack.c.l.b16 %v3135
        %v5518 = vunpack.c.h.b16 %v3135
        %v5519 = vunpack.c.l.b16 %v3136
        %v5520 = vunpack.c.h.b16 %v3136
        %v5521 = vunpack.c.l.b16 %v3137
        %v5522 = vunpack.c.h.b16 %v3137
        %v5523 = vunpack.c.l.b16 %v3138
        %v5524 = vunpack.c.h.b16 %v3138
        %v5525 = vunpack.c.l.b16 %v3139
        %v5526 = vunpack.c.h.b16 %v3139
        %v5527 = vunpack.c.l.b16 %v3140
        %v5528 = vunpack.c.h.b16 %v3140
        %v5529 = vunpack.c.l.b16 %v3141
        %v5530 = vunpack.c.h.b16 %v3141
        %v5531 = vunpack.c.l.b16 %v3142
        %v5532 = vunpack.c.h.b16 %v3142
        %v5533 = vunpack.c.l.b16 %v3143
        %v5534 = vunpack.c.h.b16 %v3143
        %v5535 = vunpack.c.l.b16 %v3144
        %v5536 = vunpack.c.h.b16 %v3144
        %v5537 = vunpack.c.l.b16 %v3145
        %v5538 = vunpack.c.h.b16 %v3145
        %v5539 = vunpack.c.l.b16 %v3146
        %v5540 = vunpack.c.h.b16 %v3146
        %v5541 = vunpack.c.l.b16 %v3147
        %v5542 = vunpack.c.h.b16 %v3147
        %v5543 = vunpack.c.l.b16 %v3148
        %v5544 = vunpack.c.h.b16 %v3148
        %v5545 = vunpack.c.l.b16 %v3149
        %v5546 = vunpack.c.h.b16 %v3149
        %v5547 = vunpack.c.l.b16 %v3150
        %v5548 = vunpack.c.h.b16 %v3150
        %v5549 = vunpack.c.l.b16 %v3151
        %v5550 = vunpack.c.h.b16 %v3151
        %v5551 = vunpack.c.l.b16 %v3152
        %v5552 = vunpack.c.h.b16 %v3152
        %v5553 = vunpack.c.l.b16 %v3153
        %v5554 = vunpack.c.h.b16 %v3153
        %v5555 = vunpack.c.l.b16 %v3154
        %v5556 = vunpack.c.h.b16 %v3154
        %v5557 = vunpack.c.l.b16 %v3155
        %v5558 = vunpack.c.h.b16 %v3155
        %v5559 = vunpack.c.l.b16 %v3156
        %v5560 = vunpack.c.h.b16 %v3156
        %v5561 = vunpack.c.l.b16 %v3157
        %v5562 = vunpack.c.h.b16 %v3157
        %v5563 = vunpack.c.l.b16 %v3158
        %v5564 = vunpack.c.h.b16 %v3158
        %v5565 = vunpack.c.l.b16 %v3159
        %v5566 = vunpack.c.h.b16 %v3159
        %v5567 = vunpack.c.l.b16 %v3160
        %v5568 = vunpack.c.h.b16 %v3160
        %v5569 = vunpack.c.l.b16 %v3161
        %v5570 = vunpack.c.h.b16 %v3161
        %v5571 = vunpack.c.l.b16 %v3162
        %v5572 = vunpack.c.h.b16 %v3162
        %v5573 = vunpack.c.l.b16 %v3163
        %v5574 = vunpack.c.h.b16 %v3163
        %v5575 = vunpack.c.l.b16 %v3164
        %v5576 = vunpack.c.h.b16 %v3164
        %v5577 = vunpack.c.l.b16 %v3165
        %v5578 = vunpack.c.h.b16 %v3165
        %v5579 = vunpack.c.l.b16 %v3166
        %v5580 = vunpack.c.h.b16 %v3166
        %v5581 = vunpack.c.l.b16 %v3167
        %v5582 = vunpack.c.h.b16 %v3167
        %v5583 = vunpack.c.l.b16 %v3168
        %v5584 = vunpack.c.h.b16 %v3168
        %v5585 = vunpack.c.l.b16 %v3169
        %v5586 = vunpack.c.h.b16 %v3169
        %v5587 = vunpack.c.l.b16 %v3170
        %v5588 = vunpack.c.h.b16 %v3170
        %v5589 = vunpack.c.l.b16 %v3171
        %v5590 = vunpack.c.h.b16 %v3171
        %v5591 = vunpack.c.l.b16 %v3172
        %v5592 = vunpack.c.h.b16 %v3172
        %v5593 = vunpack.c.l.b16 %v3173
        %v5594 = vunpack.c.h.b16 %v3173
        %v5595 = vunpack.c.l.b16 %v3174
        %v5596 = vunpack.c.h.b16 %v3174
        %v5597 = vunpack.c.l.b16 %v3175
        %v5598 = vunpack.c.h.b16 %v3175
        %v5599 = vunpack.c.l.b16 %v3176
        %v5600 = vunpack.c.h.b16 %v3176
        %v5601 = vunpack.c.l.b16 %v3177
        %v5602 = vunpack.c.h.b16 %v3177
        %v5603 = vunpack.c.l.b16 %v3178
        %v5604 = vunpack.c.h.b16 %v3178
        %v5605 = vunpack.c.l.b16 %v3179
        %v5606 = vunpack.c.h.b16 %v3179
        %v5607 = vunpack.c.l.b16 %v3180
        %v5608 = vunpack.c.h.b16 %v3180
        %v5609 = vunpack.c.l.b16 %v3181
        %v5610 = vunpack.c.h.b16 %v3181
        %v5611 = vunpack.c.l.b16 %v3182
        %v5612 = vunpack.c.h.b16 %v3182
        %v5613 = vunpack.c.l.b16 %v3183
        %v5614 = vunpack.c.h.b16 %v3183
        %v5615 = vunpack.c.l.b16 %v3184
        %v5616 = vunpack.c.h.b16 %v3184
        %v5617 = vunpack.c.l.b16 %v3185
        %v5618 = vunpack.c.h.b16 %v3185
        %v5619 = vunpack.c.l.b16 %v3186
        %v5620 = vunpack.c.h.b16 %v3186
        %v5621 = vunpack.c.l.b16 %v3187
        %v5622 = vunpack.c.h.b16 %v3187
        %v5623 = vunpack.c.l.b16 %v3188
        %v5624 = vunpack.c.h.b16 %v3188
        %v5625 = vunpack.c.l.b16 %v3189
        %v5626 = vunpack.c.h.b16 %v3189
        %v5627 = vunpack.c.l.b16 %v3190
        %v5628 = vunpack.c.h.b16 %v3190
        %v5629 = vunpack.c.l.b16 %v3191
        %v5630 = vunpack.c.h.b16 %v3191
        %v5631 = vunpack.c.l.b16 %v3192
        %v5632 = vunpack.c.h.b16 %v3192
        %v5633 = vunpack.c.l.b16 %v3193
        %v5634 = vunpack.c.h.b16 %v3193
        %v5635 = vunpack.c.l.b16 %v3194
        %v5636 = vunpack.c.h.b16 %v3194
        %v5637 = vunpack.c.l.b16 %v3195
        %v5638 = vunpack.c.h.b16 %v3195
        %v5639 = vunpack.c.l.b16 %v3196
        %v5640 = vunpack.c.h.b16 %v3196
        %v5641 = vunpack.c.l.b16 %v3197
        %v5642 = vunpack.c.h.b16 %v3197
        %v5643 = vunpack.c.l.b16 %v3198
        %v5644 = vunpack.c.h.b16 %v3198
        %v5645 = vunpack.c.l.b16 %v3199
        %v5646 = vunpack.c.h.b16 %v3199
        %v5647 = vunpack.c.l.b16 %v3200
        %v5648 = vunpack.c.h.b16 %v3200
        %v5649 = vunpack.c.l.b16 %v3201
        %v5650 = vunpack.c.h.b16 %v3201
        %v5651 = vunpack.c.l.b16 %v3202
        %v5652 = vunpack.c.h.b16 %v3202
        %v5653 = vunpack.c.l.b16 %v3203
        %v5654 = vunpack.c.h.b16 %v3203
        %v5655 = vunpack.c.l.b16 %v3204
        %v5656 = vunpack.c.h.b16 %v3204
        %v5657 = vunpack.c.l.b16 %v3205
        %v5658 = vunpack.c.h.b16 %v3205
        %v5659 = vunpack.c.l.b16 %v3206
        %v5660 = vunpack.c.h.b16 %v3206
        %v5661 = vunpack.c.l.b16 %v3207
        %v5662 = vunpack.c.h.b16 %v3207
        %v5663 = vunpack.c.l.b16 %v3208
        %v5664 = vunpack.c.h.b16 %v3208
        %v5665 = vunpack.c.l.b16 %v3209
        %v5666 = vunpack.c.h.b16 %v3209
        %v5667 = vunpack.c.l.b16 %v3210
        %v5668 = vunpack.c.h.b16 %v3210
        %v5669 = vunpack.c.l.b16 %v3211
        %v5670 = vunpack.c.h.b16 %v3211
        %v5671 = vunpack.c.l.b16 %v3212
        %v5672 = vunpack.c.h.b16 %v3212
        %v5673 = vunpack.c.l.b16 %v3213
        %v5674 = vunpack.c.h.b16 %v3213
        %v5675 = vunpack.c.l.b16 %v3214
        %v5676 = vunpack.c.h.b16 %v3214
        %v5677 = vunpack.c.l.b16 %v3215
        %v5678 = vunpack.c.h.b16 %v3215
        %v5679 = vunpack.c.l.b16 %v3216
        %v5680 = vunpack.c.h.b16 %v3216
        %v5681 = vunpack.c.l.b16 %v3217
        %v5682 = vunpack.c.h.b16 %v3217
        %v5683 = vunpack.c.l.b16 %v3218
        %v5684 = vunpack.c.h.b16 %v3218
        %v5685 = vunpack.c.l.b16 %v3219
        %v5686 = vunpack.c.h.b16 %v3219
        %v5687 = vunpack.c.l.b16 %v3220
        %v5688 = vunpack.c.h.b16 %v3220
        %v5689 = vunpack.c.l.b16 %v3221
        %v5690 = vunpack.c.h.b16 %v3221
        %v5691 = vunpack.c.l.b16 %v3222
        %v5692 = vunpack.c.h.b16 %v3222
        %v5693 = vunpack.c.l.b16 %v3223
        %v5694 = vunpack.c.h.b16 %v3223
        %v5695 = vunpack.c.l.b16 %v3224
        %v5696 = vunpack.c.h.b16 %v3224
        %v5697 = vunpack.c.l.b16 %v3225
        %v5698 = vunpack.c.h.b16 %v3225
        %v5699 = vunpack.c.l.b16 %v3226
        %v5700 = vunpack.c.h.b16 %v3226
        %v5701 = vunpack.c.l.b16 %v3227
        %v5702 = vunpack.c.h.b16 %v3227
        %v5703 = vunpack.c.l.b16 %v3228
        %v5704 = vunpack.c.h.b16 %v3228
        %v5705 = vunpack.c.l.b16 %v3229
        %v5706 = vunpack.c.h.b16 %v3229
        %v5707 = vunpack.c.l.b16 %v3230
        %v5708 = vunpack.c.h.b16 %v3230
        %v5709 = vunpack.c.l.b16 %v3231
        %v5710 = vunpack.c.h.b16 %v3231
        %v5711 = vunpack.c.l.b16 %v3232
        %v5712 = vunpack.c.h.b16 %v3232
        %v5713 = vunpack.c.l.b16 %v3233
        %v5714 = vunpack.c.h.b16 %v3233
        %v5715 = vunpack.c.l.b16 %v3234
        %v5716 = vunpack.c.h.b16 %v3234
        %v5717 = vunpack.c.l.b16 %v3235
        %v5718 = vunpack.c.h.b16 %v3235
        %v5719 = vunpack.c.l.b16 %v3236
        %v5720 = vunpack.c.h.b16 %v3236
        %v5721 = vunpack.c.l.b16 %v3237
        %v5722 = vunpack.c.h.b16 %v3237
        %v5723 = vunpack.c.l.b16 %v3238
        %v5724 = vunpack.c.h.b16 %v3238
        %v5725 = vunpack.c.l.b16 %v3239
        %v5726 = vunpack.c.h.b16 %v3239
        %v5727 = vunpack.c.l.b16 %v3240
        %v5728 = vunpack.c.h.b16 %v3240
        %v5729 = vunpack.c.l.b16 %v3241
        %v5730 = vunpack.c.h.b16 %v3241
        %v5731 = vunpack.c.l.b16 %v3242
        %v5732 = vunpack.c.h.b16 %v3242
        %v5733 = vunpack.c.l.b16 %v3243
        %v5734 = vunpack.c.h.b16 %v3243
        %v5735 = vunpack.c.l.b16 %v3244
        %v5736 = vunpack.c.h.b16 %v3244
        %v5737 = vunpack.c.l.b16 %v3245
        %v5738 = vunpack.c.h.b16 %v3245
        %v5739 = vunpack.c.l.b16 %v3246
        %v5740 = vunpack.c.h.b16 %v3246
        %v5741 = vunpack.c.l.b16 %v3247
        %v5742 = vunpack.c.h.b16 %v3247
        %v5743 = vunpack.c.l.b16 %v3248
        %v5744 = vunpack.c.h.b16 %v3248
        %v5745 = vunpack.c.l.b16 %v3249
        %v5746 = vunpack.c.h.b16 %v3249
        %v5747 = vunpack.c.l.b16 %v3250
        %v5748 = vunpack.c.h.b16 %v3250
        %v5749 = vunpack.c.l.b16 %v3251
        %v5750 = vunpack.c.h.b16 %v3251
        %v5751 = vunpack.c.l.b16 %v3252
        %v5752 = vunpack.c.h.b16 %v3252
        %v5753 = vunpack.c.l.b16 %v3253
        %v5754 = vunpack.c.h.b16 %v3253
        %v5755 = vunpack.c.l.b16 %v3254
        %v5756 = vunpack.c.h.b16 %v3254
        %v5757 = vunpack.c.l.b16 %v3255
        %v5758 = vunpack.c.h.b16 %v3255
        %v5759 = vunpack.c.l.b16 %v3256
        %v5760 = vunpack.c.h.b16 %v3256
        %v5761 = vunpack.c.l.b16 %v3257
        %v5762 = vunpack.c.h.b16 %v3257
        %v5763 = vunpack.c.l.b16 %v3258
        %v5764 = vunpack.c.h.b16 %v3258
        %v5765 = vunpack.c.l.b16 %v3259
        %v5766 = vunpack.c.h.b16 %v3259
        %v5767 = vunpack.c.l.b16 %v3260
        %v5768 = vunpack.c.h.b16 %v3260
        %v5769 = vunpack.c.l.b16 %v3261
        %v5770 = vunpack.c.h.b16 %v3261
        %v5771 = vunpack.c.l.b16 %v3262
        %v5772 = vunpack.c.h.b16 %v3262
        %v5773 = vunpack.c.l.b16 %v3263
        %v5774 = vunpack.c.h.b16 %v3263
        %v5775 = vunpack.c.l.b16 %v3264
        %v5776 = vunpack.c.h.b16 %v3264
        %v5777 = vunpack.c.l.b16 %v3265
        %v5778 = vunpack.c.h.b16 %v3265
        %v5779 = vunpack.c.l.b16 %v3266
        %v5780 = vunpack.c.h.b16 %v3266
        %v5781 = vunpack.c.l.b16 %v3267
        %v5782 = vunpack.c.h.b16 %v3267
        %v5783 = vunpack.c.l.b16 %v3268
        %v5784 = vunpack.c.h.b16 %v3268
        %v5785 = vunpack.c.l.b16 %v3269
        %v5786 = vunpack.c.h.b16 %v3269
        %v5787 = vunpack.c.l.b16 %v3270
        %v5788 = vunpack.c.h.b16 %v3270
        %v5789 = vunpack.c.l.b16 %v3271
        %v5790 = vunpack.c.h.b16 %v3271
        %v5791 = vunpack.c.l.b16 %v3272
        %v5792 = vunpack.c.h.b16 %v3272
        %v5793 = vunpack.c.l.b16 %v3273
        %v5794 = vunpack.c.h.b16 %v3273
        %v5795 = vunpack.c.l.b16 %v3274
        %v5796 = vunpack.c.h.b16 %v3274
        %v5797 = vunpack.c.l.b16 %v3275
        %v5798 = vunpack.c.h.b16 %v3275
        %v5799 = vunpack.c.l.b16 %v3276
        %v5800 = vunpack.c.h.b16 %v3276
        %v5801 = vunpack.c.l.b16 %v3277
        %v5802 = vunpack.c.h.b16 %v3277
        %v5803 = vunpack.c.l.b16 %v3278
        %v5804 = vunpack.c.h.b16 %v3278
        %v5805 = vunpack.c.l.b16 %v3279
        %v5806 = vunpack.c.h.b16 %v3279
        %v5807 = vunpack.c.l.b16 %v3280
        %v5808 = vunpack.c.h.b16 %v3280
        %v5809 = vunpack.c.l.b16 %v3281
        %v5810 = vunpack.c.h.b16 %v3281
        %v5811 = vunpack.c.l.b16 %v3282
        %v5812 = vunpack.c.h.b16 %v3282
        %v5813 = vunpack.c.l.b16 %v3283
        %v5814 = vunpack.c.h.b16 %v3283
        %v5815 = vunpack.c.l.b16 %v3284
        %v5816 = vunpack.c.h.b16 %v3284
        %v5817 = vunpack.c.l.b16 %v3285
        %v5818 = vunpack.c.h.b16 %v3285
        %v5819 = vunpack.c.l.b16 %v3286
        %v5820 = vunpack.c.h.b16 %v3286
        %v5821 = vunpack.c.l.b16 %v3287
        %v5822 = vunpack.c.h.b16 %v3287
        %v5823 = vunpack.c.l.b16 %v3288
        %v5824 = vunpack.c.h.b16 %v3288
        %v5825 = vunpack.c.l.b16 %v3289
        %v5826 = vunpack.c.h.b16 %v3289
        %v5827 = vunpack.c.l.b16 %v3290
        %v5828 = vunpack.c.h.b16 %v3290
        %v5829 = vunpack.c.l.b16 %v3291
        %v5830 = vunpack.c.h.b16 %v3291
        %v5831 = vunpack.c.l.b16 %v3292
        %v5832 = vunpack.c.h.b16 %v3292
        %v5833 = vunpack.c.l.b16 %v3293
        %v5834 = vunpack.c.h.b16 %v3293
        %v5835 = vunpack.c.l.b16 %v3294
        %v5836 = vunpack.c.h.b16 %v3294
        %v5837 = vunpack.c.l.b16 %v3295
        %v5838 = vunpack.c.h.b16 %v3295
        %v5839 = vunpack.c.l.b16 %v3296
        %v5840 = vunpack.c.h.b16 %v3296
        %v5841 = vunpack.c.l.b16 %v3297
        %v5842 = vunpack.c.h.b16 %v3297
        %v5843 = vunpack.c.l.b16 %v3298
        %v5844 = vunpack.c.h.b16 %v3298
        %v5845 = vunpack.c.l.b16 %v3299
        %v5846 = vunpack.c.h.b16 %v3299
        %v5847 = vunpack.c.l.b16 %v3300
        %v5848 = vunpack.c.h.b16 %v3300
        %v5849 = vunpack.c.l.b16 %v3301
        %v5850 = vunpack.c.h.b16 %v3301
        %v5851 = vunpack.c.l.b16 %v3302
        %v5852 = vunpack.c.h.b16 %v3302
        %v5853 = vunpack.c.l.b16 %v3303
        %v5854 = vunpack.c.h.b16 %v3303
        %v5855 = vunpack.c.l.b16 %v3304
        %v5856 = vunpack.c.h.b16 %v3304
        %v5857 = vunpack.c.l.b16 %v3305
        %v5858 = vunpack.c.h.b16 %v3305
        %v5859 = vunpack.c.l.b16 %v3306
        %v5860 = vunpack.c.h.b16 %v3306
        %v5861 = vunpack.c.l.b16 %v3307
        %v5862 = vunpack.c.h.b16 %v3307
        %v5863 = vunpack.c.l.b16 %v3308
        %v5864 = vunpack.c.h.b16 %v3308
        %v5865 = vunpack.c.l.b16 %v3309
        %v5866 = vunpack.c.h.b16 %v3309
        %v5867 = vunpack.c.l.b16 %v3310
        %v5868 = vunpack.c.h.b16 %v3310
        %v5869 = vunpack.c.l.b16 %v3311
        %v5870 = vunpack.c.h.b16 %v3311
        %v5871 = vunpack.c.l.b16 %v3312
        %v5872 = vunpack.c.h.b16 %v3312
        %v5873 = vunpack.c.l.b16 %v3313
        %v5874 = vunpack.c.h.b16 %v3313
        %v5875 = vunpack.c.l.b16 %v3314
        %v5876 = vunpack.c.h.b16 %v3314
        %v5877 = vunpack.c.l.b16 %v3315
        %v5878 = vunpack.c.h.b16 %v3315
        %v5879 = vunpack.c.l.b16 %v3316
        %v5880 = vunpack.c.h.b16 %v3316
        %v5881 = vunpack.c.l.b16 %v3317
        %v5882 = vunpack.c.h.b16 %v3317
        %v5883 = vunpack.c.l.b16 %v3318
        %v5884 = vunpack.c.h.b16 %v3318
        %v5885 = vunpack.c.l.b16 %v3319
        %v5886 = vunpack.c.h.b16 %v3319
        %v5887 = vunpack.c.l.b16 %v3320
        %v5888 = vunpack.c.h.b16 %v3320
        %v5889 = vunpack.c.l.b16 %v3321
        %v5890 = vunpack.c.h.b16 %v3321
        %v5891 = vunpack.c.l.b16 %v3322
        %v5892 = vunpack.c.h.b16 %v3322
        %v5893 = vunpack.c.l.b16 %v3323
        %v5894 = vunpack.c.h.b16 %v3323
        %v5895 = vunpack.c.l.b16 %v3324
        %v5896 = vunpack.c.h.b16 %v3324
        %v5897 = vunpack.c.l.b16 %v3325
        %v5898 = vunpack.c.h.b16 %v3325
        %v5899 = vunpack.c.l.b16 %v3326
        %v5900 = vunpack.c.h.b16 %v3326
        %v5901 = vunpack.c.l.b16 %v3327
        %v5902 = vunpack.c.h.b16 %v3327
        %v5903 = vunpack.c.l.b16 %v3328
        %v5904 = vunpack.c.h.b16 %v3328
        %v5905 = vunpack.c.l.b16 %v3329
        %v5906 = vunpack.c.h.b16 %v3329
        %v5907 = vunpack.c.l.b16 %v3330
        %v5908 = vunpack.c.h.b16 %v3330
        %v5909 = vunpack.c.l.b16 %v3331
        %v5910 = vunpack.c.h.b16 %v3331
        %v5911 = vunpack.c.l.b16 %v3332
        %v5912 = vunpack.c.h.b16 %v3332
        %v5913 = vunpack.c.l.b16 %v3333
        %v5914 = vunpack.c.h.b16 %v3333
        %v5915 = vunpack.c.l.b16 %v3334
        %v5916 = vunpack.c.h.b16 %v3334
        %v5917 = vunpack.c.l.b16 %v3335
        %v5918 = vunpack.c.h.b16 %v3335
        %v5919 = vunpack.c.l.b16 %v3336
        %v5920 = vunpack.c.h.b16 %v3336
        %v5921 = vunpack.c.l.b16 %v3337
        %v5922 = vunpack.c.h.b16 %v3337
        %v5923 = vunpack.c.l.b16 %v3338
        %v5924 = vunpack.c.h.b16 %v3338
        %v5925 = vunpack.c.l.b16 %v3339
        %v5926 = vunpack.c.h.b16 %v3339
        %v5927 = vunpack.c.l.b16 %v3340
        %v5928 = vunpack.c.h.b16 %v3340
        %v5929 = vunpack.c.l.b16 %v3341
        %v5930 = vunpack.c.h.b16 %v3341
        %v5931 = vunpack.c.l.b16 %v3342
        %v5932 = vunpack.c.h.b16 %v3342
        %v5933 = vunpack.c.l.b16 %v3343
        %v5934 = vunpack.c.h.b16 %v3343
        %v5935 = vunpack.c.l.b16 %v3344
        %v5936 = vunpack.c.h.b16 %v3344
        %v5937 = vunpack.c.l.b16 %v3345
        %v5938 = vunpack.c.h.b16 %v3345
        %v5939 = vunpack.c.l.b16 %v3346
        %v5940 = vunpack.c.h.b16 %v3346
        %v5941 = vunpack.c.l.b16 %v3347
        %v5942 = vunpack.c.h.b16 %v3347
        %v5943 = vunpack.c.l.b16 %v3348
        %v5944 = vunpack.c.h.b16 %v3348
        %v5945 = vunpack.c.l.b16 %v3349
        %v5946 = vunpack.c.h.b16 %v3349
        %v5947 = vunpack.c.l.b16 %v3350
        %v5948 = vunpack.c.h.b16 %v3350
        %v5949 = vunpack.c.l.b16 %v3351
        %v5950 = vunpack.c.h.b16 %v3351
        %v5951 = vunpack.c.l.b16 %v3352
        %v5952 = vunpack.c.h.b16 %v3352
        %v5953 = vunpack.c.l.b16 %v3353
        %v5954 = vunpack.c.h.b16 %v3353
        %v5955 = vunpack.c.l.b16 %v3354
        %v5956 = vunpack.c.h.b16 %v3354
        %v5957 = vunpack.c.l.b16 %v3355
        %v5958 = vunpack.c.h.b16 %v3355
        %v5959 = vunpack.c.l.b16 %v3356
        %v5960 = vunpack.c.h.b16 %v3356
        %v5961 = vunpack.c.l.b16 %v3357
        %v5962 = vunpack.c.h.b16 %v3357
        %v5963 = vunpack.c.l.b16 %v3358
        %v5964 = vunpack.c.h.b16 %v3358
        %v5965 = vunpack.c.l.b16 %v3359
        %v5966 = vunpack.c.h.b16 %v3359
        %v5967 = vunpack.c.l.b16 %v3360
        %v5968 = vunpack.c.h.b16 %v3360
        %v5969 = vunpack.c.l.b16 %v3361
        %v5970 = vunpack.c.h.b16 %v3361
        %v5971 = vunpack.c.l.b16 %v3362
        %v5972 = vunpack.c.h.b16 %v3362
        %v5973 = vunpack.c.l.b16 %v3363
        %v5974 = vunpack.c.h.b16 %v3363
        %v5975 = vunpack.c.l.b16 %v3364
        %v5976 = vunpack.c.h.b16 %v3364
        %v5977 = vunpack.c.l.b16 %v3365
        %v5978 = vunpack.c.h.b16 %v3365
        %v5979 = vunpack.c.l.b16 %v3366
        %v5980 = vunpack.c.h.b16 %v3366
        %v5981 = vunpack.c.l.b16 %v3367
        %v5982 = vunpack.c.h.b16 %v3367
        %v5983 = vunpack.c.l.b16 %v3368
        %v5984 = vunpack.c.h.b16 %v3368
        %v5985 = vunpack.c.l.b16 %v3369
        %v5986 = vunpack.c.h.b16 %v3369
        %v5987 = vunpack.c.l.b16 %v3370
        %v5988 = vunpack.c.h.b16 %v3370
        %v5989 = vunpack.c.l.b16 %v3371
        %v5990 = vunpack.c.h.b16 %v3371
        %v5991 = vunpack.c.l.b16 %v3372
        %v5992 = vunpack.c.h.b16 %v3372
        %v5993 = vunpack.c.l.b16 %v3373
        %v5994 = vunpack.c.h.b16 %v3373
        %v5995 = vunpack.c.l.b16 %v3374
        %v5996 = vunpack.c.h.b16 %v3374
        %v5997 = vunpack.c.l.b16 %v3375
        %v5998 = vunpack.c.h.b16 %v3375
        %v5999 = vunpack.c.l.b16 %v3376
        %v6000 = vunpack.c.h.b16 %v3376
        %v6001 = vunpack.c.l.b16 %v3377
        %v6002 = vunpack.c.h.b16 %v3377
        %v6003 = vunpack.c.l.b16 %v3378
        %v6004 = vunpack.c.h.b16 %v3378
        %v6005 = vunpack.c.l.b16 %v3379
        %v6006 = vunpack.c.h.b16 %v3379
        %v6007 = vunpack.c.l.b16 %v3380
        %v6008 = vunpack.c.h.b16 %v3380
        %v6009 = vunpack.c.l.b16 %v3381
        %v6010 = vunpack.c.h.b16 %v3381
        %v6011 = vunpack.c.l.b16 %v3382
        %v6012 = vunpack.c.h.b16 %v3382
        %v6013 = vunpack.c.l.b16 %v3383
        %v6014 = vunpack.c.h.b16 %v3383
        %v6015 = vunpack.c.l.b16 %v3384
        %v6016 = vunpack.c.h.b16 %v3384
        %v6017 = vunpack.c.l.b16 %v3385
        %v6018 = vunpack.c.h.b16 %v3385
        %v6019 = vunpack.c.l.b16 %v3386
        %v6020 = vunpack.c.h.b16 %v3386
        %v6021 = vunpack.c.l.b16 %v3387
        %v6022 = vunpack.c.h.b16 %v3387
        %v6023 = vunpack.c.l.b16 %v3388
        %v6024 = vunpack.c.h.b16 %v3388
        %v6025 = vunpack.c.l.b16 %v3389
        %v6026 = vunpack.c.h.b16 %v3389
        %v6027 = vunpack.c.l.b16 %v3390
        %v6028 = vunpack.c.h.b16 %v3390
        %v6029 = vunpack.c.l.b16 %v3391
        %v6030 = vunpack.c.h.b16 %v3391
        %v6031 = vunpack.c.l.b16 %v3392
        %v6032 = vunpack.c.h.b16 %v3392
        %v6033 = vunpack.c.l.b16 %v3393
        %v6034 = vunpack.c.h.b16 %v3393
        %v6035 = vunpack.c.l.b16 %v3394
        %v6036 = vunpack.c.h.b16 %v3394
        %v6037 = vunpack.c.l.b16 %v3395
        %v6038 = vunpack.c.h.b16 %v3395
        %v6039 = vunpack.c.l.b16 %v3396
        %v6040 = vunpack.c.h.b16 %v3396
        %v6041 = vunpack.c.l.b16 %v3397
        %v6042 = vunpack.c.h.b16 %v3397
        %v6043 = vunpack.c.l.b16 %v3398
        %v6044 = vunpack.c.h.b16 %v3398
        %v6045 = vunpack.c.l.b16 %v3399
        %v6046 = vunpack.c.h.b16 %v3399
        %v6047 = vunpack.c.l.b16 %v3400
        %v6048 = vunpack.c.h.b16 %v3400
        %v6049 = vunpack.c.l.b16 %v3401
        %v6050 = vunpack.c.h.b16 %v3401
        %v6051 = vunpack.c.l.b16 %v3402
        %v6052 = vunpack.c.h.b16 %v3402
        %v6053 = vunpack.c.l.b16 %v3403
        %v6054 = vunpack.c.h.b16 %v3403
        %v6055 = vunpack.c.l.b16 %v3404
        %v6056 = vunpack.c.h.b16 %v3404
        %v6057 = vunpack.c.l.b16 %v3405
        %v6058 = vunpack.c.h.b16 %v3405
        %v6059 = vunpack.c.l.b16 %v3406
        %v6060 = vunpack.c.h.b16 %v3406
        %v6061 = vunpack.c.l.b16 %v3407
        %v6062 = vunpack.c.h.b16 %v3407
        %v6063 = vunpack.c.l.b16 %v3408
        %v6064 = vunpack.c.h.b16 %v3408
        %v6065 = vunpack.c.l.b16 %v3409
        %v6066 = vunpack.c.h.b16 %v3409
        %v6067 = vunpack.c.l.b16 %v3410
        %v6068 = vunpack.c.h.b16 %v3410
        %v6069 = vunpack.c.l.b16 %v3411
        %v6070 = vunpack.c.h.b16 %v3411
        %v6071 = vunpack.c.l.b16 %v3412
        %v6072 = vunpack.c.h.b16 %v3412
        %v6073 = vunpack.c.l.b16 %v3413
        %v6074 = vunpack.c.h.b16 %v3413
        %v6075 = vunpack.c.l.b16 %v3414
        %v6076 = vunpack.c.h.b16 %v3414
        %v6077 = vunpack.c.l.b16 %v3415
        %v6078 = vunpack.c.h.b16 %v3415
        %v6079 = vunpack.c.l.b16 %v3416
        %v6080 = vunpack.c.h.b16 %v3416
        %v6081 = vunpack.c.l.b16 %v3417
        %v6082 = vunpack.c.h.b16 %v3417
        %v6083 = vunpack.c.l.b16 %v3418
        %v6084 = vunpack.c.h.b16 %v3418
        %v6085 = vunpack.c.l.b16 %v3419
        %v6086 = vunpack.c.h.b16 %v3419
        %v6087 = vunpack.c.l.b16 %v3420
        %v6088 = vunpack.c.h.b16 %v3420
        %v6089 = vunpack.c.l.b16 %v3421
        %v6090 = vunpack.c.h.b16 %v3421
        %v6091 = vunpack.c.l.b16 %v3422
        %v6092 = vunpack.c.h.b16 %v3422
        %v6093 = vunpack.c.l.b16 %v3423
        %v6094 = vunpack.c.h.b16 %v3423
        %v6095 = vunpack.c.l.b16 %v3424
        %v6096 = vunpack.c.h.b16 %v3424
        %v6097 = vunpack.c.l.b16 %v3425
        %v6098 = vunpack.c.h.b16 %v3425
        %v6099 = vunpack.c.l.b16 %v3426
        %v6100 = vunpack.c.h.b16 %v3426
        %v6101 = vunpack.c.l.b16 %v3427
        %v6102 = vunpack.c.h.b16 %v3427
        %v6103 = vunpack.c.l.b16 %v3428
        %v6104 = vunpack.c.h.b16 %v3428
        %v6105 = vunpack.c.l.b16 %v3429
        %v6106 = vunpack.c.h.b16 %v3429
        %v6107 = vunpack.c.l.b16 %v3430
        %v6108 = vunpack.c.h.b16 %v3430
        %v6109 = vunpack.c.l.b16 %v3431
        %v6110 = vunpack.c.h.b16 %v3431
        %v6111 = vunpack.c.l.b16 %v3432
        %v6112 = vunpack.c.h.b16 %v3432
        %v6113 = vunpack.c.l.b16 %v3433
        %v6114 = vunpack.c.h.b16 %v3433
        %v6115 = vunpack.c.l.b16 %v3434
        %v6116 = vunpack.c.h.b16 %v3434
        %v6117 = vunpack.c.l.b16 %v3435
        %v6118 = vunpack.c.h.b16 %v3435
        %v6119 = vunpack.c.l.b16 %v3436
        %v6120 = vunpack.c.h.b16 %v3436
        %v6121 = vunpack.c.l.b16 %v3437
        %v6122 = vunpack.c.h.b16 %v3437
        %v6123 = vunpack.c.l.b16 %v3438
        %v6124 = vunpack.c.h.b16 %v3438
        %v6125 = vunpack.c.l.b16 %v3439
        %v6126 = vunpack.c.h.b16 %v3439
        %v6127 = vunpack.c.l.b16 %v3440
        %v6128 = vunpack.c.h.b16 %v3440
        %v6129 = vunpack.c.l.b16 %v3441
        %v6130 = vunpack.c.h.b16 %v3441
        %v6131 = vunpack.c.l.b16 %v3442
        %v6132 = vunpack.c.h.b16 %v3442
        %v6133 = vunpack.c.l.b16 %v3443
        %v6134 = vunpack.c.h.b16 %v3443
        %v6135 = vunpack.c.l.b16 %v3444
        %v6136 = vunpack.c.h.b16 %v3444
        %v6137 = vunpack.c.l.b16 %v3445
        %v6138 = vunpack.c.h.b16 %v3445
        %v6139 = vunpack.c.l.b16 %v3446
        %v6140 = vunpack.c.h.b16 %v3446
        %v6141 = vunpack.c.l.b16 %v3447
        %v6142 = vunpack.c.h.b16 %v3447
        %v6143 = vunpack.c.l.b16 %v3448
        %v6144 = vunpack.c.h.b16 %v3448
        %v6145 = vunpack.c.l.b16 %v3449
        %v6146 = vunpack.c.h.b16 %v3449
        %v6147 = vunpack.c.l.b16 %v3450
        %v6148 = vunpack.c.h.b16 %v3450
        %v6149 = vunpack.c.l.b16 %v3451
        %v6150 = vunpack.c.h.b16 %v3451
        %v6151 = vunpack.c.l.b16 %v3452
        %v6152 = vunpack.c.h.b16 %v3452
        %v6153 = vunpack.c.l.b16 %v3453
        %v6154 = vunpack.c.h.b16 %v3453
        %v6155 = vunpack.c.l.b16 %v3454
        %v6156 = vunpack.c.h.b16 %v3454
        %v6157 = vunpack.c.l.b16 %v3455
        %v6158 = vunpack.c.h.b16 %v3455
        %v6159 = vunpack.c.l.b16 %v3456
        %v6160 = vunpack.c.h.b16 %v3456
        %v6161 = vunpack.c.l.b16 %v3457
        %v6162 = vunpack.c.h.b16 %v3457
        %v6163 = vunpack.c.l.b16 %v3458
        %v6164 = vunpack.c.h.b16 %v3458
        %v6165 = vunpack.c.l.b16 %v3459
        %v6166 = vunpack.c.h.b16 %v3459
        %v6167 = vunpack.c.l.b16 %v3460
        %v6168 = vunpack.c.h.b16 %v3460
        %v6169 = vunpack.c.l.b16 %v3461
        %v6170 = vunpack.c.h.b16 %v3461
        %v6171 = vunpack.c.l.b16 %v3462
        %v6172 = vunpack.c.h.b16 %v3462
        %v6173 = vunpack.c.l.b16 %v3463
        %v6174 = vunpack.c.h.b16 %v3463
        %v6175 = vunpack.c.l.b16 %v3464
        %v6176 = vunpack.c.h.b16 %v3464
        %v6177 = vunpack.c.l.b16 %v3465
        %v6178 = vunpack.c.h.b16 %v3465
        %v6179 = vunpack.c.l.b16 %v3466
        %v6180 = vunpack.c.h.b16 %v3466
        %v6181 = vunpack.c.l.b16 %v3467
        %v6182 = vunpack.c.h.b16 %v3467
        %v6183 = vunpack.c.l.b16 %v3468
        %v6184 = vunpack.c.h.b16 %v3468
        %v6185 = vunpack.c.l.b16 %v3469
        %v6186 = vunpack.c.h.b16 %v3469
        %v6187 = vunpack.c.l.b16 %v3470
        %v6188 = vunpack.c.h.b16 %v3470
        %v6189 = vunpack.c.l.b16 %v3471
        %v6190 = vunpack.c.h.b16 %v3471
        %v6191 = vunpack.c.l.b16 %v3472
        %v6192 = vunpack.c.h.b16 %v3472
        %v6193 = vunpack.c.l.b16 %v3473
        %v6194 = vunpack.c.h.b16 %v3473
        %v6195 = vunpack.c.l.b16 %v3474
        %v6196 = vunpack.c.h.b16 %v3474
        %v6197 = vunpack.c.l.b16 %v3475
        %v6198 = vunpack.c.h.b16 %v3475
        %v6199 = vunpack.c.l.b16 %v3476
        %v6200 = vunpack.c.h.b16 %v3476
        %v6201 = vunpack.c.l.b16 %v3477
        %v6202 = vunpack.c.h.b16 %v3477
        %v6203 = vunpack.c.l.b16 %v3478
        %v6204 = vunpack.c.h.b16 %v3478
        %v6205 = vunpack.c.l.b16 %v3479
        %v6206 = vunpack.c.h.b16 %v3479
        %v6207 = vunpack.c.l.b16 %v3480
        %v6208 = vunpack.c.h.b16 %v3480
        %v6209 = vunpack.c.l.b16 %v3481
        %v6210 = vunpack.c.h.b16 %v3481
        %v6211 = vunpack.c.l.b16 %v3482
        %v6212 = vunpack.c.h.b16 %v3482
        %v6213 = vunpack.c.l.b16 %v3483
        %v6214 = vunpack.c.h.b16 %v3483
        %v6215 = vunpack.c.l.b16 %v3484
        %v6216 = vunpack.c.h.b16 %v3484
        %v6217 = vunpack.c.l.b16 %v3485
        %v6218 = vunpack.c.h.b16 %v3485
        %v6219 = vunpack.c.l.b16 %v3486
        %v6220 = vunpack.c.h.b16 %v3486
        %v6221 = vunpack.c.l.b16 %v3487
        %v6222 = vunpack.c.h.b16 %v3487
        %v6223 = vunpack.c.l.b16 %v3488
        %v6224 = vunpack.c.h.b16 %v3488
        %v6225 = vunpack.c.l.b16 %v3489
        %v6226 = vunpack.c.h.b16 %v3489
        %v6227 = vunpack.c.l.b16 %v3490
        %v6228 = vunpack.c.h.b16 %v3490
        %v6229 = vunpack.c.l.b16 %v3491
        %v6230 = vunpack.c.h.b16 %v3491
        %v6231 = vunpack.c.l.b16 %v3492
        %v6232 = vunpack.c.h.b16 %v3492
        %v6233 = vunpack.c.l.b16 %v3493
        %v6234 = vunpack.c.h.b16 %v3493
        %v6235 = vunpack.c.l.b16 %v3494
        %v6236 = vunpack.c.h.b16 %v3494
        %v6237 = vunpack.c.l.b16 %v3495
        %v6238 = vunpack.c.h.b16 %v3495
        %v6239 = vunpack.c.l.b16 %v3496
        %v6240 = vunpack.c.h.b16 %v3496
        %v6241 = vunpack.c.l.b16 %v3497
        %v6242 = vunpack.c.h.b16 %v3497
        %v6243 = vunpack.c.l.b16 %v3498
        %v6244 = vunpack.c.h.b16 %v3498
        %v6245 = vunpack.c.l.b16 %v3499
        %v6246 = vunpack.c.h.b16 %v3499
        %v6247 = vunpack.c.l.b16 %v3500
        %v6248 = vunpack.c.h.b16 %v3500
        %v6249 = vunpack.c.l.b16 %v3501
        %v6250 = vunpack.c.h.b16 %v3501
        %v6251 = vunpack.c.l.b16 %v3502
        %v6252 = vunpack.c.h.b16 %v3502
        %v6253 = vunpack.c.l.b16 %v3503
        %v6254 = vunpack.c.h.b16 %v3503
        %v6255 = vunpack.c.l.b16 %v3504
        %v6256 = vunpack.c.h.b16 %v3504
        %v6257 = vunpack.c.l.b16 %v3505
        %v6258 = vunpack.c.h.b16 %v3505
        %v6259 = vunpack.c.l.b16 %v3506
        %v6260 = vunpack.c.h.b16 %v3506
        %v6261 = vunpack.c.l.b16 %v3507
        %v6262 = vunpack.c.h.b16 %v3507
        %v6263 = vunpack.c.l.b16 %v3508
        %v6264 = vunpack.c.h.b16 %v3508
        %v6265 = vunpack.c.l.b16 %v3509
        %v6266 = vunpack.c.h.b16 %v3509
        %v6267 = vunpack.c.l.b16 %v3510
        %v6268 = vunpack.c.h.b16 %v3510
        %v6269 = vunpack.c.l.b16 %v3511
        %v6270 = vunpack.c.h.b16 %v3511
        %v6271 = vunpack.c.l.b16 %v3512
        %v6272 = vunpack.c.h.b16 %v3512
        %v6273 = vunpack.c.l.b16 %v3513
        %v6274 = vunpack.c.h.b16 %v3513
        %v6275 = vunpack.c.l.b16 %v3514
        %v6276 = vunpack.c.h.b16 %v3514
        %v6277 = vunpack.c.l.b16 %v3515
        %v6278 = vunpack.c.h.b16 %v3515
        %v6279 = vunpack.c.l.b16 %v3516
        %v6280 = vunpack.c.h.b16 %v3516
        %v6281 = vunpack.c.l.b16 %v3517
        %v6282 = vunpack.c.h.b16 %v3517
        %v6283 = vunpack.c.l.b16 %v3518
        %v6284 = vunpack.c.h.b16 %v3518
        %v6285 = vunpack.c.l.b16 %v3519
        %v6286 = vunpack.c.h.b16 %v3519
        %v6287 = vunpack.c.l.b16 %v3520
        %v6288 = vunpack.c.h.b16 %v3520
        %v6289 = vunpack.c.l.b16 %v3521
        %v6290 = vunpack.c.h.b16 %v3521
        %v6291 = vunpack.c.l.b16 %v3522
        %v6292 = vunpack.c.h.b16 %v3522
        %v6293 = vunpack.c.l.b16 %v3523
        %v6294 = vunpack.c.h.b16 %v3523
        %v6295 = vunpack.c.l.b16 %v3524
        %v6296 = vunpack.c.h.b16 %v3524
        %v6297 = vunpack.c.l.b16 %v3525
        %v6298 = vunpack.c.h.b16 %v3525
        %v6299 = vunpack.c.l.b16 %v3526
        %v6300 = vunpack.c.h.b16 %v3526
        %v6301 = vunpack.c.l.b16 %v3527
        %v6302 = vunpack.c.h.b16 %v3527
        %v6303 = vunpack.c.l.b16 %v3528
        %v6304 = vunpack.c.h.b16 %v3528
        %v6305 = vunpack.c.l.b16 %v3529
        %v6306 = vunpack.c.h.b16 %v3529
        %v6307 = vunpack.c.l.b16 %v3530
        %v6308 = vunpack.c.h.b16 %v3530
        %v6309 = vunpack.c.l.b16 %v3531
        %v6310 = vunpack.c.h.b16 %v3531
        %v6311 = vunpack.c.l.b16 %v3532
        %v6312 = vunpack.c.h.b16 %v3532
        %v6313 = vunpack.c.l.b16 %v3533
        %v6314 = vunpack.c.h.b16 %v3533
        %v6315 = vunpack.c.l.b16 %v3534
        %v6316 = vunpack.c.h.b16 %v3534
        %v6317 = vunpack.c.l.b16 %v3535
        %v6318 = vunpack.c.h.b16 %v3535
        %v6319 = vunpack.c.l.b16 %v3536
        %v6320 = vunpack.c.h.b16 %v3536
        %v6321 = vunpack.c.l.b16 %v3537
        %v6322 = vunpack.c.h.b16 %v3537
        %v6323 = vunpack.c.l.b16 %v3538
        %v6324 = vunpack.c.h.b16 %v3538
        %v6325 = vunpack.c.l.b16 %v3539
        %v6326 = vunpack.c.h.b16 %v3539
        %v6327 = vunpack.c.l.b16 %v3540
        %v6328 = vunpack.c.h.b16 %v3540
        %v6329 = vunpack.c.l.b16 %v3541
        %v6330 = vunpack.c.h.b16 %v3541
        %v6331 = vunpack.c.l.b16 %v3542
        %v6332 = vunpack.c.h.b16 %v3542
        %v6333 = vunpack.c.l.b16 %v3543
        %v6334 = vunpack.c.h.b16 %v3543
        %v6335 = vunpack.c.l.b16 %v3544
        %v6336 = vunpack.c.h.b16 %v3544
        %v6337 = vunpack.c.l.b16 %v3545
        %v6338 = vunpack.c.h.b16 %v3545
        %v6339 = vunpack.c.l.b16 %v3546
        %v6340 = vunpack.c.h.b16 %v3546
        %v6341 = vunpack.c.l.b16 %v3547
        %v6342 = vunpack.c.h.b16 %v3547
        %v6343 = vunpack.c.l.b16 %v3548
        %v6344 = vunpack.c.h.b16 %v3548
        %v6345 = vunpack.c.l.b16 %v3549
        %v6346 = vunpack.c.h.b16 %v3549
        %v6347 = vunpack.c.l.b16 %v3550
        %v6348 = vunpack.c.h.b16 %v3550
        %v6349 = vunpack.c.l.b16 %v3551
        %v6350 = vunpack.c.h.b16 %v3551
        %v6351 = vunpack.c.l.b16 %v3552
        %v6352 = vunpack.c.h.b16 %v3552
        %v6353 = vunpack.c.l.b16 %v3553
        %v6354 = vunpack.c.h.b16 %v3553
        %v6355 = vunpack.c.l.b16 %v3554
        %v6356 = vunpack.c.h.b16 %v3554
        %v6357 = vunpack.c.l.b16 %v3555
        %v6358 = vunpack.c.h.b16 %v3555
        %v6359 = vunpack.c.l.b16 %v3556
        %v6360 = vunpack.c.h.b16 %v3556
        %v6361 = vunpack.c.l.b16 %v3557
        %v6362 = vunpack.c.h.b16 %v3557
        %v6363 = vunpack.c.l.b16 %v3558
        %v6364 = vunpack.c.h.b16 %v3558
        %v6365 = vunpack.c.l.b16 %v3559
        %v6366 = vunpack.c.h.b16 %v3559
        %v6367 = vunpack.c.l.b16 %v3560
        %v6368 = vunpack.c.h.b16 %v3560
        %v6369 = vunpack.c.l.b16 %v3561
        %v6370 = vunpack.c.h.b16 %v3561
        %v6371 = vunpack.c.l.b16 %v3562
        %v6372 = vunpack.c.h.b16 %v3562
        %v6373 = vunpack.c.l.b16 %v3563
        %v6374 = vunpack.c.h.b16 %v3563
        %v6375 = vunpack.c.l.b16 %v3564
        %v6376 = vunpack.c.h.b16 %v3564
        %v6377 = vunpack.c.l.b16 %v3565
        %v6378 = vunpack.c.h.b16 %v3565
        %v6379 = vunpack.c.l.b16 %v3566
        %v6380 = vunpack.c.h.b16 %v3566
        %v6381 = vunpack.c.l.b16 %v3567
        %v6382 = vunpack.c.h.b16 %v3567
        %v6383 = vunpack.c.l.b16 %v3568
        %v6384 = vunpack.c.h.b16 %v3568
        %v6385 = vunpack.c.l.b16 %v3569
        %v6386 = vunpack.c.h.b16 %v3569
        %v6387 = vunpack.c.l.b16 %v3570
        %v6388 = vunpack.c.h.b16 %v3570
        %v6389 = vunpack.c.l.b16 %v3571
        %v6390 = vunpack.c.h.b16 %v3571
        %v6391 = vunpack.c.l.b16 %v3572
        %v6392 = vunpack.c.h.b16 %v3572
        %v6393 = vunpack.c.l.b16 %v3573
        %v6394 = vunpack.c.h.b16 %v3573
        %v6395 = vunpack.c.l.b16 %v3574
        %v6396 = vunpack.c.h.b16 %v3574
        %v6397 = vunpack.c.l.b16 %v3575
        %v6398 = vunpack.c.h.b16 %v3575
        %v6399 = vunpack.c.l.b16 %v3576
        %v6400 = vunpack.c.h.b16 %v3576
        %v6401 = vunpack.c.l.b16 %v3577
        %v6402 = vunpack.c.h.b16 %v3577
        %v6403 = vunpack.c.l.b16 %v3578
        %v6404 = vunpack.c.h.b16 %v3578
        %v6405 = vunpack.c.l.b16 %v3579
        %v6406 = vunpack.c.h.b16 %v3579
        %v6407 = vunpack.c.l.b16 %v3580
        %v6408 = vunpack.c.h.b16 %v3580
        %v6409 = vunpack.c.l.b16 %v3581
        %v6410 = vunpack.c.h.b16 %v3581
        %v6411 = vunpack.c.l.b16 %v3582
        %v6412 = vunpack.c.h.b16 %v3582
        %v6413 = vunpack.c.l.b16 %v3583
        %v6414 = vunpack.c.h.b16 %v3583
        %v6415 = vunpack.c.l.b16 %v3584
        %v6416 = vunpack.c.h.b16 %v3584
        %v6417 = vunpack.c.l.b16 %v3585
        %v6418 = vunpack.c.h.b16 %v3585
        %v6419 = vunpack.c.l.b16 %v3586
        %v6420 = vunpack.c.h.b16 %v3586
        %v6421 = vunpack.c.l.b16 %v3587
        %v6422 = vunpack.c.h.b16 %v3587
        %v6423 = vunpack.c.l.b16 %v3588
        %v6424 = vunpack.c.h.b16 %v3588
        %v6425 = vunpack.c.l.b16 %v3589
        %v6426 = vunpack.c.h.b16 %v3589
        %v6427 = vunpack.c.l.b16 %v3590
        %v6428 = vunpack.c.h.b16 %v3590
        %v6429 = vunpack.c.l.b16 %v3591
        %v6430 = vunpack.c.h.b16 %v3591
        %v6431 = vunpack.c.l.b16 %v3592
        %v6432 = vunpack.c.h.b16 %v3592
        %v6433 = vunpack.c.l.b16 %v3593
        %v6434 = vunpack.c.h.b16 %v3593
        %v6435 = vunpack.c.l.b16 %v3594
        %v6436 = vunpack.c.h.b16 %v3594
        %v6437 = vunpack.c.l.b16 %v3595
        %v6438 = vunpack.c.h.b16 %v3595
        %v6439 = vunpack.c.l.b16 %v3596
        %v6440 = vunpack.c.h.b16 %v3596
        %v6441 = vunpack.c.l.b16 %v3597
        %v6442 = vunpack.c.h.b16 %v3597
        %v6443 = vunpack.c.l.b16 %v3598
        %v6444 = vunpack.c.h.b16 %v3598
        %v6445 = vunpack.c.l.b16 %v3599
        %v6446 = vunpack.c.h.b16 %v3599
        %v6447 = vunpack.c.l.b16 %v3600
        %v6448 = vunpack.c.h.b16 %v3600
        %v6449 = vunpack.c.l.b16 %v3601
        %v6450 = vunpack.c.h.b16 %v3601
        %v6451 = vunpack.c.l.b16 %v3602
        %v6452 = vunpack.c.h.b16 %v3602
        %v6453 = vunpack.c.l.b16 %v3603
        %v6454 = vunpack.c.h.b16 %v3603
        %v6455 = vunpack.c.l.b16 %v3604
        %v6456 = vunpack.c.h.b16 %v3604
        %v6457 = vunpack.c.l.b16 %v3605
        %v6458 = vunpack.c.h.b16 %v3605
        %v6459 = vunpack.c.l.b16 %v3606
        %v6460 = vunpack.c.h.b16 %v3606
        %v6461 = vunpack.c.l.b16 %v3607
        %v6462 = vunpack.c.h.b16 %v3607
        %v6463 = vunpack.c.l.b16 %v3608
        %v6464 = vunpack.c.h.b16 %v3608
        %v6465 = vunpack.c.l.b16 %v3609
        %v6466 = vunpack.c.h.b16 %v3609
        %v6467 = vunpack.c.l.b16 %v3610
        %v6468 = vunpack.c.h.b16 %v3610
        %v6469 = vunpack.c.l.b16 %v3611
        %v6470 = vunpack.c.h.b16 %v3611
        %v6471 = vunpack.c.l.b16 %v3612
        %v6472 = vunpack.c.h.b16 %v3612
        %v6473 = vunpack.c.l.b16 %v3613
        %v6474 = vunpack.c.h.b16 %v3613
        %v6475 = vunpack.c.l.b16 %v3614
        %v6476 = vunpack.c.h.b16 %v3614
        %v6477 = vunpack.c.l.b16 %v3615
        %v6478 = vunpack.c.h.b16 %v3615
        %v6479 = vunpack.c.l.b16 %v3616
        %v6480 = vunpack.c.h.b16 %v3616
        %v6481 = vunpack.c.l.b16 %v3617
        %v6482 = vunpack.c.h.b16 %v3617
        %v6483 = vunpack.c.l.b16 %v3618
        %v6484 = vunpack.c.h.b16 %v3618
        %v6485 = vunpack.c.l.b16 %v3619
        %v6486 = vunpack.c.h.b16 %v3619
        %v6487 = vunpack.c.l.b16 %v3620
        %v6488 = vunpack.c.h.b16 %v3620
        %v6489 = vunpack.c.l.b16 %v3621
        %v6490 = vunpack.c.h.b16 %v3621
        %v6491 = vunpack.c.l.b16 %v3622
        %v6492 = vunpack.c.h.b16 %v3622
        %v6493 = vunpack.c.l.b16 %v3623
        %v6494 = vunpack.c.h.b16 %v3623
        %v6495 = vunpack.c.l.b16 %v3624
        %v6496 = vunpack.c.h.b16 %v3624
        %v6497 = vunpack.c.l.b16 %v3625
        %v6498 = vunpack.c.h.b16 %v3625
        %v6499 = vunpack.c.l.b16 %v3626
        %v6500 = vunpack.c.h.b16 %v3626
        %v6501 = vunpack.c.l.b16 %v3627
        %v6502 = vunpack.c.h.b16 %v3627
        %v6503 = vunpack.c.l.b16 %v3628
        %v6504 = vunpack.c.h.b16 %v3628
        %v6505 = vunpack.c.l.b16 %v3629
        %v6506 = vunpack.c.h.b16 %v3629
        %v6507 = vunpack.c.l.b16 %v3630
        %v6508 = vunpack.c.h.b16 %v3630
        %v6509 = vunpack.c.l.b16 %v3631
        %v6510 = vunpack.c.h.b16 %v3631
        %v6511 = vunpack.c.l.b16 %v3632
        %v6512 = vunpack.c.h.b16 %v3632
        %v6513 = vunpack.c.l.b16 %v3633
        %v6514 = vunpack.c.h.b16 %v3633
        %v6515 = vunpack.c.l.b16 %v3634
        %v6516 = vunpack.c.h.b16 %v3634
        %v6517 = vunpack.c.l.b16 %v3635
        %v6518 = vunpack.c.h.b16 %v3635
        %v6519 = vunpack.c.l.b16 %v3636
        %v6520 = vunpack.c.h.b16 %v3636
        %v6521 = vunpack.c.l.b16 %v3637
        %v6522 = vunpack.c.h.b16 %v3637
        %v6523 = vunpack.c.l.b16 %v3638
        %v6524 = vunpack.c.h.b16 %v3638
        %v6525 = vunpack.c.l.b16 %v3639
        %v6526 = vunpack.c.h.b16 %v3639
        %v6527 = vunpack.c.l.b16 %v3640
        %v6528 = vunpack.c.h.b16 %v3640
        %v6529 = vunpack.c.l.b16 %v3641
        %v6530 = vunpack.c.h.b16 %v3641
        %v6531 = vunpack.c.l.b16 %v3642
        %v6532 = vunpack.c.h.b16 %v3642
        %v6533 = vunpack.c.l.b16 %v3643
        %v6534 = vunpack.c.h.b16 %v3643
        %v6535 = vunpack.c.l.b16 %v3644
        %v6536 = vunpack.c.h.b16 %v3644
        %v6537 = vunpack.c.l.b16 %v3645
        %v6538 = vunpack.c.h.b16 %v3645
        %v6539 = vunpack.c.l.b16 %v3646
        %v6540 = vunpack.c.h.b16 %v3646
        %v6541 = vunpack.c.l.b16 %v3647
        %v6542 = vunpack.c.h.b16 %v3647
        %v6543 = vunpack.c.l.b16 %v3648
        %v6544 = vunpack.c.h.b16 %v3648
        %v6545 = vunpack.c.l.b16 %v3649
        %v6546 = vunpack.c.h.b16 %v3649
        %v6547 = vunpack.c.l.b16 %v3650
        %v6548 = vunpack.c.h.b16 %v3650
        %v6549 = vunpack.c.l.b16 %v3651
        %v6550 = vunpack.c.h.b16 %v3651
        %v6551 = vunpack.c.l.b16 %v3652
        %v6552 = vunpack.c.h.b16 %v3652
        %v6553 = vunpack.c.l.b16 %v3653
        %v6554 = vunpack.c.h.b16 %v3653
        %v6555 = vunpack.c.l.b16 %v3654
        %v6556 = vunpack.c.h.b16 %v3654
        %v6557 = vunpack.c.l.b16 %v3655
        %v6558 = vunpack.c.h.b16 %v3655
        %v6559 = vunpack.c.l.b16 %v3656
        %v6560 = vunpack.c.h.b16 %v3656
        %v6561 = vunpack.c.l.b16 %v3657
        %v6562 = vunpack.c.h.b16 %v3657
        %v6563 = vunpack.c.l.b16 %v3658
        %v6564 = vunpack.c.h.b16 %v3658
        %v6565 = vunpack.c.l.b16 %v3659
        %v6566 = vunpack.c.h.b16 %v3659
        %v6567 = vunpack.c.l.b16 %v3660
        %v6568 = vunpack.c.h.b16 %v3660
        %v6569 = vunpack.c.l.b16 %v3661
        %v6570 = vunpack.c.h.b16 %v3661
        %v6571 = vunpack.c.l.b16 %v3662
        %v6572 = vunpack.c.h.b16 %v3662
        %v6573 = vunpack.c.l.b16 %v3663
        %v6574 = vunpack.c.h.b16 %v3663
        %v6575 = vunpack.c.l.b16 %v3664
        %v6576 = vunpack.c.h.b16 %v3664
        %v6577 = vunpack.c.l.b16 %v3665
        %v6578 = vunpack.c.h.b16 %v3665
        %v6579 = vunpack.c.l.b16 %v3666
        %v6580 = vunpack.c.h.b16 %v3666
        %v6581 = vunpack.c.l.b16 %v3667
        %v6582 = vunpack.c.h.b16 %v3667
        %v6583 = vunpack.c.l.b16 %v3668
        %v6584 = vunpack.c.h.b16 %v3668
        %v6585 = vunpack.c.l.b16 %v3669
        %v6586 = vunpack.c.h.b16 %v3669
        %v6587 = vunpack.c.l.b16 %v3670
        %v6588 = vunpack.c.h.b16 %v3670
        %v6589 = vunpack.c.l.b16 %v3671
        %v6590 = vunpack.c.h.b16 %v3671
        %v6591 = vunpack.c.l.b16 %v3672
        %v6592 = vunpack.c.h.b16 %v3672
        %v6593 = vunpack.c.l.b16 %v3673
        %v6594 = vunpack.c.h.b16 %v3673
        %v6595 = vunpack.c.l.b16 %v3674
        %v6596 = vunpack.c.h.b16 %v3674
        %v6597 = vunpack.c.l.b16 %v3675
        %v6598 = vunpack.c.h.b16 %v3675
        %v6599 = vunpack.c.l.b16 %v3676
        %v6600 = vunpack.c.h.b16 %v3676
        %v6601 = vunpack.c.l.b16 %v3677
        %v6602 = vunpack.c.h.b16 %v3677
        %v6603 = vunpack.c.l.b16 %v3678
        %v6604 = vunpack.c.h.b16 %v3678
        %v6605 = vunpack.c.l.b16 %v3679
        %v6606 = vunpack.c.h.b16 %v3679
        %v6607 = vunpack.c.l.b16 %v3680
        %v6608 = vunpack.c.h.b16 %v3680
        %v6609 = vunpack.c.l.b16 %v3681
        %v6610 = vunpack.c.h.b16 %v3681
        %v6611 = vunpack.c.l.b16 %v3682
        %v6612 = vunpack.c.h.b16 %v3682
        %v6613 = vunpack.c.l.b16 %v3683
        %v6614 = vunpack.c.h.b16 %v3683
        %v6615 = vunpack.c.l.b16 %v3684
        %v6616 = vunpack.c.h.b16 %v3684
        %v6617 = vunpack.c.l.b16 %v3685
        %v6618 = vunpack.c.h.b16 %v3685
        %v6619 = vunpack.c.l.b16 %v3686
        %v6620 = vunpack.c.h.b16 %v3686
        %v6621 = vunpack.c.l.b16 %v3687
        %v6622 = vunpack.c.h.b16 %v3687
        %v6623 = vunpack.c.l.b16 %v3688
        %v6624 = vunpack.c.h.b16 %v3688
        %v6625 = vunpack.c.l.b16 %v3689
        %v6626 = vunpack.c.h.b16 %v3689
        %v6627 = vunpack.c.l.b16 %v3690
        %v6628 = vunpack.c.h.b16 %v3690
        %v6629 = vunpack.c.l.b16 %v3691
        %v6630 = vunpack.c.h.b16 %v3691
        %v6631 = vunpack.c.l.b16 %v3692
        %v6632 = vunpack.c.h.b16 %v3692
        %v6633 = vunpack.c.l.b16 %v3693
        %v6634 = vunpack.c.h.b16 %v3693
        %v6635 = vunpack.c.l.b16 %v3694
        %v6636 = vunpack.c.h.b16 %v3694
        %v6637 = vunpack.c.l.b16 %v3695
        %v6638 = vunpack.c.h.b16 %v3695
        %v6639 = vunpack.c.l.b16 %v3696
        %v6640 = vunpack.c.h.b16 %v3696
        %v6641 = vunpack.c.l.b16 %v3697
        %v6642 = vunpack.c.h.b16 %v3697
        %v6643 = vunpack.c.l.b16 %v3698
        %v6644 = vunpack.c.h.b16 %v3698
        %v6645 = vunpack.c.l.b16 %v3699
        %v6646 = vunpack.c.h.b16 %v3699
        %v6647 = vunpack.c.l.b16 %v3700
        %v6648 = vunpack.c.h.b16 %v3700
        %v6649 = vunpack.c.l.b16 %v3701
        %v6650 = vunpack.c.h.b16 %v3701
        %v6651 = vunpack.c.l.b16 %v3702
        %v6652 = vunpack.c.h.b16 %v3702
        %v6653 = vunpack.c.l.b16 %v3703
        %v6654 = vunpack.c.h.b16 %v3703
        %v6655 = vunpack.c.l.b16 %v3704
        %v6656 = vunpack.c.h.b16 %v3704
        %v6657 = vunpack.c.l.b16 %v3705
        %v6658 = vunpack.c.h.b16 %v3705
        %v6659 = vunpack.c.l.b16 %v3706
        %v6660 = vunpack.c.h.b16 %v3706
        %v6661 = vunpack.c.l.b16 %v3707
        %v6662 = vunpack.c.h.b16 %v3707
        %v6663 = vunpack.c.l.b16 %v3708
        %v6664 = vunpack.c.h.b16 %v3708
        %v6665 = vunpack.c.l.b16 %v3709
        %v6666 = vunpack.c.h.b16 %v3709
        %v6667 = vunpack.c.l.b16 %v3710
        %v6668 = vunpack.c.h.b16 %v3710
        %v6669 = vunpack.c.l.b16 %v3711
        %v6670 = vunpack.c.h.b16 %v3711
        %v6671 = vunpack.c.l.b16 %v3712
        %v6672 = vunpack.c.h.b16 %v3712
        %v6673 = vunpack.c.l.b16 %v3713
        %v6674 = vunpack.c.h.b16 %v3713
        %v6675 = vunpack.c.l.b16 %v3714
        %v6676 = vunpack.c.h.b16 %v3714
        %v6677 = vunpack.c.l.b16 %v3715
        %v6678 = vunpack.c.h.b16 %v3715
        %v6679 = vunpack.c.l.b16 %v3716
        %v6680 = vunpack.c.h.b16 %v3716
        %v6681 = vunpack.c.l.b16 %v3717
        %v6682 = vunpack.c.h.b16 %v3717
        %v6683 = vunpack.c.l.b16 %v3718
        %v6684 = vunpack.c.h.b16 %v3718
        %v6685 = vunpack.c.l.b16 %v3719
        %v6686 = vunpack.c.h.b16 %v3719
        %v6687 = vunpack.c.l.b16 %v3720
        %v6688 = vunpack.c.h.b16 %v3720
        %v6689 = vunpack.c.l.b16 %v3721
        %v6690 = vunpack.c.h.b16 %v3721
        %v6691 = vunpack.c.l.b16 %v3722
        %v6692 = vunpack.c.h.b16 %v3722
        %v6693 = vunpack.c.l.b16 %v3723
        %v6694 = vunpack.c.h.b16 %v3723
        %v6695 = vunpack.c.l.b16 %v3724
        %v6696 = vunpack.c.h.b16 %v3724
        %v6697 = vunpack.c.l.b16 %v3725
        %v6698 = vunpack.c.h.b16 %v3725
        %v6699 = vunpack.c.l.b16 %v3726
        %v6700 = vunpack.c.h.b16 %v3726
        %v6701 = vunpack.c.l.b16 %v3727
        %v6702 = vunpack.c.h.b16 %v3727
        %v6703 = vunpack.c.l.b16 %v3728
        %v6704 = vunpack.c.h.b16 %v3728
        %v6705 = vunpack.c.l.b16 %v3729
        %v6706 = vunpack.c.h.b16 %v3729
        %v6707 = vunpack.c.l.b16 %v3730
        %v6708 = vunpack.c.h.b16 %v3730
        %v6709 = vunpack.c.l.b16 %v3731
        %v6710 = vunpack.c.h.b16 %v3731
        %v6711 = vunpack.c.l.b16 %v3732
        %v6712 = vunpack.c.h.b16 %v3732
        %v6713 = vunpack.c.l.b16 %v3733
        %v6714 = vunpack.c.h.b16 %v3733
        %v6715 = vunpack.c.l.b16 %v3734
        %v6716 = vunpack.c.h.b16 %v3734
        %v6717 = vunpack.c.l.b16 %v3735
        %v6718 = vunpack.c.h.b16 %v3735
        %v6719 = vunpack.c.l.b16 %v3736
        %v6720 = vunpack.c.h.b16 %v3736
        %v6721 = vunpack.c.l.b16 %v3737
        %v6722 = vunpack.c.h.b16 %v3737
        %v6723 = vunpack.c.l.b16 %v3738
        %v6724 = vunpack.c.h.b16 %v3738
        %v6725 = vunpack.c.l.b16 %v3739
        %v6726 = vunpack.c.h.b16 %v3739
        %v6727 = vunpack.c.l.b16 %v3740
        %v6728 = vunpack.c.h.b16 %v3740
        %v6729 = vunpack.c.l.b16 %v3741
        %v6730 = vunpack.c.h.b16 %v3741
        %v6731 = vunpack.c.l.b16 %v3742
        %v6732 = vunpack.c.h.b16 %v3742
        %v6733 = vunpack.c.l.b16 %v3743
        %v6734 = vunpack.c.h.b16 %v3743
        %v6735 = vunpack.c.l.b16 %v3744
        %v6736 = vunpack.c.h.b16 %v3744
        %v6737 = vunpack.c.l.b16 %v3745
        %v6738 = vunpack.c.h.b16 %v3745
        %v6739 = vunpack.c.l.b16 %v3746
        %v6740 = vunpack.c.h.b16 %v3746
        %v6741 = vunpack.c.l.b16 %v3747
        %v6742 = vunpack.c.h.b16 %v3747
        %v6743 = vunpack.c.l.b16 %v3748
        %v6744 = vunpack.c.h.b16 %v3748
        %v6745 = vunpack.c.l.b16 %v3749
        %v6746 = vunpack.c.h.b16 %v3749
        %v6747 = vunpack.c.l.b16 %v3750
        %v6748 = vunpack.c.h.b16 %v3750
        %v6749 = vunpack.c.l.b16 %v3751
        %v6750 = vunpack.c.h.b16 %v3751
        %v6751 = vunpack.c.l.b16 %v3752
        %v6752 = vunpack.c.h.b16 %v3752
        %v6753 = vunpack.c.l.b16 %v3753
        %v6754 = vunpack.c.h.b16 %v3753
        %v6755 = vunpack.c.l.b16 %v3754
        %v6756 = vunpack.c.h.b16 %v3754
        %v6757 = vunpack.c.l.b16 %v3755
        %v6758 = vunpack.c.h.b16 %v3755
        %v6759 = vunpack.c.l.b16 %v3756
        %v6760 = vunpack.c.h.b16 %v3756
        %v6761 = vunpack.c.l.b16 %v3757
        %v6762 = vunpack.c.h.b16 %v3757
        %v6763 = vunpack.c.l.b16 %v3758
        %v6764 = vunpack.c.h.b16 %v3758
        %v6765 = vunpack.c.l.b16 %v3759
        %v6766 = vunpack.c.h.b16 %v3759
        %v6767 = vunpack.c.l.b16 %v3760
        %v6768 = vunpack.c.h.b16 %v3760
        %v6769 = vunpack.c.l.b16 %v3761
        %v6770 = vunpack.c.h.b16 %v3761
        %v6771 = vunpack.c.l.b16 %v3762
        %v6772 = vunpack.c.h.b16 %v3762
        %v6773 = vunpack.c.l.b16 %v3763
        %v6774 = vunpack.c.h.b16 %v3763
        %v6775 = vunpack.c.l.b16 %v3764
        %v6776 = vunpack.c.h.b16 %v3764
        %v6777 = vunpack.c.l.b16 %v3765
        %v6778 = vunpack.c.h.b16 %v3765
        %v6779 = vunpack.c.l.b16 %v3766
        %v6780 = vunpack.c.h.b16 %v3766
        %v6781 = vunpack.c.l.b16 %v3767
        %v6782 = vunpack.c.h.b16 %v3767
        %v6783 = vunpack.c.l.b16 %v3768
        %v6784 = vunpack.c.h.b16 %v3768
        %v6785 = vunpack.c.l.b16 %v3769
        %v6786 = vunpack.c.h.b16 %v3769
        %v6787 = vunpack.c.l.b16 %v3770
        %v6788 = vunpack.c.h.b16 %v3770
        %v6789 = vunpack.c.l.b16 %v3771
        %v6790 = vunpack.c.h.b16 %v3771
        %v6791 = vunpack.c.l.b16 %v3772
        %v6792 = vunpack.c.h.b16 %v3772
        %v6793 = vunpack.c.l.b16 %v3773
        %v6794 = vunpack.c.h.b16 %v3773
        %v6795 = vunpack.c.l.b16 %v3774
        %v6796 = vunpack.c.h.b16 %v3774
        %v6797 = vunpack.c.l.b16 %v3775
        %v6798 = vunpack.c.h.b16 %v3775
        %v6799 = vunpack.c.l.b16 %v3776
        %v6800 = vunpack.c.h.b16 %v3776
        %v6801 = vunpack.c.l.b16 %v3777
        %v6802 = vunpack.c.h.b16 %v3777
        %v6803 = vunpack.c.l.b16 %v3778
        %v6804 = vunpack.c.h.b16 %v3778
        %v6805 = vunpack.c.l.b16 %v3779
        %v6806 = vunpack.c.h.b16 %v3779
        %v6807 = vunpack.c.l.b16 %v3780
        %v6808 = vunpack.c.h.b16 %v3780
        %v6809 = vunpack.c.l.b16 %v3781
        %v6810 = vunpack.c.h.b16 %v3781
        %v6811 = vunpack.c.l.b16 %v3782
        %v6812 = vunpack.c.h.b16 %v3782
        %v6813 = vunpack.c.l.b16 %v3783
        %v6814 = vunpack.c.h.b16 %v3783
        %v6815 = vunpack.c.l.b16 %v3784
        %v6816 = vunpack.c.h.b16 %v3784
        %v6817 = vunpack.c.l.b16 %v3785
        %v6818 = vunpack.c.h.b16 %v3785
        %v6819 = vunpack.c.l.b16 %v3786
        %v6820 = vunpack.c.h.b16 %v3786
        %v6821 = vunpack.c.l.b16 %v3787
        %v6822 = vunpack.c.h.b16 %v3787
        %v6823 = vunpack.c.l.b16 %v3788
        %v6824 = vunpack.c.h.b16 %v3788
        %v6825 = vunpack.c.l.b16 %v3789
        %v6826 = vunpack.c.h.b16 %v3789
        %v6827 = vunpack.c.l.b16 %v3790
        %v6828 = vunpack.c.h.b16 %v3790
        %v6829 = vunpack.c.l.b16 %v3791
        %v6830 = vunpack.c.h.b16 %v3791
        %v6831 = vunpack.c.l.b16 %v3792
        %v6832 = vunpack.c.h.b16 %v3792
        %v6833 = vunpack.c.l.b16 %v3793
        %v6834 = vunpack.c.h.b16 %v3793
        %v6835 = vunpack.c.l.b16 %v3794
        %v6836 = vunpack.c.h.b16 %v3794
        %v6837 = vunpack.c.l.b16 %v3795
        %v6838 = vunpack.c.h.b16 %v3795
        %v6839 = vunpack.c.l.b16 %v3796
        %v6840 = vunpack.c.h.b16 %v3796
        %v6841 = vunpack.c.l.b16 %v3797
        %v6842 = vunpack.c.h.b16 %v3797
        %v6843 = vunpack.c.l.b16 %v3798
        %v6844 = vunpack.c.h.b16 %v3798
        %v6845 = vunpack.c.l.b16 %v3799
        %v6846 = vunpack.c.h.b16 %v3799
        %v6847 = vunpack.c.l.b16 %v3800
        %v6848 = vunpack.c.h.b16 %v3800
        %v6849 = vunpack.c.l.b16 %v3801
        %v6850 = vunpack.c.h.b16 %v3801
        %v6851 = vunpack.c.l.b16 %v3802
        %v6852 = vunpack.c.h.b16 %v3802
        %v6853 = vunpack.c.l.b16 %v3803
        %v6854 = vunpack.c.h.b16 %v3803
        %v6855 = vunpack.c.l.b16 %v3804
        %v6856 = vunpack.c.h.b16 %v3804
        %v6857 = vunpack.c.l.b16 %v3805
        %v6858 = vunpack.c.h.b16 %v3805
        %v6859 = vunpack.c.l.b16 %v3806
        %v6860 = vunpack.c.h.b16 %v3806
        %v6861 = vunpack.c.l.b16 %v3807
        %v6862 = vunpack.c.h.b16 %v3807
        %v6863 = vunpack.c.l.b16 %v3808
        %v6864 = vunpack.c.h.b16 %v3808
        %v6865 = vunpack.c.l.b16 %v3809
        %v6866 = vunpack.c.h.b16 %v3809
        %v6867 = vunpack.c.l.b16 %v3810
        %v6868 = vunpack.c.h.b16 %v3810
        %v6869 = vunpack.c.l.b16 %v3811
        %v6870 = vunpack.c.h.b16 %v3811
        %v6871 = vunpack.c.l.b16 %v3812
        %v6872 = vunpack.c.h.b16 %v3812
        %v6873 = vunpack.c.l.b16 %v3813
        %v6874 = vunpack.c.h.b16 %v3813
        %v6875 = vunpack.c.l.b16 %v3814
        %v6876 = vunpack.c.h.b16 %v3814
        %v6877 = vunpack.c.l.b16 %v3815
        %v6878 = vunpack.c.h.b16 %v3815
        %v6879 = vunpack.c.l.b16 %v3816
        %v6880 = vunpack.c.h.b16 %v3816
        %v6881 = vunpack.c.l.b16 %v3817
        %v6882 = vunpack.c.h.b16 %v3817
        %v6883 = vunpack.c.l.b16 %v3818
        %v6884 = vunpack.c.h.b16 %v3818
        %v6885 = vunpack.c.l.b16 %v3819
        %v6886 = vunpack.c.h.b16 %v3819
        %v6887 = vunpack.c.l.b16 %v3820
        %v6888 = vunpack.c.h.b16 %v3820
        %v6889 = vunpack.c.l.b16 %v3821
        %v6890 = vunpack.c.h.b16 %v3821
        %v6891 = vunpack.c.l.b16 %v3822
        %v6892 = vunpack.c.h.b16 %v3822
        %v6893 = vunpack.c.l.b16 %v3823
        %v6894 = vunpack.c.h.b16 %v3823
        %v6895 = vunpack.c.l.b16 %v3824
        %v6896 = vunpack.c.h.b16 %v3824
        %v6897 = vunpack.c.l.b16 %v3825
        %v6898 = vunpack.c.h.b16 %v3825
        %v6899 = vunpack.c.l.b16 %v3826
        %v6900 = vunpack.c.h.b16 %v3826
        %v6901 = vunpack.c.l.b16 %v3827
        %v6902 = vunpack.c.h.b16 %v3827
        %v6903 = vunpack.c.l.b16 %v3828
        %v6904 = vunpack.c.h.b16 %v3828
        %v6905 = vunpack.c.l.b16 %v3829
        %v6906 = vunpack.c.h.b16 %v3829
        %v6907 = vunpack.c.l.b16 %v3830
        %v6908 = vunpack.c.h.b16 %v3830
        %v6909 = vunpack.c.l.b16 %v3831
        %v6910 = vunpack.c.h.b16 %v3831
        %v6911 = vunpack.c.l.b16 %v3832
        %v6912 = vunpack.c.h.b16 %v3832
        %v6913 = vunpack.c.l.b16 %v3833
        %v6914 = vunpack.c.h.b16 %v3833
        %v6915 = vunpack.c.l.b16 %v3834
        %v6916 = vunpack.c.h.b16 %v3834
        %v6917 = vunpack.c.l.b16 %v3835
        %v6918 = vunpack.c.h.b16 %v3835
        %v6919 = vunpack.c.l.b16 %v3836
        %v6920 = vunpack.c.h.b16 %v3836
        %v6921 = vunpack.c.l.b16 %v3837
        %v6922 = vunpack.c.h.b16 %v3837
        %v6923 = vunpack.c.l.b16 %v3838
        %v6924 = vunpack.c.h.b16 %v3838
        %v6925 = vunpack.c.l.b16 %v3839
        %v6926 = vunpack.c.h.b16 %v3839
        %v6927 = vunpack.c.l.b16 %v3840
        %v6928 = vunpack.c.h.b16 %v3840
        %v6929 = vunpack.c.l.b16 %v3841
        %v6930 = vunpack.c.h.b16 %v3841
        %v6931 = vunpack.c.l.b16 %v3842
        %v6932 = vunpack.c.h.b16 %v3842
        %v6933 = vunpack.c.l.b16 %v3843
        %v6934 = vunpack.c.h.b16 %v3843
        %v6935 = vunpack.c.l.b16 %v3844
        %v6936 = vunpack.c.h.b16 %v3844
        %v6937 = vunpack.c.l.b16 %v3845
        %v6938 = vunpack.c.h.b16 %v3845
        %v6939 = vunpack.c.l.b16 %v3846
        %v6940 = vunpack.c.h.b16 %v3846
        %v6941 = vunpack.c.l.b16 %v3847
        %v6942 = vunpack.c.h.b16 %v3847
        %v6943 = vunpack.c.l.b16 %v3848
        %v6944 = vunpack.c.h.b16 %v3848
        %v6945 = vunpack.c.l.b16 %v3849
        %v6946 = vunpack.c.h.b16 %v3849
        %v6947 = vunpack.c.l.b16 %v3850
        %v6948 = vunpack.c.h.b16 %v3850
        %v6949 = vunpack.c.l.b16 %v3851
        %v6950 = vunpack.c.h.b16 %v3851
        %v6951 = vunpack.c.l.b16 %v3852
        %v6952 = vunpack.c.h.b16 %v3852
        %v6953 = vunpack.c.l.b16 %v3853
        %v6954 = vunpack.c.h.b16 %v3853
        %v6955 = vunpack.c.l.b16 %v3854
        %v6956 = vunpack.c.h.b16 %v3854
        %v6957 = vunpack.c.l.b16 %v3855
        %v6958 = vunpack.c.h.b16 %v3855
        %v6959 = vunpack.c.l.b16 %v3856
        %v6960 = vunpack.c.h.b16 %v3856
        %v6961 = vunpack.c.l.b16 %v3857
        %v6962 = vunpack.c.h.b16 %v3857
        %v6963 = vunpack.c.l.b16 %v3858
        %v6964 = vunpack.c.h.b16 %v3858
        %v6965 = vunpack.c.l.b16 %v3859
        %v6966 = vunpack.c.h.b16 %v3859
        %v6967 = vunpack.c.l.b16 %v3860
        %v6968 = vunpack.c.h.b16 %v3860
        %v6969 = vunpack.c.l.b16 %v3861
        %v6970 = vunpack.c.h.b16 %v3861
        %v6971 = vunpack.c.l.b16 %v3862
        %v6972 = vunpack.c.h.b16 %v3862
        %v6973 = vunpack.c.l.b16 %v3863
        %v6974 = vunpack.c.h.b16 %v3863
        %v6975 = vunpack.c.l.b16 %v3864
        %v6976 = vunpack.c.h.b16 %v3864
        %v6977 = vunpack.c.l.b16 %v3865
        %v6978 = vunpack.c.h.b16 %v3865
        %v6979 = vunpack.c.l.b16 %v3866
        %v6980 = vunpack.c.h.b16 %v3866
        %v6981 = vunpack.c.l.b16 %v3867
        %v6982 = vunpack.c.h.b16 %v3867
        %v6983 = vunpack.c.l.b16 %v3868
        %v6984 = vunpack.c.h.b16 %v3868
        %v6985 = vunpack.c.l.b16 %v3869
        %v6986 = vunpack.c.h.b16 %v3869
        %v6987 = vunpack.c.l.b16 %v3870
        %v6988 = vunpack.c.h.b16 %v3870
        %v6989 = vunpack.c.l.b16 %v3871
        %v6990 = vunpack.c.h.b16 %v3871
        %v6991 = vunpack.c.l.b16 %v3872
        %v6992 = vunpack.c.h.b16 %v3872
        %v6993 = vunpack.c.l.b16 %v3873
        %v6994 = vunpack.c.h.b16 %v3873
        %v6995 = vunpack.c.l.b16 %v3874
        %v6996 = vunpack.c.h.b16 %v3874
        %v6997 = vunpack.c.l.b16 %v3875
        %v6998 = vunpack.c.h.b16 %v3875
        %v6999 = vunpack.c.l.b16 %v3876
        %v7000 = vunpack.c.h.b16 %v3876
        %v7001 = vunpack.c.l.b16 %v3877
        %v7002 = vunpack.c.h.b16 %v3877
        %v7003 = vunpack.c.l.b16 %v3878
        %v7004 = vunpack.c.h.b16 %v3878
        %v7005 = vunpack.c.l.b16 %v3879
        %v7006 = vunpack.c.h.b16 %v3879
        %v7007 = vunpack.c.l.b16 %v3880
        %v7008 = vunpack.c.h.b16 %v3880
        %v7009 = vunpack.c.l.b16 %v3881
        %v7010 = vunpack.c.h.b16 %v3881
        %v7011 = vunpack.c.l.b16 %v3882
        %v7012 = vunpack.c.h.b16 %v3882
        %v7013 = vunpack.c.l.b16 %v3883
        %v7014 = vunpack.c.h.b16 %v3883
        %v7015 = vunpack.c.l.b16 %v3884
        %v7016 = vunpack.c.h.b16 %v3884
        %v7017 = vunpack.c.l.b16 %v3885
        %v7018 = vunpack.c.h.b16 %v3885
        %v7019 = vunpack.c.l.b16 %v3886
        %v7020 = vunpack.c.h.b16 %v3886
        %v7021 = vunpack.c.l.b16 %v3887
        %v7022 = vunpack.c.h.b16 %v3887
        %v7023 = vunpack.c.l.b16 %v3888
        %v7024 = vunpack.c.h.b16 %v3888
        %v7025 = vunpack.c.l.b16 %v3889
        %v7026 = vunpack.c.h.b16 %v3889
        %v7027 = vunpack.c.l.b16 %v3890
        %v7028 = vunpack.c.h.b16 %v3890
        %v7029 = vunpack.c.l.b16 %v3891
        %v7030 = vunpack.c.h.b16 %v3891
        %v7031 = vunpack.c.l.b16 %v3892
        %v7032 = vunpack.c.h.b16 %v3892
        %v7033 = vunpack.c.l.b16 %v3893
        %v7034 = vunpack.c.h.b16 %v3893
        %v7035 = vunpack.c.l.b16 %v3894
        %v7036 = vunpack.c.h.b16 %v3894
        %v7037 = vunpack.c.l.b16 %v3895
        %v7038 = vunpack.c.h.b16 %v3895
        %v7039 = vunpack.c.l.b16 %v3896
        %v7040 = vunpack.c.h.b16 %v3896
        %v7041 = vunpack.c.l.b16 %v3897
        %v7042 = vunpack.c.h.b16 %v3897
        %v7043 = vunpack.c.l.b16 %v3898
        %v7044 = vunpack.c.h.b16 %v3898
        %v7045 = vunpack.c.l.b16 %v3899
        %v7046 = vunpack.c.h.b16 %v3899
        %v7047 = vunpack.c.l.b16 %v3900
        %v7048 = vunpack.c.h.b16 %v3900
        %v7049 = vunpack.c.l.b16 %v3901
        %v7050 = vunpack.c.h.b16 %v3901
        %v7051 = vunpack.c.l.b16 %v3902
        %v7052 = vunpack.c.h.b16 %v3902
        %v7053 = vunpack.c.l.b16 %v3903
        %v7054 = vunpack.c.h.b16 %v3903
        %v7055 = vunpack.c.l.b16 %v3904
        %v7056 = vunpack.c.h.b16 %v3904
        %v7057 = vunpack.c.l.b16 %v3905
        %v7058 = vunpack.c.h.b16 %v3905
        %v7059 = vunpack.c.l.b16 %v3906
        %v7060 = vunpack.c.h.b16 %v3906
        %v7061 = vunpack.c.l.b16 %v3907
        %v7062 = vunpack.c.h.b16 %v3907
        %v7063 = vunpack.c.l.b16 %v3908
        %v7064 = vunpack.c.h.b16 %v3908
        %v7065 = vunpack.c.l.b16 %v3909
        %v7066 = vunpack.c.h.b16 %v3909
        %v7067 = vunpack.c.l.b16 %v3910
        %v7068 = vunpack.c.h.b16 %v3910
        %v7069 = vpack.c.b16 %v5345, %v5341
        %v7070 = vpack.c.b16 %v5346, %v5342
        %v7071 = vpack.c.b16 %v5347, %v5343
        %v7072 = vpack.c.b16 %v5348, %v5344
        %v7073 = vpack.c.b16 %v5353, %v5349
        %v7074 = vpack.c.b16 %v5354, %v5350
        %v7075 = vpack.c.b16 %v5355, %v5351
        %v7076 = vpack.c.b16 %v5356, %v5352
        %v7077 = vpack.c.b16 %v5361, %v5357
        %v7078 = vpack.c.b16 %v5362, %v5358
        %v7079 = vpack.c.b16 %v5363, %v5359
        %v7080 = vpack.c.b16 %v5364, %v5360
        %v7081 = vpack.c.b16 %v5369, %v5365
        %v7082 = vpack.c.b16 %v5370, %v5366
        %v7083 = vpack.c.b16 %v5371, %v5367
        %v7084 = vpack.c.b16 %v5372, %v5368
        %v7085 = vpack.c.b16 %v5377, %v5373
        %v7086 = vpack.c.b16 %v5378, %v5374
        %v7087 = vpack.c.b16 %v5379, %v5375
        %v7088 = vpack.c.b16 %v5380, %v5376
        %v7089 = vpack.c.b16 %v5385, %v5381
        %v7090 = vpack.c.b16 %v5386, %v5382
        %v7091 = vpack.c.b16 %v5387, %v5383
        %v7092 = vpack.c.b16 %v5388, %v5384
        %v7093 = vpack.c.b16 %v5393, %v5389
        %v7094 = vpack.c.b16 %v5394, %v5390
        %v7095 = vpack.c.b16 %v5395, %v5391
        %v7096 = vpack.c.b16 %v5396, %v5392
        %v7097 = vpack.c.b16 %v5401, %v5397
        %v7098 = vpack.c.b16 %v5402, %v5398
        %v7099 = vpack.c.b16 %v5403, %v5399
        %v7100 = vpack.c.b16 %v5404, %v5400
        %v7101 = vpack.c.b16 %v5409, %v5405
        %v7102 = vpack.c.b16 %v5410, %v5406
        %v7103 = vpack.c.b16 %v5411, %v5407
        %v7104 = vpack.c.b16 %v5412, %v5408
        %v7105 = vpack.c.b16 %v5417, %v5413
        %v7106 = vpack.c.b16 %v5418, %v5414
        %v7107 = vpack.c.b16 %v5419, %v5415
        %v7108 = vpack.c.b16 %v5420, %v5416
        %v7109 = vpack.c.b16 %v5425, %v5421
        %v7110 = vpack.c.b16 %v5426, %v5422
        %v7111 = vpack.c.b16 %v5427, %v5423
        %v7112 = vpack.c.b16 %v5428, %v5424
        %v7113 = vpack.c.b16 %v5433, %v5429
        %v7114 = vpack.c.b16 %v5434, %v5430
        %v7115 = vpack.c.b16 %v5435, %v5431
        %v7116 = vpack.c.b16 %v5436, %v5432
        %v7117 = vpack.c.b16 %v5441, %v5437
        %v7118 = vpack.c.b16 %v5442, %v5438
        %v7119 = vpack.c.b16 %v5443, %v5439
        %v7120 = vpack.c.b16 %v5444, %v5440
        %v7121 = vpack.c.b16 %v5449, %v5445
        %v7122 = vpack.c.b16 %v5450, %v5446
        %v7123 = vpack.c.b16 %v5451, %v5447
        %v7124 = vpack.c.b16 %v5452, %v5448
        %v7125 = vpack.c.b16 %v5457, %v5453
        %v7126 = vpack.c.b16 %v5458, %v5454
        %v7127 = vpack.c.b16 %v5459, %v5455
        %v7128 = vpack.c.b16 %v5460, %v5456
        %v7129 = vpack.c.b16 %v5465, %v5461
        %v7130 = vpack.c.b16 %v5466, %v5462
        %v7131 = vpack.c.b16 %v5467, %v5463
        %v7132 = vpack.c.b16 %v5468, %v5464
        %v7133 = vpack.c.b16 %v5473, %v5469
        %v7134 = vpack.c.b16 %v5474, %v5470
        %v7135 = vpack.c.b16 %v5475, %v5471
        %v7136 = vpack.c.b16 %v5476, %v5472
        %v7137 = vpack.c.b16 %v5481, %v5477
        %v7138 = vpack.c.b16 %v5482, %v5478
        %v7139 = vpack.c.b16 %v5483, %v5479
        %v7140 = vpack.c.b16 %v5484, %v5480
        %v7141 = vpack.c.b16 %v5489, %v5485
        %v7142 = vpack.c.b16 %v5490, %v5486
        %v7143 = vpack.c.b16 %v5491, %v5487
        %v7144 = vpack.c.b16 %v5492, %v5488
        %v7145 = vpack.c.b16 %v5497, %v5493
        %v7146 = vpack.c.b16 %v5498, %v5494
        %v7147 = vpack.c.b16 %v5499, %v5495
        %v7148 = vpack.c.b16 %v5500, %v5496
        %v7149 = vpack.c.b16 %v5505, %v5501
        %v7150 = vpack.c.b16 %v5506, %v5502
        %v7151 = vpack.c.b16 %v5507, %v5503
        %v7152 = vpack.c.b16 %v5508, %v5504
        %v7153 = vpack.c.b16 %v5513, %v5509
        %v7154 = vpack.c.b16 %v5514, %v5510
        %v7155 = vpack.c.b16 %v5515, %v5511
        %v7156 = vpack.c.b16 %v5516, %v5512
        %v7157 = vpack.c.b16 %v5521, %v5517
        %v7158 = vpack.c.b16 %v5522, %v5518
        %v7159 = vpack.c.b16 %v5523, %v5519
        %v7160 = vpack.c.b16 %v5524, %v5520
        %v7161 = vpack.c.b16 %v5529, %v5525
        %v7162 = vpack.c.b16 %v5530, %v5526
        %v7163 = vpack.c.b16 %v5531, %v5527
        %v7164 = vpack.c.b16 %v5532, %v5528
        %v7165 = vpack.c.b16 %v5537, %v5533
        %v7166 = vpack.c.b16 %v5538, %v5534
        %v7167 = vpack.c.b16 %v5539, %v5535
        %v7168 = vpack.c.b16 %v5540, %v5536
        %v7169 = vpack.c.b16 %v5545, %v5541
        %v7170 = vpack.c.b16 %v5546, %v5542
        %v7171 = vpack.c.b16 %v5547, %v5543
        %v7172 = vpack.c.b16 %v5548, %v5544
        %v7173 = vpack.c.b16 %v5553, %v5549
        %v7174 = vpack.c.b16 %v5554, %v5550
        %v7175 = vpack.c.b16 %v5555, %v5551
        %v7176 = vpack.c.b16 %v5556, %v5552
        %v7177 = vpack.c.b16 %v5561, %v5557
        %v7178 = vpack.c.b16 %v5562, %v5558
        %v7179 = vpack.c.b16 %v5563, %v5559
        %v7180 = vpack.c.b16 %v5564, %v5560
        %v7181 = vpack.c.b16 %v5569, %v5565
        %v7182 = vpack.c.b16 %v5570, %v5566
        %v7183 = vpack.c.b16 %v5571, %v5567
        %v7184 = vpack.c.b16 %v5572, %v5568
        %v7185 = vpack.c.b16 %v5577, %v5573
        %v7186 = vpack.c.b16 %v5578, %v5574
        %v7187 = vpack.c.b16 %v5579, %v5575
        %v7188 = vpack.c.b16 %v5580, %v5576
        %v7189 = vpack.c.b16 %v5585, %v5581
        %v7190 = vpack.c.b16 %v5586, %v5582
        %v7191 = vpack.c.b16 %v5587, %v5583
        %v7192 = vpack.c.b16 %v5588, %v5584
        %v7193 = vpack.c.b16 %v5593, %v5589
        %v7194 = vpack.c.b16 %v5594, %v5590
        %v7195 = vpack.c.b16 %v5595, %v5591
        %v7196 = vpack.c.b16 %v5596, %v5592
        %v7197 = vpack.c.b16 %v5601, %v5597
        %v7198 = vpack.c.b16 %v5602, %v5598
        %v7199 = vpack.c.b16 %v5603, %v5599
        %v7200 = vpack.c.b16 %v5604, %v5600
        %v7201 = vpack.c.b16 %v5609, %v5605
        %v7202 = vpack.c.b16 %v5610, %v5606
        %v7203 = vpack.c.b16 %v5611, %v5607
        %v7204 = vpack.c.b16 %v5612, %v5608
        %v7205 = vpack.c.b16 %v5617, %v5613
        %v7206 = vpack.c.b16 %v5618, %v5614
        %v7207 = vpack.c.b16 %v5619, %v5615
        %v7208 = vpack.c.b16 %v5620, %v5616
        %v7209 = vpack.c.b16 %v5625, %v5621
        %v7210 = vpack.c.b16 %v5626, %v5622
        %v7211 = vpack.c.b16 %v5627, %v5623
        %v7212 = vpack.c.b16 %v5628, %v5624
        %v7213 = vpack.c.b16 %v5633, %v5629
        %v7214 = vpack.c.b16 %v5634, %v5630
        %v7215 = vpack.c.b16 %v5635, %v5631
        %v7216 = vpack.c.b16 %v5636, %v5632
        %v7217 = vpack.c.b16 %v5641, %v5637
        %v7218 = vpack.c.b16 %v5642, %v5638
        %v7219 = vpack.c.b16 %v5643, %v5639
        %v7220 = vpack.c.b16 %v5644, %v5640
        %v7221 = vpack.c.b16 %v5649, %v5645
        %v7222 = vpack.c.b16 %v5650, %v5646
        %v7223 = vpack.c.b16 %v5651, %v5647
        %v7224 = vpack.c.b16 %v5652, %v5648
        %v7225 = vpack.c.b16 %v5657, %v5653
        %v7226 = vpack.c.b16 %v5658, %v5654
        %v7227 = vpack.c.b16 %v5659, %v5655
        %v7228 = vpack.c.b16 %v5660, %v5656
        %v7229 = vpack.c.b16 %v5665, %v5661
        %v7230 = vpack.c.b16 %v5666, %v5662
        %v7231 = vpack.c.b16 %v5667, %v5663
        %v7232 = vpack.c.b16 %v5668, %v5664
        %v7233 = vpack.c.b16 %v5673, %v5669
        %v7234 = vpack.c.b16 %v5674, %v5670
        %v7235 = vpack.c.b16 %v5675, %v5671
        %v7236 = vpack.c.b16 %v5676, %v5672
        %v7237 = vpack.c.b16 %v5681, %v5677
        %v7238 = vpack.c.b16 %v5682, %v5678
        %v7239 = vpack.c.b16 %v5683, %v5679
        %v7240 = vpack.c.b16 %v5684, %v5680
        %v7241 = vpack.c.b16 %v5689, %v5685
        %v7242 = vpack.c.b16 %v5690, %v5686
        %v7243 = vpack.c.b16 %v5691, %v5687
        %v7244 = vpack.c.b16 %v5692, %v5688
        %v7245 = vpack.c.b16 %v5697, %v5693
        %v7246 = vpack.c.b16 %v5698, %v5694
        %v7247 = vpack.c.b16 %v5699, %v5695
        %v7248 = vpack.c.b16 %v5700, %v5696
        %v7249 = vpack.c.b16 %v5705, %v5701
        %v7250 = vpack.c.b16 %v5706, %v5702
        %v7251 = vpack.c.b16 %v5707, %v5703
        %v7252 = vpack.c.b16 %v5708, %v5704
        %v7253 = vpack.c.b16 %v5713, %v5709
        %v7254 = vpack.c.b16 %v5714, %v5710
        %v7255 = vpack.c.b16 %v5715, %v5711
        %v7256 = vpack.c.b16 %v5716, %v5712
        %v7257 = vpack.c.b16 %v5721, %v5717
        %v7258 = vpack.c.b16 %v5722, %v5718
        %v7259 = vpack.c.b16 %v5723, %v5719
        %v7260 = vpack.c.b16 %v5724, %v5720
        %v7261 = vpack.c.b16 %v5729, %v5725
        %v7262 = vpack.c.b16 %v5730, %v5726
        %v7263 = vpack.c.b16 %v5731, %v5727
        %v7264 = vpack.c.b16 %v5732, %v5728
        %v7265 = vpack.c.b16 %v5737, %v5733
        %v7266 = vpack.c.b16 %v5738, %v5734
        %v7267 = vpack.c.b16 %v5739, %v5735
        %v7268 = vpack.c.b16 %v5740, %v5736
        %v7269 = vpack.c.b16 %v5745, %v5741
        %v7270 = vpack.c.b16 %v5746, %v5742
        %v7271 = vpack.c.b16 %v5747, %v5743
        %v7272 = vpack.c.b16 %v5748, %v5744
        %v7273 = vpack.c.b16 %v5753, %v5749
        %v7274 = vpack.c.b16 %v5754, %v5750
        %v7275 = vpack.c.b16 %v5755, %v5751
        %v7276 = vpack.c.b16 %v5756, %v5752
        %v7277 = vpack.c.b16 %v5761, %v5757
        %v7278 = vpack.c.b16 %v5762, %v5758
        %v7279 = vpack.c.b16 %v5763, %v5759
        %v7280 = vpack.c.b16 %v5764, %v5760
        %v7281 = vpack.c.b16 %v5769, %v5765
        %v7282 = vpack.c.b16 %v5770, %v5766
        %v7283 = vpack.c.b16 %v5771, %v5767
        %v7284 = vpack.c.b16 %v5772, %v5768
        %v7285 = vpack.c.b16 %v5777, %v5773
        %v7286 = vpack.c.b16 %v5778, %v5774
        %v7287 = vpack.c.b16 %v5779, %v5775
        %v7288 = vpack.c.b16 %v5780, %v5776
        %v7289 = vpack.c.b16 %v5785, %v5781
        %v7290 = vpack.c.b16 %v5786, %v5782
        %v7291 = vpack.c.b16 %v5787, %v5783
        %v7292 = vpack.c.b16 %v5788, %v5784
        %v7293 = vpack.c.b16 %v5793, %v5789
        %v7294 = vpack.c.b16 %v5794, %v5790
        %v7295 = vpack.c.b16 %v5795, %v5791
        %v7296 = vpack.c.b16 %v5796, %v5792
        %v7297 = vpack.c.b16 %v5801, %v5797
        %v7298 = vpack.c.b16 %v5802, %v5798
        %v7299 = vpack.c.b16 %v5803, %v5799
        %v7300 = vpack.c.b16 %v5804, %v5800
        %v7301 = vpack.c.b16 %v5809, %v5805
        %v7302 = vpack.c.b16 %v5810, %v5806
        %v7303 = vpack.c.b16 %v5811, %v5807
        %v7304 = vpack.c.b16 %v5812, %v5808
        %v7305 = vpack.c.b16 %v5817, %v5813
        %v7306 = vpack.c.b16 %v5818, %v5814
        %v7307 = vpack.c.b16 %v5819, %v5815
        %v7308 = vpack.c.b16 %v5820, %v5816
        %v7309 = vpack.c.b16 %v5825, %v5821
        %v7310 = vpack.c.b16 %v5826, %v5822
        %v7311 = vpack.c.b16 %v5827, %v5823
        %v7312 = vpack.c.b16 %v5828, %v5824
        %v7313 = vpack.c.b16 %v5833, %v5829
        %v7314 = vpack.c.b16 %v5834, %v5830
        %v7315 = vpack.c.b16 %v5835, %v5831
        %v7316 = vpack.c.b16 %v5836, %v5832
        %v7317 = vpack.c.b16 %v5841, %v5837
        %v7318 = vpack.c.b16 %v5842, %v5838
        %v7319 = vpack.c.b16 %v5843, %v5839
        %v7320 = vpack.c.b16 %v5844, %v5840
        %v7321 = vpack.c.b16 %v5849, %v5845
        %v7322 = vpack.c.b16 %v5850, %v5846
        %v7323 = vpack.c.b16 %v5851, %v5847
        %v7324 = vpack.c.b16 %v5852, %v5848
        %v7325 = vpack.c.b16 %v5857, %v5853
        %v7326 = vpack.c.b16 %v5858, %v5854
        %v7327 = vpack.c.b16 %v5859, %v5855
        %v7328 = vpack.c.b16 %v5860, %v5856
        %v7329 = vpack.c.b16 %v5865, %v5861
        %v7330 = vpack.c.b16 %v5866, %v5862
        %v7331 = vpack.c.b16 %v5867, %v5863
        %v7332 = vpack.c.b16 %v5868, %v5864
        %v7333 = vpack.c.b16 %v5873, %v5869
        %v7334 = vpack.c.b16 %v5874, %v5870
        %v7335 = vpack.c.b16 %v5875, %v5871
        %v7336 = vpack.c.b16 %v5876, %v5872
        %v7337 = vpack.c.b16 %v5881, %v5877
        %v7338 = vpack.c.b16 %v5882, %v5878
        %v7339 = vpack.c.b16 %v5883, %v5879
        %v7340 = vpack.c.b16 %v5884, %v5880
        %v7341 = vpack.c.b16 %v5889, %v5885
        %v7342 = vpack.c.b16 %v5890, %v5886
        %v7343 = vpack.c.b16 %v5891, %v5887
        %v7344 = vpack.c.b16 %v5892, %v5888
        %v7345 = vpack.c.b16 %v5897, %v5893
        %v7346 = vpack.c.b16 %v5898, %v5894
        %v7347 = vpack.c.b16 %v5899, %v5895
        %v7348 = vpack.c.b16 %v5900, %v5896
        %v7349 = vpack.c.b16 %v5905, %v5901
        %v7350 = vpack.c.b16 %v5906, %v5902
        %v7351 = vpack.c.b16 %v5907, %v5903
        %v7352 = vpack.c.b16 %v5908, %v5904
        %v7353 = vpack.c.b16 %v5913, %v5909
        %v7354 = vpack.c.b16 %v5914, %v5910
        %v7355 = vpack.c.b16 %v5915, %v5911
        %v7356 = vpack.c.b16 %v5916, %v5912
        %v7357 = vpack.c.b16 %v5921, %v5917
        %v7358 = vpack.c.b16 %v5922, %v5918
        %v7359 = vpack.c.b16 %v5923, %v5919
        %v7360 = vpack.c.b16 %v5924, %v5920
        %v7361 = vpack.c.b16 %v5929, %v5925
        %v7362 = vpack.c.b16 %v5930, %v5926
        %v7363 = vpack.c.b16 %v5931, %v5927
        %v7364 = vpack.c.b16 %v5932, %v5928
        %v7365 = vpack.c.b16 %v5937, %v5933
        %v7366 = vpack.c.b16 %v5938, %v5934
        %v7367 = vpack.c.b16 %v5939, %v5935
        %v7368 = vpack.c.b16 %v5940, %v5936
        %v7369 = vpack.c.b16 %v5945, %v5941
        %v7370 = vpack.c.b16 %v5946, %v5942
        %v7371 = vpack.c.b16 %v5947, %v5943
        %v7372 = vpack.c.b16 %v5948, %v5944
        %v7373 = vpack.c.b16 %v5953, %v5949
        %v7374 = vpack.c.b16 %v5954, %v5950
        %v7375 = vpack.c.b16 %v5955, %v5951
        %v7376 = vpack.c.b16 %v5956, %v5952
        %v7377 = vpack.c.b16 %v5961, %v5957
        %v7378 = vpack.c.b16 %v5962, %v5958
        %v7379 = vpack.c.b16 %v5963, %v5959
        %v7380 = vpack.c.b16 %v5964, %v5960
        %v7381 = vpack.c.b16 %v5969, %v5965
        %v7382 = vpack.c.b16 %v5970, %v5966
        %v7383 = vpack.c.b16 %v5971, %v5967
        %v7384 = vpack.c.b16 %v5972, %v5968
        %v7385 = vpack.c.b16 %v5977, %v5973
        %v7386 = vpack.c.b16 %v5978, %v5974
        %v7387 = vpack.c.b16 %v5979, %v5975
        %v7388 = vpack.c.b16 %v5980, %v5976
        %v7389 = vpack.c.b16 %v5985, %v5981
        %v7390 = vpack.c.b16 %v5986, %v5982
        %v7391 = vpack.c.b16 %v5987, %v5983
        %v7392 = vpack.c.b16 %v5988, %v5984
        %v7393 = vpack.c.b16 %v5993, %v5989
        %v7394 = vpack.c.b16 %v5994, %v5990
        %v7395 = vpack.c.b16 %v5995, %v5991
        %v7396 = vpack.c.b16 %v5996, %v5992
        %v7397 = vpack.c.b16 %v6001, %v5997
        %v7398 = vpack.c.b16 %v6002, %v5998
        %v7399 = vpack.c.b16 %v6003, %v5999
        %v7400 = vpack.c.b16 %v6004, %v6000
        %v7401 = vpack.c.b16 %v6009, %v6005
        %v7402 = vpack.c.b16 %v6010, %v6006
        %v7403 = vpack.c.b16 %v6011, %v6007
        %v7404 = vpack.c.b16 %v6012, %v6008
        %v7405 = vpack.c.b16 %v6017, %v6013
        %v7406 = vpack.c.b16 %v6018, %v6014
        %v7407 = vpack.c.b16 %v6019, %v6015
        %v7408 = vpack.c.b16 %v6020, %v6016
        %v7409 = vpack.c.b16 %v6025, %v6021
        %v7410 = vpack.c.b16 %v6026, %v6022
        %v7411 = vpack.c.b16 %v6027, %v6023
        %v7412 = vpack.c.b16 %v6028, %v6024
        %v7413 = vpack.c.b16 %v6033, %v6029
        %v7414 = vpack.c.b16 %v6034, %v6030
        %v7415 = vpack.c.b16 %v6035, %v6031
        %v7416 = vpack.c.b16 %v6036, %v6032
        %v7417 = vpack.c.b16 %v6041, %v6037
        %v7418 = vpack.c.b16 %v6042, %v6038
        %v7419 = vpack.c.b16 %v6043, %v6039
        %v7420 = vpack.c.b16 %v6044, %v6040
        %v7421 = vpack.c.b16 %v6049, %v6045
        %v7422 = vpack.c.b16 %v6050, %v6046
        %v7423 = vpack.c.b16 %v6051, %v6047
        %v7424 = vpack.c.b16 %v6052, %v6048
        %v7425 = vpack.c.b16 %v6057, %v6053
        %v7426 = vpack.c.b16 %v6058, %v6054
        %v7427 = vpack.c.b16 %v6059, %v6055
        %v7428 = vpack.c.b16 %v6060, %v6056
        %v7429 = vpack.c.b16 %v6065, %v6061
        %v7430 = vpack.c.b16 %v6066, %v6062
        %v7431 = vpack.c.b16 %v6067, %v6063
        %v7432 = vpack.c.b16 %v6068, %v6064
        %v7433 = vpack.c.b16 %v6073, %v6069
        %v7434 = vpack.c.b16 %v6074, %v6070
        %v7435 = vpack.c.b16 %v6075, %v6071
        %v7436 = vpack.c.b16 %v6076, %v6072
        %v7437 = vpack.c.b16 %v6081, %v6077
        %v7438 = vpack.c.b16 %v6082, %v6078
        %v7439 = vpack.c.b16 %v6083, %v6079
        %v7440 = vpack.c.b16 %v6084, %v6080
        %v7441 = vpack.c.b16 %v6089, %v6085
        %v7442 = vpack.c.b16 %v6090, %v6086
        %v7443 = vpack.c.b16 %v6091, %v6087
        %v7444 = vpack.c.b16 %v6092, %v6088
        %v7445 = vpack.c.b16 %v6097, %v6093
        %v7446 = vpack.c.b16 %v6098, %v6094
        %v7447 = vpack.c.b16 %v6099, %v6095
        %v7448 = vpack.c.b16 %v6100, %v6096
        %v7449 = vpack.c.b16 %v6105, %v6101
        %v7450 = vpack.c.b16 %v6106, %v6102
        %v7451 = vpack.c.b16 %v6107, %v6103
        %v7452 = vpack.c.b16 %v6108, %v6104
        %v7453 = vpack.c.b16 %v6113, %v6109
        %v7454 = vpack.c.b16 %v6114, %v6110
        %v7455 = vpack.c.b16 %v6115, %v6111
        %v7456 = vpack.c.b16 %v6116, %v6112
        %v7457 = vpack.c.b16 %v6121, %v6117
        %v7458 = vpack.c.b16 %v6122, %v6118
        %v7459 = vpack.c.b16 %v6123, %v6119
        %v7460 = vpack.c.b16 %v6124, %v6120
        %v7461 = vpack.c.b16 %v6129, %v6125
        %v7462 = vpack.c.b16 %v6130, %v6126
        %v7463 = vpack.c.b16 %v6131, %v6127
        %v7464 = vpack.c.b16 %v6132, %v6128
        %v7465 = vpack.c.b16 %v6137, %v6133
        %v7466 = vpack.c.b16 %v6138, %v6134
        %v7467 = vpack.c.b16 %v6139, %v6135
        %v7468 = vpack.c.b16 %v6140, %v6136
        %v7469 = vpack.c.b16 %v6145, %v6141
        %v7470 = vpack.c.b16 %v6146, %v6142
        %v7471 = vpack.c.b16 %v6147, %v6143
        %v7472 = vpack.c.b16 %v6148, %v6144
        %v7473 = vpack.c.b16 %v6153, %v6149
        %v7474 = vpack.c.b16 %v6154, %v6150
        %v7475 = vpack.c.b16 %v6155, %v6151
        %v7476 = vpack.c.b16 %v6156, %v6152
        %v7477 = vpack.c.b16 %v6161, %v6157
        %v7478 = vpack.c.b16 %v6162, %v6158
        %v7479 = vpack.c.b16 %v6163, %v6159
        %v7480 = vpack.c.b16 %v6164, %v6160
        %v7481 = vpack.c.b16 %v6169, %v6165
        %v7482 = vpack.c.b16 %v6170, %v6166
        %v7483 = vpack.c.b16 %v6171, %v6167
        %v7484 = vpack.c.b16 %v6172, %v6168
        %v7485 = vpack.c.b16 %v6177, %v6173
        %v7486 = vpack.c.b16 %v6178, %v6174
        %v7487 = vpack.c.b16 %v6179, %v6175
        %v7488 = vpack.c.b16 %v6180, %v6176
        %v7489 = vpack.c.b16 %v6185, %v6181
        %v7490 = vpack.c.b16 %v6186, %v6182
        %v7491 = vpack.c.b16 %v6187, %v6183
        %v7492 = vpack.c.b16 %v6188, %v6184
        %v7493 = vpack.c.b16 %v6193, %v6189
        %v7494 = vpack.c.b16 %v6194, %v6190
        %v7495 = vpack.c.b16 %v6195, %v6191
        %v7496 = vpack.c.b16 %v6196, %v6192
        %v7497 = vpack.c.b16 %v6201, %v6197
        %v7498 = vpack.c.b16 %v6202, %v6198
        %v7499 = vpack.c.b16 %v6203, %v6199
        %v7500 = vpack.c.b16 %v6204, %v6200
        %v7501 = vpack.c.b16 %v6209, %v6205
        %v7502 = vpack.c.b16 %v6210, %v6206
        %v7503 = vpack.c.b16 %v6211, %v6207
        %v7504 = vpack.c.b16 %v6212, %v6208
        %v7505 = vpack.c.b16 %v6217, %v6213
        %v7506 = vpack.c.b16 %v6218, %v6214
        %v7507 = vpack.c.b16 %v6219, %v6215
        %v7508 = vpack.c.b16 %v6220, %v6216
        %v7509 = vpack.c.b16 %v6225, %v6221
        %v7510 = vpack.c.b16 %v6226, %v6222
        %v7511 = vpack.c.b16 %v6227, %v6223
        %v7512 = vpack.c.b16 %v6228, %v6224
        %v7513 = vpack.c.b16 %v6233, %v6229
        %v7514 = vpack.c.b16 %v6234, %v6230
        %v7515 = vpack.c.b16 %v6235, %v6231
        %v7516 = vpack.c.b16 %v6236, %v6232
        %v7517 = vpack.c.b16 %v6241, %v6237
        %v7518 = vpack.c.b16 %v6242, %v6238
        %v7519 = vpack.c.b16 %v6243, %v6239
        %v7520 = vpack.c.b16 %v6244, %v6240
        %v7521 = vpack.c.b16 %v6249, %v6245
        %v7522 = vpack.c.b16 %v6250, %v6246
        %v7523 = vpack.c.b16 %v6251, %v6247
        %v7524 = vpack.c.b16 %v6252, %v6248
        %v7525 = vpack.c.b16 %v6257, %v6253
        %v7526 = vpack.c.b16 %v6258, %v6254
        %v7527 = vpack.c.b16 %v6259, %v6255
        %v7528 = vpack.c.b16 %v6260, %v6256
        %v7529 = vpack.c.b16 %v6265, %v6261
        %v7530 = vpack.c.b16 %v6266, %v6262
        %v7531 = vpack.c.b16 %v6267, %v6263
        %v7532 = vpack.c.b16 %v6268, %v6264
        %v7533 = vpack.c.b16 %v6273, %v6269
        %v7534 = vpack.c.b16 %v6274, %v6270
        %v7535 = vpack.c.b16 %v6275, %v6271
        %v7536 = vpack.c.b16 %v6276, %v6272
        %v7537 = vpack.c.b16 %v6281, %v6277
        %v7538 = vpack.c.b16 %v6282, %v6278
        %v7539 = vpack.c.b16 %v6283, %v6279
        %v7540 = vpack.c.b16 %v6284, %v6280
        %v7541 = vpack.c.b16 %v6289, %v6285
        %v7542 = vpack.c.b16 %v6290, %v6286
        %v7543 = vpack.c.b16 %v6291, %v6287
        %v7544 = vpack.c.b16 %v6292, %v6288
        %v7545 = vpack.c.b16 %v6297, %v6293
        %v7546 = vpack.c.b16 %v6298, %v6294
        %v7547 = vpack.c.b16 %v6299, %v6295
        %v7548 = vpack.c.b16 %v6300, %v6296
        %v7549 = vpack.c.b16 %v6305, %v6301
        %v7550 = vpack.c.b16 %v6306, %v6302
        %v7551 = vpack.c.b16 %v6307, %v6303
        %v7552 = vpack.c.b16 %v6308, %v6304
        %v7553 = vpack.c.b16 %v6313, %v6309
        %v7554 = vpack.c.b16 %v6314, %v6310
        %v7555 = vpack.c.b16 %v6315, %v6311
        %v7556 = vpack.c.b16 %v6316, %v6312
        %v7557 = vpack.c.b16 %v6321, %v6317
        %v7558 = vpack.c.b16 %v6322, %v6318
        %v7559 = vpack.c.b16 %v6323, %v6319
        %v7560 = vpack.c.b16 %v6324, %v6320
        %v7561 = vpack.c.b16 %v6329, %v6325
        %v7562 = vpack.c.b16 %v6330, %v6326
        %v7563 = vpack.c.b16 %v6331, %v6327
        %v7564 = vpack.c.b16 %v6332, %v6328
        %v7565 = vpack.c.b16 %v6337, %v6333
        %v7566 = vpack.c.b16 %v6338, %v6334
        %v7567 = vpack.c.b16 %v6339, %v6335
        %v7568 = vpack.c.b16 %v6340, %v6336
        %v7569 = vpack.c.b16 %v6345, %v6341
        %v7570 = vpack.c.b16 %v6346, %v6342
        %v7571 = vpack.c.b16 %v6347, %v6343
        %v7572 = vpack.c.b16 %v6348, %v6344
        %v7573 = vpack.c.b16 %v6353, %v6349
        %v7574 = vpack.c.b16 %v6354, %v6350
        %v7575 = vpack.c.b16 %v6355, %v6351
        %v7576 = vpack.c.b16 %v6356, %v6352
        %v7577 = vpack.c.b16 %v6361, %v6357
        %v7578 = vpack.c.b16 %v6362, %v6358
        %v7579 = vpack.c.b16 %v6363, %v6359
        %v7580 = vpack.c.b16 %v6364, %v6360
        %v7581 = vpack.c.b16 %v6369, %v6365
        %v7582 = vpack.c.b16 %v6370, %v6366
        %v7583 = vpack.c.b16 %v6371, %v6367
        %v7584 = vpack.c.b16 %v6372, %v6368
        %v7585 = vpack.c.b16 %v6377, %v6373
        %v7586 = vpack.c.b16 %v6378, %v6374
        %v7587 = vpack.c.b16 %v6379, %v6375
        %v7588 = vpack.c.b16 %v6380, %v6376
        %v7589 = vpack.c.b16 %v6385, %v6381
        %v7590 = vpack.c.b16 %v6386, %v6382
        %v7591 = vpack.c.b16 %v6387, %v6383
        %v7592 = vpack.c.b16 %v6388, %v6384
        %v7593 = vpack.c.b16 %v6393, %v6389
        %v7594 = vpack.c.b16 %v6394, %v6390
        %v7595 = vpack.c.b16 %v6395, %v6391
        %v7596 = vpack.c.b16 %v6396, %v6392
        %v7597 = vpack.c.b16 %v6401, %v6397
        %v7598 = vpack.c.b16 %v6402, %v6398
        %v7599 = vpack.c.b16 %v6403, %v6399
        %v7600 = vpack.c.b16 %v6404, %v6400
        %v7601 = vpack.c.b16 %v6409, %v6405
        %v7602 = vpack.c.b16 %v6410, %v6406
        %v7603 = vpack.c.b16 %v6411, %v6407
        %v7604 = vpack.c.b16 %v6412, %v6408
        %v7605 = vpack.c.b16 %v6417, %v6413
        %v7606 = vpack.c.b16 %v6418, %v6414
        %v7607 = vpack.c.b16 %v6419, %v6415
        %v7608 = vpack.c.b16 %v6420, %v6416
        %v7609 = vpack.c.b16 %v6425, %v6421
        %v7610 = vpack.c.b16 %v6426, %v6422
        %v7611 = vpack.c.b16 %v6427, %v6423
        %v7612 = vpack.c.b16 %v6428, %v6424
        %v7613 = vpack.c.b16 %v6433, %v6429
        %v7614 = vpack.c.b16 %v6434, %v6430
        %v7615 = vpack.c.b16 %v6435, %v6431
        %v7616 = vpack.c.b16 %v6436, %v6432
        %v7617 = vpack.c.b16 %v6441, %v6437
        %v7618 = vpack.c.b16 %v6442, %v6438
        %v7619 = vpack.c.b16 %v6443, %v6439
        %v7620 = vpack.c.b16 %v6444, %v6440
        %v7621 = vpack.c.b16 %v6449, %v6445
        %v7622 = vpack.c.b16 %v6450, %v6446
        %v7623 = vpack.c.b16 %v6451, %v6447
        %v7624 = vpack.c.b16 %v6452, %v6448
        %v7625 = vpack.c.b16 %v6457, %v6453
        %v7626 = vpack.c.b16 %v6458, %v6454
        %v7627 = vpack.c.b16 %v6459, %v6455
        %v7628 = vpack.c.b16 %v6460, %v6456
        %v7629 = vpack.c.b16 %v6465, %v6461
        %v7630 = vpack.c.b16 %v6466, %v6462
        %v7631 = vpack.c.b16 %v6467, %v6463
        %v7632 = vpack.c.b16 %v6468, %v6464
        %v7633 = vpack.c.b16 %v6473, %v6469
        %v7634 = vpack.c.b16 %v6474, %v6470
        %v7635 = vpack.c.b16 %v6475, %v6471
        %v7636 = vpack.c.b16 %v6476, %v6472
        %v7637 = vpack.c.b16 %v6481, %v6477
        %v7638 = vpack.c.b16 %v6482, %v6478
        %v7639 = vpack.c.b16 %v6483, %v6479
        %v7640 = vpack.c.b16 %v6484, %v6480
        %v7641 = vpack.c.b16 %v6489, %v6485
        %v7642 = vpack.c.b16 %v6490, %v6486
        %v7643 = vpack.c.b16 %v6491, %v6487
        %v7644 = vpack.c.b16 %v6492, %v6488
        %v7645 = vpack.c.b16 %v6497, %v6493
        %v7646 = vpack.c.b16 %v6498, %v6494
        %v7647 = vpack.c.b16 %v6499, %v6495
        %v7648 = vpack.c.b16 %v6500, %v6496
        %v7649 = vpack.c.b16 %v6505, %v6501
        %v7650 = vpack.c.b16 %v6506, %v6502
        %v7651 = vpack.c.b16 %v6507, %v6503
        %v7652 = vpack.c.b16 %v6508, %v6504
        %v7653 = vpack.c.b16 %v6513, %v6509
        %v7654 = vpack.c.b16 %v6514, %v6510
        %v7655 = vpack.c.b16 %v6515, %v6511
        %v7656 = vpack.c.b16 %v6516, %v6512
        %v7657 = vpack.c.b16 %v6521, %v6517
        %v7658 = vpack.c.b16 %v6522, %v6518
        %v7659 = vpack.c.b16 %v6523, %v6519
        %v7660 = vpack.c.b16 %v6524, %v6520
        %v7661 = vpack.c.b16 %v6529, %v6525
        %v7662 = vpack.c.b16 %v6530, %v6526
        %v7663 = vpack.c.b16 %v6531, %v6527
        %v7664 = vpack.c.b16 %v6532, %v6528
        %v7665 = vpack.c.b16 %v6537, %v6533
        %v7666 = vpack.c.b16 %v6538, %v6534
        %v7667 = vpack.c.b16 %v6539, %v6535
        %v7668 = vpack.c.b16 %v6540, %v6536
        %v7669 = vpack.c.b16 %v6545, %v6541
        %v7670 = vpack.c.b16 %v6546, %v6542
        %v7671 = vpack.c.b16 %v6547, %v6543
        %v7672 = vpack.c.b16 %v6548, %v6544
        %v7673 = vpack.c.b16 %v6553, %v6549
        %v7674 = vpack.c.b16 %v6554, %v6550
        %v7675 = vpack.c.b16 %v6555, %v6551
        %v7676 = vpack.c.b16 %v6556, %v6552
        %v7677 = vpack.c.b16 %v6561, %v6557
        %v7678 = vpack.c.b16 %v6562, %v6558
        %v7679 = vpack.c.b16 %v6563, %v6559
        %v7680 = vpack.c.b16 %v6564, %v6560
        %v7681 = vpack.c.b16 %v6569, %v6565
        %v7682 = vpack.c.b16 %v6570, %v6566
        %v7683 = vpack.c.b16 %v6571, %v6567
        %v7684 = vpack.c.b16 %v6572, %v6568
        %v7685 = vpack.c.b16 %v6577, %v6573
        %v7686 = vpack.c.b16 %v6578, %v6574
        %v7687 = vpack.c.b16 %v6579, %v6575
        %v7688 = vpack.c.b16 %v6580, %v6576
        %v7689 = vpack.c.b16 %v6585, %v6581
        %v7690 = vpack.c.b16 %v6586, %v6582
        %v7691 = vpack.c.b16 %v6587, %v6583
        %v7692 = vpack.c.b16 %v6588, %v6584
        %v7693 = vpack.c.b16 %v6593, %v6589
        %v7694 = vpack.c.b16 %v6594, %v6590
        %v7695 = vpack.c.b16 %v6595, %v6591
        %v7696 = vpack.c.b16 %v6596, %v6592
        %v7697 = vpack.c.b16 %v6601, %v6597
        %v7698 = vpack.c.b16 %v6602, %v6598
        %v7699 = vpack.c.b16 %v6603, %v6599
        %v7700 = vpack.c.b16 %v6604, %v6600
        %v7701 = vpack.c.b16 %v6609, %v6605
        %v7702 = vpack.c.b16 %v6610, %v6606
        %v7703 = vpack.c.b16 %v6611, %v6607
        %v7704 = vpack.c.b16 %v6612, %v6608
        %v7705 = vpack.c.b16 %v6617, %v6613
        %v7706 = vpack.c.b16 %v6618, %v6614
        %v7707 = vpack.c.b16 %v6619, %v6615
        %v7708 = vpack.c.b16 %v6620, %v6616
        %v7709 = vpack.c.b16 %v6625, %v6621
        %v7710 = vpack.c.b16 %v6626, %v6622
        %v7711 = vpack.c.b16 %v6627, %v6623
        %v7712 = vpack.c.b16 %v6628, %v6624
        %v7713 = vpack.c.b16 %v6633, %v6629
        %v7714 = vpack.c.b16 %v6634, %v6630
        %v7715 = vpack.c.b16 %v6635, %v6631
        %v7716 = vpack.c.b16 %v6636, %v6632
        %v7717 = vpack.c.b16 %v6641, %v6637
        %v7718 = vpack.c.b16 %v6642, %v6638
        %v7719 = vpack.c.b16 %v6643, %v6639
        %v7720 = vpack.c.b16 %v6644, %v6640
        %v7721 = vpack.c.b16 %v6649, %v6645
        %v7722 = vpack.c.b16 %v6650, %v6646
        %v7723 = vpack.c.b16 %v6651, %v6647
        %v7724 = vpack.c.b16 %v6652, %v6648
        %v7725 = vpack.c.b16 %v6657, %v6653
        %v7726 = vpack.c.b16 %v6658, %v6654
        %v7727 = vpack.c.b16 %v6659, %v6655
        %v7728 = vpack.c.b16 %v6660, %v6656
        %v7729 = vpack.c.b16 %v6665, %v6661
        %v7730 = vpack.c.b16 %v6666, %v6662
        %v7731 = vpack.c.b16 %v6667, %v6663
        %v7732 = vpack.c.b16 %v6668, %v6664
        %v7733 = vpack.c.b16 %v6673, %v6669
        %v7734 = vpack.c.b16 %v6674, %v6670
        %v7735 = vpack.c.b16 %v6675, %v6671
        %v7736 = vpack.c.b16 %v6676, %v6672
        %v7737 = vpack.c.b16 %v6681, %v6677
        %v7738 = vpack.c.b16 %v6682, %v6678
        %v7739 = vpack.c.b16 %v6683, %v6679
        %v7740 = vpack.c.b16 %v6684, %v6680
        %v7741 = vpack.c.b16 %v6689, %v6685
        %v7742 = vpack.c.b16 %v6690, %v6686
        %v7743 = vpack.c.b16 %v6691, %v6687
        %v7744 = vpack.c.b16 %v6692, %v6688
        %v7745 = vpack.c.b16 %v6697, %v6693
        %v7746 = vpack.c.b16 %v6698, %v6694
        %v7747 = vpack.c.b16 %v6699, %v6695
        %v7748 = vpack.c.b16 %v6700, %v6696
        %v7749 = vpack.c.b16 %v6705, %v6701
        %v7750 = vpack.c.b16 %v6706, %v6702
        %v7751 = vpack.c.b16 %v6707, %v6703
        %v7752 = vpack.c.b16 %v6708, %v6704
        %v7753 = vpack.c.b16 %v6713, %v6709
        %v7754 = vpack.c.b16 %v6714, %v6710
        %v7755 = vpack.c.b16 %v6715, %v6711
        %v7756 = vpack.c.b16 %v6716, %v6712
        %v7757 = vpack.c.b16 %v6721, %v6717
        %v7758 = vpack.c.b16 %v6722, %v6718
        %v7759 = vpack.c.b16 %v6723, %v6719
        %v7760 = vpack.c.b16 %v6724, %v6720
        %v7761 = vpack.c.b16 %v6729, %v6725
        %v7762 = vpack.c.b16 %v6730, %v6726
        %v7763 = vpack.c.b16 %v6731, %v6727
        %v7764 = vpack.c.b16 %v6732, %v6728
        %v7765 = vpack.c.b16 %v6737, %v6733
        %v7766 = vpack.c.b16 %v6738, %v6734
        %v7767 = vpack.c.b16 %v6739, %v6735
        %v7768 = vpack.c.b16 %v6740, %v6736
        %v7769 = vpack.c.b16 %v6745, %v6741
        %v7770 = vpack.c.b16 %v6746, %v6742
        %v7771 = vpack.c.b16 %v6747, %v6743
        %v7772 = vpack.c.b16 %v6748, %v6744
        %v7773 = vpack.c.b16 %v6753, %v6749
        %v7774 = vpack.c.b16 %v6754, %v6750
        %v7775 = vpack.c.b16 %v6755, %v6751
        %v7776 = vpack.c.b16 %v6756, %v6752
        %v7777 = vpack.c.b16 %v6761, %v6757
        %v7778 = vpack.c.b16 %v6762, %v6758
        %v7779 = vpack.c.b16 %v6763, %v6759
        %v7780 = vpack.c.b16 %v6764, %v6760
        %v7781 = vpack.c.b16 %v6769, %v6765
        %v7782 = vpack.c.b16 %v6770, %v6766
        %v7783 = vpack.c.b16 %v6771, %v6767
        %v7784 = vpack.c.b16 %v6772, %v6768
        %v7785 = vpack.c.b16 %v6777, %v6773
        %v7786 = vpack.c.b16 %v6778, %v6774
        %v7787 = vpack.c.b16 %v6779, %v6775
        %v7788 = vpack.c.b16 %v6780, %v6776
        %v7789 = vpack.c.b16 %v6785, %v6781
        %v7790 = vpack.c.b16 %v6786, %v6782
        %v7791 = vpack.c.b16 %v6787, %v6783
        %v7792 = vpack.c.b16 %v6788, %v6784
        %v7793 = vpack.c.b16 %v6793, %v6789
        %v7794 = vpack.c.b16 %v6794, %v6790
        %v7795 = vpack.c.b16 %v6795, %v6791
        %v7796 = vpack.c.b16 %v6796, %v6792
        %v7797 = vpack.c.b16 %v6801, %v6797
        %v7798 = vpack.c.b16 %v6802, %v6798
        %v7799 = vpack.c.b16 %v6803, %v6799
        %v7800 = vpack.c.b16 %v6804, %v6800
        %v7801 = vpack.c.b16 %v6809, %v6805
        %v7802 = vpack.c.b16 %v6810, %v6806
        %v7803 = vpack.c.b16 %v6811, %v6807
        %v7804 = vpack.c.b16 %v6812, %v6808
        %v7805 = vpack.c.b16 %v6817, %v6813
        %v7806 = vpack.c.b16 %v6818, %v6814
        %v7807 = vpack.c.b16 %v6819, %v6815
        %v7808 = vpack.c.b16 %v6820, %v6816
        %v7809 = vpack.c.b16 %v6825, %v6821
        %v7810 = vpack.c.b16 %v6826, %v6822
        %v7811 = vpack.c.b16 %v6827, %v6823
        %v7812 = vpack.c.b16 %v6828, %v6824
        %v7813 = vpack.c.b16 %v6833, %v6829
        %v7814 = vpack.c.b16 %v6834, %v6830
        %v7815 = vpack.c.b16 %v6835, %v6831
        %v7816 = vpack.c.b16 %v6836, %v6832
        %v7817 = vpack.c.b16 %v6841, %v6837
        %v7818 = vpack.c.b16 %v6842, %v6838
        %v7819 = vpack.c.b16 %v6843, %v6839
        %v7820 = vpack.c.b16 %v6844, %v6840
        %v7821 = vpack.c.b16 %v6849, %v6845
        %v7822 = vpack.c.b16 %v6850, %v6846
        %v7823 = vpack.c.b16 %v6851, %v6847
        %v7824 = vpack.c.b16 %v6852, %v6848
        %v7825 = vpack.c.b16 %v6857, %v6853
        %v7826 = vpack.c.b16 %v6858, %v6854
        %v7827 = vpack.c.b16 %v6859, %v6855
        %v7828 = vpack.c.b16 %v6860, %v6856
        %v7829 = vpack.c.b16 %v6865, %v6861
        %v7830 = vpack.c.b16 %v6866, %v6862
        %v7831 = vpack.c.b16 %v6867, %v6863
        %v7832 = vpack.c.b16 %v6868, %v6864
        %v7833 = vpack.c.b16 %v6873, %v6869
        %v7834 = vpack.c.b16 %v6874, %v6870
        %v7835 = vpack.c.b16 %v6875, %v6871
        %v7836 = vpack.c.b16 %v6876, %v6872
        %v7837 = vpack.c.b16 %v6881, %v6877
        %v7838 = vpack.c.b16 %v6882, %v6878
        %v7839 = vpack.c.b16 %v6883, %v6879
        %v7840 = vpack.c.b16 %v6884, %v6880
        %v7841 = vpack.c.b16 %v6889, %v6885
        %v7842 = vpack.c.b16 %v6890, %v6886
        %v7843 = vpack.c.b16 %v6891, %v6887
        %v7844 = vpack.c.b16 %v6892, %v6888
        %v7845 = vpack.c.b16 %v6897, %v6893
        %v7846 = vpack.c.b16 %v6898, %v6894
        %v7847 = vpack.c.b16 %v6899, %v6895
        %v7848 = vpack.c.b16 %v6900, %v6896
        %v7849 = vpack.c.b16 %v6905, %v6901
        %v7850 = vpack.c.b16 %v6906, %v6902
        %v7851 = vpack.c.b16 %v6907, %v6903
        %v7852 = vpack.c.b16 %v6908, %v6904
        %v7853 = vpack.c.b16 %v6913, %v6909
        %v7854 = vpack.c.b16 %v6914, %v6910
        %v7855 = vpack.c.b16 %v6915, %v6911
        %v7856 = vpack.c.b16 %v6916, %v6912
        %v7857 = vpack.c.b16 %v6921, %v6917
        %v7858 = vpack.c.b16 %v6922, %v6918
        %v7859 = vpack.c.b16 %v6923, %v6919
        %v7860 = vpack.c.b16 %v6924, %v6920
        %v7861 = vpack.c.b16 %v6929, %v6925
        %v7862 = vpack.c.b16 %v6930, %v6926
        %v7863 = vpack.c.b16 %v6931, %v6927
        %v7864 = vpack.c.b16 %v6932, %v6928
        %v7865 = vpack.c.b16 %v6937, %v6933
        %v7866 = vpack.c.b16 %v6938, %v6934
        %v7867 = vpack.c.b16 %v6939, %v6935
        %v7868 = vpack.c.b16 %v6940, %v6936
        %v7869 = vpack.c.b16 %v6945, %v6941
        %v7870 = vpack.c.b16 %v6946, %v6942
        %v7871 = vpack.c.b16 %v6947, %v6943
        %v7872 = vpack.c.b16 %v6948, %v6944
        %v7873 = vpack.c.b16 %v6953, %v6949
        %v7874 = vpack.c.b16 %v6954, %v6950
        %v7875 = vpack.c.b16 %v6955, %v6951
        %v7876 = vpack.c.b16 %v6956, %v6952
        %v7877 = vpack.c.b16 %v6961, %v6957
        %v7878 = vpack.c.b16 %v6962, %v6958
        %v7879 = vpack.c.b16 %v6963, %v6959
        %v7880 = vpack.c.b16 %v6964, %v6960
        %v7881 = vpack.c.b16 %v6969, %v6965
        %v7882 = vpack.c.b16 %v6970, %v6966
        %v7883 = vpack.c.b16 %v6971, %v6967
        %v7884 = vpack.c.b16 %v6972, %v6968
        %v7885 = vpack.c.b16 %v6977, %v6973
        %v7886 = vpack.c.b16 %v6978, %v6974
        %v7887 = vpack.c.b16 %v6979, %v6975
        %v7888 = vpack.c.b16 %v6980, %v6976
        %v7889 = vpack.c.b16 %v6985, %v6981
        %v7890 = vpack.c.b16 %v6986, %v6982
        %v7891 = vpack.c.b16 %v6987, %v6983
        %v7892 = vpack.c.b16 %v6988, %v6984
        %v7893 = vpack.c.b16 %v6993, %v6989
        %v7894 = vpack.c.b16 %v6994, %v6990
        %v7895 = vpack.c.b16 %v6995, %v6991
        %v7896 = vpack.c.b16 %v6996, %v6992
        %v7897 = vpack.c.b16 %v7001, %v6997
        %v7898 = vpack.c.b16 %v7002, %v6998
        %v7899 = vpack.c.b16 %v7003, %v6999
        %v7900 = vpack.c.b16 %v7004, %v7000
        %v7901 = vpack.c.b16 %v7009, %v7005
        %v7902 = vpack.c.b16 %v7010, %v7006
        %v7903 = vpack.c.b16 %v7011, %v7007
        %v7904 = vpack.c.b16 %v7012, %v7008
        %v7905 = vpack.c.b16 %v7017, %v7013
        %v7906 = vpack.c.b16 %v7018, %v7014
        %v7907 = vpack.c.b16 %v7019, %v7015
        %v7908 = vpack.c.b16 %v7020, %v7016
        %v7909 = vpack.c.b16 %v7025, %v7021
        %v7910 = vpack.c.b16 %v7026, %v7022
        %v7911 = vpack.c.b16 %v7027, %v7023
        %v7912 = vpack.c.b16 %v7028, %v7024
        %v7913 = vpack.c.b16 %v7033, %v7029
        %v7914 = vpack.c.b16 %v7034, %v7030
        %v7915 = vpack.c.b16 %v7035, %v7031
        %v7916 = vpack.c.b16 %v7036, %v7032
        %v7917 = vpack.c.b16 %v7041, %v7037
        %v7918 = vpack.c.b16 %v7042, %v7038
        %v7919 = vpack.c.b16 %v7043, %v7039
        %v7920 = vpack.c.b16 %v7044, %v7040
        %v7921 = vpack.c.b16 %v7049, %v7045
        %v7922 = vpack.c.b16 %v7050, %v7046
        %v7923 = vpack.c.b16 %v7051, %v7047
        %v7924 = vpack.c.b16 %v7052, %v7048
        %v7925 = vpack.c.b16 %v7057, %v7053
        %v7926 = vpack.c.b16 %v7058, %v7054
        %v7927 = vpack.c.b16 %v7059, %v7055
        %v7928 = vpack.c.b16 %v7060, %v7056
        %v7929 = vpack.c.b16 %v7065, %v7061
        %v7930 = vpack.c.b16 %v7066, %v7062
        %v7931 = vpack.c.b16 %v7067, %v7063
        %v7932 = vpack.c.b16 %v7068, %v7064
        %8797 = vmatprep.subr.bf16.mxu0 %v7098
        %8798 = vmatpush1.bf16.msra.mxu0 %v7097
        %8799 = vmatprep.subr.bf16.mxu0 %v7094
        %8800 = vmatpush1.bf16.msra.mxu0 %v7093
        %8801 = vmatprep.subr.bf16.mxu0 %v7090
        %8802 = vmatpush1.bf16.msra.mxu0 %v7089
        %8803 = vmatprep.subr.bf16.mxu0 %v7086
        %8804 = vmatpush1.bf16.msra.mxu0 %v7085
        %8805 = vmatprep.subr.bf16.mxu0 %v7082
        %8806 = vmatpush1.bf16.msra.mxu0 %v7081
        %8807 = vmatprep.subr.bf16.mxu0 %v7078
        %8808 = vmatpush1.bf16.msra.mxu0 %v7077
        %8809 = vmatprep.subr.bf16.mxu0 %v7074
        %8810 = vmatpush1.bf16.msra.mxu0 %v7073
        %8811 = vmatprep.subr.bf16.mxu0 %v7070
        %8812 = vmatpush1.bf16.msra.mxu0 %v7069
        %8813 = vmatprep.subr.bf16.mxu0 %v7130
        %8814 = vmatpush2.bf16.msra.mxu0 %v7129
        %8815 = vmatprep.subr.bf16.mxu0 %v7126
        %8816 = vmatpush2.bf16.msra.mxu0 %v7125
        %8817 = vmatprep.subr.bf16.mxu0 %v7122
        %8818 = vmatpush2.bf16.msra.mxu0 %v7121
        %8819 = vmatprep.subr.bf16.mxu0 %v7118
        %8820 = vmatpush2.bf16.msra.mxu0 %v7117
        %8821 = vmatprep.subr.bf16.mxu0 %v7114
        %8822 = vmatpush2.bf16.msra.mxu0 %v7113
        %8823 = vmatprep.subr.bf16.mxu0 %v7110
        %8824 = vmatpush2.bf16.msra.mxu0 %v7109
        %8825 = vmatprep.subr.bf16.mxu0 %v7106
        %8826 = vmatpush2.bf16.msra.mxu0 %v7105
        %8827 = vmatprep.subr.bf16.mxu0 %v7102
        %8828 = vmatpush2.bf16.msra.mxu0 %v7101
        %8829 = vmatprep.mubr.bf16.mxu0 %v4262
        %8830 = vmatmul.mubr.bf16.gmra.mxu0 %v4261
        %v8831 = vpop.f32.mrf.mxu0
        %v8832 = vadd.f32 %v3916, %v8831
        %v8833 = vpop.f32.mrf.mxu0
        %v8834 = vadd.f32 %v3920, %v8833
        %v8835 = vpop.f32.mrf.mxu0
        %v8836 = vadd.f32 %v3916, %v8835
        %v8837 = vpop.f32.mrf.mxu0
        %v8838 = vadd.f32 %v3920, %v8837
        %8839 = vmatprep.mubr.bf16.mxu0 %v4289
        %8840 = vmatmul.mubr.bf16.gmra.mxu0 %v4288
        %v8841 = vpop.f32.mrf.mxu0
        %v8842 = vadd.f32 %v3916, %v8841
        %v8843 = vpop.f32.mrf.mxu0
        %v8844 = vadd.f32 %v3920, %v8843
        %v8845 = vpop.f32.mrf.mxu0
        %v8846 = vadd.f32 %v3916, %v8845
        %v8847 = vpop.f32.mrf.mxu0
        %v8848 = vadd.f32 %v3920, %v8847
        %8849 = vmatprep.mubr.bf16.mxu0 %v4316
        %8850 = vmatmul.mubr.bf16.gmra.mxu0 %v4315
        %v8851 = vpop.f32.mrf.mxu0
        %v8852 = vadd.f32 %v3916, %v8851
        %v8853 = vpop.f32.mrf.mxu0
        %v8854 = vadd.f32 %v3920, %v8853
        %v8855 = vpop.f32.mrf.mxu0
        %v8856 = vadd.f32 %v3916, %v8855
        %v8857 = vpop.f32.mrf.mxu0
        %v8858 = vadd.f32 %v3920, %v8857
        %8859 = vmatprep.mubr.bf16.mxu0 %v4343
        %8860 = vmatmul.mubr.bf16.gmra.mxu0 %v4342
        %v8861 = vpop.f32.mrf.mxu0
        %v8862 = vadd.f32 %v3916, %v8861
        %v8863 = vpop.f32.mrf.mxu0
        %v8864 = vadd.f32 %v3920, %v8863
        %v8865 = vpop.f32.mrf.mxu0
        %v8866 = vadd.f32 %v3916, %v8865
        %v8867 = vpop.f32.mrf.mxu0
        %v8868 = vadd.f32 %v3920, %v8867
        %8869 = vdwg.mxu0
        %8870 = vmatprep.subr.bf16.mxu0 %v7162
        %8871 = vmatpush1.bf16.msra.mxu0 %v7161
        %8872 = vmatprep.subr.bf16.mxu0 %v7158
        %8873 = vmatpush1.bf16.msra.mxu0 %v7157
        %8874 = vmatprep.subr.bf16.mxu0 %v7154
        %8875 = vmatpush1.bf16.msra.mxu0 %v7153
        %8876 = vmatprep.subr.bf16.mxu0 %v7150
        %8877 = vmatpush1.bf16.msra.mxu0 %v7149
        %8878 = vmatprep.subr.bf16.mxu0 %v7146
        %8879 = vmatpush1.bf16.msra.mxu0 %v7145
        %8880 = vmatprep.subr.bf16.mxu0 %v7142
        %8881 = vmatpush1.bf16.msra.mxu0 %v7141
        %8882 = vmatprep.subr.bf16.mxu0 %v7138
        %8883 = vmatpush1.bf16.msra.mxu0 %v7137
        %8884 = vmatprep.subr.bf16.mxu0 %v7134
        %8885 = vmatpush1.bf16.msra.mxu0 %v7133
        %8886 = vmatprep.subr.bf16.mxu0 %v7194
        %8887 = vmatpush2.bf16.msra.mxu0 %v7193
        %8888 = vmatprep.subr.bf16.mxu0 %v7190
        %8889 = vmatpush2.bf16.msra.mxu0 %v7189
        %8890 = vmatprep.subr.bf16.mxu0 %v7186
        %8891 = vmatpush2.bf16.msra.mxu0 %v7185
        %8892 = vmatprep.subr.bf16.mxu0 %v7182
        %8893 = vmatpush2.bf16.msra.mxu0 %v7181
        %8894 = vmatprep.subr.bf16.mxu0 %v7178
        %8895 = vmatpush2.bf16.msra.mxu0 %v7177
        %8896 = vmatprep.subr.bf16.mxu0 %v7174
        %8897 = vmatpush2.bf16.msra.mxu0 %v7173
        %8898 = vmatprep.subr.bf16.mxu0 %v7170
        %8899 = vmatpush2.bf16.msra.mxu0 %v7169
        %8900 = vmatprep.subr.bf16.mxu0 %v7166
        %8901 = vmatpush2.bf16.msra.mxu0 %v7165
        %8902 = vmatprep.mubr.bf16.mxu0 %v4264
        %8903 = vmatmul.mubr.bf16.gmra.mxu0 %v4263
        %v8904 = vpop.f32.mrf.mxu0
        %v8905 = vadd.f32 %v8832, %v8904
        %v8906 = vpop.f32.mrf.mxu0
        %v8907 = vadd.f32 %v8834, %v8906
        %v8908 = vpop.f32.mrf.mxu0
        %v8909 = vadd.f32 %v8836, %v8908
        %v8910 = vpop.f32.mrf.mxu0
        %v8911 = vadd.f32 %v8838, %v8910
        %8912 = vmatprep.mubr.bf16.mxu0 %v4291
        %8913 = vmatmul.mubr.bf16.gmra.mxu0 %v4290
        %v8914 = vpop.f32.mrf.mxu0
        %v8915 = vadd.f32 %v8842, %v8914
        %v8916 = vpop.f32.mrf.mxu0
        %v8917 = vadd.f32 %v8844, %v8916
        %v8918 = vpop.f32.mrf.mxu0
        %v8919 = vadd.f32 %v8846, %v8918
        %v8920 = vpop.f32.mrf.mxu0
        %v8921 = vadd.f32 %v8848, %v8920
        %8922 = vmatprep.mubr.bf16.mxu0 %v4318
        %8923 = vmatmul.mubr.bf16.gmra.mxu0 %v4317
        %v8924 = vpop.f32.mrf.mxu0
        %v8925 = vadd.f32 %v8852, %v8924
        %v8926 = vpop.f32.mrf.mxu0
        %v8927 = vadd.f32 %v8854, %v8926
        %v8928 = vpop.f32.mrf.mxu0
        %v8929 = vadd.f32 %v8856, %v8928
        %v8930 = vpop.f32.mrf.mxu0
        %v8931 = vadd.f32 %v8858, %v8930
        %8932 = vmatprep.mubr.bf16.mxu0 %v4345
        %8933 = vmatmul.mubr.bf16.gmra.mxu0 %v4344
        %v8934 = vpop.f32.mrf.mxu0
        %v8935 = vadd.f32 %v8862, %v8934
        %v8936 = vpop.f32.mrf.mxu0
        %v8937 = vadd.f32 %v8864, %v8936
        %v8938 = vpop.f32.mrf.mxu0
        %v8939 = vadd.f32 %v8866, %v8938
        %v8940 = vpop.f32.mrf.mxu0
        %v8941 = vadd.f32 %v8868, %v8940
        %8942 = vdwg.mxu0
        %8943 = vmatprep.subr.bf16.mxu0 %v7226
        %8944 = vmatpush1.bf16.msra.mxu0 %v7225
        %8945 = vmatprep.subr.bf16.mxu0 %v7222
        %8946 = vmatpush1.bf16.msra.mxu0 %v7221
        %8947 = vmatprep.subr.bf16.mxu0 %v7218
        %8948 = vmatpush1.bf16.msra.mxu0 %v7217
        %8949 = vmatprep.subr.bf16.mxu0 %v7214
        %8950 = vmatpush1.bf16.msra.mxu0 %v7213
        %8951 = vmatprep.subr.bf16.mxu0 %v7210
        %8952 = vmatpush1.bf16.msra.mxu0 %v7209
        %8953 = vmatprep.subr.bf16.mxu0 %v7206
        %8954 = vmatpush1.bf16.msra.mxu0 %v7205
        %8955 = vmatprep.subr.bf16.mxu0 %v7202
        %8956 = vmatpush1.bf16.msra.mxu0 %v7201
        %8957 = vmatprep.subr.bf16.mxu0 %v7198
        %8958 = vmatpush1.bf16.msra.mxu0 %v7197
        %8959 = vmatprep.subr.bf16.mxu0 %v7258
        %8960 = vmatpush2.bf16.msra.mxu0 %v7257
        %8961 = vmatprep.subr.bf16.mxu0 %v7254
        %8962 = vmatpush2.bf16.msra.mxu0 %v7253
        %8963 = vmatprep.subr.bf16.mxu0 %v7250
        %8964 = vmatpush2.bf16.msra.mxu0 %v7249
        %8965 = vmatprep.subr.bf16.mxu0 %v7246
        %8966 = vmatpush2.bf16.msra.mxu0 %v7245
        %8967 = vmatprep.subr.bf16.mxu0 %v7242
        %8968 = vmatpush2.bf16.msra.mxu0 %v7241
        %8969 = vmatprep.subr.bf16.mxu0 %v7238
        %8970 = vmatpush2.bf16.msra.mxu0 %v7237
        %8971 = vmatprep.subr.bf16.mxu0 %v7234
        %8972 = vmatpush2.bf16.msra.mxu0 %v7233
        %8973 = vmatprep.subr.bf16.mxu0 %v7230
        %8974 = vmatpush2.bf16.msra.mxu0 %v7229
        %8975 = vmatprep.mubr.bf16.mxu0 %v4266
        %8976 = vmatmul.mubr.bf16.gmra.mxu0 %v4265
        %v8977 = vpop.f32.mrf.mxu0
        %v8978 = vadd.f32 %v8905, %v8977
        %v8979 = vpop.f32.mrf.mxu0
        %v8980 = vadd.f32 %v8907, %v8979
        %v8981 = vpop.f32.mrf.mxu0
        %v8982 = vadd.f32 %v8909, %v8981
        %v8983 = vpop.f32.mrf.mxu0
        %v8984 = vadd.f32 %v8911, %v8983
        %8985 = vmatprep.mubr.bf16.mxu0 %v4293
        %8986 = vmatmul.mubr.bf16.gmra.mxu0 %v4292
        %v8987 = vpop.f32.mrf.mxu0
        %v8988 = vadd.f32 %v8915, %v8987
        %v8989 = vpop.f32.mrf.mxu0
        %v8990 = vadd.f32 %v8917, %v8989
        %v8991 = vpop.f32.mrf.mxu0
        %v8992 = vadd.f32 %v8919, %v8991
        %v8993 = vpop.f32.mrf.mxu0
        %v8994 = vadd.f32 %v8921, %v8993
        %8995 = vmatprep.mubr.bf16.mxu0 %v4320
        %8996 = vmatmul.mubr.bf16.gmra.mxu0 %v4319
        %v8997 = vpop.f32.mrf.mxu0
        %v8998 = vadd.f32 %v8925, %v8997
        %v8999 = vpop.f32.mrf.mxu0
        %v9000 = vadd.f32 %v8927, %v8999
        %v9001 = vpop.f32.mrf.mxu0
        %v9002 = vadd.f32 %v8929, %v9001
        %v9003 = vpop.f32.mrf.mxu0
        %v9004 = vadd.f32 %v8931, %v9003
        %9005 = vmatprep.mubr.bf16.mxu0 %v4347
        %9006 = vmatmul.mubr.bf16.gmra.mxu0 %v4346
        %v9007 = vpop.f32.mrf.mxu0
        %v9008 = vadd.f32 %v8935, %v9007
        %v9009 = vpop.f32.mrf.mxu0
        %v9010 = vadd.f32 %v8937, %v9009
        %v9011 = vpop.f32.mrf.mxu0
        %v9012 = vadd.f32 %v8939, %v9011
        %v9013 = vpop.f32.mrf.mxu0
        %v9014 = vadd.f32 %v8941, %v9013
        %9015 = vdwg.mxu0
        %9016 = vmatprep.subr.bf16.mxu0 %v7290
        %9017 = vmatpush1.bf16.msra.mxu0 %v7289
        %9018 = vmatprep.subr.bf16.mxu0 %v7286
        %9019 = vmatpush1.bf16.msra.mxu0 %v7285
        %9020 = vmatprep.subr.bf16.mxu0 %v7282
        %9021 = vmatpush1.bf16.msra.mxu0 %v7281
        %9022 = vmatprep.subr.bf16.mxu0 %v7278
        %9023 = vmatpush1.bf16.msra.mxu0 %v7277
        %9024 = vmatprep.subr.bf16.mxu0 %v7274
        %9025 = vmatpush1.bf16.msra.mxu0 %v7273
        %9026 = vmatprep.subr.bf16.mxu0 %v7270
        %9027 = vmatpush1.bf16.msra.mxu0 %v7269
        %9028 = vmatprep.subr.bf16.mxu0 %v7266
        %9029 = vmatpush1.bf16.msra.mxu0 %v7265
        %9030 = vmatprep.subr.bf16.mxu0 %v7262
        %9031 = vmatpush1.bf16.msra.mxu0 %v7261
        %9032 = vmatprep.subr.bf16.mxu0 %v7322
        %9033 = vmatpush2.bf16.msra.mxu0 %v7321
        %9034 = vmatprep.subr.bf16.mxu0 %v7318
        %9035 = vmatpush2.bf16.msra.mxu0 %v7317
        %9036 = vmatprep.subr.bf16.mxu0 %v7314
        %9037 = vmatpush2.bf16.msra.mxu0 %v7313
        %9038 = vmatprep.subr.bf16.mxu0 %v7310
        %9039 = vmatpush2.bf16.msra.mxu0 %v7309
        %9040 = vmatprep.subr.bf16.mxu0 %v7306
        %9041 = vmatpush2.bf16.msra.mxu0 %v7305
        %9042 = vmatprep.subr.bf16.mxu0 %v7302
        %9043 = vmatpush2.bf16.msra.mxu0 %v7301
        %9044 = vmatprep.subr.bf16.mxu0 %v7298
        %9045 = vmatpush2.bf16.msra.mxu0 %v7297
        %9046 = vmatprep.subr.bf16.mxu0 %v7294
        %9047 = vmatpush2.bf16.msra.mxu0 %v7293
        %9048 = vmatprep.mubr.bf16.mxu0 %v4268
        %9049 = vmatmul.mubr.bf16.gmra.mxu0 %v4267
        %v9050 = vpop.f32.mrf.mxu0
        %v9051 = vadd.f32 %v8978, %v9050
        %v9052 = vpop.f32.mrf.mxu0
        %v9053 = vadd.f32 %v8980, %v9052
        %v9054 = vpop.f32.mrf.mxu0
        %v9055 = vadd.f32 %v8982, %v9054
        %v9056 = vpop.f32.mrf.mxu0
        %v9057 = vadd.f32 %v8984, %v9056
        %9058 = vmatprep.mubr.bf16.mxu0 %v4295
        %9059 = vmatmul.mubr.bf16.gmra.mxu0 %v4294
        %v9060 = vpop.f32.mrf.mxu0
        %v9061 = vadd.f32 %v8988, %v9060
        %v9062 = vpop.f32.mrf.mxu0
        %v9063 = vadd.f32 %v8990, %v9062
        %v9064 = vpop.f32.mrf.mxu0
        %v9065 = vadd.f32 %v8992, %v9064
        %v9066 = vpop.f32.mrf.mxu0
        %v9067 = vadd.f32 %v8994, %v9066
        %9068 = vmatprep.mubr.bf16.mxu0 %v4322
        %9069 = vmatmul.mubr.bf16.gmra.mxu0 %v4321
        %v9070 = vpop.f32.mrf.mxu0
        %v9071 = vadd.f32 %v8998, %v9070
        %v9072 = vpop.f32.mrf.mxu0
        %v9073 = vadd.f32 %v9000, %v9072
        %v9074 = vpop.f32.mrf.mxu0
        %v9075 = vadd.f32 %v9002, %v9074
        %v9076 = vpop.f32.mrf.mxu0
        %v9077 = vadd.f32 %v9004, %v9076
        %9078 = vmatprep.mubr.bf16.mxu0 %v4349
        %9079 = vmatmul.mubr.bf16.gmra.mxu0 %v4348
        %v9080 = vpop.f32.mrf.mxu0
        %v9081 = vadd.f32 %v9008, %v9080
        %v9082 = vpop.f32.mrf.mxu0
        %v9083 = vadd.f32 %v9010, %v9082
        %v9084 = vpop.f32.mrf.mxu0
        %v9085 = vadd.f32 %v9012, %v9084
        %v9086 = vpop.f32.mrf.mxu0
        %v9087 = vadd.f32 %v9014, %v9086
        %9088 = vdwg.mxu0
        %9089 = vmatprep.subr.bf16.mxu0 %v7354
        %9090 = vmatpush1.bf16.msra.mxu0 %v7353
        %9091 = vmatprep.subr.bf16.mxu0 %v7350
        %9092 = vmatpush1.bf16.msra.mxu0 %v7349
        %9093 = vmatprep.subr.bf16.mxu0 %v7346
        %9094 = vmatpush1.bf16.msra.mxu0 %v7345
        %9095 = vmatprep.subr.bf16.mxu0 %v7342
        %9096 = vmatpush1.bf16.msra.mxu0 %v7341
        %9097 = vmatprep.subr.bf16.mxu0 %v7338
        %9098 = vmatpush1.bf16.msra.mxu0 %v7337
        %9099 = vmatprep.subr.bf16.mxu0 %v7334
        %9100 = vmatpush1.bf16.msra.mxu0 %v7333
        %9101 = vmatprep.subr.bf16.mxu0 %v7330
        %9102 = vmatpush1.bf16.msra.mxu0 %v7329
        %9103 = vmatprep.subr.bf16.mxu0 %v7326
        %9104 = vmatpush1.bf16.msra.mxu0 %v7325
        %9105 = vmatprep.subr.bf16.mxu0 %v7386
        %9106 = vmatpush2.bf16.msra.mxu0 %v7385
        %9107 = vmatprep.subr.bf16.mxu0 %v7382
        %9108 = vmatpush2.bf16.msra.mxu0 %v7381
        %9109 = vmatprep.subr.bf16.mxu0 %v7378
        %9110 = vmatpush2.bf16.msra.mxu0 %v7377
        %9111 = vmatprep.subr.bf16.mxu0 %v7374
        %9112 = vmatpush2.bf16.msra.mxu0 %v7373
        %9113 = vmatprep.subr.bf16.mxu0 %v7370
        %9114 = vmatpush2.bf16.msra.mxu0 %v7369
        %9115 = vmatprep.subr.bf16.mxu0 %v7366
        %9116 = vmatpush2.bf16.msra.mxu0 %v7365
        %9117 = vmatprep.subr.bf16.mxu0 %v7362
        %9118 = vmatpush2.bf16.msra.mxu0 %v7361
        %9119 = vmatprep.subr.bf16.mxu0 %v7358
        %9120 = vmatpush2.bf16.msra.mxu0 %v7357
        %9121 = vmatprep.mubr.bf16.mxu0 %v4270
        %9122 = vmatmul.mubr.bf16.gmra.mxu0 %v4269
        %v9123 = vpop.f32.mrf.mxu0
        %v9124 = vadd.f32 %v9051, %v9123
        %v9125 = vpop.f32.mrf.mxu0
        %v9126 = vadd.f32 %v9053, %v9125
        %v9127 = vpop.f32.mrf.mxu0
        %v9128 = vadd.f32 %v9055, %v9127
        %v9129 = vpop.f32.mrf.mxu0
        %v9130 = vadd.f32 %v9057, %v9129
        %9131 = vmatprep.mubr.bf16.mxu0 %v4297
        %9132 = vmatmul.mubr.bf16.gmra.mxu0 %v4296
        %v9133 = vpop.f32.mrf.mxu0
        %v9134 = vadd.f32 %v9061, %v9133
        %v9135 = vpop.f32.mrf.mxu0
        %v9136 = vadd.f32 %v9063, %v9135
        %v9137 = vpop.f32.mrf.mxu0
        %v9138 = vadd.f32 %v9065, %v9137
        %v9139 = vpop.f32.mrf.mxu0
        %v9140 = vadd.f32 %v9067, %v9139
        %9141 = vmatprep.mubr.bf16.mxu0 %v4324
        %9142 = vmatmul.mubr.bf16.gmra.mxu0 %v4323
        %v9143 = vpop.f32.mrf.mxu0
        %v9144 = vadd.f32 %v9071, %v9143
        %v9145 = vpop.f32.mrf.mxu0
        %v9146 = vadd.f32 %v9073, %v9145
        %v9147 = vpop.f32.mrf.mxu0
        %v9148 = vadd.f32 %v9075, %v9147
        %v9149 = vpop.f32.mrf.mxu0
        %v9150 = vadd.f32 %v9077, %v9149
        %9151 = vmatprep.mubr.bf16.mxu0 %v4351
        %9152 = vmatmul.mubr.bf16.gmra.mxu0 %v4350
        %v9153 = vpop.f32.mrf.mxu0
        %v9154 = vadd.f32 %v9081, %v9153
        %v9155 = vpop.f32.mrf.mxu0
        %v9156 = vadd.f32 %v9083, %v9155
        %v9157 = vpop.f32.mrf.mxu0
        %v9158 = vadd.f32 %v9085, %v9157
        %v9159 = vpop.f32.mrf.mxu0
        %v9160 = vadd.f32 %v9087, %v9159
        %9161 = vdwg.mxu0
        %9162 = vmatprep.subr.bf16.mxu0 %v7418
        %9163 = vmatpush1.bf16.msra.mxu0 %v7417
        %9164 = vmatprep.subr.bf16.mxu0 %v7414
        %9165 = vmatpush1.bf16.msra.mxu0 %v7413
        %9166 = vmatprep.subr.bf16.mxu0 %v7410
        %9167 = vmatpush1.bf16.msra.mxu0 %v7409
        %9168 = vmatprep.subr.bf16.mxu0 %v7406
        %9169 = vmatpush1.bf16.msra.mxu0 %v7405
        %9170 = vmatprep.subr.bf16.mxu0 %v7402
        %9171 = vmatpush1.bf16.msra.mxu0 %v7401
        %9172 = vmatprep.subr.bf16.mxu0 %v7398
        %9173 = vmatpush1.bf16.msra.mxu0 %v7397
        %9174 = vmatprep.subr.bf16.mxu0 %v7394
        %9175 = vmatpush1.bf16.msra.mxu0 %v7393
        %9176 = vmatprep.subr.bf16.mxu0 %v7390
        %9177 = vmatpush1.bf16.msra.mxu0 %v7389
        %9178 = vmatprep.subr.bf16.mxu0 %v7450
        %9179 = vmatpush2.bf16.msra.mxu0 %v7449
        %9180 = vmatprep.subr.bf16.mxu0 %v7446
        %9181 = vmatpush2.bf16.msra.mxu0 %v7445
        %9182 = vmatprep.subr.bf16.mxu0 %v7442
        %9183 = vmatpush2.bf16.msra.mxu0 %v7441
        %9184 = vmatprep.subr.bf16.mxu0 %v7438
        %9185 = vmatpush2.bf16.msra.mxu0 %v7437
        %9186 = vmatprep.subr.bf16.mxu0 %v7434
        %9187 = vmatpush2.bf16.msra.mxu0 %v7433
        %9188 = vmatprep.subr.bf16.mxu0 %v7430
        %9189 = vmatpush2.bf16.msra.mxu0 %v7429
        %9190 = vmatprep.subr.bf16.mxu0 %v7426
        %9191 = vmatpush2.bf16.msra.mxu0 %v7425
        %9192 = vmatprep.subr.bf16.mxu0 %v7422
        %9193 = vmatpush2.bf16.msra.mxu0 %v7421
        %9194 = vmatprep.mubr.bf16.mxu0 %v4272
        %9195 = vmatmul.mubr.bf16.gmra.mxu0 %v4271
        %v9196 = vpop.f32.mrf.mxu0
        %v9197 = vadd.f32 %v9124, %v9196
        %v9198 = vpop.f32.mrf.mxu0
        %v9199 = vadd.f32 %v9126, %v9198
        %v9200 = vpop.f32.mrf.mxu0
        %v9201 = vadd.f32 %v9128, %v9200
        %v9202 = vpop.f32.mrf.mxu0
        %v9203 = vadd.f32 %v9130, %v9202
        %9204 = vmatprep.mubr.bf16.mxu0 %v4299
        %9205 = vmatmul.mubr.bf16.gmra.mxu0 %v4298
        %v9206 = vpop.f32.mrf.mxu0
        %v9207 = vadd.f32 %v9134, %v9206
        %v9208 = vpop.f32.mrf.mxu0
        %v9209 = vadd.f32 %v9136, %v9208
        %v9210 = vpop.f32.mrf.mxu0
        %v9211 = vadd.f32 %v9138, %v9210
        %v9212 = vpop.f32.mrf.mxu0
        %v9213 = vadd.f32 %v9140, %v9212
        %9214 = vmatprep.mubr.bf16.mxu0 %v4326
        %9215 = vmatmul.mubr.bf16.gmra.mxu0 %v4325
        %v9216 = vpop.f32.mrf.mxu0
        %v9217 = vadd.f32 %v9144, %v9216
        %v9218 = vpop.f32.mrf.mxu0
        %v9219 = vadd.f32 %v9146, %v9218
        %v9220 = vpop.f32.mrf.mxu0
        %v9221 = vadd.f32 %v9148, %v9220
        %v9222 = vpop.f32.mrf.mxu0
        %v9223 = vadd.f32 %v9150, %v9222
        %9224 = vmatprep.mubr.bf16.mxu0 %v4353
        %9225 = vmatmul.mubr.bf16.gmra.mxu0 %v4352
        %v9226 = vpop.f32.mrf.mxu0
        %v9227 = vadd.f32 %v9154, %v9226
        %v9228 = vpop.f32.mrf.mxu0
        %v9229 = vadd.f32 %v9156, %v9228
        %v9230 = vpop.f32.mrf.mxu0
        %v9231 = vadd.f32 %v9158, %v9230
        %v9232 = vpop.f32.mrf.mxu0
        %v9233 = vadd.f32 %v9160, %v9232
        %9234 = vdwg.mxu0
        %9235 = vmatprep.subr.bf16.mxu0 %v7482
        %9236 = vmatpush1.bf16.msra.mxu0 %v7481
        %9237 = vmatprep.subr.bf16.mxu0 %v7478
        %9238 = vmatpush1.bf16.msra.mxu0 %v7477
        %9239 = vmatprep.subr.bf16.mxu0 %v7474
        %9240 = vmatpush1.bf16.msra.mxu0 %v7473
        %9241 = vmatprep.subr.bf16.mxu0 %v7470
        %9242 = vmatpush1.bf16.msra.mxu0 %v7469
        %9243 = vmatprep.subr.bf16.mxu0 %v7466
        %9244 = vmatpush1.bf16.msra.mxu0 %v7465
        %9245 = vmatprep.subr.bf16.mxu0 %v7462
        %9246 = vmatpush1.bf16.msra.mxu0 %v7461
        %9247 = vmatprep.subr.bf16.mxu0 %v7458
        %9248 = vmatpush1.bf16.msra.mxu0 %v7457
        %9249 = vmatprep.subr.bf16.mxu0 %v7454
        %9250 = vmatpush1.bf16.msra.mxu0 %v7453
        %9251 = vmatprep.subr.bf16.mxu0 %v7514
        %9252 = vmatpush2.bf16.msra.mxu0 %v7513
        %9253 = vmatprep.subr.bf16.mxu0 %v7510
        %9254 = vmatpush2.bf16.msra.mxu0 %v7509
        %9255 = vmatprep.subr.bf16.mxu0 %v7506
        %9256 = vmatpush2.bf16.msra.mxu0 %v7505
        %9257 = vmatprep.subr.bf16.mxu0 %v7502
        %9258 = vmatpush2.bf16.msra.mxu0 %v7501
        %9259 = vmatprep.subr.bf16.mxu0 %v7498
        %9260 = vmatpush2.bf16.msra.mxu0 %v7497
        %9261 = vmatprep.subr.bf16.mxu0 %v7494
        %9262 = vmatpush2.bf16.msra.mxu0 %v7493
        %9263 = vmatprep.subr.bf16.mxu0 %v7490
        %9264 = vmatpush2.bf16.msra.mxu0 %v7489
        %9265 = vmatprep.subr.bf16.mxu0 %v7486
        %9266 = vmatpush2.bf16.msra.mxu0 %v7485
        %9267 = vmatprep.mubr.bf16.mxu0 %v4274
        %9268 = vmatmul.mubr.bf16.gmra.mxu0 %v4273
        %v9269 = vpop.f32.mrf.mxu0
        %v9270 = vadd.f32 %v9197, %v9269
        %v9271 = vpop.f32.mrf.mxu0
        %v9272 = vadd.f32 %v9199, %v9271
        %v9273 = vpop.f32.mrf.mxu0
        %v9274 = vadd.f32 %v9201, %v9273
        %v9275 = vpop.f32.mrf.mxu0
        %v9276 = vadd.f32 %v9203, %v9275
        %9277 = vmatprep.mubr.bf16.mxu0 %v4301
        %9278 = vmatmul.mubr.bf16.gmra.mxu0 %v4300
        %v9279 = vpop.f32.mrf.mxu0
        %v9280 = vadd.f32 %v9207, %v9279
        %v9281 = vpop.f32.mrf.mxu0
        %v9282 = vadd.f32 %v9209, %v9281
        %v9283 = vpop.f32.mrf.mxu0
        %v9284 = vadd.f32 %v9211, %v9283
        %v9285 = vpop.f32.mrf.mxu0
        %v9286 = vadd.f32 %v9213, %v9285
        %9287 = vmatprep.mubr.bf16.mxu0 %v4328
        %9288 = vmatmul.mubr.bf16.gmra.mxu0 %v4327
        %v9289 = vpop.f32.mrf.mxu0
        %v9290 = vadd.f32 %v9217, %v9289
        %v9291 = vpop.f32.mrf.mxu0
        %v9292 = vadd.f32 %v9219, %v9291
        %v9293 = vpop.f32.mrf.mxu0
        %v9294 = vadd.f32 %v9221, %v9293
        %v9295 = vpop.f32.mrf.mxu0
        %v9296 = vadd.f32 %v9223, %v9295
        %9297 = vmatprep.mubr.bf16.mxu0 %v4355
        %9298 = vmatmul.mubr.bf16.gmra.mxu0 %v4354
        %v9299 = vpop.f32.mrf.mxu0
        %v9300 = vadd.f32 %v9227, %v9299
        %v9301 = vpop.f32.mrf.mxu0
        %v9302 = vadd.f32 %v9229, %v9301
        %v9303 = vpop.f32.mrf.mxu0
        %v9304 = vadd.f32 %v9231, %v9303
        %v9305 = vpop.f32.mrf.mxu0
        %v9306 = vadd.f32 %v9233, %v9305
        %9307 = vdwg.mxu0
        %9308 = vmatprep.subr.bf16.mxu0 %v7546
        %9309 = vmatpush1.bf16.msra.mxu0 %v7545
        %9310 = vmatprep.subr.bf16.mxu0 %v7542
        %9311 = vmatpush1.bf16.msra.mxu0 %v7541
        %9312 = vmatprep.subr.bf16.mxu0 %v7538
        %9313 = vmatpush1.bf16.msra.mxu0 %v7537
        %9314 = vmatprep.subr.bf16.mxu0 %v7534
        %9315 = vmatpush1.bf16.msra.mxu0 %v7533
        %9316 = vmatprep.subr.bf16.mxu0 %v7530
        %9317 = vmatpush1.bf16.msra.mxu0 %v7529
        %9318 = vmatprep.subr.bf16.mxu0 %v7526
        %9319 = vmatpush1.bf16.msra.mxu0 %v7525
        %9320 = vmatprep.subr.bf16.mxu0 %v7522
        %9321 = vmatpush1.bf16.msra.mxu0 %v7521
        %9322 = vmatprep.subr.bf16.mxu0 %v7518
        %9323 = vmatpush1.bf16.msra.mxu0 %v7517
        %9324 = vmatprep.subr.bf16.mxu0 %v7578
        %9325 = vmatpush2.bf16.msra.mxu0 %v7577
        %9326 = vmatprep.subr.bf16.mxu0 %v7574
        %9327 = vmatpush2.bf16.msra.mxu0 %v7573
        %9328 = vmatprep.subr.bf16.mxu0 %v7570
        %9329 = vmatpush2.bf16.msra.mxu0 %v7569
        %9330 = vmatprep.subr.bf16.mxu0 %v7566
        %9331 = vmatpush2.bf16.msra.mxu0 %v7565
        %9332 = vmatprep.subr.bf16.mxu0 %v7562
        %9333 = vmatpush2.bf16.msra.mxu0 %v7561
        %9334 = vmatprep.subr.bf16.mxu0 %v7558
        %9335 = vmatpush2.bf16.msra.mxu0 %v7557
        %9336 = vmatprep.subr.bf16.mxu0 %v7554
        %9337 = vmatpush2.bf16.msra.mxu0 %v7553
        %9338 = vmatprep.subr.bf16.mxu0 %v7550
        %9339 = vmatpush2.bf16.msra.mxu0 %v7549
        %9340 = vmatprep.mubr.bf16.mxu0 %v4276
        %9341 = vmatmul.mubr.bf16.gmra.mxu0 %v4275
        %v9342 = vpop.f32.mrf.mxu0
        %v9343 = vadd.f32 %v9270, %v9342
        %v9344 = vpop.f32.mrf.mxu0
        %v9345 = vadd.f32 %v9272, %v9344
        %v9346 = vpop.f32.mrf.mxu0
        %v9347 = vadd.f32 %v9274, %v9346
        %v9348 = vpop.f32.mrf.mxu0
        %v9349 = vadd.f32 %v9276, %v9348
        %9350 = vmatprep.mubr.bf16.mxu0 %v4303
        %9351 = vmatmul.mubr.bf16.gmra.mxu0 %v4302
        %v9352 = vpop.f32.mrf.mxu0
        %v9353 = vadd.f32 %v9280, %v9352
        %v9354 = vpop.f32.mrf.mxu0
        %v9355 = vadd.f32 %v9282, %v9354
        %v9356 = vpop.f32.mrf.mxu0
        %v9357 = vadd.f32 %v9284, %v9356
        %v9358 = vpop.f32.mrf.mxu0
        %v9359 = vadd.f32 %v9286, %v9358
        %9360 = vmatprep.mubr.bf16.mxu0 %v4330
        %9361 = vmatmul.mubr.bf16.gmra.mxu0 %v4329
        %v9362 = vpop.f32.mrf.mxu0
        %v9363 = vadd.f32 %v9290, %v9362
        %v9364 = vpop.f32.mrf.mxu0
        %v9365 = vadd.f32 %v9292, %v9364
        %v9366 = vpop.f32.mrf.mxu0
        %v9367 = vadd.f32 %v9294, %v9366
        %v9368 = vpop.f32.mrf.mxu0
        %v9369 = vadd.f32 %v9296, %v9368
        %9370 = vmatprep.mubr.bf16.mxu0 %v4357
        %9371 = vmatmul.mubr.bf16.gmra.mxu0 %v4356
        %v9372 = vpop.f32.mrf.mxu0
        %v9373 = vadd.f32 %v9300, %v9372
        %v9374 = vpop.f32.mrf.mxu0
        %v9375 = vadd.f32 %v9302, %v9374
        %v9376 = vpop.f32.mrf.mxu0
        %v9377 = vadd.f32 %v9304, %v9376
        %v9378 = vpop.f32.mrf.mxu0
        %v9379 = vadd.f32 %v9306, %v9378
        %9380 = vdwg.mxu0
        %9381 = vmatprep.subr.bf16.mxu0 %v7610
        %9382 = vmatpush1.bf16.msra.mxu0 %v7609
        %9383 = vmatprep.subr.bf16.mxu0 %v7606
        %9384 = vmatpush1.bf16.msra.mxu0 %v7605
        %9385 = vmatprep.subr.bf16.mxu0 %v7602
        %9386 = vmatpush1.bf16.msra.mxu0 %v7601
        %9387 = vmatprep.subr.bf16.mxu0 %v7598
        %9388 = vmatpush1.bf16.msra.mxu0 %v7597
        %9389 = vmatprep.subr.bf16.mxu0 %v7594
        %9390 = vmatpush1.bf16.msra.mxu0 %v7593
        %9391 = vmatprep.subr.bf16.mxu0 %v7590
        %9392 = vmatpush1.bf16.msra.mxu0 %v7589
        %9393 = vmatprep.subr.bf16.mxu0 %v7586
        %9394 = vmatpush1.bf16.msra.mxu0 %v7585
        %9395 = vmatprep.subr.bf16.mxu0 %v7582
        %9396 = vmatpush1.bf16.msra.mxu0 %v7581
        %9397 = vmatprep.subr.bf16.mxu0 %v7642
        %9398 = vmatpush2.bf16.msra.mxu0 %v7641
        %9399 = vmatprep.subr.bf16.mxu0 %v7638
        %9400 = vmatpush2.bf16.msra.mxu0 %v7637
        %9401 = vmatprep.subr.bf16.mxu0 %v7634
        %9402 = vmatpush2.bf16.msra.mxu0 %v7633
        %9403 = vmatprep.subr.bf16.mxu0 %v7630
        %9404 = vmatpush2.bf16.msra.mxu0 %v7629
        %9405 = vmatprep.subr.bf16.mxu0 %v7626
        %9406 = vmatpush2.bf16.msra.mxu0 %v7625
        %9407 = vmatprep.subr.bf16.mxu0 %v7622
        %9408 = vmatpush2.bf16.msra.mxu0 %v7621
        %9409 = vmatprep.subr.bf16.mxu0 %v7618
        %9410 = vmatpush2.bf16.msra.mxu0 %v7617
        %9411 = vmatprep.subr.bf16.mxu0 %v7614
        %9412 = vmatpush2.bf16.msra.mxu0 %v7613
        %9413 = vmatprep.mubr.bf16.mxu0 %v4278
        %9414 = vmatmul.mubr.bf16.gmra.mxu0 %v4277
        %v9415 = vpop.f32.mrf.mxu0
        %v9416 = vadd.f32 %v9343, %v9415
        %v9417 = vpop.f32.mrf.mxu0
        %v9418 = vadd.f32 %v9345, %v9417
        %v9419 = vpop.f32.mrf.mxu0
        %v9420 = vadd.f32 %v9347, %v9419
        %v9421 = vpop.f32.mrf.mxu0
        %v9422 = vadd.f32 %v9349, %v9421
        %9423 = vmatprep.mubr.bf16.mxu0 %v4305
        %9424 = vmatmul.mubr.bf16.gmra.mxu0 %v4304
        %v9425 = vpop.f32.mrf.mxu0
        %v9426 = vadd.f32 %v9353, %v9425
        %v9427 = vpop.f32.mrf.mxu0
        %v9428 = vadd.f32 %v9355, %v9427
        %v9429 = vpop.f32.mrf.mxu0
        %v9430 = vadd.f32 %v9357, %v9429
        %v9431 = vpop.f32.mrf.mxu0
        %v9432 = vadd.f32 %v9359, %v9431
        %9433 = vmatprep.mubr.bf16.mxu0 %v4332
        %9434 = vmatmul.mubr.bf16.gmra.mxu0 %v4331
        %v9435 = vpop.f32.mrf.mxu0
        %v9436 = vadd.f32 %v9363, %v9435
        %v9437 = vpop.f32.mrf.mxu0
        %v9438 = vadd.f32 %v9365, %v9437
        %v9439 = vpop.f32.mrf.mxu0
        %v9440 = vadd.f32 %v9367, %v9439
        %v9441 = vpop.f32.mrf.mxu0
        %v9442 = vadd.f32 %v9369, %v9441
        %9443 = vmatprep.mubr.bf16.mxu0 %v4359
        %9444 = vmatmul.mubr.bf16.gmra.mxu0 %v4358
        %v9445 = vpop.f32.mrf.mxu0
        %v9446 = vadd.f32 %v9373, %v9445
        %v9447 = vpop.f32.mrf.mxu0
        %v9448 = vadd.f32 %v9375, %v9447
        %v9449 = vpop.f32.mrf.mxu0
        %v9450 = vadd.f32 %v9377, %v9449
        %v9451 = vpop.f32.mrf.mxu0
        %v9452 = vadd.f32 %v9379, %v9451
        %9453 = vdwg.mxu0
        %9454 = vmatprep.subr.bf16.mxu0 %v7674
        %9455 = vmatpush1.bf16.msra.mxu0 %v7673
        %9456 = vmatprep.subr.bf16.mxu0 %v7670
        %9457 = vmatpush1.bf16.msra.mxu0 %v7669
        %9458 = vmatprep.subr.bf16.mxu0 %v7666
        %9459 = vmatpush1.bf16.msra.mxu0 %v7665
        %9460 = vmatprep.subr.bf16.mxu0 %v7662
        %9461 = vmatpush1.bf16.msra.mxu0 %v7661
        %9462 = vmatprep.subr.bf16.mxu0 %v7658
        %9463 = vmatpush1.bf16.msra.mxu0 %v7657
        %9464 = vmatprep.subr.bf16.mxu0 %v7654
        %9465 = vmatpush1.bf16.msra.mxu0 %v7653
        %9466 = vmatprep.subr.bf16.mxu0 %v7650
        %9467 = vmatpush1.bf16.msra.mxu0 %v7649
        %9468 = vmatprep.subr.bf16.mxu0 %v7646
        %9469 = vmatpush1.bf16.msra.mxu0 %v7645
        %9470 = vmatprep.subr.bf16.mxu0 %v7706
        %9471 = vmatpush2.bf16.msra.mxu0 %v7705
        %9472 = vmatprep.subr.bf16.mxu0 %v7702
        %9473 = vmatpush2.bf16.msra.mxu0 %v7701
        %9474 = vmatprep.subr.bf16.mxu0 %v7698
        %9475 = vmatpush2.bf16.msra.mxu0 %v7697
        %9476 = vmatprep.subr.bf16.mxu0 %v7694
        %9477 = vmatpush2.bf16.msra.mxu0 %v7693
        %9478 = vmatprep.subr.bf16.mxu0 %v7690
        %9479 = vmatpush2.bf16.msra.mxu0 %v7689
        %9480 = vmatprep.subr.bf16.mxu0 %v7686
        %9481 = vmatpush2.bf16.msra.mxu0 %v7685
        %9482 = vmatprep.subr.bf16.mxu0 %v7682
        %9483 = vmatpush2.bf16.msra.mxu0 %v7681
        %9484 = vmatprep.subr.bf16.mxu0 %v7678
        %9485 = vmatpush2.bf16.msra.mxu0 %v7677
        %9486 = vmatprep.mubr.bf16.mxu0 %v4280
        %9487 = vmatmul.mubr.bf16.gmra.mxu0 %v4279
        %v9488 = vpop.f32.mrf.mxu0
        %v9489 = vadd.f32 %v9416, %v9488
        %v9490 = vpop.f32.mrf.mxu0
        %v9491 = vadd.f32 %v9418, %v9490
        %v9492 = vpop.f32.mrf.mxu0
        %v9493 = vadd.f32 %v9420, %v9492
        %v9494 = vpop.f32.mrf.mxu0
        %v9495 = vadd.f32 %v9422, %v9494
        %9496 = vmatprep.mubr.bf16.mxu0 %v4307
        %9497 = vmatmul.mubr.bf16.gmra.mxu0 %v4306
        %v9498 = vpop.f32.mrf.mxu0
        %v9499 = vadd.f32 %v9426, %v9498
        %v9500 = vpop.f32.mrf.mxu0
        %v9501 = vadd.f32 %v9428, %v9500
        %v9502 = vpop.f32.mrf.mxu0
        %v9503 = vadd.f32 %v9430, %v9502
        %v9504 = vpop.f32.mrf.mxu0
        %v9505 = vadd.f32 %v9432, %v9504
        %9506 = vmatprep.mubr.bf16.mxu0 %v4334
        %9507 = vmatmul.mubr.bf16.gmra.mxu0 %v4333
        %v9508 = vpop.f32.mrf.mxu0
        %v9509 = vadd.f32 %v9436, %v9508
        %v9510 = vpop.f32.mrf.mxu0
        %v9511 = vadd.f32 %v9438, %v9510
        %v9512 = vpop.f32.mrf.mxu0
        %v9513 = vadd.f32 %v9440, %v9512
        %v9514 = vpop.f32.mrf.mxu0
        %v9515 = vadd.f32 %v9442, %v9514
        %9516 = vmatprep.mubr.bf16.mxu0 %v4361
        %9517 = vmatmul.mubr.bf16.gmra.mxu0 %v4360
        %v9518 = vpop.f32.mrf.mxu0
        %v9519 = vadd.f32 %v9446, %v9518
        %v9520 = vpop.f32.mrf.mxu0
        %v9521 = vadd.f32 %v9448, %v9520
        %v9522 = vpop.f32.mrf.mxu0
        %v9523 = vadd.f32 %v9450, %v9522
        %v9524 = vpop.f32.mrf.mxu0
        %v9525 = vadd.f32 %v9452, %v9524
        %9526 = vdwg.mxu0
        %9527 = vmatprep.subr.bf16.mxu0 %v7738
        %9528 = vmatpush1.bf16.msra.mxu0 %v7737
        %9529 = vmatprep.subr.bf16.mxu0 %v7734
        %9530 = vmatpush1.bf16.msra.mxu0 %v7733
        %9531 = vmatprep.subr.bf16.mxu0 %v7730
        %9532 = vmatpush1.bf16.msra.mxu0 %v7729
        %9533 = vmatprep.subr.bf16.mxu0 %v7726
        %9534 = vmatpush1.bf16.msra.mxu0 %v7725
        %9535 = vmatprep.subr.bf16.mxu0 %v7722
        %9536 = vmatpush1.bf16.msra.mxu0 %v7721
        %9537 = vmatprep.subr.bf16.mxu0 %v7718
        %9538 = vmatpush1.bf16.msra.mxu0 %v7717
        %9539 = vmatprep.subr.bf16.mxu0 %v7714
        %9540 = vmatpush1.bf16.msra.mxu0 %v7713
        %9541 = vmatprep.subr.bf16.mxu0 %v7710
        %9542 = vmatpush1.bf16.msra.mxu0 %v7709
        %9543 = vmatprep.subr.bf16.mxu0 %v7770
        %9544 = vmatpush2.bf16.msra.mxu0 %v7769
        %9545 = vmatprep.subr.bf16.mxu0 %v7766
        %9546 = vmatpush2.bf16.msra.mxu0 %v7765
        %9547 = vmatprep.subr.bf16.mxu0 %v7762
        %9548 = vmatpush2.bf16.msra.mxu0 %v7761
        %9549 = vmatprep.subr.bf16.mxu0 %v7758
        %9550 = vmatpush2.bf16.msra.mxu0 %v7757
        %9551 = vmatprep.subr.bf16.mxu0 %v7754
        %9552 = vmatpush2.bf16.msra.mxu0 %v7753
        %9553 = vmatprep.subr.bf16.mxu0 %v7750
        %9554 = vmatpush2.bf16.msra.mxu0 %v7749
        %9555 = vmatprep.subr.bf16.mxu0 %v7746
        %9556 = vmatpush2.bf16.msra.mxu0 %v7745
        %9557 = vmatprep.subr.bf16.mxu0 %v7742
        %9558 = vmatpush2.bf16.msra.mxu0 %v7741
        %9559 = vmatprep.mubr.bf16.mxu0 %v4282
        %9560 = vmatmul.mubr.bf16.gmra.mxu0 %v4281
        %v9561 = vpop.f32.mrf.mxu0
        %v9562 = vadd.f32 %v9489, %v9561
        %v9563 = vpop.f32.mrf.mxu0
        %v9564 = vadd.f32 %v9491, %v9563
        %v9565 = vpop.f32.mrf.mxu0
        %v9566 = vadd.f32 %v9493, %v9565
        %v9567 = vpop.f32.mrf.mxu0
        %v9568 = vadd.f32 %v9495, %v9567
        %9569 = vmatprep.mubr.bf16.mxu0 %v4309
        %9570 = vmatmul.mubr.bf16.gmra.mxu0 %v4308
        %v9571 = vpop.f32.mrf.mxu0
        %v9572 = vadd.f32 %v9499, %v9571
        %v9573 = vpop.f32.mrf.mxu0
        %v9574 = vadd.f32 %v9501, %v9573
        %v9575 = vpop.f32.mrf.mxu0
        %v9576 = vadd.f32 %v9503, %v9575
        %v9577 = vpop.f32.mrf.mxu0
        %v9578 = vadd.f32 %v9505, %v9577
        %9579 = vmatprep.mubr.bf16.mxu0 %v4336
        %9580 = vmatmul.mubr.bf16.gmra.mxu0 %v4335
        %v9581 = vpop.f32.mrf.mxu0
        %v9582 = vadd.f32 %v9509, %v9581
        %v9583 = vpop.f32.mrf.mxu0
        %v9584 = vadd.f32 %v9511, %v9583
        %v9585 = vpop.f32.mrf.mxu0
        %v9586 = vadd.f32 %v9513, %v9585
        %v9587 = vpop.f32.mrf.mxu0
        %v9588 = vadd.f32 %v9515, %v9587
        %9589 = vmatprep.mubr.bf16.mxu0 %v4363
        %9590 = vmatmul.mubr.bf16.gmra.mxu0 %v4362
        %v9591 = vpop.f32.mrf.mxu0
        %v9592 = vadd.f32 %v9519, %v9591
        %v9593 = vpop.f32.mrf.mxu0
        %v9594 = vadd.f32 %v9521, %v9593
        %v9595 = vpop.f32.mrf.mxu0
        %v9596 = vadd.f32 %v9523, %v9595
        %v9597 = vpop.f32.mrf.mxu0
        %v9598 = vadd.f32 %v9525, %v9597
        %9599 = vdwg.mxu0
        %9600 = vmatprep.subr.bf16.mxu0 %v7802
        %9601 = vmatpush1.bf16.msra.mxu0 %v7801
        %9602 = vmatprep.subr.bf16.mxu0 %v7798
        %9603 = vmatpush1.bf16.msra.mxu0 %v7797
        %9604 = vmatprep.subr.bf16.mxu0 %v7794
        %9605 = vmatpush1.bf16.msra.mxu0 %v7793
        %9606 = vmatprep.subr.bf16.mxu0 %v7790
        %9607 = vmatpush1.bf16.msra.mxu0 %v7789
        %9608 = vmatprep.subr.bf16.mxu0 %v7786
        %9609 = vmatpush1.bf16.msra.mxu0 %v7785
        %9610 = vmatprep.subr.bf16.mxu0 %v7782
        %9611 = vmatpush1.bf16.msra.mxu0 %v7781
        %9612 = vmatprep.subr.bf16.mxu0 %v7778
        %9613 = vmatpush1.bf16.msra.mxu0 %v7777
        %9614 = vmatprep.subr.bf16.mxu0 %v7774
        %9615 = vmatpush1.bf16.msra.mxu0 %v7773
        %9616 = vmatprep.subr.bf16.mxu0 %v7834
        %9617 = vmatpush2.bf16.msra.mxu0 %v7833
        %9618 = vmatprep.subr.bf16.mxu0 %v7830
        %9619 = vmatpush2.bf16.msra.mxu0 %v7829
        %9620 = vmatprep.subr.bf16.mxu0 %v7826
        %9621 = vmatpush2.bf16.msra.mxu0 %v7825
        %9622 = vmatprep.subr.bf16.mxu0 %v7822
        %9623 = vmatpush2.bf16.msra.mxu0 %v7821
        %9624 = vmatprep.subr.bf16.mxu0 %v7818
        %9625 = vmatpush2.bf16.msra.mxu0 %v7817
        %9626 = vmatprep.subr.bf16.mxu0 %v7814
        %9627 = vmatpush2.bf16.msra.mxu0 %v7813
        %9628 = vmatprep.subr.bf16.mxu0 %v7810
        %9629 = vmatpush2.bf16.msra.mxu0 %v7809
        %9630 = vmatprep.subr.bf16.mxu0 %v7806
        %9631 = vmatpush2.bf16.msra.mxu0 %v7805
        %9632 = vmatprep.mubr.bf16.mxu0 %v4284
        %9633 = vmatmul.mubr.bf16.gmra.mxu0 %v4283
        %v9634 = vpop.f32.mrf.mxu0
        %v9635 = vadd.f32 %v9562, %v9634
        %v9636 = vpop.f32.mrf.mxu0
        %v9637 = vadd.f32 %v9564, %v9636
        %v9638 = vpop.f32.mrf.mxu0
        %v9639 = vadd.f32 %v9566, %v9638
        %v9640 = vpop.f32.mrf.mxu0
        %v9641 = vadd.f32 %v9568, %v9640
        %9642 = vmatprep.mubr.bf16.mxu0 %v4311
        %9643 = vmatmul.mubr.bf16.gmra.mxu0 %v4310
        %v9644 = vpop.f32.mrf.mxu0
        %v9645 = vadd.f32 %v9572, %v9644
        %v9646 = vpop.f32.mrf.mxu0
        %v9647 = vadd.f32 %v9574, %v9646
        %v9648 = vpop.f32.mrf.mxu0
        %v9649 = vadd.f32 %v9576, %v9648
        %v9650 = vpop.f32.mrf.mxu0
        %v9651 = vadd.f32 %v9578, %v9650
        %9652 = vmatprep.mubr.bf16.mxu0 %v4338
        %9653 = vmatmul.mubr.bf16.gmra.mxu0 %v4337
        %v9654 = vpop.f32.mrf.mxu0
        %v9655 = vadd.f32 %v9582, %v9654
        %v9656 = vpop.f32.mrf.mxu0
        %v9657 = vadd.f32 %v9584, %v9656
        %v9658 = vpop.f32.mrf.mxu0
        %v9659 = vadd.f32 %v9586, %v9658
        %v9660 = vpop.f32.mrf.mxu0
        %v9661 = vadd.f32 %v9588, %v9660
        %9662 = vmatprep.mubr.bf16.mxu0 %v4365
        %9663 = vmatmul.mubr.bf16.gmra.mxu0 %v4364
        %v9664 = vpop.f32.mrf.mxu0
        %v9665 = vadd.f32 %v9592, %v9664
        %v9666 = vpop.f32.mrf.mxu0
        %v9667 = vadd.f32 %v9594, %v9666
        %v9668 = vpop.f32.mrf.mxu0
        %v9669 = vadd.f32 %v9596, %v9668
        %v9670 = vpop.f32.mrf.mxu0
        %v9671 = vadd.f32 %v9598, %v9670
        %9672 = vdwg.mxu0
        %9673 = vmatprep.subr.bf16.mxu0 %v7866
        %9674 = vmatpush1.bf16.msra.mxu0 %v7865
        %9675 = vmatprep.subr.bf16.mxu0 %v7862
        %9676 = vmatpush1.bf16.msra.mxu0 %v7861
        %9677 = vmatprep.subr.bf16.mxu0 %v7858
        %9678 = vmatpush1.bf16.msra.mxu0 %v7857
        %9679 = vmatprep.subr.bf16.mxu0 %v7854
        %9680 = vmatpush1.bf16.msra.mxu0 %v7853
        %9681 = vmatprep.subr.bf16.mxu0 %v7850
        %9682 = vmatpush1.bf16.msra.mxu0 %v7849
        %9683 = vmatprep.subr.bf16.mxu0 %v7846
        %9684 = vmatpush1.bf16.msra.mxu0 %v7845
        %9685 = vmatprep.subr.bf16.mxu0 %v7842
        %9686 = vmatpush1.bf16.msra.mxu0 %v7841
        %9687 = vmatprep.subr.bf16.mxu0 %v7838
        %9688 = vmatpush1.bf16.msra.mxu0 %v7837
        %9689 = vmatprep.subr.bf16.mxu0 %v7898
        %9690 = vmatpush2.bf16.msra.mxu0 %v7897
        %9691 = vmatprep.subr.bf16.mxu0 %v7894
        %9692 = vmatpush2.bf16.msra.mxu0 %v7893
        %9693 = vmatprep.subr.bf16.mxu0 %v7890
        %9694 = vmatpush2.bf16.msra.mxu0 %v7889
        %9695 = vmatprep.subr.bf16.mxu0 %v7886
        %9696 = vmatpush2.bf16.msra.mxu0 %v7885
        %9697 = vmatprep.subr.bf16.mxu0 %v7882
        %9698 = vmatpush2.bf16.msra.mxu0 %v7881
        %9699 = vmatprep.subr.bf16.mxu0 %v7878
        %9700 = vmatpush2.bf16.msra.mxu0 %v7877
        %9701 = vmatprep.subr.bf16.mxu0 %v7874
        %9702 = vmatpush2.bf16.msra.mxu0 %v7873
        %9703 = vmatprep.subr.bf16.mxu0 %v7870
        %9704 = vmatpush2.bf16.msra.mxu0 %v7869
        %9705 = vmatprep.mubr.bf16.mxu0 %v4286
        %9706 = vmatmul.mubr.bf16.gmra.mxu0 %v4285
        %v9707 = vpop.f32.mrf.mxu0
        %v9708 = vadd.f32 %v9635, %v9707
        %v9709 = vpop.f32.mrf.mxu0
        %v9710 = vadd.f32 %v9637, %v9709
        %v9711 = vpop.f32.mrf.mxu0
        %v9712 = vadd.f32 %v9639, %v9711
        %v9713 = vpop.f32.mrf.mxu0
        %v9714 = vadd.f32 %v9641, %v9713
        %9715 = vmatprep.mubr.bf16.mxu0 %v4313
        %9716 = vmatmul.mubr.bf16.gmra.mxu0 %v4312
        %v9717 = vpop.f32.mrf.mxu0
        %v9718 = vadd.f32 %v9645, %v9717
        %v9719 = vpop.f32.mrf.mxu0
        %v9720 = vadd.f32 %v9647, %v9719
        %v9721 = vpop.f32.mrf.mxu0
        %v9722 = vadd.f32 %v9649, %v9721
        %v9723 = vpop.f32.mrf.mxu0
        %v9724 = vadd.f32 %v9651, %v9723
        %9725 = vmatprep.mubr.bf16.mxu0 %v4340
        %9726 = vmatmul.mubr.bf16.gmra.mxu0 %v4339
        %v9727 = vpop.f32.mrf.mxu0
        %v9728 = vadd.f32 %v9655, %v9727
        %v9729 = vpop.f32.mrf.mxu0
        %v9730 = vadd.f32 %v9657, %v9729
        %v9731 = vpop.f32.mrf.mxu0
        %v9732 = vadd.f32 %v9659, %v9731
        %v9733 = vpop.f32.mrf.mxu0
        %v9734 = vadd.f32 %v9661, %v9733
        %9735 = vmatprep.mubr.bf16.mxu0 %v4367
        %9736 = vmatmul.mubr.bf16.gmra.mxu0 %v4366
        %v9737 = vpop.f32.mrf.mxu0
        %v9738 = vadd.f32 %v9665, %v9737
        %v9739 = vpop.f32.mrf.mxu0
        %v9740 = vadd.f32 %v9667, %v9739
        %v9741 = vpop.f32.mrf.mxu0
        %v9742 = vadd.f32 %v9669, %v9741
        %v9743 = vpop.f32.mrf.mxu0
        %v9744 = vadd.f32 %v9671, %v9743
        %9745 = vdwg.mxu0
        %9746 = vmatprep.subr.bf16.mxu0 %v7930
        %9747 = vmatpush1.bf16.msra.mxu0 %v7929
        %9748 = vmatprep.subr.bf16.mxu0 %v7926
        %9749 = vmatpush1.bf16.msra.mxu0 %v7925
        %9750 = vmatprep.subr.bf16.mxu0 %v7922
        %9751 = vmatpush1.bf16.msra.mxu0 %v7921
        %9752 = vmatprep.subr.bf16.mxu0 %v7918
        %9753 = vmatpush1.bf16.msra.mxu0 %v7917
        %9754 = vmatprep.subr.bf16.mxu0 %v7914
        %9755 = vmatpush1.bf16.msra.mxu0 %v7913
        %9756 = vmatprep.subr.bf16.mxu0 %v7910
        %9757 = vmatpush1.bf16.msra.mxu0 %v7909
        %9758 = vmatprep.subr.bf16.mxu0 %v7906
        %9759 = vmatpush1.bf16.msra.mxu0 %v7905
        %9760 = vmatprep.subr.bf16.mxu0 %v7902
        %9761 = vmatpush1.bf16.msra.mxu0 %v7901
        %9762 = vmatprep.subr.bf16.mxu0 0
        %9763 = vmatpush2.bf16.msra.mxu0 0
        %9764 = vmatprep.subr.bf16.mxu0 0
        %9765 = vmatpush2.bf16.msra.mxu0 0
        %9766 = vmatprep.subr.bf16.mxu0 0
        %9767 = vmatpush2.bf16.msra.mxu0 0
        %9768 = vmatprep.subr.bf16.mxu0 0
        %9769 = vmatpush2.bf16.msra.mxu0 0
        %9770 = vmatprep.subr.bf16.mxu0 0
        %9771 = vmatpush2.bf16.msra.mxu0 0
        %9772 = vmatprep.subr.bf16.mxu0 0
        %9773 = vmatpush2.bf16.msra.mxu0 0
        %9774 = vmatprep.subr.bf16.mxu0 0
        %9775 = vmatpush2.bf16.msra.mxu0 0
        %9776 = vmatprep.subr.bf16.mxu0 0
        %9777 = vmatpush2.bf16.msra.mxu0 0
        %9778 = vmatprep.mubr.bf16.mxu0 0
        %9779 = vmatmul.mubr.bf16.gmra.mxu0 %v4287
        %v9780 = vpop.f32.mrf.mxu0
        %v9781 = vadd.f32 %v9708, %v9780
        %v9782 = vpop.f32.mrf.mxu0
        %v9783 = vadd.f32 %v9710, %v9782
        %v9784 = vpop.f32.mrf.mxu0
        %v9785 = vadd.f32 %v9712, %v9784
        %v9786 = vpop.f32.mrf.mxu0
        %v9787 = vadd.f32 %v9714, %v9786
        %9788 = vmatprep.mubr.bf16.mxu0 0
        %9789 = vmatmul.mubr.bf16.gmra.mxu0 %v4314
        %v9790 = vpop.f32.mrf.mxu0
        %v9791 = vadd.f32 %v9718, %v9790
        %v9792 = vpop.f32.mrf.mxu0
        %v9793 = vadd.f32 %v9720, %v9792
        %v9794 = vpop.f32.mrf.mxu0
        %v9795 = vadd.f32 %v9722, %v9794
        %v9796 = vpop.f32.mrf.mxu0
        %v9797 = vadd.f32 %v9724, %v9796
        %9798 = vmatprep.mubr.bf16.mxu0 0
        %9799 = vmatmul.mubr.bf16.gmra.mxu0 %v4341
        %v9800 = vpop.f32.mrf.mxu0
        %v9801 = vadd.f32 %v9728, %v9800
        %v9802 = vpop.f32.mrf.mxu0
        %v9803 = vadd.f32 %v9730, %v9802
        %v9804 = vpop.f32.mrf.mxu0
        %v9805 = vadd.f32 %v9732, %v9804
        %v9806 = vpop.f32.mrf.mxu0
        %v9807 = vadd.f32 %v9734, %v9806
        %9808 = vmatprep.mubr.bf16.mxu0 0
        %9809 = vmatmul.mubr.bf16.gmra.mxu0 %v4368
        %v9810 = vpop.f32.mrf.mxu0
        %v9811 = vadd.f32 %v9738, %v9810
        %v9812 = vpop.f32.mrf.mxu0
        %v9813 = vadd.f32 %v9740, %v9812
        %v9814 = vpop.f32.mrf.mxu0
        %v9815 = vadd.f32 %v9742, %v9814
        %v9816 = vpop.f32.mrf.mxu0
        %v9817 = vadd.f32 %v9744, %v9816
        %9818 = vdwg.mxu0
        %9819 = vmatprep.subr.bf16.mxu0 %v7100
        %9820 = vmatpush1.bf16.msra.mxu0 %v7099
        %9821 = vmatprep.subr.bf16.mxu0 %v7096
        %9822 = vmatpush1.bf16.msra.mxu0 %v7095
        %9823 = vmatprep.subr.bf16.mxu0 %v7092
        %9824 = vmatpush1.bf16.msra.mxu0 %v7091
        %9825 = vmatprep.subr.bf16.mxu0 %v7088
        %9826 = vmatpush1.bf16.msra.mxu0 %v7087
        %9827 = vmatprep.subr.bf16.mxu0 %v7084
        %9828 = vmatpush1.bf16.msra.mxu0 %v7083
        %9829 = vmatprep.subr.bf16.mxu0 %v7080
        %9830 = vmatpush1.bf16.msra.mxu0 %v7079
        %9831 = vmatprep.subr.bf16.mxu0 %v7076
        %9832 = vmatpush1.bf16.msra.mxu0 %v7075
        %9833 = vmatprep.subr.bf16.mxu0 %v7072
        %9834 = vmatpush1.bf16.msra.mxu0 %v7071
        %9835 = vmatprep.subr.bf16.mxu0 %v7132
        %9836 = vmatpush2.bf16.msra.mxu0 %v7131
        %9837 = vmatprep.subr.bf16.mxu0 %v7128
        %9838 = vmatpush2.bf16.msra.mxu0 %v7127
        %9839 = vmatprep.subr.bf16.mxu0 %v7124
        %9840 = vmatpush2.bf16.msra.mxu0 %v7123
        %9841 = vmatprep.subr.bf16.mxu0 %v7120
        %9842 = vmatpush2.bf16.msra.mxu0 %v7119
        %9843 = vmatprep.subr.bf16.mxu0 %v7116
        %9844 = vmatpush2.bf16.msra.mxu0 %v7115
        %9845 = vmatprep.subr.bf16.mxu0 %v7112
        %9846 = vmatpush2.bf16.msra.mxu0 %v7111
        %9847 = vmatprep.subr.bf16.mxu0 %v7108
        %9848 = vmatpush2.bf16.msra.mxu0 %v7107
        %9849 = vmatprep.subr.bf16.mxu0 %v7104
        %9850 = vmatpush2.bf16.msra.mxu0 %v7103
        %9851 = vmatprep.mubr.bf16.mxu0 %v4262
        %9852 = vmatmul.mubr.bf16.gmra.mxu0 %v4261
        %v9853 = vpop.f32.mrf.mxu0
        %v9854 = vadd.f32 %v3924, %v9853
        %v9855 = vpop.f32.mrf.mxu0
        %v9856 = vadd.f32 %v3928, %v9855
        %v9857 = vpop.f32.mrf.mxu0
        %v9858 = vadd.f32 %v3924, %v9857
        %v9859 = vpop.f32.mrf.mxu0
        %v9860 = vadd.f32 %v3928, %v9859
        %9861 = vmatprep.mubr.bf16.mxu0 %v4289
        %9862 = vmatmul.mubr.bf16.gmra.mxu0 %v4288
        %v9863 = vpop.f32.mrf.mxu0
        %v9864 = vadd.f32 %v3924, %v9863
        %v9865 = vpop.f32.mrf.mxu0
        %v9866 = vadd.f32 %v3928, %v9865
        %v9867 = vpop.f32.mrf.mxu0
        %v9868 = vadd.f32 %v3924, %v9867
        %v9869 = vpop.f32.mrf.mxu0
        %v9870 = vadd.f32 %v3928, %v9869
        %9871 = vmatprep.mubr.bf16.mxu0 %v4316
        %9872 = vmatmul.mubr.bf16.gmra.mxu0 %v4315
        %v9873 = vpop.f32.mrf.mxu0
        %v9874 = vadd.f32 %v3924, %v9873
        %v9875 = vpop.f32.mrf.mxu0
        %v9876 = vadd.f32 %v3928, %v9875
        %v9877 = vpop.f32.mrf.mxu0
        %v9878 = vadd.f32 %v3924, %v9877
        %v9879 = vpop.f32.mrf.mxu0
        %v9880 = vadd.f32 %v3928, %v9879
        %9881 = vmatprep.mubr.bf16.mxu0 %v4343
        %9882 = vmatmul.mubr.bf16.gmra.mxu0 %v4342
        %v9883 = vpop.f32.mrf.mxu0
        %v9884 = vadd.f32 %v3924, %v9883
        %v9885 = vpop.f32.mrf.mxu0
        %v9886 = vadd.f32 %v3928, %v9885
        %v9887 = vpop.f32.mrf.mxu0
        %v9888 = vadd.f32 %v3924, %v9887
        %v9889 = vpop.f32.mrf.mxu0
        %v9890 = vadd.f32 %v3928, %v9889
        %9891 = vdwg.mxu0
        %9892 = vmatprep.subr.bf16.mxu0 %v7164
        %9893 = vmatpush1.bf16.msra.mxu0 %v7163
        %9894 = vmatprep.subr.bf16.mxu0 %v7160
        %9895 = vmatpush1.bf16.msra.mxu0 %v7159
        %9896 = vmatprep.subr.bf16.mxu0 %v7156
        %9897 = vmatpush1.bf16.msra.mxu0 %v7155
        %9898 = vmatprep.subr.bf16.mxu0 %v7152
        %9899 = vmatpush1.bf16.msra.mxu0 %v7151
        %9900 = vmatprep.subr.bf16.mxu0 %v7148
        %9901 = vmatpush1.bf16.msra.mxu0 %v7147
        %9902 = vmatprep.subr.bf16.mxu0 %v7144
        %9903 = vmatpush1.bf16.msra.mxu0 %v7143
        %9904 = vmatprep.subr.bf16.mxu0 %v7140
        %9905 = vmatpush1.bf16.msra.mxu0 %v7139
        %9906 = vmatprep.subr.bf16.mxu0 %v7136
        %9907 = vmatpush1.bf16.msra.mxu0 %v7135
        %9908 = vmatprep.subr.bf16.mxu0 %v7196
        %9909 = vmatpush2.bf16.msra.mxu0 %v7195
        %9910 = vmatprep.subr.bf16.mxu0 %v7192
        %9911 = vmatpush2.bf16.msra.mxu0 %v7191
        %9912 = vmatprep.subr.bf16.mxu0 %v7188
        %9913 = vmatpush2.bf16.msra.mxu0 %v7187
        %9914 = vmatprep.subr.bf16.mxu0 %v7184
        %9915 = vmatpush2.bf16.msra.mxu0 %v7183
        %9916 = vmatprep.subr.bf16.mxu0 %v7180
        %9917 = vmatpush2.bf16.msra.mxu0 %v7179
        %9918 = vmatprep.subr.bf16.mxu0 %v7176
        %9919 = vmatpush2.bf16.msra.mxu0 %v7175
        %9920 = vmatprep.subr.bf16.mxu0 %v7172
        %9921 = vmatpush2.bf16.msra.mxu0 %v7171
        %9922 = vmatprep.subr.bf16.mxu0 %v7168
        %9923 = vmatpush2.bf16.msra.mxu0 %v7167
        %9924 = vmatprep.mubr.bf16.mxu0 %v4264
        %9925 = vmatmul.mubr.bf16.gmra.mxu0 %v4263
        %v9926 = vpop.f32.mrf.mxu0
        %v9927 = vadd.f32 %v9854, %v9926
        %v9928 = vpop.f32.mrf.mxu0
        %v9929 = vadd.f32 %v9856, %v9928
        %v9930 = vpop.f32.mrf.mxu0
        %v9931 = vadd.f32 %v9858, %v9930
        %v9932 = vpop.f32.mrf.mxu0
        %v9933 = vadd.f32 %v9860, %v9932
        %9934 = vmatprep.mubr.bf16.mxu0 %v4291
        %9935 = vmatmul.mubr.bf16.gmra.mxu0 %v4290
        %v9936 = vpop.f32.mrf.mxu0
        %v9937 = vadd.f32 %v9864, %v9936
        %v9938 = vpop.f32.mrf.mxu0
        %v9939 = vadd.f32 %v9866, %v9938
        %v9940 = vpop.f32.mrf.mxu0
        %v9941 = vadd.f32 %v9868, %v9940
        %v9942 = vpop.f32.mrf.mxu0
        %v9943 = vadd.f32 %v9870, %v9942
        %9944 = vmatprep.mubr.bf16.mxu0 %v4318
        %9945 = vmatmul.mubr.bf16.gmra.mxu0 %v4317
        %v9946 = vpop.f32.mrf.mxu0
        %v9947 = vadd.f32 %v9874, %v9946
        %v9948 = vpop.f32.mrf.mxu0
        %v9949 = vadd.f32 %v9876, %v9948
        %v9950 = vpop.f32.mrf.mxu0
        %v9951 = vadd.f32 %v9878, %v9950
        %v9952 = vpop.f32.mrf.mxu0
        %v9953 = vadd.f32 %v9880, %v9952
        %9954 = vmatprep.mubr.bf16.mxu0 %v4345
        %9955 = vmatmul.mubr.bf16.gmra.mxu0 %v4344
        %v9956 = vpop.f32.mrf.mxu0
        %v9957 = vadd.f32 %v9884, %v9956
        %v9958 = vpop.f32.mrf.mxu0
        %v9959 = vadd.f32 %v9886, %v9958
        %v9960 = vpop.f32.mrf.mxu0
        %v9961 = vadd.f32 %v9888, %v9960
        %v9962 = vpop.f32.mrf.mxu0
        %v9963 = vadd.f32 %v9890, %v9962
        %9964 = vdwg.mxu0
        %9965 = vmatprep.subr.bf16.mxu0 %v7228
        %9966 = vmatpush1.bf16.msra.mxu0 %v7227
        %9967 = vmatprep.subr.bf16.mxu0 %v7224
        %9968 = vmatpush1.bf16.msra.mxu0 %v7223
        %9969 = vmatprep.subr.bf16.mxu0 %v7220
        %9970 = vmatpush1.bf16.msra.mxu0 %v7219
        %9971 = vmatprep.subr.bf16.mxu0 %v7216
        %9972 = vmatpush1.bf16.msra.mxu0 %v7215
        %9973 = vmatprep.subr.bf16.mxu0 %v7212
        %9974 = vmatpush1.bf16.msra.mxu0 %v7211
        %9975 = vmatprep.subr.bf16.mxu0 %v7208
        %9976 = vmatpush1.bf16.msra.mxu0 %v7207
        %9977 = vmatprep.subr.bf16.mxu0 %v7204
        %9978 = vmatpush1.bf16.msra.mxu0 %v7203
        %9979 = vmatprep.subr.bf16.mxu0 %v7200
        %9980 = vmatpush1.bf16.msra.mxu0 %v7199
        %9981 = vmatprep.subr.bf16.mxu0 %v7260
        %9982 = vmatpush2.bf16.msra.mxu0 %v7259
        %9983 = vmatprep.subr.bf16.mxu0 %v7256
        %9984 = vmatpush2.bf16.msra.mxu0 %v7255
        %9985 = vmatprep.subr.bf16.mxu0 %v7252
        %9986 = vmatpush2.bf16.msra.mxu0 %v7251
        %9987 = vmatprep.subr.bf16.mxu0 %v7248
        %9988 = vmatpush2.bf16.msra.mxu0 %v7247
        %9989 = vmatprep.subr.bf16.mxu0 %v7244
        %9990 = vmatpush2.bf16.msra.mxu0 %v7243
        %9991 = vmatprep.subr.bf16.mxu0 %v7240
        %9992 = vmatpush2.bf16.msra.mxu0 %v7239
        %9993 = vmatprep.subr.bf16.mxu0 %v7236
        %9994 = vmatpush2.bf16.msra.mxu0 %v7235
        %9995 = vmatprep.subr.bf16.mxu0 %v7232
        %9996 = vmatpush2.bf16.msra.mxu0 %v7231
        %9997 = vmatprep.mubr.bf16.mxu0 %v4266
        %9998 = vmatmul.mubr.bf16.gmra.mxu0 %v4265
        %v9999 = vpop.f32.mrf.mxu0
        %v10000 = vadd.f32 %v9927, %v9999
        %v10001 = vpop.f32.mrf.mxu0
        %v10002 = vadd.f32 %v9929, %v10001
        %v10003 = vpop.f32.mrf.mxu0
        %v10004 = vadd.f32 %v9931, %v10003
        %v10005 = vpop.f32.mrf.mxu0
        %v10006 = vadd.f32 %v9933, %v10005
        %10007 = vmatprep.mubr.bf16.mxu0 %v4293
        %10008 = vmatmul.mubr.bf16.gmra.mxu0 %v4292
        %v10009 = vpop.f32.mrf.mxu0
        %v10010 = vadd.f32 %v9937, %v10009
        %v10011 = vpop.f32.mrf.mxu0
        %v10012 = vadd.f32 %v9939, %v10011
        %v10013 = vpop.f32.mrf.mxu0
        %v10014 = vadd.f32 %v9941, %v10013
        %v10015 = vpop.f32.mrf.mxu0
        %v10016 = vadd.f32 %v9943, %v10015
        %10017 = vmatprep.mubr.bf16.mxu0 %v4320
        %10018 = vmatmul.mubr.bf16.gmra.mxu0 %v4319
        %v10019 = vpop.f32.mrf.mxu0
        %v10020 = vadd.f32 %v9947, %v10019
        %v10021 = vpop.f32.mrf.mxu0
        %v10022 = vadd.f32 %v9949, %v10021
        %v10023 = vpop.f32.mrf.mxu0
        %v10024 = vadd.f32 %v9951, %v10023
        %v10025 = vpop.f32.mrf.mxu0
        %v10026 = vadd.f32 %v9953, %v10025
        %10027 = vmatprep.mubr.bf16.mxu0 %v4347
        %10028 = vmatmul.mubr.bf16.gmra.mxu0 %v4346
        %v10029 = vpop.f32.mrf.mxu0
        %v10030 = vadd.f32 %v9957, %v10029
        %v10031 = vpop.f32.mrf.mxu0
        %v10032 = vadd.f32 %v9959, %v10031
        %v10033 = vpop.f32.mrf.mxu0
        %v10034 = vadd.f32 %v9961, %v10033
        %v10035 = vpop.f32.mrf.mxu0
        %v10036 = vadd.f32 %v9963, %v10035
        %10037 = vdwg.mxu0
        %10038 = vmatprep.subr.bf16.mxu0 %v7292
        %10039 = vmatpush1.bf16.msra.mxu0 %v7291
        %10040 = vmatprep.subr.bf16.mxu0 %v7288
        %10041 = vmatpush1.bf16.msra.mxu0 %v7287
        %10042 = vmatprep.subr.bf16.mxu0 %v7284
        %10043 = vmatpush1.bf16.msra.mxu0 %v7283
        %10044 = vmatprep.subr.bf16.mxu0 %v7280
        %10045 = vmatpush1.bf16.msra.mxu0 %v7279
        %10046 = vmatprep.subr.bf16.mxu0 %v7276
        %10047 = vmatpush1.bf16.msra.mxu0 %v7275
        %10048 = vmatprep.subr.bf16.mxu0 %v7272
        %10049 = vmatpush1.bf16.msra.mxu0 %v7271
        %10050 = vmatprep.subr.bf16.mxu0 %v7268
        %10051 = vmatpush1.bf16.msra.mxu0 %v7267
        %10052 = vmatprep.subr.bf16.mxu0 %v7264
        %10053 = vmatpush1.bf16.msra.mxu0 %v7263
        %10054 = vmatprep.subr.bf16.mxu0 %v7324
        %10055 = vmatpush2.bf16.msra.mxu0 %v7323
        %10056 = vmatprep.subr.bf16.mxu0 %v7320
        %10057 = vmatpush2.bf16.msra.mxu0 %v7319
        %10058 = vmatprep.subr.bf16.mxu0 %v7316
        %10059 = vmatpush2.bf16.msra.mxu0 %v7315
        %10060 = vmatprep.subr.bf16.mxu0 %v7312
        %10061 = vmatpush2.bf16.msra.mxu0 %v7311
        %10062 = vmatprep.subr.bf16.mxu0 %v7308
        %10063 = vmatpush2.bf16.msra.mxu0 %v7307
        %10064 = vmatprep.subr.bf16.mxu0 %v7304
        %10065 = vmatpush2.bf16.msra.mxu0 %v7303
        %10066 = vmatprep.subr.bf16.mxu0 %v7300
        %10067 = vmatpush2.bf16.msra.mxu0 %v7299
        %10068 = vmatprep.subr.bf16.mxu0 %v7296
        %10069 = vmatpush2.bf16.msra.mxu0 %v7295
        %10070 = vmatprep.mubr.bf16.mxu0 %v4268
        %10071 = vmatmul.mubr.bf16.gmra.mxu0 %v4267
        %v10072 = vpop.f32.mrf.mxu0
        %v10073 = vadd.f32 %v10000, %v10072
        %v10074 = vpop.f32.mrf.mxu0
        %v10075 = vadd.f32 %v10002, %v10074
        %v10076 = vpop.f32.mrf.mxu0
        %v10077 = vadd.f32 %v10004, %v10076
        %v10078 = vpop.f32.mrf.mxu0
        %v10079 = vadd.f32 %v10006, %v10078
        %10080 = vmatprep.mubr.bf16.mxu0 %v4295
        %10081 = vmatmul.mubr.bf16.gmra.mxu0 %v4294
        %v10082 = vpop.f32.mrf.mxu0
        %v10083 = vadd.f32 %v10010, %v10082
        %v10084 = vpop.f32.mrf.mxu0
        %v10085 = vadd.f32 %v10012, %v10084
        %v10086 = vpop.f32.mrf.mxu0
        %v10087 = vadd.f32 %v10014, %v10086
        %v10088 = vpop.f32.mrf.mxu0
        %v10089 = vadd.f32 %v10016, %v10088
        %10090 = vmatprep.mubr.bf16.mxu0 %v4322
        %10091 = vmatmul.mubr.bf16.gmra.mxu0 %v4321
        %v10092 = vpop.f32.mrf.mxu0
        %v10093 = vadd.f32 %v10020, %v10092
        %v10094 = vpop.f32.mrf.mxu0
        %v10095 = vadd.f32 %v10022, %v10094
        %v10096 = vpop.f32.mrf.mxu0
        %v10097 = vadd.f32 %v10024, %v10096
        %v10098 = vpop.f32.mrf.mxu0
        %v10099 = vadd.f32 %v10026, %v10098
        %10100 = vmatprep.mubr.bf16.mxu0 %v4349
        %10101 = vmatmul.mubr.bf16.gmra.mxu0 %v4348
        %v10102 = vpop.f32.mrf.mxu0
        %v10103 = vadd.f32 %v10030, %v10102
        %v10104 = vpop.f32.mrf.mxu0
        %v10105 = vadd.f32 %v10032, %v10104
        %v10106 = vpop.f32.mrf.mxu0
        %v10107 = vadd.f32 %v10034, %v10106
        %v10108 = vpop.f32.mrf.mxu0
        %v10109 = vadd.f32 %v10036, %v10108
        %10110 = vdwg.mxu0
        %10111 = vmatprep.subr.bf16.mxu0 %v7356
        %10112 = vmatpush1.bf16.msra.mxu0 %v7355
        %10113 = vmatprep.subr.bf16.mxu0 %v7352
        %10114 = vmatpush1.bf16.msra.mxu0 %v7351
        %10115 = vmatprep.subr.bf16.mxu0 %v7348
        %10116 = vmatpush1.bf16.msra.mxu0 %v7347
        %10117 = vmatprep.subr.bf16.mxu0 %v7344
        %10118 = vmatpush1.bf16.msra.mxu0 %v7343
        %10119 = vmatprep.subr.bf16.mxu0 %v7340
        %10120 = vmatpush1.bf16.msra.mxu0 %v7339
        %10121 = vmatprep.subr.bf16.mxu0 %v7336
        %10122 = vmatpush1.bf16.msra.mxu0 %v7335
        %10123 = vmatprep.subr.bf16.mxu0 %v7332
        %10124 = vmatpush1.bf16.msra.mxu0 %v7331
        %10125 = vmatprep.subr.bf16.mxu0 %v7328
        %10126 = vmatpush1.bf16.msra.mxu0 %v7327
        %10127 = vmatprep.subr.bf16.mxu0 %v7388
        %10128 = vmatpush2.bf16.msra.mxu0 %v7387
        %10129 = vmatprep.subr.bf16.mxu0 %v7384
        %10130 = vmatpush2.bf16.msra.mxu0 %v7383
        %10131 = vmatprep.subr.bf16.mxu0 %v7380
        %10132 = vmatpush2.bf16.msra.mxu0 %v7379
        %10133 = vmatprep.subr.bf16.mxu0 %v7376
        %10134 = vmatpush2.bf16.msra.mxu0 %v7375
        %10135 = vmatprep.subr.bf16.mxu0 %v7372
        %10136 = vmatpush2.bf16.msra.mxu0 %v7371
        %10137 = vmatprep.subr.bf16.mxu0 %v7368
        %10138 = vmatpush2.bf16.msra.mxu0 %v7367
        %10139 = vmatprep.subr.bf16.mxu0 %v7364
        %10140 = vmatpush2.bf16.msra.mxu0 %v7363
        %10141 = vmatprep.subr.bf16.mxu0 %v7360
        %10142 = vmatpush2.bf16.msra.mxu0 %v7359
        %10143 = vmatprep.mubr.bf16.mxu0 %v4270
        %10144 = vmatmul.mubr.bf16.gmra.mxu0 %v4269
        %v10145 = vpop.f32.mrf.mxu0
        %v10146 = vadd.f32 %v10073, %v10145
        %v10147 = vpop.f32.mrf.mxu0
        %v10148 = vadd.f32 %v10075, %v10147
        %v10149 = vpop.f32.mrf.mxu0
        %v10150 = vadd.f32 %v10077, %v10149
        %v10151 = vpop.f32.mrf.mxu0
        %v10152 = vadd.f32 %v10079, %v10151
        %10153 = vmatprep.mubr.bf16.mxu0 %v4297
        %10154 = vmatmul.mubr.bf16.gmra.mxu0 %v4296
        %v10155 = vpop.f32.mrf.mxu0
        %v10156 = vadd.f32 %v10083, %v10155
        %v10157 = vpop.f32.mrf.mxu0
        %v10158 = vadd.f32 %v10085, %v10157
        %v10159 = vpop.f32.mrf.mxu0
        %v10160 = vadd.f32 %v10087, %v10159
        %v10161 = vpop.f32.mrf.mxu0
        %v10162 = vadd.f32 %v10089, %v10161
        %10163 = vmatprep.mubr.bf16.mxu0 %v4324
        %10164 = vmatmul.mubr.bf16.gmra.mxu0 %v4323
        %v10165 = vpop.f32.mrf.mxu0
        %v10166 = vadd.f32 %v10093, %v10165
        %v10167 = vpop.f32.mrf.mxu0
        %v10168 = vadd.f32 %v10095, %v10167
        %v10169 = vpop.f32.mrf.mxu0
        %v10170 = vadd.f32 %v10097, %v10169
        %v10171 = vpop.f32.mrf.mxu0
        %v10172 = vadd.f32 %v10099, %v10171
        %10173 = vmatprep.mubr.bf16.mxu0 %v4351
        %10174 = vmatmul.mubr.bf16.gmra.mxu0 %v4350
        %v10175 = vpop.f32.mrf.mxu0
        %v10176 = vadd.f32 %v10103, %v10175
        %v10177 = vpop.f32.mrf.mxu0
        %v10178 = vadd.f32 %v10105, %v10177
        %v10179 = vpop.f32.mrf.mxu0
        %v10180 = vadd.f32 %v10107, %v10179
        %v10181 = vpop.f32.mrf.mxu0
        %v10182 = vadd.f32 %v10109, %v10181
        %10183 = vdwg.mxu0
        %10184 = vmatprep.subr.bf16.mxu0 %v7420
        %10185 = vmatpush1.bf16.msra.mxu0 %v7419
        %10186 = vmatprep.subr.bf16.mxu0 %v7416
        %10187 = vmatpush1.bf16.msra.mxu0 %v7415
        %10188 = vmatprep.subr.bf16.mxu0 %v7412
        %10189 = vmatpush1.bf16.msra.mxu0 %v7411
        %10190 = vmatprep.subr.bf16.mxu0 %v7408
        %10191 = vmatpush1.bf16.msra.mxu0 %v7407
        %10192 = vmatprep.subr.bf16.mxu0 %v7404
        %10193 = vmatpush1.bf16.msra.mxu0 %v7403
        %10194 = vmatprep.subr.bf16.mxu0 %v7400
        %10195 = vmatpush1.bf16.msra.mxu0 %v7399
        %10196 = vmatprep.subr.bf16.mxu0 %v7396
        %10197 = vmatpush1.bf16.msra.mxu0 %v7395
        %10198 = vmatprep.subr.bf16.mxu0 %v7392
        %10199 = vmatpush1.bf16.msra.mxu0 %v7391
        %10200 = vmatprep.subr.bf16.mxu0 %v7452
        %10201 = vmatpush2.bf16.msra.mxu0 %v7451
        %10202 = vmatprep.subr.bf16.mxu0 %v7448
        %10203 = vmatpush2.bf16.msra.mxu0 %v7447
        %10204 = vmatprep.subr.bf16.mxu0 %v7444
        %10205 = vmatpush2.bf16.msra.mxu0 %v7443
        %10206 = vmatprep.subr.bf16.mxu0 %v7440
        %10207 = vmatpush2.bf16.msra.mxu0 %v7439
        %10208 = vmatprep.subr.bf16.mxu0 %v7436
        %10209 = vmatpush2.bf16.msra.mxu0 %v7435
        %10210 = vmatprep.subr.bf16.mxu0 %v7432
        %10211 = vmatpush2.bf16.msra.mxu0 %v7431
        %10212 = vmatprep.subr.bf16.mxu0 %v7428
        %10213 = vmatpush2.bf16.msra.mxu0 %v7427
        %10214 = vmatprep.subr.bf16.mxu0 %v7424
        %10215 = vmatpush2.bf16.msra.mxu0 %v7423
        %10216 = vmatprep.mubr.bf16.mxu0 %v4272
        %10217 = vmatmul.mubr.bf16.gmra.mxu0 %v4271
        %v10218 = vpop.f32.mrf.mxu0
        %v10219 = vadd.f32 %v10146, %v10218
        %v10220 = vpop.f32.mrf.mxu0
        %v10221 = vadd.f32 %v10148, %v10220
        %v10222 = vpop.f32.mrf.mxu0
        %v10223 = vadd.f32 %v10150, %v10222
        %v10224 = vpop.f32.mrf.mxu0
        %v10225 = vadd.f32 %v10152, %v10224
        %10226 = vmatprep.mubr.bf16.mxu0 %v4299
        %10227 = vmatmul.mubr.bf16.gmra.mxu0 %v4298
        %v10228 = vpop.f32.mrf.mxu0
        %v10229 = vadd.f32 %v10156, %v10228
        %v10230 = vpop.f32.mrf.mxu0
        %v10231 = vadd.f32 %v10158, %v10230
        %v10232 = vpop.f32.mrf.mxu0
        %v10233 = vadd.f32 %v10160, %v10232
        %v10234 = vpop.f32.mrf.mxu0
        %v10235 = vadd.f32 %v10162, %v10234
        %10236 = vmatprep.mubr.bf16.mxu0 %v4326
        %10237 = vmatmul.mubr.bf16.gmra.mxu0 %v4325
        %v10238 = vpop.f32.mrf.mxu0
        %v10239 = vadd.f32 %v10166, %v10238
        %v10240 = vpop.f32.mrf.mxu0
        %v10241 = vadd.f32 %v10168, %v10240
        %v10242 = vpop.f32.mrf.mxu0
        %v10243 = vadd.f32 %v10170, %v10242
        %v10244 = vpop.f32.mrf.mxu0
        %v10245 = vadd.f32 %v10172, %v10244
        %10246 = vmatprep.mubr.bf16.mxu0 %v4353
        %10247 = vmatmul.mubr.bf16.gmra.mxu0 %v4352
        %v10248 = vpop.f32.mrf.mxu0
        %v10249 = vadd.f32 %v10176, %v10248
        %v10250 = vpop.f32.mrf.mxu0
        %v10251 = vadd.f32 %v10178, %v10250
        %v10252 = vpop.f32.mrf.mxu0
        %v10253 = vadd.f32 %v10180, %v10252
        %v10254 = vpop.f32.mrf.mxu0
        %v10255 = vadd.f32 %v10182, %v10254
        %10256 = vdwg.mxu0
        %10257 = vmatprep.subr.bf16.mxu0 %v7484
        %10258 = vmatpush1.bf16.msra.mxu0 %v7483
        %10259 = vmatprep.subr.bf16.mxu0 %v7480
        %10260 = vmatpush1.bf16.msra.mxu0 %v7479
        %10261 = vmatprep.subr.bf16.mxu0 %v7476
        %10262 = vmatpush1.bf16.msra.mxu0 %v7475
        %10263 = vmatprep.subr.bf16.mxu0 %v7472
        %10264 = vmatpush1.bf16.msra.mxu0 %v7471
        %10265 = vmatprep.subr.bf16.mxu0 %v7468
        %10266 = vmatpush1.bf16.msra.mxu0 %v7467
        %10267 = vmatprep.subr.bf16.mxu0 %v7464
        %10268 = vmatpush1.bf16.msra.mxu0 %v7463
        %10269 = vmatprep.subr.bf16.mxu0 %v7460
        %10270 = vmatpush1.bf16.msra.mxu0 %v7459
        %10271 = vmatprep.subr.bf16.mxu0 %v7456
        %10272 = vmatpush1.bf16.msra.mxu0 %v7455
        %10273 = vmatprep.subr.bf16.mxu0 %v7516
        %10274 = vmatpush2.bf16.msra.mxu0 %v7515
        %10275 = vmatprep.subr.bf16.mxu0 %v7512
        %10276 = vmatpush2.bf16.msra.mxu0 %v7511
        %10277 = vmatprep.subr.bf16.mxu0 %v7508
        %10278 = vmatpush2.bf16.msra.mxu0 %v7507
        %10279 = vmatprep.subr.bf16.mxu0 %v7504
        %10280 = vmatpush2.bf16.msra.mxu0 %v7503
        %10281 = vmatprep.subr.bf16.mxu0 %v7500
        %10282 = vmatpush2.bf16.msra.mxu0 %v7499
        %10283 = vmatprep.subr.bf16.mxu0 %v7496
        %10284 = vmatpush2.bf16.msra.mxu0 %v7495
        %10285 = vmatprep.subr.bf16.mxu0 %v7492
        %10286 = vmatpush2.bf16.msra.mxu0 %v7491
        %10287 = vmatprep.subr.bf16.mxu0 %v7488
        %10288 = vmatpush2.bf16.msra.mxu0 %v7487
        %10289 = vmatprep.mubr.bf16.mxu0 %v4274
        %10290 = vmatmul.mubr.bf16.gmra.mxu0 %v4273
        %v10291 = vpop.f32.mrf.mxu0
        %v10292 = vadd.f32 %v10219, %v10291
        %v10293 = vpop.f32.mrf.mxu0
        %v10294 = vadd.f32 %v10221, %v10293
        %v10295 = vpop.f32.mrf.mxu0
        %v10296 = vadd.f32 %v10223, %v10295
        %v10297 = vpop.f32.mrf.mxu0
        %v10298 = vadd.f32 %v10225, %v10297
        %10299 = vmatprep.mubr.bf16.mxu0 %v4301
        %10300 = vmatmul.mubr.bf16.gmra.mxu0 %v4300
        %v10301 = vpop.f32.mrf.mxu0
        %v10302 = vadd.f32 %v10229, %v10301
        %v10303 = vpop.f32.mrf.mxu0
        %v10304 = vadd.f32 %v10231, %v10303
        %v10305 = vpop.f32.mrf.mxu0
        %v10306 = vadd.f32 %v10233, %v10305
        %v10307 = vpop.f32.mrf.mxu0
        %v10308 = vadd.f32 %v10235, %v10307
        %10309 = vmatprep.mubr.bf16.mxu0 %v4328
        %10310 = vmatmul.mubr.bf16.gmra.mxu0 %v4327
        %v10311 = vpop.f32.mrf.mxu0
        %v10312 = vadd.f32 %v10239, %v10311
        %v10313 = vpop.f32.mrf.mxu0
        %v10314 = vadd.f32 %v10241, %v10313
        %v10315 = vpop.f32.mrf.mxu0
        %v10316 = vadd.f32 %v10243, %v10315
        %v10317 = vpop.f32.mrf.mxu0
        %v10318 = vadd.f32 %v10245, %v10317
        %10319 = vmatprep.mubr.bf16.mxu0 %v4355
        %10320 = vmatmul.mubr.bf16.gmra.mxu0 %v4354
        %v10321 = vpop.f32.mrf.mxu0
        %v10322 = vadd.f32 %v10249, %v10321
        %v10323 = vpop.f32.mrf.mxu0
        %v10324 = vadd.f32 %v10251, %v10323
        %v10325 = vpop.f32.mrf.mxu0
        %v10326 = vadd.f32 %v10253, %v10325
        %v10327 = vpop.f32.mrf.mxu0
        %v10328 = vadd.f32 %v10255, %v10327
        %10329 = vdwg.mxu0
        %10330 = vmatprep.subr.bf16.mxu0 %v7548
        %10331 = vmatpush1.bf16.msra.mxu0 %v7547
        %10332 = vmatprep.subr.bf16.mxu0 %v7544
        %10333 = vmatpush1.bf16.msra.mxu0 %v7543
        %10334 = vmatprep.subr.bf16.mxu0 %v7540
        %10335 = vmatpush1.bf16.msra.mxu0 %v7539
        %10336 = vmatprep.subr.bf16.mxu0 %v7536
        %10337 = vmatpush1.bf16.msra.mxu0 %v7535
        %10338 = vmatprep.subr.bf16.mxu0 %v7532
        %10339 = vmatpush1.bf16.msra.mxu0 %v7531
        %10340 = vmatprep.subr.bf16.mxu0 %v7528
        %10341 = vmatpush1.bf16.msra.mxu0 %v7527
        %10342 = vmatprep.subr.bf16.mxu0 %v7524
        %10343 = vmatpush1.bf16.msra.mxu0 %v7523
        %10344 = vmatprep.subr.bf16.mxu0 %v7520
        %10345 = vmatpush1.bf16.msra.mxu0 %v7519
        %10346 = vmatprep.subr.bf16.mxu0 %v7580
        %10347 = vmatpush2.bf16.msra.mxu0 %v7579
        %10348 = vmatprep.subr.bf16.mxu0 %v7576
        %10349 = vmatpush2.bf16.msra.mxu0 %v7575
        %10350 = vmatprep.subr.bf16.mxu0 %v7572
        %10351 = vmatpush2.bf16.msra.mxu0 %v7571
        %10352 = vmatprep.subr.bf16.mxu0 %v7568
        %10353 = vmatpush2.bf16.msra.mxu0 %v7567
        %10354 = vmatprep.subr.bf16.mxu0 %v7564
        %10355 = vmatpush2.bf16.msra.mxu0 %v7563
        %10356 = vmatprep.subr.bf16.mxu0 %v7560
        %10357 = vmatpush2.bf16.msra.mxu0 %v7559
        %10358 = vmatprep.subr.bf16.mxu0 %v7556
        %10359 = vmatpush2.bf16.msra.mxu0 %v7555
        %10360 = vmatprep.subr.bf16.mxu0 %v7552
        %10361 = vmatpush2.bf16.msra.mxu0 %v7551
        %10362 = vmatprep.mubr.bf16.mxu0 %v4276
        %10363 = vmatmul.mubr.bf16.gmra.mxu0 %v4275
        %v10364 = vpop.f32.mrf.mxu0
        %v10365 = vadd.f32 %v10292, %v10364
        %v10366 = vpop.f32.mrf.mxu0
        %v10367 = vadd.f32 %v10294, %v10366
        %v10368 = vpop.f32.mrf.mxu0
        %v10369 = vadd.f32 %v10296, %v10368
        %v10370 = vpop.f32.mrf.mxu0
        %v10371 = vadd.f32 %v10298, %v10370
        %10372 = vmatprep.mubr.bf16.mxu0 %v4303
        %10373 = vmatmul.mubr.bf16.gmra.mxu0 %v4302
        %v10374 = vpop.f32.mrf.mxu0
        %v10375 = vadd.f32 %v10302, %v10374
        %v10376 = vpop.f32.mrf.mxu0
        %v10377 = vadd.f32 %v10304, %v10376
        %v10378 = vpop.f32.mrf.mxu0
        %v10379 = vadd.f32 %v10306, %v10378
        %v10380 = vpop.f32.mrf.mxu0
        %v10381 = vadd.f32 %v10308, %v10380
        %10382 = vmatprep.mubr.bf16.mxu0 %v4330
        %10383 = vmatmul.mubr.bf16.gmra.mxu0 %v4329
        %v10384 = vpop.f32.mrf.mxu0
        %v10385 = vadd.f32 %v10312, %v10384
        %v10386 = vpop.f32.mrf.mxu0
        %v10387 = vadd.f32 %v10314, %v10386
        %v10388 = vpop.f32.mrf.mxu0
        %v10389 = vadd.f32 %v10316, %v10388
        %v10390 = vpop.f32.mrf.mxu0
        %v10391 = vadd.f32 %v10318, %v10390
        %10392 = vmatprep.mubr.bf16.mxu0 %v4357
        %10393 = vmatmul.mubr.bf16.gmra.mxu0 %v4356
        %v10394 = vpop.f32.mrf.mxu0
        %v10395 = vadd.f32 %v10322, %v10394
        %v10396 = vpop.f32.mrf.mxu0
        %v10397 = vadd.f32 %v10324, %v10396
        %v10398 = vpop.f32.mrf.mxu0
        %v10399 = vadd.f32 %v10326, %v10398
        %v10400 = vpop.f32.mrf.mxu0
        %v10401 = vadd.f32 %v10328, %v10400
        %10402 = vdwg.mxu0
        %10403 = vmatprep.subr.bf16.mxu0 %v7612
        %10404 = vmatpush1.bf16.msra.mxu0 %v7611
        %10405 = vmatprep.subr.bf16.mxu0 %v7608
        %10406 = vmatpush1.bf16.msra.mxu0 %v7607
        %10407 = vmatprep.subr.bf16.mxu0 %v7604
        %10408 = vmatpush1.bf16.msra.mxu0 %v7603
        %10409 = vmatprep.subr.bf16.mxu0 %v7600
        %10410 = vmatpush1.bf16.msra.mxu0 %v7599
        %10411 = vmatprep.subr.bf16.mxu0 %v7596
        %10412 = vmatpush1.bf16.msra.mxu0 %v7595
        %10413 = vmatprep.subr.bf16.mxu0 %v7592
        %10414 = vmatpush1.bf16.msra.mxu0 %v7591
        %10415 = vmatprep.subr.bf16.mxu0 %v7588
        %10416 = vmatpush1.bf16.msra.mxu0 %v7587
        %10417 = vmatprep.subr.bf16.mxu0 %v7584
        %10418 = vmatpush1.bf16.msra.mxu0 %v7583
        %10419 = vmatprep.subr.bf16.mxu0 %v7644
        %10420 = vmatpush2.bf16.msra.mxu0 %v7643
        %10421 = vmatprep.subr.bf16.mxu0 %v7640
        %10422 = vmatpush2.bf16.msra.mxu0 %v7639
        %10423 = vmatprep.subr.bf16.mxu0 %v7636
        %10424 = vmatpush2.bf16.msra.mxu0 %v7635
        %10425 = vmatprep.subr.bf16.mxu0 %v7632
        %10426 = vmatpush2.bf16.msra.mxu0 %v7631
        %10427 = vmatprep.subr.bf16.mxu0 %v7628
        %10428 = vmatpush2.bf16.msra.mxu0 %v7627
        %10429 = vmatprep.subr.bf16.mxu0 %v7624
        %10430 = vmatpush2.bf16.msra.mxu0 %v7623
        %10431 = vmatprep.subr.bf16.mxu0 %v7620
        %10432 = vmatpush2.bf16.msra.mxu0 %v7619
        %10433 = vmatprep.subr.bf16.mxu0 %v7616
        %10434 = vmatpush2.bf16.msra.mxu0 %v7615
        %10435 = vmatprep.mubr.bf16.mxu0 %v4278
        %10436 = vmatmul.mubr.bf16.gmra.mxu0 %v4277
        %v10437 = vpop.f32.mrf.mxu0
        %v10438 = vadd.f32 %v10365, %v10437
        %v10439 = vpop.f32.mrf.mxu0
        %v10440 = vadd.f32 %v10367, %v10439
        %v10441 = vpop.f32.mrf.mxu0
        %v10442 = vadd.f32 %v10369, %v10441
        %v10443 = vpop.f32.mrf.mxu0
        %v10444 = vadd.f32 %v10371, %v10443
        %10445 = vmatprep.mubr.bf16.mxu0 %v4305
        %10446 = vmatmul.mubr.bf16.gmra.mxu0 %v4304
        %v10447 = vpop.f32.mrf.mxu0
        %v10448 = vadd.f32 %v10375, %v10447
        %v10449 = vpop.f32.mrf.mxu0
        %v10450 = vadd.f32 %v10377, %v10449
        %v10451 = vpop.f32.mrf.mxu0
        %v10452 = vadd.f32 %v10379, %v10451
        %v10453 = vpop.f32.mrf.mxu0
        %v10454 = vadd.f32 %v10381, %v10453
        %10455 = vmatprep.mubr.bf16.mxu0 %v4332
        %10456 = vmatmul.mubr.bf16.gmra.mxu0 %v4331
        %v10457 = vpop.f32.mrf.mxu0
        %v10458 = vadd.f32 %v10385, %v10457
        %v10459 = vpop.f32.mrf.mxu0
        %v10460 = vadd.f32 %v10387, %v10459
        %v10461 = vpop.f32.mrf.mxu0
        %v10462 = vadd.f32 %v10389, %v10461
        %v10463 = vpop.f32.mrf.mxu0
        %v10464 = vadd.f32 %v10391, %v10463
        %10465 = vmatprep.mubr.bf16.mxu0 %v4359
        %10466 = vmatmul.mubr.bf16.gmra.mxu0 %v4358
        %v10467 = vpop.f32.mrf.mxu0
        %v10468 = vadd.f32 %v10395, %v10467
        %v10469 = vpop.f32.mrf.mxu0
        %v10470 = vadd.f32 %v10397, %v10469
        %v10471 = vpop.f32.mrf.mxu0
        %v10472 = vadd.f32 %v10399, %v10471
        %v10473 = vpop.f32.mrf.mxu0
        %v10474 = vadd.f32 %v10401, %v10473
        %10475 = vdwg.mxu0
        %10476 = vmatprep.subr.bf16.mxu0 %v7676
        %10477 = vmatpush1.bf16.msra.mxu0 %v7675
        %10478 = vmatprep.subr.bf16.mxu0 %v7672
        %10479 = vmatpush1.bf16.msra.mxu0 %v7671
        %10480 = vmatprep.subr.bf16.mxu0 %v7668
        %10481 = vmatpush1.bf16.msra.mxu0 %v7667
        %10482 = vmatprep.subr.bf16.mxu0 %v7664
        %10483 = vmatpush1.bf16.msra.mxu0 %v7663
        %10484 = vmatprep.subr.bf16.mxu0 %v7660
        %10485 = vmatpush1.bf16.msra.mxu0 %v7659
        %10486 = vmatprep.subr.bf16.mxu0 %v7656
        %10487 = vmatpush1.bf16.msra.mxu0 %v7655
        %10488 = vmatprep.subr.bf16.mxu0 %v7652
        %10489 = vmatpush1.bf16.msra.mxu0 %v7651
        %10490 = vmatprep.subr.bf16.mxu0 %v7648
        %10491 = vmatpush1.bf16.msra.mxu0 %v7647
        %10492 = vmatprep.subr.bf16.mxu0 %v7708
        %10493 = vmatpush2.bf16.msra.mxu0 %v7707
        %10494 = vmatprep.subr.bf16.mxu0 %v7704
        %10495 = vmatpush2.bf16.msra.mxu0 %v7703
        %10496 = vmatprep.subr.bf16.mxu0 %v7700
        %10497 = vmatpush2.bf16.msra.mxu0 %v7699
        %10498 = vmatprep.subr.bf16.mxu0 %v7696
        %10499 = vmatpush2.bf16.msra.mxu0 %v7695
        %10500 = vmatprep.subr.bf16.mxu0 %v7692
        %10501 = vmatpush2.bf16.msra.mxu0 %v7691
        %10502 = vmatprep.subr.bf16.mxu0 %v7688
        %10503 = vmatpush2.bf16.msra.mxu0 %v7687
        %10504 = vmatprep.subr.bf16.mxu0 %v7684
        %10505 = vmatpush2.bf16.msra.mxu0 %v7683
        %10506 = vmatprep.subr.bf16.mxu0 %v7680
        %10507 = vmatpush2.bf16.msra.mxu0 %v7679
        %10508 = vmatprep.mubr.bf16.mxu0 %v4280
        %10509 = vmatmul.mubr.bf16.gmra.mxu0 %v4279
        %v10510 = vpop.f32.mrf.mxu0
        %v10511 = vadd.f32 %v10438, %v10510
        %v10512 = vpop.f32.mrf.mxu0
        %v10513 = vadd.f32 %v10440, %v10512
        %v10514 = vpop.f32.mrf.mxu0
        %v10515 = vadd.f32 %v10442, %v10514
        %v10516 = vpop.f32.mrf.mxu0
        %v10517 = vadd.f32 %v10444, %v10516
        %10518 = vmatprep.mubr.bf16.mxu0 %v4307
        %10519 = vmatmul.mubr.bf16.gmra.mxu0 %v4306
        %v10520 = vpop.f32.mrf.mxu0
        %v10521 = vadd.f32 %v10448, %v10520
        %v10522 = vpop.f32.mrf.mxu0
        %v10523 = vadd.f32 %v10450, %v10522
        %v10524 = vpop.f32.mrf.mxu0
        %v10525 = vadd.f32 %v10452, %v10524
        %v10526 = vpop.f32.mrf.mxu0
        %v10527 = vadd.f32 %v10454, %v10526
        %10528 = vmatprep.mubr.bf16.mxu0 %v4334
        %10529 = vmatmul.mubr.bf16.gmra.mxu0 %v4333
        %v10530 = vpop.f32.mrf.mxu0
        %v10531 = vadd.f32 %v10458, %v10530
        %v10532 = vpop.f32.mrf.mxu0
        %v10533 = vadd.f32 %v10460, %v10532
        %v10534 = vpop.f32.mrf.mxu0
        %v10535 = vadd.f32 %v10462, %v10534
        %v10536 = vpop.f32.mrf.mxu0
        %v10537 = vadd.f32 %v10464, %v10536
        %10538 = vmatprep.mubr.bf16.mxu0 %v4361
        %10539 = vmatmul.mubr.bf16.gmra.mxu0 %v4360
        %v10540 = vpop.f32.mrf.mxu0
        %v10541 = vadd.f32 %v10468, %v10540
        %v10542 = vpop.f32.mrf.mxu0
        %v10543 = vadd.f32 %v10470, %v10542
        %v10544 = vpop.f32.mrf.mxu0
        %v10545 = vadd.f32 %v10472, %v10544
        %v10546 = vpop.f32.mrf.mxu0
        %v10547 = vadd.f32 %v10474, %v10546
        %10548 = vdwg.mxu0
        %10549 = vmatprep.subr.bf16.mxu0 %v7740
        %10550 = vmatpush1.bf16.msra.mxu0 %v7739
        %10551 = vmatprep.subr.bf16.mxu0 %v7736
        %10552 = vmatpush1.bf16.msra.mxu0 %v7735
        %10553 = vmatprep.subr.bf16.mxu0 %v7732
        %10554 = vmatpush1.bf16.msra.mxu0 %v7731
        %10555 = vmatprep.subr.bf16.mxu0 %v7728
        %10556 = vmatpush1.bf16.msra.mxu0 %v7727
        %10557 = vmatprep.subr.bf16.mxu0 %v7724
        %10558 = vmatpush1.bf16.msra.mxu0 %v7723
        %10559 = vmatprep.subr.bf16.mxu0 %v7720
        %10560 = vmatpush1.bf16.msra.mxu0 %v7719
        %10561 = vmatprep.subr.bf16.mxu0 %v7716
        %10562 = vmatpush1.bf16.msra.mxu0 %v7715
        %10563 = vmatprep.subr.bf16.mxu0 %v7712
        %10564 = vmatpush1.bf16.msra.mxu0 %v7711
        %10565 = vmatprep.subr.bf16.mxu0 %v7772
        %10566 = vmatpush2.bf16.msra.mxu0 %v7771
        %10567 = vmatprep.subr.bf16.mxu0 %v7768
        %10568 = vmatpush2.bf16.msra.mxu0 %v7767
        %10569 = vmatprep.subr.bf16.mxu0 %v7764
        %10570 = vmatpush2.bf16.msra.mxu0 %v7763
        %10571 = vmatprep.subr.bf16.mxu0 %v7760
        %10572 = vmatpush2.bf16.msra.mxu0 %v7759
        %10573 = vmatprep.subr.bf16.mxu0 %v7756
        %10574 = vmatpush2.bf16.msra.mxu0 %v7755
        %10575 = vmatprep.subr.bf16.mxu0 %v7752
        %10576 = vmatpush2.bf16.msra.mxu0 %v7751
        %10577 = vmatprep.subr.bf16.mxu0 %v7748
        %10578 = vmatpush2.bf16.msra.mxu0 %v7747
        %10579 = vmatprep.subr.bf16.mxu0 %v7744
        %10580 = vmatpush2.bf16.msra.mxu0 %v7743
        %10581 = vmatprep.mubr.bf16.mxu0 %v4282
        %10582 = vmatmul.mubr.bf16.gmra.mxu0 %v4281
        %v10583 = vpop.f32.mrf.mxu0
        %v10584 = vadd.f32 %v10511, %v10583
        %v10585 = vpop.f32.mrf.mxu0
        %v10586 = vadd.f32 %v10513, %v10585
        %v10587 = vpop.f32.mrf.mxu0
        %v10588 = vadd.f32 %v10515, %v10587
        %v10589 = vpop.f32.mrf.mxu0
        %v10590 = vadd.f32 %v10517, %v10589
        %10591 = vmatprep.mubr.bf16.mxu0 %v4309
        %10592 = vmatmul.mubr.bf16.gmra.mxu0 %v4308
        %v10593 = vpop.f32.mrf.mxu0
        %v10594 = vadd.f32 %v10521, %v10593
        %v10595 = vpop.f32.mrf.mxu0
        %v10596 = vadd.f32 %v10523, %v10595
        %v10597 = vpop.f32.mrf.mxu0
        %v10598 = vadd.f32 %v10525, %v10597
        %v10599 = vpop.f32.mrf.mxu0
        %v10600 = vadd.f32 %v10527, %v10599
        %10601 = vmatprep.mubr.bf16.mxu0 %v4336
        %10602 = vmatmul.mubr.bf16.gmra.mxu0 %v4335
        %v10603 = vpop.f32.mrf.mxu0
        %v10604 = vadd.f32 %v10531, %v10603
        %v10605 = vpop.f32.mrf.mxu0
        %v10606 = vadd.f32 %v10533, %v10605
        %v10607 = vpop.f32.mrf.mxu0
        %v10608 = vadd.f32 %v10535, %v10607
        %v10609 = vpop.f32.mrf.mxu0
        %v10610 = vadd.f32 %v10537, %v10609
        %10611 = vmatprep.mubr.bf16.mxu0 %v4363
        %10612 = vmatmul.mubr.bf16.gmra.mxu0 %v4362
        %v10613 = vpop.f32.mrf.mxu0
        %v10614 = vadd.f32 %v10541, %v10613
        %v10615 = vpop.f32.mrf.mxu0
        %v10616 = vadd.f32 %v10543, %v10615
        %v10617 = vpop.f32.mrf.mxu0
        %v10618 = vadd.f32 %v10545, %v10617
        %v10619 = vpop.f32.mrf.mxu0
        %v10620 = vadd.f32 %v10547, %v10619
        %10621 = vdwg.mxu0
        %10622 = vmatprep.subr.bf16.mxu0 %v7804
        %10623 = vmatpush1.bf16.msra.mxu0 %v7803
        %10624 = vmatprep.subr.bf16.mxu0 %v7800
        %10625 = vmatpush1.bf16.msra.mxu0 %v7799
        %10626 = vmatprep.subr.bf16.mxu0 %v7796
        %10627 = vmatpush1.bf16.msra.mxu0 %v7795
        %10628 = vmatprep.subr.bf16.mxu0 %v7792
        %10629 = vmatpush1.bf16.msra.mxu0 %v7791
        %10630 = vmatprep.subr.bf16.mxu0 %v7788
        %10631 = vmatpush1.bf16.msra.mxu0 %v7787
        %10632 = vmatprep.subr.bf16.mxu0 %v7784
        %10633 = vmatpush1.bf16.msra.mxu0 %v7783
        %10634 = vmatprep.subr.bf16.mxu0 %v7780
        %10635 = vmatpush1.bf16.msra.mxu0 %v7779
        %10636 = vmatprep.subr.bf16.mxu0 %v7776
        %10637 = vmatpush1.bf16.msra.mxu0 %v7775
        %10638 = vmatprep.subr.bf16.mxu0 %v7836
        %10639 = vmatpush2.bf16.msra.mxu0 %v7835
        %10640 = vmatprep.subr.bf16.mxu0 %v7832
        %10641 = vmatpush2.bf16.msra.mxu0 %v7831
        %10642 = vmatprep.subr.bf16.mxu0 %v7828
        %10643 = vmatpush2.bf16.msra.mxu0 %v7827
        %10644 = vmatprep.subr.bf16.mxu0 %v7824
        %10645 = vmatpush2.bf16.msra.mxu0 %v7823
        %10646 = vmatprep.subr.bf16.mxu0 %v7820
        %10647 = vmatpush2.bf16.msra.mxu0 %v7819
        %10648 = vmatprep.subr.bf16.mxu0 %v7816
        %10649 = vmatpush2.bf16.msra.mxu0 %v7815
        %10650 = vmatprep.subr.bf16.mxu0 %v7812
        %10651 = vmatpush2.bf16.msra.mxu0 %v7811
        %10652 = vmatprep.subr.bf16.mxu0 %v7808
        %10653 = vmatpush2.bf16.msra.mxu0 %v7807
        %10654 = vmatprep.mubr.bf16.mxu0 %v4284
        %10655 = vmatmul.mubr.bf16.gmra.mxu0 %v4283
        %v10656 = vpop.f32.mrf.mxu0
        %v10657 = vadd.f32 %v10584, %v10656
        %v10658 = vpop.f32.mrf.mxu0
        %v10659 = vadd.f32 %v10586, %v10658
        %v10660 = vpop.f32.mrf.mxu0
        %v10661 = vadd.f32 %v10588, %v10660
        %v10662 = vpop.f32.mrf.mxu0
        %v10663 = vadd.f32 %v10590, %v10662
        %10664 = vmatprep.mubr.bf16.mxu0 %v4311
        %10665 = vmatmul.mubr.bf16.gmra.mxu0 %v4310
        %v10666 = vpop.f32.mrf.mxu0
        %v10667 = vadd.f32 %v10594, %v10666
        %v10668 = vpop.f32.mrf.mxu0
        %v10669 = vadd.f32 %v10596, %v10668
        %v10670 = vpop.f32.mrf.mxu0
        %v10671 = vadd.f32 %v10598, %v10670
        %v10672 = vpop.f32.mrf.mxu0
        %v10673 = vadd.f32 %v10600, %v10672
        %10674 = vmatprep.mubr.bf16.mxu0 %v4338
        %10675 = vmatmul.mubr.bf16.gmra.mxu0 %v4337
        %v10676 = vpop.f32.mrf.mxu0
        %v10677 = vadd.f32 %v10604, %v10676
        %v10678 = vpop.f32.mrf.mxu0
        %v10679 = vadd.f32 %v10606, %v10678
        %v10680 = vpop.f32.mrf.mxu0
        %v10681 = vadd.f32 %v10608, %v10680
        %v10682 = vpop.f32.mrf.mxu0
        %v10683 = vadd.f32 %v10610, %v10682
        %10684 = vmatprep.mubr.bf16.mxu0 %v4365
        %10685 = vmatmul.mubr.bf16.gmra.mxu0 %v4364
        %v10686 = vpop.f32.mrf.mxu0
        %v10687 = vadd.f32 %v10614, %v10686
        %v10688 = vpop.f32.mrf.mxu0
        %v10689 = vadd.f32 %v10616, %v10688
        %v10690 = vpop.f32.mrf.mxu0
        %v10691 = vadd.f32 %v10618, %v10690
        %v10692 = vpop.f32.mrf.mxu0
        %v10693 = vadd.f32 %v10620, %v10692
        %10694 = vdwg.mxu0
        %10695 = vmatprep.subr.bf16.mxu0 %v7868
        %10696 = vmatpush1.bf16.msra.mxu0 %v7867
        %10697 = vmatprep.subr.bf16.mxu0 %v7864
        %10698 = vmatpush1.bf16.msra.mxu0 %v7863
        %10699 = vmatprep.subr.bf16.mxu0 %v7860
        %10700 = vmatpush1.bf16.msra.mxu0 %v7859
        %10701 = vmatprep.subr.bf16.mxu0 %v7856
        %10702 = vmatpush1.bf16.msra.mxu0 %v7855
        %10703 = vmatprep.subr.bf16.mxu0 %v7852
        %10704 = vmatpush1.bf16.msra.mxu0 %v7851
        %10705 = vmatprep.subr.bf16.mxu0 %v7848
        %10706 = vmatpush1.bf16.msra.mxu0 %v7847
        %10707 = vmatprep.subr.bf16.mxu0 %v7844
        %10708 = vmatpush1.bf16.msra.mxu0 %v7843
        %10709 = vmatprep.subr.bf16.mxu0 %v7840
        %10710 = vmatpush1.bf16.msra.mxu0 %v7839
        %10711 = vmatprep.subr.bf16.mxu0 %v7900
        %10712 = vmatpush2.bf16.msra.mxu0 %v7899
        %10713 = vmatprep.subr.bf16.mxu0 %v7896
        %10714 = vmatpush2.bf16.msra.mxu0 %v7895
        %10715 = vmatprep.subr.bf16.mxu0 %v7892
        %10716 = vmatpush2.bf16.msra.mxu0 %v7891
        %10717 = vmatprep.subr.bf16.mxu0 %v7888
        %10718 = vmatpush2.bf16.msra.mxu0 %v7887
        %10719 = vmatprep.subr.bf16.mxu0 %v7884
        %10720 = vmatpush2.bf16.msra.mxu0 %v7883
        %10721 = vmatprep.subr.bf16.mxu0 %v7880
        %10722 = vmatpush2.bf16.msra.mxu0 %v7879
        %10723 = vmatprep.subr.bf16.mxu0 %v7876
        %10724 = vmatpush2.bf16.msra.mxu0 %v7875
        %10725 = vmatprep.subr.bf16.mxu0 %v7872
        %10726 = vmatpush2.bf16.msra.mxu0 %v7871
        %10727 = vmatprep.mubr.bf16.mxu0 %v4286
        %10728 = vmatmul.mubr.bf16.gmra.mxu0 %v4285
        %v10729 = vpop.f32.mrf.mxu0
        %v10730 = vadd.f32 %v10657, %v10729
        %v10731 = vpop.f32.mrf.mxu0
        %v10732 = vadd.f32 %v10659, %v10731
        %v10733 = vpop.f32.mrf.mxu0
        %v10734 = vadd.f32 %v10661, %v10733
        %v10735 = vpop.f32.mrf.mxu0
        %v10736 = vadd.f32 %v10663, %v10735
        %10737 = vmatprep.mubr.bf16.mxu0 %v4313
        %10738 = vmatmul.mubr.bf16.gmra.mxu0 %v4312
        %v10739 = vpop.f32.mrf.mxu0
        %v10740 = vadd.f32 %v10667, %v10739
        %v10741 = vpop.f32.mrf.mxu0
        %v10742 = vadd.f32 %v10669, %v10741
        %v10743 = vpop.f32.mrf.mxu0
        %v10744 = vadd.f32 %v10671, %v10743
        %v10745 = vpop.f32.mrf.mxu0
        %v10746 = vadd.f32 %v10673, %v10745
        %10747 = vmatprep.mubr.bf16.mxu0 %v4340
        %10748 = vmatmul.mubr.bf16.gmra.mxu0 %v4339
        %v10749 = vpop.f32.mrf.mxu0
        %v10750 = vadd.f32 %v10677, %v10749
        %v10751 = vpop.f32.mrf.mxu0
        %v10752 = vadd.f32 %v10679, %v10751
        %v10753 = vpop.f32.mrf.mxu0
        %v10754 = vadd.f32 %v10681, %v10753
        %v10755 = vpop.f32.mrf.mxu0
        %v10756 = vadd.f32 %v10683, %v10755
        %10757 = vmatprep.mubr.bf16.mxu0 %v4367
        %10758 = vmatmul.mubr.bf16.gmra.mxu0 %v4366
        %v10759 = vpop.f32.mrf.mxu0
        %v10760 = vadd.f32 %v10687, %v10759
        %v10761 = vpop.f32.mrf.mxu0
        %v10762 = vadd.f32 %v10689, %v10761
        %v10763 = vpop.f32.mrf.mxu0
        %v10764 = vadd.f32 %v10691, %v10763
        %v10765 = vpop.f32.mrf.mxu0
        %v10766 = vadd.f32 %v10693, %v10765
        %10767 = vdwg.mxu0
        %10768 = vmatprep.subr.bf16.mxu0 %v7932
        %10769 = vmatpush1.bf16.msra.mxu0 %v7931
        %10770 = vmatprep.subr.bf16.mxu0 %v7928
        %10771 = vmatpush1.bf16.msra.mxu0 %v7927
        %10772 = vmatprep.subr.bf16.mxu0 %v7924
        %10773 = vmatpush1.bf16.msra.mxu0 %v7923
        %10774 = vmatprep.subr.bf16.mxu0 %v7920
        %10775 = vmatpush1.bf16.msra.mxu0 %v7919
        %10776 = vmatprep.subr.bf16.mxu0 %v7916
        %10777 = vmatpush1.bf16.msra.mxu0 %v7915
        %10778 = vmatprep.subr.bf16.mxu0 %v7912
        %10779 = vmatpush1.bf16.msra.mxu0 %v7911
        %10780 = vmatprep.subr.bf16.mxu0 %v7908
        %10781 = vmatpush1.bf16.msra.mxu0 %v7907
        %10782 = vmatprep.subr.bf16.mxu0 %v7904
        %10783 = vmatpush1.bf16.msra.mxu0 %v7903
        %10784 = vmatprep.subr.bf16.mxu0 0
        %10785 = vmatpush2.bf16.msra.mxu0 0
        %10786 = vmatprep.subr.bf16.mxu0 0
        %10787 = vmatpush2.bf16.msra.mxu0 0
        %10788 = vmatprep.subr.bf16.mxu0 0
        %10789 = vmatpush2.bf16.msra.mxu0 0
        %10790 = vmatprep.subr.bf16.mxu0 0
        %10791 = vmatpush2.bf16.msra.mxu0 0
        %10792 = vmatprep.subr.bf16.mxu0 0
        %10793 = vmatpush2.bf16.msra.mxu0 0
        %10794 = vmatprep.subr.bf16.mxu0 0
        %10795 = vmatpush2.bf16.msra.mxu0 0
        %10796 = vmatprep.subr.bf16.mxu0 0
        %10797 = vmatpush2.bf16.msra.mxu0 0
        %10798 = vmatprep.subr.bf16.mxu0 0
        %10799 = vmatpush2.bf16.msra.mxu0 0
        %10800 = vmatprep.mubr.bf16.mxu0 0
        %10801 = vmatmul.mubr.bf16.gmra.mxu0 %v4287
        %v10802 = vpop.f32.mrf.mxu0
        %v10803 = vadd.f32 %v10730, %v10802
        %v10804 = vpop.f32.mrf.mxu0
        %v10805 = vadd.f32 %v10732, %v10804
        %v10806 = vpop.f32.mrf.mxu0
        %v10807 = vadd.f32 %v10734, %v10806
        %v10808 = vpop.f32.mrf.mxu0
        %v10809 = vadd.f32 %v10736, %v10808
        %10810 = vmatprep.mubr.bf16.mxu0 0
        %10811 = vmatmul.mubr.bf16.gmra.mxu0 %v4314
        %v10812 = vpop.f32.mrf.mxu0
        %v10813 = vadd.f32 %v10740, %v10812
        %v10814 = vpop.f32.mrf.mxu0
        %v10815 = vadd.f32 %v10742, %v10814
        %v10816 = vpop.f32.mrf.mxu0
        %v10817 = vadd.f32 %v10744, %v10816
        %v10818 = vpop.f32.mrf.mxu0
        %v10819 = vadd.f32 %v10746, %v10818
        %10820 = vmatprep.mubr.bf16.mxu0 0
        %10821 = vmatmul.mubr.bf16.gmra.mxu0 %v4341
        %v10822 = vpop.f32.mrf.mxu0
        %v10823 = vadd.f32 %v10750, %v10822
        %v10824 = vpop.f32.mrf.mxu0
        %v10825 = vadd.f32 %v10752, %v10824
        %v10826 = vpop.f32.mrf.mxu0
        %v10827 = vadd.f32 %v10754, %v10826
        %v10828 = vpop.f32.mrf.mxu0
        %v10829 = vadd.f32 %v10756, %v10828
        %10830 = vmatprep.mubr.bf16.mxu0 0
        %10831 = vmatmul.mubr.bf16.gmra.mxu0 %v4368
        %v10832 = vpop.f32.mrf.mxu0
        %v10833 = vadd.f32 %v10760, %v10832
        %v10834 = vpop.f32.mrf.mxu0
        %v10835 = vadd.f32 %v10762, %v10834
        %v10836 = vpop.f32.mrf.mxu0
        %v10837 = vadd.f32 %v10764, %v10836
        %v10838 = vpop.f32.mrf.mxu0
        %v10839 = vadd.f32 %v10766, %v10838
        %10840 = vdwg.mxu0
        %v10841 = vmax.f32 %v9781, 0.0
        %v10842 = vmax.f32 %v9783, 0.0
        %v10843 = vmax.f32 %v10803, 0.0
        %v10844 = vmax.f32 %v10805, 0.0
        %v10845 = vmax.f32 %v9785, 0.0
        %v10846 = vmax.f32 %v9787, 0.0
        %v10847 = vmax.f32 %v10807, 0.0
        %v10848 = vmax.f32 %v10809, 0.0
        %v10849 = vmax.f32 %v9791, 0.0
        %v10850 = vmax.f32 %v9793, 0.0
        %v10851 = vmax.f32 %v10813, 0.0
        %v10852 = vmax.f32 %v10815, 0.0
        %v10853 = vmax.f32 %v9795, 0.0
        %v10854 = vmax.f32 %v9797, 0.0
        %v10855 = vmax.f32 %v10817, 0.0
        %v10856 = vmax.f32 %v10819, 0.0
        %v10857 = vmax.f32 %v9801, 0.0
        %v10858 = vmax.f32 %v9803, 0.0
        %v10859 = vmax.f32 %v10823, 0.0
        %v10860 = vmax.f32 %v10825, 0.0
        %v10861 = vmax.f32 %v9805, 0.0
        %v10862 = vmax.f32 %v9807, 0.0
        %v10863 = vmax.f32 %v10827, 0.0
        %v10864 = vmax.f32 %v10829, 0.0
        %v10865 = vmax.f32 %v9811, 0.0
        %v10866 = vmax.f32 %v9813, 0.0
        %v10867 = vmax.f32 %v10833, 0.0
        %v10868 = vmax.f32 %v10835, 0.0
        %v10869 = vmax.f32 %v9815, 0.0
        %v10870 = vmax.f32 %v9817, 0.0
        %v10871 = vmax.f32 %v10837, 0.0
        %v10872 = vmax.f32 %v10839, 0.0
        %v10873 = vpack.c.bf16 %v10845, %v10841
        %v10874 = vpack.c.bf16 %v10846, %v10842
        %v10875 = vpack.c.bf16 %v10847, %v10843
        %v10876 = vpack.c.bf16 %v10848, %v10844
        %v10877 = vpack.c.bf16 %v10853, %v10849
        %v10878 = vpack.c.bf16 %v10854, %v10850
        %v10879 = vpack.c.bf16 %v10855, %v10851
        %v10880 = vpack.c.bf16 %v10856, %v10852
        %v10881 = vpack.c.bf16 %v10861, %v10857
        %v10882 = vpack.c.bf16 %v10862, %v10858
        %v10883 = vpack.c.bf16 %v10863, %v10859
        %v10884 = vpack.c.bf16 %v10864, %v10860
        %v10885 = vpack.c.bf16 %v10869, %v10865
        %v10886 = vpack.c.bf16 %v10870, %v10866
        %v10887 = vpack.c.bf16 %v10871, %v10867
        %v10888 = vpack.c.bf16 %v10872, %v10868
        %v10889 = vld [vmem:[%s8] sm:$0xf]
        %v10890 = vld [vmem:[%s8 + $0x4] sm:$0xf]
        %v10891 = vld [vmem:[%s8 + $0x8] sm:$0xf]
        %v10892 = vld [vmem:[%s8 + $0xc] sm:$0xf]
        %v10893 = vld [vmem:[%s8 + $0x10] sm:$0xf]
        %v10894 = vld [vmem:[%s8 + $0x14] sm:$0xf]
        %v10895 = vld [vmem:[%s8 + $0x18] sm:$0xf]
        %v10896 = vld [vmem:[%s8 + $0x1c] sm:$0xf]
        %v10897 = vld [vmem:[%s8 + $0x20] sm:$0xf]
        %v10898 = vld [vmem:[%s8 + $0x24] sm:$0xf]
        %v10899 = vld [vmem:[%s8 + $0x28] sm:$0xf]
        %v10900 = vld [vmem:[%s8 + $0x2c] sm:$0xf]
        %v10901 = vld [vmem:[%s8 + $0x30] sm:$0xf]
        %v10902 = vld [vmem:[%s8 + $0x34] sm:$0xf]
        %v10903 = vld [vmem:[%s8 + $0x38] sm:$0xf]
        %v10904 = vld [vmem:[%s8 + $0x3c] sm:$0xf]
        %v10905 = vld [vmem:[%s8 + $0x40] sm:$0xf]
        %v10906 = vld [vmem:[%s8 + $0x44] sm:$0xf]
        %v10907 = vld [vmem:[%s8 + $0x48] sm:$0xf]
        %v10908 = vld [vmem:[%s8 + $0x4c] sm:$0xf]
        %v10909 = vld [vmem:[%s8 + $0x50] sm:$0xf]
        %v10910 = vld [vmem:[%s8 + $0x54] sm:$0xf]
        %v10911 = vld [vmem:[%s8 + $0x58] sm:$0xf]
        %v10912 = vld [vmem:[%s8 + $0x5c] sm:$0xf]
        %v10913 = vld [vmem:[%s8 + $0x60] sm:$0xf]
        %v10914 = vld [vmem:[%s8 + $0x64] sm:$0xf]
        %v10915 = vld [vmem:[%s8 + $0x68] sm:$0xf]
        %v10916 = vld [vmem:[%s8 + $0x6c] sm:$0xf]
        %v10917 = vld [vmem:[%s8 + $0x70] sm:$0xf]
        %v10918 = vld [vmem:[%s8 + $0x74] sm:$0xf]
        %v10919 = vld [vmem:[%s8 + $0x78] sm:$0xf]
        %v10920 = vld [vmem:[%s8 + $0x7c] sm:$0xf]
        %v10921 = vld [vmem:[%s8 + $0x80] sm:$0xf]
        %v10922 = vld [vmem:[%s8 + $0x84] sm:$0xf]
        %v10923 = vld [vmem:[%s8 + $0x88] sm:$0xf]
        %v10924 = vld [vmem:[%s8 + $0x8c] sm:$0xf]
        %v10925 = vld [vmem:[%s8 + $0x90] sm:$0xf]
        %v10926 = vld [vmem:[%s8 + $0x94] sm:$0xf]
        %v10927 = vld [vmem:[%s8 + $0x98] sm:$0xf]
        %v10928 = vld [vmem:[%s8 + $0x9c] sm:$0xf]
        %v10929 = vld [vmem:[%s8 + $0xa0] sm:$0xf]
        %v10930 = vld [vmem:[%s8 + $0xa4] sm:$0xf]
        %v10931 = vld [vmem:[%s8 + $0xa8] sm:$0xf]
        %v10932 = vld [vmem:[%s8 + $0xac] sm:$0xf]
        %v10933 = vld [vmem:[%s8 + $0xb0] sm:$0xf]
        %v10934 = vld [vmem:[%s8 + $0xb4] sm:$0xf]
        %v10935 = vld [vmem:[%s8 + $0xb8] sm:$0xf]
        %v10936 = vld [vmem:[%s8 + $0xbc] sm:$0xf]
        %v10937 = vld [vmem:[%s8 + $0xc0] sm:$0xf]
        %v10938 = vld [vmem:[%s8 + $0xc4] sm:$0xf]
        %v10939 = vld [vmem:[%s8 + $0xc8] sm:$0xf]
        %v10940 = vld [vmem:[%s8 + $0xcc] sm:$0xf]
        %v10941 = vld [vmem:[%s8 + $0xd0] sm:$0xf]
        %v10942 = vld [vmem:[%s8 + $0xd4] sm:$0xf]
        %v10943 = vld [vmem:[%s8 + $0xd8] sm:$0xf]
        %v10944 = vld [vmem:[%s8 + $0xdc] sm:$0xf]
        %v10945 = vld [vmem:[%s8 + $0xe0] sm:$0xf]
        %v10946 = vld [vmem:[%s8 + $0xe4] sm:$0xf]
        %v10947 = vld [vmem:[%s8 + $0xe8] sm:$0xf]
        %v10948 = vld [vmem:[%s8 + $0xec] sm:$0xf]
        %v10949 = vld [vmem:[%s8 + $0xf0] sm:$0xf]
        %v10950 = vld [vmem:[%s8 + $0xf4] sm:$0xf]
        %v10951 = vld [vmem:[%s8 + $0xf8] sm:$0xf]
        %v10952 = vld [vmem:[%s8 + $0xfc] sm:$0xf]
        %v11017 = vunpack.c.l.b16 %v10889
        %v11018 = vunpack.c.l.b16 %v10890
        %v11019 = vunpack.c.l.b16 %v10891
        %v11020 = vunpack.c.l.b16 %v10892
        %v11021 = vunpack.c.l.b16 %v10893
        %v11022 = vunpack.c.l.b16 %v10894
        %v11023 = vunpack.c.l.b16 %v10895
        %v11024 = vunpack.c.l.b16 %v10896
        %v11025 = vunpack.c.l.b16 %v10897
        %v11026 = vunpack.c.l.b16 %v10898
        %v11027 = vunpack.c.l.b16 %v10899
        %v11028 = vunpack.c.l.b16 %v10900
        %v11029 = vunpack.c.l.b16 %v10901
        %v11030 = vunpack.c.l.b16 %v10902
        %v11031 = vunpack.c.l.b16 %v10903
        %v11032 = vunpack.c.l.b16 %v10904
        %v11033 = vunpack.c.l.b16 %v10905
        %v11034 = vunpack.c.l.b16 %v10906
        %v11035 = vunpack.c.l.b16 %v10907
        %v11036 = vunpack.c.l.b16 %v10908
        %v11037 = vunpack.c.l.b16 %v10909
        %v11038 = vunpack.c.l.b16 %v10910
        %v11039 = vunpack.c.l.b16 %v10911
        %v11040 = vunpack.c.l.b16 %v10912
        %v11041 = vunpack.c.l.b16 %v10913
        %v11042 = vunpack.c.l.b16 %v10914
        %v11043 = vunpack.c.l.b16 %v10915
        %v11044 = vunpack.c.l.b16 %v10916
        %v11045 = vunpack.c.l.b16 %v10917
        %v11046 = vunpack.c.l.b16 %v10918
        %v11047 = vunpack.c.l.b16 %v10919
        %v11048 = vunpack.c.l.b16 %v10920
        %v11049 = vunpack.c.l.b16 %v10921
        %v11050 = vunpack.c.l.b16 %v10922
        %v11051 = vunpack.c.l.b16 %v10923
        %v11052 = vunpack.c.l.b16 %v10924
        %v11053 = vunpack.c.l.b16 %v10925
        %v11054 = vunpack.c.l.b16 %v10926
        %v11055 = vunpack.c.l.b16 %v10927
        %v11056 = vunpack.c.l.b16 %v10928
        %v11057 = vunpack.c.l.b16 %v10929
        %v11058 = vunpack.c.l.b16 %v10930
        %v11059 = vunpack.c.l.b16 %v10931
        %v11060 = vunpack.c.l.b16 %v10932
        %v11061 = vunpack.c.l.b16 %v10933
        %v11062 = vunpack.c.l.b16 %v10934
        %v11063 = vunpack.c.l.b16 %v10935
        %v11064 = vunpack.c.l.b16 %v10936
        %v11065 = vunpack.c.l.b16 %v10937
        %v11066 = vunpack.c.l.b16 %v10938
        %v11067 = vunpack.c.l.b16 %v10939
        %v11068 = vunpack.c.l.b16 %v10940
        %v11069 = vunpack.c.l.b16 %v10941
        %v11070 = vunpack.c.l.b16 %v10942
        %v11071 = vunpack.c.l.b16 %v10943
        %v11072 = vunpack.c.l.b16 %v10944
        %v11073 = vunpack.c.l.b16 %v10945
        %v11074 = vunpack.c.l.b16 %v10946
        %v11075 = vunpack.c.l.b16 %v10947
        %v11076 = vunpack.c.l.b16 %v10948
        %v11077 = vunpack.c.l.b16 %v10949
        %v11078 = vunpack.c.l.b16 %v10950
        %v11079 = vunpack.c.l.b16 %v10951
        %v11080 = vunpack.c.l.b16 %v10952
        %v11081 = vpack.c.b16 %v11018, %v11017
        %v11082 = vpack.c.b16 %v11020, %v11019
        %v11083 = vpack.c.b16 %v11022, %v11021
        %v11084 = vpack.c.b16 %v11024, %v11023
        %v11085 = vpack.c.b16 %v11026, %v11025
        %v11086 = vpack.c.b16 %v11028, %v11027
        %v11087 = vpack.c.b16 %v11030, %v11029
        %v11088 = vpack.c.b16 %v11032, %v11031
        %v11089 = vpack.c.b16 %v11034, %v11033
        %v11090 = vpack.c.b16 %v11036, %v11035
        %v11091 = vpack.c.b16 %v11038, %v11037
        %v11092 = vpack.c.b16 %v11040, %v11039
        %v11093 = vpack.c.b16 %v11042, %v11041
        %v11094 = vpack.c.b16 %v11044, %v11043
        %v11095 = vpack.c.b16 %v11046, %v11045
        %v11096 = vpack.c.b16 %v11048, %v11047
        %v11097 = vpack.c.b16 %v11050, %v11049
        %v11098 = vpack.c.b16 %v11052, %v11051
        %v11099 = vpack.c.b16 %v11054, %v11053
        %v11100 = vpack.c.b16 %v11056, %v11055
        %v11101 = vpack.c.b16 %v11058, %v11057
        %v11102 = vpack.c.b16 %v11060, %v11059
        %v11103 = vpack.c.b16 %v11062, %v11061
        %v11104 = vpack.c.b16 %v11064, %v11063
        %v11105 = vpack.c.b16 %v11066, %v11065
        %v11106 = vpack.c.b16 %v11068, %v11067
        %v11107 = vpack.c.b16 %v11070, %v11069
        %v11108 = vpack.c.b16 %v11072, %v11071
        %v11109 = vpack.c.b16 %v11074, %v11073
        %v11110 = vpack.c.b16 %v11076, %v11075
        %v11111 = vpack.c.b16 %v11078, %v11077
        %v11112 = vpack.c.b16 %v11080, %v11079
        %11145 = vmatprep.subr.bf16.mxu0 0
        %11146 = vmatpush1.bf16.msra.mxu0 %v11088
        %11147 = vmatprep.subr.bf16.mxu0 0
        %11148 = vmatpush1.bf16.msra.mxu0 %v11087
        %11149 = vmatprep.subr.bf16.mxu0 0
        %11150 = vmatpush1.bf16.msra.mxu0 %v11086
        %11151 = vmatprep.subr.bf16.mxu0 0
        %11152 = vmatpush1.bf16.msra.mxu0 %v11085
        %11153 = vmatprep.subr.bf16.mxu0 0
        %11154 = vmatpush1.bf16.msra.mxu0 %v11084
        %11155 = vmatprep.subr.bf16.mxu0 0
        %11156 = vmatpush1.bf16.msra.mxu0 %v11083
        %11157 = vmatprep.subr.bf16.mxu0 0
        %11158 = vmatpush1.bf16.msra.mxu0 %v11082
        %11159 = vmatprep.subr.bf16.mxu0 0
        %11160 = vmatpush1.bf16.msra.mxu0 %v11081
        %11161 = vmatprep.subr.bf16.mxu0 0
        %11162 = vmatpush2.bf16.msra.mxu0 %v11096
        %11163 = vmatprep.subr.bf16.mxu0 0
        %11164 = vmatpush2.bf16.msra.mxu0 %v11095
        %11165 = vmatprep.subr.bf16.mxu0 0
        %11166 = vmatpush2.bf16.msra.mxu0 %v11094
        %11167 = vmatprep.subr.bf16.mxu0 0
        %11168 = vmatpush2.bf16.msra.mxu0 %v11093
        %11169 = vmatprep.subr.bf16.mxu0 0
        %11170 = vmatpush2.bf16.msra.mxu0 %v11092
        %11171 = vmatprep.subr.bf16.mxu0 0
        %11172 = vmatpush2.bf16.msra.mxu0 %v11091
        %11173 = vmatprep.subr.bf16.mxu0 0
        %11174 = vmatpush2.bf16.msra.mxu0 %v11090
        %11175 = vmatprep.subr.bf16.mxu0 0
        %11176 = vmatpush2.bf16.msra.mxu0 %v11089
        %11177 = vmatprep.mubr.bf16.mxu0 %v10874
        %11178 = vmatmul.mubr.bf16.gmra.mxu0 %v10873
        %v11179 = vpop.f32.mrf.mxu0
        %v11180 = vadd.f32 0.0, %v11179
        %v11181 = vpop.f32.mrf.mxu0
        %v11182 = vpop.f32.mrf.mxu0
        %v11183 = vadd.f32 0.0, %v11182
        %v11184 = vpop.f32.mrf.mxu0
        %11185 = vmatprep.mubr.bf16.mxu0 %v10878
        %11186 = vmatmul.mubr.bf16.gmra.mxu0 %v10877
        %v11187 = vpop.f32.mrf.mxu0
        %v11188 = vadd.f32 0.0, %v11187
        %v11189 = vpop.f32.mrf.mxu0
        %v11190 = vpop.f32.mrf.mxu0
        %v11191 = vadd.f32 0.0, %v11190
        %v11192 = vpop.f32.mrf.mxu0
        %11193 = vmatprep.mubr.bf16.mxu0 %v10882
        %11194 = vmatmul.mubr.bf16.gmra.mxu0 %v10881
        %v11195 = vpop.f32.mrf.mxu0
        %v11196 = vadd.f32 0.0, %v11195
        %v11197 = vpop.f32.mrf.mxu0
        %v11198 = vpop.f32.mrf.mxu0
        %v11199 = vadd.f32 0.0, %v11198
        %v11200 = vpop.f32.mrf.mxu0
        %11201 = vmatprep.mubr.bf16.mxu0 %v10886
        %11202 = vmatmul.mubr.bf16.gmra.mxu0 %v10885
        %v11203 = vpop.f32.mrf.mxu0
        %v11204 = vadd.f32 0.0, %v11203
        %v11205 = vpop.f32.mrf.mxu0
        %v11206 = vpop.f32.mrf.mxu0
        %v11207 = vadd.f32 0.0, %v11206
        %v11208 = vpop.f32.mrf.mxu0
        %11209 = vdwg.mxu0
        %11210 = vmatprep.subr.bf16.mxu0 0
        %11211 = vmatpush1.bf16.msra.mxu0 %v11104
        %11212 = vmatprep.subr.bf16.mxu0 0
        %11213 = vmatpush1.bf16.msra.mxu0 %v11103
        %11214 = vmatprep.subr.bf16.mxu0 0
        %11215 = vmatpush1.bf16.msra.mxu0 %v11102
        %11216 = vmatprep.subr.bf16.mxu0 0
        %11217 = vmatpush1.bf16.msra.mxu0 %v11101
        %11218 = vmatprep.subr.bf16.mxu0 0
        %11219 = vmatpush1.bf16.msra.mxu0 %v11100
        %11220 = vmatprep.subr.bf16.mxu0 0
        %11221 = vmatpush1.bf16.msra.mxu0 %v11099
        %11222 = vmatprep.subr.bf16.mxu0 0
        %11223 = vmatpush1.bf16.msra.mxu0 %v11098
        %11224 = vmatprep.subr.bf16.mxu0 0
        %11225 = vmatpush1.bf16.msra.mxu0 %v11097
        %11226 = vmatprep.subr.bf16.mxu0 0
        %11227 = vmatpush2.bf16.msra.mxu0 %v11112
        %11228 = vmatprep.subr.bf16.mxu0 0
        %11229 = vmatpush2.bf16.msra.mxu0 %v11111
        %11230 = vmatprep.subr.bf16.mxu0 0
        %11231 = vmatpush2.bf16.msra.mxu0 %v11110
        %11232 = vmatprep.subr.bf16.mxu0 0
        %11233 = vmatpush2.bf16.msra.mxu0 %v11109
        %11234 = vmatprep.subr.bf16.mxu0 0
        %11235 = vmatpush2.bf16.msra.mxu0 %v11108
        %11236 = vmatprep.subr.bf16.mxu0 0
        %11237 = vmatpush2.bf16.msra.mxu0 %v11107
        %11238 = vmatprep.subr.bf16.mxu0 0
        %11239 = vmatpush2.bf16.msra.mxu0 %v11106
        %11240 = vmatprep.subr.bf16.mxu0 0
        %11241 = vmatpush2.bf16.msra.mxu0 %v11105
        %11242 = vmatprep.mubr.bf16.mxu0 %v10876
        %11243 = vmatmul.mubr.bf16.gmra.mxu0 %v10875
        %v11244 = vpop.f32.mrf.mxu0
        %v11245 = vadd.f32 %v11180, %v11244
        %v11246 = vpop.f32.mrf.mxu0
        %v11247 = vpop.f32.mrf.mxu0
        %v11248 = vadd.f32 %v11183, %v11247
        %v11249 = vpop.f32.mrf.mxu0
        %11250 = vmatprep.mubr.bf16.mxu0 %v10880
        %11251 = vmatmul.mubr.bf16.gmra.mxu0 %v10879
        %v11252 = vpop.f32.mrf.mxu0
        %v11253 = vadd.f32 %v11188, %v11252
        %v11254 = vpop.f32.mrf.mxu0
        %v11255 = vpop.f32.mrf.mxu0
        %v11256 = vadd.f32 %v11191, %v11255
        %v11257 = vpop.f32.mrf.mxu0
        %11258 = vmatprep.mubr.bf16.mxu0 %v10884
        %11259 = vmatmul.mubr.bf16.gmra.mxu0 %v10883
        %v11260 = vpop.f32.mrf.mxu0
        %v11261 = vadd.f32 %v11196, %v11260
        %v11262 = vpop.f32.mrf.mxu0
        %v11263 = vpop.f32.mrf.mxu0
        %v11264 = vadd.f32 %v11199, %v11263
        %v11265 = vpop.f32.mrf.mxu0
        %11266 = vmatprep.mubr.bf16.mxu0 %v10888
        %11267 = vmatmul.mubr.bf16.gmra.mxu0 %v10887
        %v11268 = vpop.f32.mrf.mxu0
        %v11269 = vadd.f32 %v11204, %v11268
        %v11270 = vpop.f32.mrf.mxu0
        %v11271 = vpop.f32.mrf.mxu0
        %v11272 = vadd.f32 %v11207, %v11271
        %v11273 = vpop.f32.mrf.mxu0
        %11274 = vdwg.mxu0
        %11275 = vxpose.xlu0.b32.start [1/16] %v11245, 128
        %11276 = vxpose.xlu0.b32.cont [2/16] %v11248, 128
        %11277 = vxpose.xlu0.b32.cont [3/16] %v11253, 128
        %11278 = vxpose.xlu0.b32.cont [4/16] %v11256, 128
        %11279 = vxpose.xlu0.b32.cont [5/16] %v11261, 128
        %11280 = vxpose.xlu0.b32.cont [6/16] %v11264, 128
        %11281 = vxpose.xlu0.b32.cont [7/16] %v11269, 128
        %11282 = vxpose.xlu0.b32.cont [8/16] %v11272, 128
        %11283 = vxpose.xlu0.b32.cont [9/16] 0.0, 128
        %11284 = vxpose.xlu0.b32.cont [10/16] 0.0, 128
        %11285 = vxpose.xlu0.b32.cont [11/16] 0.0, 128
        %11286 = vxpose.xlu0.b32.cont [12/16] 0.0, 128
        %11287 = vxpose.xlu0.b32.cont [13/16] 0.0, 128
        %11288 = vxpose.xlu0.b32.cont [14/16] 0.0, 128
        %11289 = vxpose.xlu0.b32.cont [15/16] 0.0, 128
        %11290 = vxpose.xlu0.b32.end [16/16] 0.0, 128
        %v11291 = vpop.trf.xlu0
        %v11292 = vpop.trf.xlu0
        %v11293 = vpop.trf.xlu0
        %v11294 = vpop.trf.xlu0
        %v11295 = vpop.trf.xlu0
        %v11296 = vpop.trf.xlu0
        %v11297 = vpop.trf.xlu0
        %v11298 = vpop.trf.xlu0
        %v11299 = vpop.trf.xlu0
        %v11300 = vpop.trf.xlu0
        %v11301 = vpop.trf.xlu0
        %v11302 = vpop.trf.xlu0
        %v11303 = vpop.trf.xlu0
        %v11304 = vpop.trf.xlu0
        %v11305 = vpop.trf.xlu0
        %v11306 = vpop.trf.xlu0
        %v11307 = vpack.c.bf16 %v11291, %v11291
        %v11308 = vld [vmem:[#allocation10] sm:$0xff]
        %v11309 = vld [vmem:[#allocation10 + $0x8] sm:$0xff]
        %v11310 = vld [vmem:[#allocation10 + $0x10] sm:$0xff]
        %v11311 = vld [vmem:[#allocation10 + $0x18] sm:$0xff]
        %v11312 = vld [vmem:[#allocation10 + $0x20] sm:$0xff]
        %v11313 = vld [vmem:[#allocation10 + $0x28] sm:$0xff]
        %v11314 = vld [vmem:[#allocation10 + $0x30] sm:$0xff]
        %v11315 = vld [vmem:[#allocation10 + $0x38] sm:$0xff]
        %v11316 = vld [vmem:[#allocation10 + $0x40] sm:$0xff]
        %v11317 = vld [vmem:[#allocation10 + $0x48] sm:$0xff]
        %v11318 = vld [vmem:[#allocation10 + $0x50] sm:$0xff]
        %v11319 = vld [vmem:[#allocation10 + $0x58] sm:$0xff]
        %v11320 = vld [vmem:[#allocation10 + $0x60] sm:$0xff]
        %v11321 = vld [vmem:[#allocation10 + $0x68] sm:$0xff]
        %v11322 = vld [vmem:[#allocation10 + $0x70] sm:$0xff]
        %v11323 = vld [vmem:[#allocation10 + $0x78] sm:$0xff]
        %v11324 = vld [vmem:[#allocation10 + $0x80] sm:$0xff]
        %v11325 = vld [vmem:[#allocation10 + $0x88] sm:$0xff]
        %v11326 = vld [vmem:[#allocation10 + $0x90] sm:$0xff]
        %v11327 = vld [vmem:[#allocation10 + $0x98] sm:$0xff]
        %v11328 = vld [vmem:[#allocation10 + $0xa0] sm:$0xff]
        %v11329 = vld [vmem:[#allocation10 + $0xa8] sm:$0xff]
        %v11330 = vld [vmem:[#allocation10 + $0xb0] sm:$0xff]
        %v11331 = vld [vmem:[#allocation10 + $0xb8] sm:$0xff]
        %v11332 = vld [vmem:[#allocation10 + $0xc0] sm:$0xff]
        %v11333 = vld [vmem:[#allocation10 + $0xc8] sm:$0xff]
        %v11334 = vld [vmem:[#allocation10 + $0xd0] sm:$0xff]
        %v11335 = vld [vmem:[#allocation10 + $0xd8] sm:$0xff]
        %v11336 = vld [vmem:[#allocation10 + $0xe0] sm:$0xff]
        %v11337 = vld [vmem:[#allocation10 + $0xe8] sm:$0xff]
        %v11338 = vld [vmem:[#allocation10 + $0xf0] sm:$0xff]
        %v11339 = vld [vmem:[#allocation10 + $0xf8] sm:$0xff]
        %v11372 = vunpack.c.l.b16 %v11308
        %v11373 = vunpack.c.h.b16 %v11308
        %v11374 = vunpack.c.l.b16 %v11309
        %v11375 = vunpack.c.h.b16 %v11309
        %v11376 = vunpack.c.l.b16 %v11310
        %v11377 = vunpack.c.h.b16 %v11310
        %v11378 = vunpack.c.l.b16 %v11311
        %v11379 = vunpack.c.h.b16 %v11311
        %v11380 = vunpack.c.l.b16 %v11312
        %v11381 = vunpack.c.h.b16 %v11312
        %v11382 = vunpack.c.l.b16 %v11313
        %v11383 = vunpack.c.h.b16 %v11313
        %v11384 = vunpack.c.l.b16 %v11314
        %v11385 = vunpack.c.h.b16 %v11314
        %v11386 = vunpack.c.l.b16 %v11315
        %v11387 = vunpack.c.h.b16 %v11315
        %v11388 = vunpack.c.l.b16 %v11316
        %v11389 = vunpack.c.h.b16 %v11316
        %v11390 = vunpack.c.l.b16 %v11317
        %v11391 = vunpack.c.h.b16 %v11317
        %v11392 = vunpack.c.l.b16 %v11318
        %v11393 = vunpack.c.h.b16 %v11318
        %v11394 = vunpack.c.l.b16 %v11319
        %v11395 = vunpack.c.h.b16 %v11319
        %v11396 = vunpack.c.l.b16 %v11320
        %v11397 = vunpack.c.h.b16 %v11320
        %v11398 = vunpack.c.l.b16 %v11321
        %v11399 = vunpack.c.h.b16 %v11321
        %v11400 = vunpack.c.l.b16 %v11322
        %v11401 = vunpack.c.h.b16 %v11322
        %v11402 = vunpack.c.l.b16 %v11323
        %v11403 = vunpack.c.h.b16 %v11323
        %v11404 = vunpack.c.l.b16 %v11324
        %v11405 = vunpack.c.h.b16 %v11324
        %v11406 = vunpack.c.l.b16 %v11325
        %v11407 = vunpack.c.h.b16 %v11325
        %v11408 = vunpack.c.l.b16 %v11326
        %v11409 = vunpack.c.h.b16 %v11326
        %v11410 = vunpack.c.l.b16 %v11327
        %v11411 = vunpack.c.h.b16 %v11327
        %v11412 = vunpack.c.l.b16 %v11328
        %v11413 = vunpack.c.h.b16 %v11328
        %v11414 = vunpack.c.l.b16 %v11329
        %v11415 = vunpack.c.h.b16 %v11329
        %v11416 = vunpack.c.l.b16 %v11330
        %v11417 = vunpack.c.h.b16 %v11330
        %v11418 = vunpack.c.l.b16 %v11331
        %v11419 = vunpack.c.h.b16 %v11331
        %v11420 = vunpack.c.l.b16 %v11332
        %v11421 = vunpack.c.h.b16 %v11332
        %v11422 = vunpack.c.l.b16 %v11333
        %v11423 = vunpack.c.h.b16 %v11333
        %v11424 = vunpack.c.l.b16 %v11334
        %v11425 = vunpack.c.h.b16 %v11334
        %v11426 = vunpack.c.l.b16 %v11335
        %v11427 = vunpack.c.h.b16 %v11335
        %v11428 = vunpack.c.l.b16 %v11336
        %v11429 = vunpack.c.h.b16 %v11336
        %v11430 = vunpack.c.l.b16 %v11337
        %v11431 = vunpack.c.h.b16 %v11337
        %v11432 = vunpack.c.l.b16 %v11338
        %v11433 = vunpack.c.h.b16 %v11338
        %v11434 = vunpack.c.l.b16 %v11339
        %v11435 = vunpack.c.h.b16 %v11339
        %v11436 = vpack.c.b16 %v11380, %v11372
        %v11437 = vpack.c.b16 %v11381, %v11373
        %v11438 = vpack.c.b16 %v11382, %v11374
        %v11439 = vpack.c.b16 %v11383, %v11375
        %v11440 = vpack.c.b16 %v11384, %v11376
        %v11441 = vpack.c.b16 %v11385, %v11377
        %v11442 = vpack.c.b16 %v11386, %v11378
        %v11443 = vpack.c.b16 %v11387, %v11379
        %v11444 = vpack.c.b16 %v11396, %v11388
        %v11445 = vpack.c.b16 %v11397, %v11389
        %v11446 = vpack.c.b16 %v11398, %v11390
        %v11447 = vpack.c.b16 %v11399, %v11391
        %v11448 = vpack.c.b16 %v11400, %v11392
        %v11449 = vpack.c.b16 %v11401, %v11393
        %v11450 = vpack.c.b16 %v11402, %v11394
        %v11451 = vpack.c.b16 %v11403, %v11395
        %v11452 = vpack.c.b16 %v11412, %v11404
        %v11453 = vpack.c.b16 %v11413, %v11405
        %v11454 = vpack.c.b16 %v11414, %v11406
        %v11455 = vpack.c.b16 %v11415, %v11407
        %v11456 = vpack.c.b16 %v11416, %v11408
        %v11457 = vpack.c.b16 %v11417, %v11409
        %v11458 = vpack.c.b16 %v11418, %v11410
        %v11459 = vpack.c.b16 %v11419, %v11411
        %v11460 = vpack.c.b16 %v11428, %v11420
        %v11461 = vpack.c.b16 %v11429, %v11421
        %v11462 = vpack.c.b16 %v11430, %v11422
        %v11463 = vpack.c.b16 %v11431, %v11423
        %v11464 = vpack.c.b16 %v11432, %v11424
        %v11465 = vpack.c.b16 %v11433, %v11425
        %v11466 = vpack.c.b16 %v11434, %v11426
        %v11467 = vpack.c.b16 %v11435, %v11427
        %vm11500 = vcmask 523264
        %v11502 = vsel %vm11500, %v11307, 0
        %11504 = vmatprep.subr.bf16.mxu0 0
        %11505 = vmatpush1.bf16.msra.mxu0 0
        %11506 = vmatprep.subr.bf16.mxu0 0
        %11507 = vmatpush1.bf16.msra.mxu0 0
        %11508 = vmatprep.subr.bf16.mxu0 0
        %11509 = vmatpush1.bf16.msra.mxu0 0
        %11510 = vmatprep.subr.bf16.mxu0 0
        %11511 = vmatpush1.bf16.msra.mxu0 0
        %11512 = vmatprep.subr.bf16.mxu0 %v11461
        %11513 = vmatpush1.bf16.msra.mxu0 %v11460
        %11514 = vmatprep.subr.bf16.mxu0 %v11453
        %11515 = vmatpush1.bf16.msra.mxu0 %v11452
        %11516 = vmatprep.subr.bf16.mxu0 %v11445
        %11517 = vmatpush1.bf16.msra.mxu0 %v11444
        %11518 = vmatprep.subr.bf16.mxu0 %v11437
        %11519 = vmatpush1.bf16.msra.mxu0 %v11436
        %11520 = vmatprep.subr.bf16.mxu0 0
        %11521 = vmatpush2.bf16.msra.mxu0 0
        %11522 = vmatprep.subr.bf16.mxu0 0
        %11523 = vmatpush2.bf16.msra.mxu0 0
        %11524 = vmatprep.subr.bf16.mxu0 0
        %11525 = vmatpush2.bf16.msra.mxu0 0
        %11526 = vmatprep.subr.bf16.mxu0 0
        %11527 = vmatpush2.bf16.msra.mxu0 0
        %11528 = vmatprep.subr.bf16.mxu0 0
        %11529 = vmatpush2.bf16.msra.mxu0 0
        %11530 = vmatprep.subr.bf16.mxu0 0
        %11531 = vmatpush2.bf16.msra.mxu0 0
        %11532 = vmatprep.subr.bf16.mxu0 0
        %11533 = vmatpush2.bf16.msra.mxu0 0
        %11534 = vmatprep.subr.bf16.mxu0 0
        %11535 = vmatpush2.bf16.msra.mxu0 0
        %11536 = vmatprep.mubr.bf16.mxu0 0
        %11537 = vmatmul.mubr.bf16.gmra.mxu0 %v11502
        %v11538 = vpop.f32.mrf.mxu0
        %v11539 = vadd.f32 0.0, %v11538
        %v11540 = vpop.f32.mrf.mxu0
        %v11541 = vadd.f32 0.0, %v11540
        %v11542 = vpop.f32.mrf.mxu0
        %v11543 = vpop.f32.mrf.mxu0
        %11544 = vdwg.mxu0
        %11545 = vmatprep.subr.bf16.mxu0 0
        %11546 = vmatpush1.bf16.msra.mxu0 0
        %11547 = vmatprep.subr.bf16.mxu0 0
        %11548 = vmatpush1.bf16.msra.mxu0 0
        %11549 = vmatprep.subr.bf16.mxu0 0
        %11550 = vmatpush1.bf16.msra.mxu0 0
        %11551 = vmatprep.subr.bf16.mxu0 0
        %11552 = vmatpush1.bf16.msra.mxu0 0
        %11553 = vmatprep.subr.bf16.mxu0 %v11463
        %11554 = vmatpush1.bf16.msra.mxu0 %v11462
        %11555 = vmatprep.subr.bf16.mxu0 %v11455
        %11556 = vmatpush1.bf16.msra.mxu0 %v11454
        %11557 = vmatprep.subr.bf16.mxu0 %v11447
        %11558 = vmatpush1.bf16.msra.mxu0 %v11446
        %11559 = vmatprep.subr.bf16.mxu0 %v11439
        %11560 = vmatpush1.bf16.msra.mxu0 %v11438
        %11561 = vmatprep.subr.bf16.mxu0 0
        %11562 = vmatpush2.bf16.msra.mxu0 0
        %11563 = vmatprep.subr.bf16.mxu0 0
        %11564 = vmatpush2.bf16.msra.mxu0 0
        %11565 = vmatprep.subr.bf16.mxu0 0
        %11566 = vmatpush2.bf16.msra.mxu0 0
        %11567 = vmatprep.subr.bf16.mxu0 0
        %11568 = vmatpush2.bf16.msra.mxu0 0
        %11569 = vmatprep.subr.bf16.mxu0 0
        %11570 = vmatpush2.bf16.msra.mxu0 0
        %11571 = vmatprep.subr.bf16.mxu0 0
        %11572 = vmatpush2.bf16.msra.mxu0 0
        %11573 = vmatprep.subr.bf16.mxu0 0
        %11574 = vmatpush2.bf16.msra.mxu0 0
        %11575 = vmatprep.subr.bf16.mxu0 0
        %11576 = vmatpush2.bf16.msra.mxu0 0
        %11577 = vmatprep.mubr.bf16.mxu0 0
        %11578 = vmatmul.mubr.bf16.gmra.mxu0 %v11502
        %v11579 = vpop.f32.mrf.mxu0
        %v11580 = vadd.f32 0.0, %v11579
        %v11581 = vpop.f32.mrf.mxu0
        %v11582 = vadd.f32 0.0, %v11581
        %v11583 = vpop.f32.mrf.mxu0
        %v11584 = vpop.f32.mrf.mxu0
        %11585 = vdwg.mxu0
        %11586 = vmatprep.subr.bf16.mxu0 0
        %11587 = vmatpush1.bf16.msra.mxu0 0
        %11588 = vmatprep.subr.bf16.mxu0 0
        %11589 = vmatpush1.bf16.msra.mxu0 0
        %11590 = vmatprep.subr.bf16.mxu0 0
        %11591 = vmatpush1.bf16.msra.mxu0 0
        %11592 = vmatprep.subr.bf16.mxu0 0
        %11593 = vmatpush1.bf16.msra.mxu0 0
        %11594 = vmatprep.subr.bf16.mxu0 %v11465
        %11595 = vmatpush1.bf16.msra.mxu0 %v11464
        %11596 = vmatprep.subr.bf16.mxu0 %v11457
        %11597 = vmatpush1.bf16.msra.mxu0 %v11456
        %11598 = vmatprep.subr.bf16.mxu0 %v11449
        %11599 = vmatpush1.bf16.msra.mxu0 %v11448
        %11600 = vmatprep.subr.bf16.mxu0 %v11441
        %11601 = vmatpush1.bf16.msra.mxu0 %v11440
        %11602 = vmatprep.subr.bf16.mxu0 0
        %11603 = vmatpush2.bf16.msra.mxu0 0
        %11604 = vmatprep.subr.bf16.mxu0 0
        %11605 = vmatpush2.bf16.msra.mxu0 0
        %11606 = vmatprep.subr.bf16.mxu0 0
        %11607 = vmatpush2.bf16.msra.mxu0 0
        %11608 = vmatprep.subr.bf16.mxu0 0
        %11609 = vmatpush2.bf16.msra.mxu0 0
        %11610 = vmatprep.subr.bf16.mxu0 0
        %11611 = vmatpush2.bf16.msra.mxu0 0
        %11612 = vmatprep.subr.bf16.mxu0 0
        %11613 = vmatpush2.bf16.msra.mxu0 0
        %11614 = vmatprep.subr.bf16.mxu0 0
        %11615 = vmatpush2.bf16.msra.mxu0 0
        %11616 = vmatprep.subr.bf16.mxu0 0
        %11617 = vmatpush2.bf16.msra.mxu0 0
        %11618 = vmatprep.mubr.bf16.mxu0 0
        %11619 = vmatmul.mubr.bf16.gmra.mxu0 %v11502
        %v11620 = vpop.f32.mrf.mxu0
        %v11621 = vadd.f32 0.0, %v11620
        %v11622 = vpop.f32.mrf.mxu0
        %v11623 = vadd.f32 0.0, %v11622
        %v11624 = vpop.f32.mrf.mxu0
        %v11625 = vpop.f32.mrf.mxu0
        %11626 = vdwg.mxu0
        %11627 = vmatprep.subr.bf16.mxu0 0
        %11628 = vmatpush1.bf16.msra.mxu0 0
        %11629 = vmatprep.subr.bf16.mxu0 0
        %11630 = vmatpush1.bf16.msra.mxu0 0
        %11631 = vmatprep.subr.bf16.mxu0 0
        %11632 = vmatpush1.bf16.msra.mxu0 0
        %11633 = vmatprep.subr.bf16.mxu0 0
        %11634 = vmatpush1.bf16.msra.mxu0 0
        %11635 = vmatprep.subr.bf16.mxu0 %v11467
        %11636 = vmatpush1.bf16.msra.mxu0 %v11466
        %11637 = vmatprep.subr.bf16.mxu0 %v11459
        %11638 = vmatpush1.bf16.msra.mxu0 %v11458
        %11639 = vmatprep.subr.bf16.mxu0 %v11451
        %11640 = vmatpush1.bf16.msra.mxu0 %v11450
        %11641 = vmatprep.subr.bf16.mxu0 %v11443
        %11642 = vmatpush1.bf16.msra.mxu0 %v11442
        %11643 = vmatprep.subr.bf16.mxu0 0
        %11644 = vmatpush2.bf16.msra.mxu0 0
        %11645 = vmatprep.subr.bf16.mxu0 0
        %11646 = vmatpush2.bf16.msra.mxu0 0
        %11647 = vmatprep.subr.bf16.mxu0 0
        %11648 = vmatpush2.bf16.msra.mxu0 0
        %11649 = vmatprep.subr.bf16.mxu0 0
        %11650 = vmatpush2.bf16.msra.mxu0 0
        %11651 = vmatprep.subr.bf16.mxu0 0
        %11652 = vmatpush2.bf16.msra.mxu0 0
        %11653 = vmatprep.subr.bf16.mxu0 0
        %11654 = vmatpush2.bf16.msra.mxu0 0
        %11655 = vmatprep.subr.bf16.mxu0 0
        %11656 = vmatpush2.bf16.msra.mxu0 0
        %11657 = vmatprep.subr.bf16.mxu0 0
        %11658 = vmatpush2.bf16.msra.mxu0 0
        %11659 = vmatprep.mubr.bf16.mxu0 0
        %11660 = vmatmul.mubr.bf16.gmra.mxu0 %v11502
        %v11661 = vpop.f32.mrf.mxu0
        %v11662 = vadd.f32 0.0, %v11661
        %v11663 = vpop.f32.mrf.mxu0
        %v11664 = vadd.f32 0.0, %v11663
        %v11665 = vpop.f32.mrf.mxu0
        %v11666 = vpop.f32.mrf.mxu0
        %11667 = vdwg.mxu0
        %11668 = vst [vmem:[%s467] sm:$0xff] %v11539
        %11669 = vst [vmem:[%s467 + $0x8] sm:$0xff] %v11541
        %11670 = vst [vmem:[%s467 + $0x10] sm:$0xff] %v11580
        %11671 = vst [vmem:[%s467 + $0x18] sm:$0xff] %v11582
        %11672 = vst [vmem:[%s467 + $0x20] sm:$0xff] %v11621
        %11673 = vst [vmem:[%s467 + $0x28] sm:$0xff] %v11623
        %11674 = vst [vmem:[%s467 + $0x30] sm:$0xff] %v11662
        %11675 = vst [vmem:[%s467 + $0x38] sm:$0xff] %v11664
        %s11676 = sand.u32 %s243, 1
        %s11677 = scalar_lea.sflag [#allocation6], %s11676
        %s11678 = sand.u32 %s243, 1
        %s11679 = smul.addr %s11678, 64
        %s11680 = scalar_lea.vmem [#allocation15], %s11679
        // Predicated region
        $region81: #{tpu_custom_call.1} parent=55 // pred_check
          %p11681 = pneg %p253
        $region82: #{tpu_custom_call.1} parent=55 // pred_check_branch
          %11683 = sbr.rel (%p11681) target = $region84
        $region83: #{tpu_custom_call.1} parent=55 // pred_region
          %s11685 = ssub.s32 1024, 1024
          %11686 = vsyncadd %s11677, %s11685
          %s11687 = smul.addr %s31, 8
          %s11688 = smul.addr %s11687, 128
          %s11689 = scalar_lea.hbm %s9, %s11688
          %s11691 = sshll.u32 %s11680, 4
          %s11692 = int_to_ptr.vmem [resolvable:$true] %s11691
          %11694 = dma.vmem_to_hbm [thread:$0]  %s11692, 1024, %s11689, %s11677
        $region84: #{tpu_custom_call.1} parent=55 // pred_fallthru
          _
      $region56: #{tpu_custom_call.1} parent=5 // pred_fallthru
        _
      %p11695 = scmp.le.s32.totalorder 2, %s26
      // Predicated region
      $region85: #{tpu_custom_call.1} parent=5 // pred_check
        %p11696 = pneg %p11695
      $region86: #{tpu_custom_call.1} parent=5 // pred_check_branch
        %11698 = sbr.rel (%p11696) target = $region88
      $region87: #{tpu_custom_call.1} parent=5 // pred_region
        %s11699 = ssub.s32 %s26, 2
        // Predicated region
        $region89: #{tpu_custom_call.1} parent=87 // pred_check
          %p11700 = pneg %p259
        $region90: #{tpu_custom_call.1} parent=87 // pred_check_branch
          %11702 = sbr.rel (%p11700) target = $region92
        $region91: #{tpu_custom_call.1} parent=87 // pred_region
          %s11703 = sand.u32 %s244, 1
          %s11704 = scalar_lea.sflag [#allocation6], %s11703
          %s11705 = sand.u32 %s244, 1
          %s11706 = smul.addr %s11705, 64
          %s11707 = scalar_lea.vmem [#allocation15], %s11706
          %11708 = dma.done %s11704, 1024
        $region92: #{tpu_custom_call.1} parent=87 // pred_fallthru
          _
      $region88: #{tpu_custom_call.1} parent=5 // pred_fallthru
        _
    $region6: #{tpu_custom_call.1} parent=1 // loop_footer
      %s30 = sadd.s32 1, %s26
    $region7: #{tpu_custom_call.1} parent=1 // loop_footer_branch
      %25 = sbr.rel target = $region3
    $region8: #{tpu_custom_call.1} parent=1 // loop_exit
      _
    %11709 = vsyncpa [#allocation5], 1
    %s11710 = scalar_lea.sflag [#allocation5], 1
    %11711 = vsyncpa %s11710, 1
    %11712 = vsyncpa [#allocation8], 1
    %s11713 = scalar_lea.sflag [#allocation8], 1
    %11714 = vsyncpa %s11713, 1
    %11715 = vsyncpa [#allocation11], 1
    %11716 = vsyncpa [#allocation14], 1
    %11717 = vsyncpa [#allocation6], 1
    %s11718 = scalar_lea.sflag [#allocation6], 1
    %11719 = vsyncpa %s11718, 1

</llo_original>
